<compile_context>
chip_gen: v7x
topology: tpu7x:2x2x1
jax: 0.10.0
libtpu: 0.0.40
codegen_flags: <defaults>
</compile_context>

<pallas_src>
import functools

import jax
import jax.numpy as jnp
from jax.experimental import pallas as pl
from jax.experimental.pallas import tpu as pltpu

EPS = 1e-5


# ---------------------------------------------------------------------------
# Wrapper-side weight preprocessing
# ---------------------------------------------------------------------------
def _banded_weight(w, W):
    """(3,3,3,Ci,Co) conv weight -> (3,3,(W+2)*Ci, W*Co) block-banded matrices.

    With rows[(n,d,h), wi*Ci+ci] = x_padded[n, d+kd, h+kh, wi, ci],
        sum_{kd,kh} rows @ band[kd, kh]
    equals the 'same' 3x3x3 conv output laid out as rows=(n,d,h), cols=(w, co).
    """
    kD, kH, kW, Ci, Co = w.shape
    band = jnp.zeros((kD, kH, (W + 2) * Ci, W * Co), w.dtype)
    for kw in range(kW):
        for wo in range(W):
            band = band.at[:, :,
                           (wo + kw) * Ci:(wo + kw + 1) * Ci,
                           wo * Co:(wo + 1) * Co].set(w[:, :, kw])
    return band


# ---------------------------------------------------------------------------
# Kernel
# ---------------------------------------------------------------------------
def up3d_kernel(x_ref, band01_ref, band2_ref,
                g1_ref, b1_ref, g2_ref, b2_ref, out_ref,
                *, N, D, H, W, Cout):
    f32 = jnp.float32
    M = N * D * H                              # rows of every banded matmul
    inv_count = 1.0 / float(N * D * H * W)     # BN reduction count

    xp = x_ref[...]                            # (N, D+2, H+2, (W+2)*Cin)

    def conv_banded(xpad, band_ref):
        """sum_{kd,kh} rows(kd,kh) @ band[kd,kh]  ->  (M, band cols)."""
        k_rows = band_ref.shape[2]
        n_cols = band_ref.shape[3]
        acc = jnp.zeros((M, n_cols), f32)
        for kd in range(3):
            for kh in range(3):
                rows = xpad[:, kd:kd + D, kh:kh + H, :].reshape(M, k_rows)
                acc = acc + jnp.dot(rows, band_ref[kd, kh],
                                    preferred_element_type=f32)
        return acc

    def bn(flat, g_ref, b_ref):
        """Training-mode BatchNorm3d; lanes of `flat` are laid out as (w, c)."""
        s1 = jnp.sum(flat, axis=0, keepdims=True)              # (1, W*Cout)
        s2 = jnp.sum(flat * flat, axis=0, keepdims=True)       # (1, W*Cout)
        s1c = jnp.zeros((1, Cout), f32)
        s2c = jnp.zeros((1, Cout), f32)
        for w in range(W):                                     # fold W groups
            s1c = s1c + s1[:, w * Cout:(w + 1) * Cout]
            s2c = s2c + s2[:, w * Cout:(w + 1) * Cout]
        mean = s1c * inv_count
        var = jnp.maximum(s2c * inv_count - mean * mean, 0.0)
        scale = g_ref[...] * jax.lax.rsqrt(var + EPS)          # (1, Cout)
        shift = b_ref[...] - mean * scale
        scale_l = jnp.concatenate([scale] * W, axis=-1)        # (1, W*Cout)
        shift_l = jnp.concatenate([shift] * W, axis=-1)
        return flat * scale_l + shift_l                        # single FMA

    # ---- fused conv0 || conv1, then BN1 + ReLU ----------------------------
    acc01 = conv_banded(xp, band01_ref)            # (M, 2*W*Cout)
    out1 = acc01[:, :W * Cout]                     # conv1 path
    res = acc01[:, W * Cout:]                      # conv0 residual path
    h1 = jnp.maximum(bn(out1, g1_ref, b1_ref), 0.0)

    # ---- pad BN1 output once, conv2, BN2, residual add, ReLU --------------
    h1 = h1.reshape(N, D, H, W * Cout)
    zw = jnp.zeros((N, D, H, Cout), f32)
    h1 = jnp.concatenate([zw, h1, zw], axis=-1)                # pad W (lanes)
    zh = jnp.zeros((N, D, 1, (W + 2) * Cout), f32)
    h1 = jnp.concatenate([zh, h1, zh], axis=2)                 # pad H
    zd = jnp.zeros((N, 1, H + 2, (W + 2) * Cout), f32)
    h1p = jnp.concatenate([zd, h1, zd], axis=1)                # pad D

    acc2 = conv_banded(h1p, band2_ref)             # (M, W*Cout)
    y = jnp.maximum(bn(acc2, g2_ref, b2_ref) + res, 0.0)
    y = y.reshape(N, D, H, W * Cout)

    # ---- x2 trilinear upsample (align_corners=False) ----------------------
    #   even output 2k   = 0.75*in[k] + 0.25*in[k-1]   (edge clamped)
    #   odd  output 2k+1 = 0.75*in[k] + 0.25*in[k+1]   (edge clamped)
    def shift(t, axis, direction):
        size = t.shape[axis]
        if direction < 0:                       # t[k-1], clamped
            p0 = jax.lax.slice_in_dim(t, 0, 1, axis=axis)
            p1 = jax.lax.slice_in_dim(t, 0, size - 1, axis=axis)
        else:                                   # t[k+1], clamped
            p0 = jax.lax.slice_in_dim(t, 1, size, axis=axis)
            p1 = jax.lax.slice_in_dim(t, size - 1, size, axis=axis)
        return jnp.concatenate([p0, p1], axis=axis)

    def shift_w(t, direction):                  # W lives on lanes, stride Cout
        L = t.shape[-1]
        if direction < 0:
            return jnp.concatenate([t[..., :Cout], t[..., :L - Cout]], axis=-1)
        return jnp.concatenate([t[..., Cout:], t[..., L - Cout:]], axis=-1)

    for a in range(2):              # D parity
        ya = 0.75 * y + 0.25 * shift(y, 1, -1 if a == 0 else 1)
        for b in range(2):          # H parity
            yab = 0.75 * ya + 0.25 * shift(ya, 2, -1 if b == 0 else 1)
            y_even = 0.75 * yab + 0.25 * shift_w(yab, -1)
            y_odd = 0.75 * yab + 0.25 * shift_w(yab, 1)
            # interleave the W parity inside the lane axis -> 2*W*Cout lanes
            pieces = []
            for w in range(W):
                pieces.append(y_even[..., w * Cout:(w + 1) * Cout])
                pieces.append(y_odd[..., w * Cout:(w + 1) * Cout])
            inter = jnp.concatenate(pieces, axis=-1)   # (N, D, H, 2*W*Cout)
            out_ref[a * 2 + b] = inter


# ---------------------------------------------------------------------------
# Wrapper
# ---------------------------------------------------------------------------
def up3d_forward(params, x1, x2=None):
    """x1, x2: NCDHW float32 (PyTorch convention).  Returns NCDHW output."""
    def to_ndhwc(t):
        return jnp.transpose(t, (0, 2, 3, 4, 1))

    x = (jnp.concatenate([to_ndhwc(x2), to_ndhwc(x1)], axis=-1)   # cat([x2, x1])
         if x2 is not None else to_ndhwc(x1))
    N, D, H, W, Cin = x.shape
    Cout = params["w1"].shape[-1]

    # pad once for both first-layer convs; fuse (W, C) onto the lane axis
    xp = jnp.pad(x, ((0, 0), (1, 1), (1, 1), (1, 1), (0, 0)))
    xp = xp.reshape(N, D + 2, H + 2, (W + 2) * Cin)

    # conv1 and conv0 fused into one banded weight (columns [conv1 | conv0])
    band01 = jnp.concatenate([_banded_weight(params["w1"], W),
                              _banded_weight(params["w0"], W)], axis=-1)
    band2 = _banded_weight(params["w2"], W)

    kernel = functools.partial(up3d_kernel, N=N, D=D, H=H, W=W, Cout=Cout)
    vmem = pltpu.MemorySpace.VMEM
    out = pl.pallas_call(
        kernel,
        out_shape=jax.ShapeDtypeStruct((4, N, D, H, 2 * W * Cout), jnp.float32),
        in_specs=[pl.BlockSpec(memory_space=vmem)] * 7,
        out_specs=pl.BlockSpec(memory_space=vmem),
        compiler_params=pltpu.CompilerParams(vmem_limit_bytes=32 * 1024 * 1024),
    )(xp, band01, band2,
      params["g1"], params["b1"], params["g2"], params["b2"])

    # out[a*2+b, n, d, h, :] holds the (2d+a, 2h+b) plane with the W parity
    # already interleaved on the lane axis -> only the final NCDHW transpose.
    y = out.reshape(2, 2, N, D, H, 2 * W, Cout)
    y = jnp.transpose(y, (2, 6, 3, 0, 4, 1, 5))        # (N, C, D, a, H, b, 2W)
    return y.reshape(N, Cout, 2 * D, 2 * H, 2 * W)


def init_params(key, in_channels, out_channels, single_upsampling=False):
    cin = in_channels if single_upsampling else in_channels * 2
    k0, k1, k2 = jax.random.split(key, 3)

    def w(k, ci, co):   # synthetic conv weights, (kD,kH,kW,Cin,Cout)
        return jax.random.normal(k, (3, 3, 3, ci, co), jnp.float32) * 0.1

    return dict(
        w0=w(k0, cin, out_channels),
        w1=w(k1, cin, out_channels),
        w2=w(k2, out_channels, out_channels),
        g1=jnp.ones((1, out_channels), jnp.float32),   # BN affine defaults
        b1=jnp.zeros((1, out_channels), jnp.float32),
        g2=jnp.ones((1, out_channels), jnp.float32),
        b2=jnp.zeros((1, out_channels), jnp.float32),
    )


# ---------------------------------------------------------------------------
# Pure-JAX reference (XLA conv + identical BN/upsample math)
# ---------------------------------------------------------------------------
def _up_axis(t, axis, parity):
    size = t.shape[axis]
    if parity == 0:
        shifted = jnp.concatenate(
            [jax.lax.slice_in_dim(t, 0, 1, axis=axis),
             jax.lax.slice_in_dim(t, 0, size - 1, axis=axis)], axis=axis)
    else:
        shifted = jnp.concatenate(
            [jax.lax.slice_in_dim(t, 1, size, axis=axis),
             jax.lax.slice_in_dim(t, size - 1, size, axis=axis)], axis=axis)
    return 0.75 * t + 0.25 * shifted


def ref_up3d(params, x1, x2=None):
    def to_ndhwc(t):
        return jnp.transpose(t, (0, 2, 3, 4, 1))

    x = (jnp.concatenate([to_ndhwc(x2), to_ndhwc(x1)], axis=-1)
         if x2 is not None else to_ndhwc(x1))
    dn = ('NDHWC', 'DHWIO', 'NDHWC')
    conv = lambda t, w: jax.lax.conv_general_dilated(
        t, w, (1, 1, 1), 'SAME', dimension_numbers=dn)

    def bn(t, g, b):
        mean = jnp.mean(t, axis=(0, 1, 2, 3), keepdims=True)
        var = jnp.mean((t - mean) ** 2, axis=(0, 1, 2, 3), keepdims=True)
        return ((t - mean) * jax.lax.rsqrt(var + EPS)
                * g.reshape(1, 1, 1, 1, -1) + b.reshape(1, 1, 1, 1, -1))

    res = conv(x, params["w0"])
    out = jnp.maximum(bn(conv(x, params["w1"]), params["g1"], params["b1"]), 0.0)
    out = bn(conv(out, params["w2"]), params["g2"], params["b2"]) + res
    out = jnp.maximum(out, 0.0)

    def up(t, axis):
        even = _up_axis(t, axis, 0)
        odd = _up_axis(t, axis, 1)
        s = jnp.stack([even, odd], axis=axis + 1)
        shp = list(t.shape)
        shp[axis] *= 2
        return s.reshape(shp)

    for ax in (1, 2, 3):
        out = up(out, ax)
    return jnp.transpose(out, (0, 4, 1, 2, 3))


if __name__ == "__main__":
    key = jax.random.PRNGKey(0)
    kx1, kx2, kp = jax.random.split(key, 3)

    in_channels, out_channels = 4, 8
    N, D, H, W = 2, 8, 8, 8
    x1 = jax.random.normal(kx1, (N, in_channels, D, H, W), jnp.float32)
    x2 = jax.random.normal(kx2, (N, in_channels, D, H, W), jnp.float32)
    params = init_params(kp, in_channels, out_channels)

    y = jax.block_until_ready(up3d_forward(params, x1, x2))
    assert y.shape == (N, out_channels, 2 * D, 2 * H, 2 * W), y.shape

    y_ref = jax.block_until_ready(ref_up3d(params, x1, x2))
    err = float(jnp.max(jnp.abs(y - y_ref)))
    assert err < 1e-3, f"max abs err {err}"

    print("KERNEL_OK")
</pallas_src>

<mosaic_0001>
module attributes {stable_mosaic.version = 11 : i64} {
  func.func @up3d_kernel(%arg0: memref<2x10x10x80xf32, #tpu.memory_space<vmem>>, %arg1: memref<3x3x80x128xf32, #tpu.memory_space<vmem>>, %arg2: memref<3x3x80x64xf32, #tpu.memory_space<vmem>>, %arg3: memref<1x8xf32, #tpu.memory_space<vmem>>, %arg4: memref<1x8xf32, #tpu.memory_space<vmem>>, %arg5: memref<1x8xf32, #tpu.memory_space<vmem>>, %arg6: memref<1x8xf32, #tpu.memory_space<vmem>>, %arg7: memref<4x2x8x8x128xf32, #tpu.memory_space<vmem>>) attributes {dimension_semantics = [], scalar_prefetch = 0 : i64, scratch_operands = 0 : i64, tpu.core_type = #tpu.core_type<tc>} {
    %c0 = arith.constant 0 : index
    %c0_0 = arith.constant 0 : index
    %c0_1 = arith.constant 0 : index
    %c0_2 = arith.constant 0 : index
    %0 = vector.load %arg0[%c0, %c0_0, %c0_1, %c0_2] : memref<2x10x10x80xf32, #tpu.memory_space<vmem>>, vector<2x10x10x80xf32>
    %cst = arith.constant 0.000000e+00 : f32
    %1 = vector.broadcast %cst : f32 to vector<128x128xf32>
    %2 = vector.extract_strided_slice %0 {offsets = [0, 0, 0, 0], sizes = [2, 8, 8, 80], strides = [1, 1, 1, 1]} : vector<2x10x10x80xf32> to vector<2x8x8x80xf32>
    %3 = vector.shape_cast %2 : vector<2x8x8x80xf32> to vector<128x80xf32>
    %c0_3 = arith.constant 0 : index
    %c0_4 = arith.constant 0 : index
    %c0_5 = arith.constant 0 : index
    %c0_6 = arith.constant 0 : index
    %4 = vector.load %arg1[%c0_3, %c0_4, %c0_5, %c0_6] : memref<3x3x80x128xf32, #tpu.memory_space<vmem>>, vector<1x1x80x128xf32>
    %5 = vector.shape_cast %4 : vector<1x1x80x128xf32> to vector<80x128xf32>
    %cst_7 = arith.constant dense<0.000000e+00> : vector<128x128xf32>
    %6 = tpu.matmul %3, %5, %cst_7 {dimension_numbers = #tpu.dot_dimension_numbers<[1], [0], [0], [1], [0, 0, 1, 1], [], []>} : vector<128x80xf32>, vector<80x128xf32>, vector<128x128xf32> -> vector<128x128xf32>
    %7 = arith.addf %1, %6 : vector<128x128xf32>
    %8 = vector.extract_strided_slice %0 {offsets = [0, 0, 1, 0], sizes = [2, 8, 8, 80], strides = [1, 1, 1, 1]} : vector<2x10x10x80xf32> to vector<2x8x8x80xf32>
    %9 = vector.shape_cast %8 : vector<2x8x8x80xf32> to vector<128x80xf32>
    %c0_8 = arith.constant 0 : index
    %c1 = arith.constant 1 : index
    %c0_9 = arith.constant 0 : index
    %c0_10 = arith.constant 0 : index
    %10 = vector.load %arg1[%c0_8, %c1, %c0_9, %c0_10] : memref<3x3x80x128xf32, #tpu.memory_space<vmem>>, vector<1x1x80x128xf32>
    %11 = vector.shape_cast %10 : vector<1x1x80x128xf32> to vector<80x128xf32>
    %cst_11 = arith.constant dense<0.000000e+00> : vector<128x128xf32>
    %12 = tpu.matmul %9, %11, %cst_11 {dimension_numbers = #tpu.dot_dimension_numbers<[1], [0], [0], [1], [0, 0, 1, 1], [], []>} : vector<128x80xf32>, vector<80x128xf32>, vector<128x128xf32> -> vector<128x128xf32>
    %13 = arith.addf %7, %12 : vector<128x128xf32>
    %14 = vector.extract_strided_slice %0 {offsets = [0, 0, 2, 0], sizes = [2, 8, 8, 80], strides = [1, 1, 1, 1]} : vector<2x10x10x80xf32> to vector<2x8x8x80xf32>
    %15 = vector.shape_cast %14 : vector<2x8x8x80xf32> to vector<128x80xf32>
    %c0_12 = arith.constant 0 : index
    %c2 = arith.constant 2 : index
    %c0_13 = arith.constant 0 : index
    %c0_14 = arith.constant 0 : index
    %16 = vector.load %arg1[%c0_12, %c2, %c0_13, %c0_14] : memref<3x3x80x128xf32, #tpu.memory_space<vmem>>, vector<1x1x80x128xf32>
    %17 = vector.shape_cast %16 : vector<1x1x80x128xf32> to vector<80x128xf32>
    %cst_15 = arith.constant dense<0.000000e+00> : vector<128x128xf32>
    %18 = tpu.matmul %15, %17, %cst_15 {dimension_numbers = #tpu.dot_dimension_numbers<[1], [0], [0], [1], [0, 0, 1, 1], [], []>} : vector<128x80xf32>, vector<80x128xf32>, vector<128x128xf32> -> vector<128x128xf32>
    %19 = arith.addf %13, %18 : vector<128x128xf32>
    %20 = vector.extract_strided_slice %0 {offsets = [0, 1, 0, 0], sizes = [2, 8, 8, 80], strides = [1, 1, 1, 1]} : vector<2x10x10x80xf32> to vector<2x8x8x80xf32>
    %21 = vector.shape_cast %20 : vector<2x8x8x80xf32> to vector<128x80xf32>
    %c1_16 = arith.constant 1 : index
    %c0_17 = arith.constant 0 : index
    %c0_18 = arith.constant 0 : index
    %c0_19 = arith.constant 0 : index
    %22 = vector.load %arg1[%c1_16, %c0_17, %c0_18, %c0_19] : memref<3x3x80x128xf32, #tpu.memory_space<vmem>>, vector<1x1x80x128xf32>
    %23 = vector.shape_cast %22 : vector<1x1x80x128xf32> to vector<80x128xf32>
    %cst_20 = arith.constant dense<0.000000e+00> : vector<128x128xf32>
    %24 = tpu.matmul %21, %23, %cst_20 {dimension_numbers = #tpu.dot_dimension_numbers<[1], [0], [0], [1], [0, 0, 1, 1], [], []>} : vector<128x80xf32>, vector<80x128xf32>, vector<128x128xf32> -> vector<128x128xf32>
    %25 = arith.addf %19, %24 : vector<128x128xf32>
    %26 = vector.extract_strided_slice %0 {offsets = [0, 1, 1, 0], sizes = [2, 8, 8, 80], strides = [1, 1, 1, 1]} : vector<2x10x10x80xf32> to vector<2x8x8x80xf32>
    %27 = vector.shape_cast %26 : vector<2x8x8x80xf32> to vector<128x80xf32>
    %c1_21 = arith.constant 1 : index
    %c1_22 = arith.constant 1 : index
    %c0_23 = arith.constant 0 : index
    %c0_24 = arith.constant 0 : index
    %28 = vector.load %arg1[%c1_21, %c1_22, %c0_23, %c0_24] : memref<3x3x80x128xf32, #tpu.memory_space<vmem>>, vector<1x1x80x128xf32>
    %29 = vector.shape_cast %28 : vector<1x1x80x128xf32> to vector<80x128xf32>
    %cst_25 = arith.constant dense<0.000000e+00> : vector<128x128xf32>
    %30 = tpu.matmul %27, %29, %cst_25 {dimension_numbers = #tpu.dot_dimension_numbers<[1], [0], [0], [1], [0, 0, 1, 1], [], []>} : vector<128x80xf32>, vector<80x128xf32>, vector<128x128xf32> -> vector<128x128xf32>
    %31 = arith.addf %25, %30 : vector<128x128xf32>
    %32 = vector.extract_strided_slice %0 {offsets = [0, 1, 2, 0], sizes = [2, 8, 8, 80], strides = [1, 1, 1, 1]} : vector<2x10x10x80xf32> to vector<2x8x8x80xf32>
    %33 = vector.shape_cast %32 : vector<2x8x8x80xf32> to vector<128x80xf32>
    %c1_26 = arith.constant 1 : index
    %c2_27 = arith.constant 2 : index
    %c0_28 = arith.constant 0 : index
    %c0_29 = arith.constant 0 : index
    %34 = vector.load %arg1[%c1_26, %c2_27, %c0_28, %c0_29] : memref<3x3x80x128xf32, #tpu.memory_space<vmem>>, vector<1x1x80x128xf32>
    %35 = vector.shape_cast %34 : vector<1x1x80x128xf32> to vector<80x128xf32>
    %cst_30 = arith.constant dense<0.000000e+00> : vector<128x128xf32>
    %36 = tpu.matmul %33, %35, %cst_30 {dimension_numbers = #tpu.dot_dimension_numbers<[1], [0], [0], [1], [0, 0, 1, 1], [], []>} : vector<128x80xf32>, vector<80x128xf32>, vector<128x128xf32> -> vector<128x128xf32>
    %37 = arith.addf %31, %36 : vector<128x128xf32>
    %38 = vector.extract_strided_slice %0 {offsets = [0, 2, 0, 0], sizes = [2, 8, 8, 80], strides = [1, 1, 1, 1]} : vector<2x10x10x80xf32> to vector<2x8x8x80xf32>
    %39 = vector.shape_cast %38 : vector<2x8x8x80xf32> to vector<128x80xf32>
    %c2_31 = arith.constant 2 : index
    %c0_32 = arith.constant 0 : index
    %c0_33 = arith.constant 0 : index
    %c0_34 = arith.constant 0 : index
    %40 = vector.load %arg1[%c2_31, %c0_32, %c0_33, %c0_34] : memref<3x3x80x128xf32, #tpu.memory_space<vmem>>, vector<1x1x80x128xf32>
    %41 = vector.shape_cast %40 : vector<1x1x80x128xf32> to vector<80x128xf32>
    %cst_35 = arith.constant dense<0.000000e+00> : vector<128x128xf32>
    %42 = tpu.matmul %39, %41, %cst_35 {dimension_numbers = #tpu.dot_dimension_numbers<[1], [0], [0], [1], [0, 0, 1, 1], [], []>} : vector<128x80xf32>, vector<80x128xf32>, vector<128x128xf32> -> vector<128x128xf32>
    %43 = arith.addf %37, %42 : vector<128x128xf32>
    %44 = vector.extract_strided_slice %0 {offsets = [0, 2, 1, 0], sizes = [2, 8, 8, 80], strides = [1, 1, 1, 1]} : vector<2x10x10x80xf32> to vector<2x8x8x80xf32>
    %45 = vector.shape_cast %44 : vector<2x8x8x80xf32> to vector<128x80xf32>
    %c2_36 = arith.constant 2 : index
    %c1_37 = arith.constant 1 : index
    %c0_38 = arith.constant 0 : index
    %c0_39 = arith.constant 0 : index
    %46 = vector.load %arg1[%c2_36, %c1_37, %c0_38, %c0_39] : memref<3x3x80x128xf32, #tpu.memory_space<vmem>>, vector<1x1x80x128xf32>
    %47 = vector.shape_cast %46 : vector<1x1x80x128xf32> to vector<80x128xf32>
    %cst_40 = arith.constant dense<0.000000e+00> : vector<128x128xf32>
    %48 = tpu.matmul %45, %47, %cst_40 {dimension_numbers = #tpu.dot_dimension_numbers<[1], [0], [0], [1], [0, 0, 1, 1], [], []>} : vector<128x80xf32>, vector<80x128xf32>, vector<128x128xf32> -> vector<128x128xf32>
    %49 = arith.addf %43, %48 : vector<128x128xf32>
    %50 = vector.extract_strided_slice %0 {offsets = [0, 2, 2, 0], sizes = [2, 8, 8, 80], strides = [1, 1, 1, 1]} : vector<2x10x10x80xf32> to vector<2x8x8x80xf32>
    %51 = vector.shape_cast %50 : vector<2x8x8x80xf32> to vector<128x80xf32>
    %c2_41 = arith.constant 2 : index
    %c2_42 = arith.constant 2 : index
    %c0_43 = arith.constant 0 : index
    %c0_44 = arith.constant 0 : index
    %52 = vector.load %arg1[%c2_41, %c2_42, %c0_43, %c0_44] : memref<3x3x80x128xf32, #tpu.memory_space<vmem>>, vector<1x1x80x128xf32>
    %53 = vector.shape_cast %52 : vector<1x1x80x128xf32> to vector<80x128xf32>
    %cst_45 = arith.constant dense<0.000000e+00> : vector<128x128xf32>
    %54 = tpu.matmul %51, %53, %cst_45 {dimension_numbers = #tpu.dot_dimension_numbers<[1], [0], [0], [1], [0, 0, 1, 1], [], []>} : vector<128x80xf32>, vector<80x128xf32>, vector<128x128xf32> -> vector<128x128xf32>
    %55 = arith.addf %49, %54 : vector<128x128xf32>
    %56 = vector.extract_strided_slice %55 {offsets = [0, 0], sizes = [128, 64], strides = [1, 1]} : vector<128x128xf32> to vector<128x64xf32>
    %57 = vector.extract_strided_slice %55 {offsets = [0, 64], sizes = [128, 64], strides = [1, 1]} : vector<128x128xf32> to vector<128x64xf32>
    %cst_46 = arith.constant dense<0.000000e+00> : vector<64xf32>
    %58 = vector.multi_reduction <add>, %56, %cst_46 [0] : vector<128x64xf32> to vector<64xf32>
    %59 = vector.shape_cast %58 : vector<64xf32> to vector<1x64xf32>
    %60 = arith.mulf %56, %56 : vector<128x64xf32>
    %cst_47 = arith.constant dense<0.000000e+00> : vector<64xf32>
    %61 = vector.multi_reduction <add>, %60, %cst_47 [0] : vector<128x64xf32> to vector<64xf32>
    %62 = vector.shape_cast %61 : vector<64xf32> to vector<1x64xf32>
    %cst_48 = arith.constant 0.000000e+00 : f32
    %63 = vector.broadcast %cst_48 : f32 to vector<1x8xf32>
    %cst_49 = arith.constant 0.000000e+00 : f32
    %64 = vector.broadcast %cst_49 : f32 to vector<1x8xf32>
    %65 = vector.extract_strided_slice %59 {offsets = [0, 0], sizes = [1, 8], strides = [1, 1]} : vector<1x64xf32> to vector<1x8xf32>
    %66 = arith.addf %63, %65 : vector<1x8xf32>
    %67 = vector.extract_strided_slice %62 {offsets = [0, 0], sizes = [1, 8], strides = [1, 1]} : vector<1x64xf32> to vector<1x8xf32>
    %68 = arith.addf %64, %67 : vector<1x8xf32>
    %69 = vector.extract_strided_slice %59 {offsets = [0, 8], sizes = [1, 8], strides = [1, 1]} : vector<1x64xf32> to vector<1x8xf32>
    %70 = arith.addf %66, %69 : vector<1x8xf32>
    %71 = vector.extract_strided_slice %62 {offsets = [0, 8], sizes = [1, 8], strides = [1, 1]} : vector<1x64xf32> to vector<1x8xf32>
    %72 = arith.addf %68, %71 : vector<1x8xf32>
    %73 = vector.extract_strided_slice %59 {offsets = [0, 16], sizes = [1, 8], strides = [1, 1]} : vector<1x64xf32> to vector<1x8xf32>
    %74 = arith.addf %70, %73 : vector<1x8xf32>
    %75 = vector.extract_strided_slice %62 {offsets = [0, 16], sizes = [1, 8], strides = [1, 1]} : vector<1x64xf32> to vector<1x8xf32>
    %76 = arith.addf %72, %75 : vector<1x8xf32>
    %77 = vector.extract_strided_slice %59 {offsets = [0, 24], sizes = [1, 8], strides = [1, 1]} : vector<1x64xf32> to vector<1x8xf32>
    %78 = arith.addf %74, %77 : vector<1x8xf32>
    %79 = vector.extract_strided_slice %62 {offsets = [0, 24], sizes = [1, 8], strides = [1, 1]} : vector<1x64xf32> to vector<1x8xf32>
    %80 = arith.addf %76, %79 : vector<1x8xf32>
    %81 = vector.extract_strided_slice %59 {offsets = [0, 32], sizes = [1, 8], strides = [1, 1]} : vector<1x64xf32> to vector<1x8xf32>
    %82 = arith.addf %78, %81 : vector<1x8xf32>
    %83 = vector.extract_strided_slice %62 {offsets = [0, 32], sizes = [1, 8], strides = [1, 1]} : vector<1x64xf32> to vector<1x8xf32>
    %84 = arith.addf %80, %83 : vector<1x8xf32>
    %85 = vector.extract_strided_slice %59 {offsets = [0, 40], sizes = [1, 8], strides = [1, 1]} : vector<1x64xf32> to vector<1x8xf32>
    %86 = arith.addf %82, %85 : vector<1x8xf32>
    %87 = vector.extract_strided_slice %62 {offsets = [0, 40], sizes = [1, 8], strides = [1, 1]} : vector<1x64xf32> to vector<1x8xf32>
    %88 = arith.addf %84, %87 : vector<1x8xf32>
    %89 = vector.extract_strided_slice %59 {offsets = [0, 48], sizes = [1, 8], strides = [1, 1]} : vector<1x64xf32> to vector<1x8xf32>
    %90 = arith.addf %86, %89 : vector<1x8xf32>
    %91 = vector.extract_strided_slice %62 {offsets = [0, 48], sizes = [1, 8], strides = [1, 1]} : vector<1x64xf32> to vector<1x8xf32>
    %92 = arith.addf %88, %91 : vector<1x8xf32>
    %93 = vector.extract_strided_slice %59 {offsets = [0, 56], sizes = [1, 8], strides = [1, 1]} : vector<1x64xf32> to vector<1x8xf32>
    %94 = arith.addf %90, %93 : vector<1x8xf32>
    %95 = vector.extract_strided_slice %62 {offsets = [0, 56], sizes = [1, 8], strides = [1, 1]} : vector<1x64xf32> to vector<1x8xf32>
    %96 = arith.addf %92, %95 : vector<1x8xf32>
    %cst_50 = arith.constant 9.765625E-4 : f32
    %97 = vector.broadcast %cst_50 : f32 to vector<1x8xf32>
    %98 = arith.mulf %94, %97 : vector<1x8xf32>
    %cst_51 = arith.constant 9.765625E-4 : f32
    %99 = vector.broadcast %cst_51 : f32 to vector<1x8xf32>
    %100 = arith.mulf %96, %99 : vector<1x8xf32>
    %101 = arith.mulf %98, %98 : vector<1x8xf32>
    %102 = arith.subf %100, %101 : vector<1x8xf32>
    %cst_52 = arith.constant 0.000000e+00 : f32
    %103 = vector.broadcast %cst_52 : f32 to vector<1x8xf32>
    %104 = arith.maximumf %102, %103 : vector<1x8xf32>
    %c0_53 = arith.constant 0 : index
    %c0_54 = arith.constant 0 : index
    %105 = vector.load %arg3[%c0_53, %c0_54] : memref<1x8xf32, #tpu.memory_space<vmem>>, vector<1x8xf32>
    %cst_55 = arith.constant 9.99999974E-6 : f32
    %106 = vector.broadcast %cst_55 : f32 to vector<1x8xf32>
    %107 = arith.addf %104, %106 : vector<1x8xf32>
    %108 = math.rsqrt %107 : vector<1x8xf32>
    %109 = arith.mulf %105, %108 : vector<1x8xf32>
    %c0_56 = arith.constant 0 : index
    %c0_57 = arith.constant 0 : index
    %110 = vector.load %arg4[%c0_56, %c0_57] : memref<1x8xf32, #tpu.memory_space<vmem>>, vector<1x8xf32>
    %111 = arith.mulf %98, %109 : vector<1x8xf32>
    %112 = arith.subf %110, %111 : vector<1x8xf32>
    %113 = tpu.concatenate %109, %109, %109, %109, %109, %109, %109, %109 in 1 : vector<1x8xf32>, vector<1x8xf32>, vector<1x8xf32>, vector<1x8xf32>, vector<1x8xf32>, vector<1x8xf32>, vector<1x8xf32>, vector<1x8xf32> -> vector<1x64xf32>
    %114 = tpu.concatenate %112, %112, %112, %112, %112, %112, %112, %112 in 1 : vector<1x8xf32>, vector<1x8xf32>, vector<1x8xf32>, vector<1x8xf32>, vector<1x8xf32>, vector<1x8xf32>, vector<1x8xf32>, vector<1x8xf32> -> vector<1x64xf32>
    %115 = vector.broadcast %113 : vector<1x64xf32> to vector<128x64xf32>
    %116 = arith.mulf %56, %115 : vector<128x64xf32>
    %117 = vector.broadcast %114 : vector<1x64xf32> to vector<128x64xf32>
    %118 = arith.addf %116, %117 : vector<128x64xf32>
    %cst_58 = arith.constant 0.000000e+00 : f32
    %119 = vector.broadcast %cst_58 : f32 to vector<128x64xf32>
    %120 = arith.maximumf %118, %119 : vector<128x64xf32>
    %121 = vector.shape_cast %120 : vector<128x64xf32> to vector<2x8x8x64xf32>
    %cst_59 = arith.constant 0.000000e+00 : f32
    %122 = vector.broadcast %cst_59 : f32 to vector<2x8x8x8xf32>
    %123 = tpu.concatenate %122, %121, %122 in 3 : vector<2x8x8x8xf32>, vector<2x8x8x64xf32>, vector<2x8x8x8xf32> -> vector<2x8x8x80xf32>
    %cst_60 = arith.constant 0.000000e+00 : f32
    %124 = vector.broadcast %cst_60 : f32 to vector<2x8x1x80xf32>
    %125 = tpu.concatenate %124, %123, %124 in 2 : vector<2x8x1x80xf32>, vector<2x8x8x80xf32>, vector<2x8x1x80xf32> -> vector<2x8x10x80xf32>
    %cst_61 = arith.constant 0.000000e+00 : f32
    %126 = vector.broadcast %cst_61 : f32 to vector<2x1x10x80xf32>
    %127 = tpu.concatenate %126, %125, %126 in 1 : vector<2x1x10x80xf32>, vector<2x8x10x80xf32>, vector<2x1x10x80xf32> -> vector<2x10x10x80xf32>
    %cst_62 = arith.constant 0.000000e+00 : f32
    %128 = vector.broadcast %cst_62 : f32 to vector<128x64xf32>
    %129 = vector.extract_strided_slice %127 {offsets = [0, 0, 0, 0], sizes = [2, 8, 8, 80], strides = [1, 1, 1, 1]} : vector<2x10x10x80xf32> to vector<2x8x8x80xf32>
    %130 = vector.shape_cast %129 : vector<2x8x8x80xf32> to vector<128x80xf32>
    %c0_63 = arith.constant 0 : index
    %c0_64 = arith.constant 0 : index
    %c0_65 = arith.constant 0 : index
    %c0_66 = arith.constant 0 : index
    %131 = vector.load %arg2[%c0_63, %c0_64, %c0_65, %c0_66] : memref<3x3x80x64xf32, #tpu.memory_space<vmem>>, vector<1x1x80x64xf32>
    %132 = vector.shape_cast %131 : vector<1x1x80x64xf32> to vector<80x64xf32>
    %cst_67 = arith.constant dense<0.000000e+00> : vector<128x64xf32>
    %133 = tpu.matmul %130, %132, %cst_67 {dimension_numbers = #tpu.dot_dimension_numbers<[1], [0], [0], [1], [0, 0, 1, 1], [], []>} : vector<128x80xf32>, vector<80x64xf32>, vector<128x64xf32> -> vector<128x64xf32>
    %134 = arith.addf %128, %133 : vector<128x64xf32>
    %135 = vector.extract_strided_slice %127 {offsets = [0, 0, 1, 0], sizes = [2, 8, 8, 80], strides = [1, 1, 1, 1]} : vector<2x10x10x80xf32> to vector<2x8x8x80xf32>
    %136 = vector.shape_cast %135 : vector<2x8x8x80xf32> to vector<128x80xf32>
    %c0_68 = arith.constant 0 : index
    %c1_69 = arith.constant 1 : index
    %c0_70 = arith.constant 0 : index
    %c0_71 = arith.constant 0 : index
    %137 = vector.load %arg2[%c0_68, %c1_69, %c0_70, %c0_71] : memref<3x3x80x64xf32, #tpu.memory_space<vmem>>, vector<1x1x80x64xf32>
    %138 = vector.shape_cast %137 : vector<1x1x80x64xf32> to vector<80x64xf32>
    %cst_72 = arith.constant dense<0.000000e+00> : vector<128x64xf32>
    %139 = tpu.matmul %136, %138, %cst_72 {dimension_numbers = #tpu.dot_dimension_numbers<[1], [0], [0], [1], [0, 0, 1, 1], [], []>} : vector<128x80xf32>, vector<80x64xf32>, vector<128x64xf32> -> vector<128x64xf32>
    %140 = arith.addf %134, %139 : vector<128x64xf32>
    %141 = vector.extract_strided_slice %127 {offsets = [0, 0, 2, 0], sizes = [2, 8, 8, 80], strides = [1, 1, 1, 1]} : vector<2x10x10x80xf32> to vector<2x8x8x80xf32>
    %142 = vector.shape_cast %141 : vector<2x8x8x80xf32> to vector<128x80xf32>
    %c0_73 = arith.constant 0 : index
    %c2_74 = arith.constant 2 : index
    %c0_75 = arith.constant 0 : index
    %c0_76 = arith.constant 0 : index
    %143 = vector.load %arg2[%c0_73, %c2_74, %c0_75, %c0_76] : memref<3x3x80x64xf32, #tpu.memory_space<vmem>>, vector<1x1x80x64xf32>
    %144 = vector.shape_cast %143 : vector<1x1x80x64xf32> to vector<80x64xf32>
    %cst_77 = arith.constant dense<0.000000e+00> : vector<128x64xf32>
    %145 = tpu.matmul %142, %144, %cst_77 {dimension_numbers = #tpu.dot_dimension_numbers<[1], [0], [0], [1], [0, 0, 1, 1], [], []>} : vector<128x80xf32>, vector<80x64xf32>, vector<128x64xf32> -> vector<128x64xf32>
    %146 = arith.addf %140, %145 : vector<128x64xf32>
    %147 = vector.extract_strided_slice %127 {offsets = [0, 1, 0, 0], sizes = [2, 8, 8, 80], strides = [1, 1, 1, 1]} : vector<2x10x10x80xf32> to vector<2x8x8x80xf32>
    %148 = vector.shape_cast %147 : vector<2x8x8x80xf32> to vector<128x80xf32>
    %c1_78 = arith.constant 1 : index
    %c0_79 = arith.constant 0 : index
    %c0_80 = arith.constant 0 : index
    %c0_81 = arith.constant 0 : index
    %149 = vector.load %arg2[%c1_78, %c0_79, %c0_80, %c0_81] : memref<3x3x80x64xf32, #tpu.memory_space<vmem>>, vector<1x1x80x64xf32>
    %150 = vector.shape_cast %149 : vector<1x1x80x64xf32> to vector<80x64xf32>
    %cst_82 = arith.constant dense<0.000000e+00> : vector<128x64xf32>
    %151 = tpu.matmul %148, %150, %cst_82 {dimension_numbers = #tpu.dot_dimension_numbers<[1], [0], [0], [1], [0, 0, 1, 1], [], []>} : vector<128x80xf32>, vector<80x64xf32>, vector<128x64xf32> -> vector<128x64xf32>
    %152 = arith.addf %146, %151 : vector<128x64xf32>
    %153 = vector.extract_strided_slice %127 {offsets = [0, 1, 1, 0], sizes = [2, 8, 8, 80], strides = [1, 1, 1, 1]} : vector<2x10x10x80xf32> to vector<2x8x8x80xf32>
    %154 = vector.shape_cast %153 : vector<2x8x8x80xf32> to vector<128x80xf32>
    %c1_83 = arith.constant 1 : index
    %c1_84 = arith.constant 1 : index
    %c0_85 = arith.constant 0 : index
    %c0_86 = arith.constant 0 : index
    %155 = vector.load %arg2[%c1_83, %c1_84, %c0_85, %c0_86] : memref<3x3x80x64xf32, #tpu.memory_space<vmem>>, vector<1x1x80x64xf32>
    %156 = vector.shape_cast %155 : vector<1x1x80x64xf32> to vector<80x64xf32>
    %cst_87 = arith.constant dense<0.000000e+00> : vector<128x64xf32>
    %157 = tpu.matmul %154, %156, %cst_87 {dimension_numbers = #tpu.dot_dimension_numbers<[1], [0], [0], [1], [0, 0, 1, 1], [], []>} : vector<128x80xf32>, vector<80x64xf32>, vector<128x64xf32> -> vector<128x64xf32>
    %158 = arith.addf %152, %157 : vector<128x64xf32>
    %159 = vector.extract_strided_slice %127 {offsets = [0, 1, 2, 0], sizes = [2, 8, 8, 80], strides = [1, 1, 1, 1]} : vector<2x10x10x80xf32> to vector<2x8x8x80xf32>
    %160 = vector.shape_cast %159 : vector<2x8x8x80xf32> to vector<128x80xf32>
    %c1_88 = arith.constant 1 : index
    %c2_89 = arith.constant 2 : index
    %c0_90 = arith.constant 0 : index
    %c0_91 = arith.constant 0 : index
    %161 = vector.load %arg2[%c1_88, %c2_89, %c0_90, %c0_91] : memref<3x3x80x64xf32, #tpu.memory_space<vmem>>, vector<1x1x80x64xf32>
    %162 = vector.shape_cast %161 : vector<1x1x80x64xf32> to vector<80x64xf32>
    %cst_92 = arith.constant dense<0.000000e+00> : vector<128x64xf32>
    %163 = tpu.matmul %160, %162, %cst_92 {dimension_numbers = #tpu.dot_dimension_numbers<[1], [0], [0], [1], [0, 0, 1, 1], [], []>} : vector<128x80xf32>, vector<80x64xf32>, vector<128x64xf32> -> vector<128x64xf32>
    %164 = arith.addf %158, %163 : vector<128x64xf32>
    %165 = vector.extract_strided_slice %127 {offsets = [0, 2, 0, 0], sizes = [2, 8, 8, 80], strides = [1, 1, 1, 1]} : vector<2x10x10x80xf32> to vector<2x8x8x80xf32>
    %166 = vector.shape_cast %165 : vector<2x8x8x80xf32> to vector<128x80xf32>
    %c2_93 = arith.constant 2 : index
    %c0_94 = arith.constant 0 : index
    %c0_95 = arith.constant 0 : index
    %c0_96 = arith.constant 0 : index
    %167 = vector.load %arg2[%c2_93, %c0_94, %c0_95, %c0_96] : memref<3x3x80x64xf32, #tpu.memory_space<vmem>>, vector<1x1x80x64xf32>
    %168 = vector.shape_cast %167 : vector<1x1x80x64xf32> to vector<80x64xf32>
    %cst_97 = arith.constant dense<0.000000e+00> : vector<128x64xf32>
    %169 = tpu.matmul %166, %168, %cst_97 {dimension_numbers = #tpu.dot_dimension_numbers<[1], [0], [0], [1], [0, 0, 1, 1], [], []>} : vector<128x80xf32>, vector<80x64xf32>, vector<128x64xf32> -> vector<128x64xf32>
    %170 = arith.addf %164, %169 : vector<128x64xf32>
    %171 = vector.extract_strided_slice %127 {offsets = [0, 2, 1, 0], sizes = [2, 8, 8, 80], strides = [1, 1, 1, 1]} : vector<2x10x10x80xf32> to vector<2x8x8x80xf32>
    %172 = vector.shape_cast %171 : vector<2x8x8x80xf32> to vector<128x80xf32>
    %c2_98 = arith.constant 2 : index
    %c1_99 = arith.constant 1 : index
    %c0_100 = arith.constant 0 : index
    %c0_101 = arith.constant 0 : index
    %173 = vector.load %arg2[%c2_98, %c1_99, %c0_100, %c0_101] : memref<3x3x80x64xf32, #tpu.memory_space<vmem>>, vector<1x1x80x64xf32>
    %174 = vector.shape_cast %173 : vector<1x1x80x64xf32> to vector<80x64xf32>
    %cst_102 = arith.constant dense<0.000000e+00> : vector<128x64xf32>
    %175 = tpu.matmul %172, %174, %cst_102 {dimension_numbers = #tpu.dot_dimension_numbers<[1], [0], [0], [1], [0, 0, 1, 1], [], []>} : vector<128x80xf32>, vector<80x64xf32>, vector<128x64xf32> -> vector<128x64xf32>
    %176 = arith.addf %170, %175 : vector<128x64xf32>
    %177 = vector.extract_strided_slice %127 {offsets = [0, 2, 2, 0], sizes = [2, 8, 8, 80], strides = [1, 1, 1, 1]} : vector<2x10x10x80xf32> to vector<2x8x8x80xf32>
    %178 = vector.shape_cast %177 : vector<2x8x8x80xf32> to vector<128x80xf32>
    %c2_103 = arith.constant 2 : index
    %c2_104 = arith.constant 2 : index
    %c0_105 = arith.constant 0 : index
    %c0_106 = arith.constant 0 : index
    %179 = vector.load %arg2[%c2_103, %c2_104, %c0_105, %c0_106] : memref<3x3x80x64xf32, #tpu.memory_space<vmem>>, vector<1x1x80x64xf32>
    %180 = vector.shape_cast %179 : vector<1x1x80x64xf32> to vector<80x64xf32>
    %cst_107 = arith.constant dense<0.000000e+00> : vector<128x64xf32>
    %181 = tpu.matmul %178, %180, %cst_107 {dimension_numbers = #tpu.dot_dimension_numbers<[1], [0], [0], [1], [0, 0, 1, 1], [], []>} : vector<128x80xf32>, vector<80x64xf32>, vector<128x64xf32> -> vector<128x64xf32>
    %182 = arith.addf %176, %181 : vector<128x64xf32>
    %cst_108 = arith.constant dense<0.000000e+00> : vector<64xf32>
    %183 = vector.multi_reduction <add>, %182, %cst_108 [0] : vector<128x64xf32> to vector<64xf32>
    %184 = vector.shape_cast %183 : vector<64xf32> to vector<1x64xf32>
    %185 = arith.mulf %182, %182 : vector<128x64xf32>
    %cst_109 = arith.constant dense<0.000000e+00> : vector<64xf32>
    %186 = vector.multi_reduction <add>, %185, %cst_109 [0] : vector<128x64xf32> to vector<64xf32>
    %187 = vector.shape_cast %186 : vector<64xf32> to vector<1x64xf32>
    %cst_110 = arith.constant 0.000000e+00 : f32
    %188 = vector.broadcast %cst_110 : f32 to vector<1x8xf32>
    %cst_111 = arith.constant 0.000000e+00 : f32
    %189 = vector.broadcast %cst_111 : f32 to vector<1x8xf32>
    %190 = vector.extract_strided_slice %184 {offsets = [0, 0], sizes = [1, 8], strides = [1, 1]} : vector<1x64xf32> to vector<1x8xf32>
    %191 = arith.addf %188, %190 : vector<1x8xf32>
    %192 = vector.extract_strided_slice %187 {offsets = [0, 0], sizes = [1, 8], strides = [1, 1]} : vector<1x64xf32> to vector<1x8xf32>
    %193 = arith.addf %189, %192 : vector<1x8xf32>
    %194 = vector.extract_strided_slice %184 {offsets = [0, 8], sizes = [1, 8], strides = [1, 1]} : vector<1x64xf32> to vector<1x8xf32>
    %195 = arith.addf %191, %194 : vector<1x8xf32>
    %196 = vector.extract_strided_slice %187 {offsets = [0, 8], sizes = [1, 8], strides = [1, 1]} : vector<1x64xf32> to vector<1x8xf32>
    %197 = arith.addf %193, %196 : vector<1x8xf32>
    %198 = vector.extract_strided_slice %184 {offsets = [0, 16], sizes = [1, 8], strides = [1, 1]} : vector<1x64xf32> to vector<1x8xf32>
    %199 = arith.addf %195, %198 : vector<1x8xf32>
    %200 = vector.extract_strided_slice %187 {offsets = [0, 16], sizes = [1, 8], strides = [1, 1]} : vector<1x64xf32> to vector<1x8xf32>
    %201 = arith.addf %197, %200 : vector<1x8xf32>
    %202 = vector.extract_strided_slice %184 {offsets = [0, 24], sizes = [1, 8], strides = [1, 1]} : vector<1x64xf32> to vector<1x8xf32>
    %203 = arith.addf %199, %202 : vector<1x8xf32>
    %204 = vector.extract_strided_slice %187 {offsets = [0, 24], sizes = [1, 8], strides = [1, 1]} : vector<1x64xf32> to vector<1x8xf32>
    %205 = arith.addf %201, %204 : vector<1x8xf32>
    %206 = vector.extract_strided_slice %184 {offsets = [0, 32], sizes = [1, 8], strides = [1, 1]} : vector<1x64xf32> to vector<1x8xf32>
    %207 = arith.addf %203, %206 : vector<1x8xf32>
    %208 = vector.extract_strided_slice %187 {offsets = [0, 32], sizes = [1, 8], strides = [1, 1]} : vector<1x64xf32> to vector<1x8xf32>
    %209 = arith.addf %205, %208 : vector<1x8xf32>
    %210 = vector.extract_strided_slice %184 {offsets = [0, 40], sizes = [1, 8], strides = [1, 1]} : vector<1x64xf32> to vector<1x8xf32>
    %211 = arith.addf %207, %210 : vector<1x8xf32>
    %212 = vector.extract_strided_slice %187 {offsets = [0, 40], sizes = [1, 8], strides = [1, 1]} : vector<1x64xf32> to vector<1x8xf32>
    %213 = arith.addf %209, %212 : vector<1x8xf32>
    %214 = vector.extract_strided_slice %184 {offsets = [0, 48], sizes = [1, 8], strides = [1, 1]} : vector<1x64xf32> to vector<1x8xf32>
    %215 = arith.addf %211, %214 : vector<1x8xf32>
    %216 = vector.extract_strided_slice %187 {offsets = [0, 48], sizes = [1, 8], strides = [1, 1]} : vector<1x64xf32> to vector<1x8xf32>
    %217 = arith.addf %213, %216 : vector<1x8xf32>
    %218 = vector.extract_strided_slice %184 {offsets = [0, 56], sizes = [1, 8], strides = [1, 1]} : vector<1x64xf32> to vector<1x8xf32>
    %219 = arith.addf %215, %218 : vector<1x8xf32>
    %220 = vector.extract_strided_slice %187 {offsets = [0, 56], sizes = [1, 8], strides = [1, 1]} : vector<1x64xf32> to vector<1x8xf32>
    %221 = arith.addf %217, %220 : vector<1x8xf32>
    %cst_112 = arith.constant 9.765625E-4 : f32
    %222 = vector.broadcast %cst_112 : f32 to vector<1x8xf32>
    %223 = arith.mulf %219, %222 : vector<1x8xf32>
    %cst_113 = arith.constant 9.765625E-4 : f32
    %224 = vector.broadcast %cst_113 : f32 to vector<1x8xf32>
    %225 = arith.mulf %221, %224 : vector<1x8xf32>
    %226 = arith.mulf %223, %223 : vector<1x8xf32>
    %227 = arith.subf %225, %226 : vector<1x8xf32>
    %cst_114 = arith.constant 0.000000e+00 : f32
    %228 = vector.broadcast %cst_114 : f32 to vector<1x8xf32>
    %229 = arith.maximumf %227, %228 : vector<1x8xf32>
    %c0_115 = arith.constant 0 : index
    %c0_116 = arith.constant 0 : index
    %230 = vector.load %arg5[%c0_115, %c0_116] : memref<1x8xf32, #tpu.memory_space<vmem>>, vector<1x8xf32>
    %cst_117 = arith.constant 9.99999974E-6 : f32
    %231 = vector.broadcast %cst_117 : f32 to vector<1x8xf32>
    %232 = arith.addf %229, %231 : vector<1x8xf32>
    %233 = math.rsqrt %232 : vector<1x8xf32>
    %234 = arith.mulf %230, %233 : vector<1x8xf32>
    %c0_118 = arith.constant 0 : index
    %c0_119 = arith.constant 0 : index
    %235 = vector.load %arg6[%c0_118, %c0_119] : memref<1x8xf32, #tpu.memory_space<vmem>>, vector<1x8xf32>
    %236 = arith.mulf %223, %234 : vector<1x8xf32>
    %237 = arith.subf %235, %236 : vector<1x8xf32>
    %238 = tpu.concatenate %234, %234, %234, %234, %234, %234, %234, %234 in 1 : vector<1x8xf32>, vector<1x8xf32>, vector<1x8xf32>, vector<1x8xf32>, vector<1x8xf32>, vector<1x8xf32>, vector<1x8xf32>, vector<1x8xf32> -> vector<1x64xf32>
    %239 = tpu.concatenate %237, %237, %237, %237, %237, %237, %237, %237 in 1 : vector<1x8xf32>, vector<1x8xf32>, vector<1x8xf32>, vector<1x8xf32>, vector<1x8xf32>, vector<1x8xf32>, vector<1x8xf32>, vector<1x8xf32> -> vector<1x64xf32>
    %240 = vector.broadcast %238 : vector<1x64xf32> to vector<128x64xf32>
    %241 = arith.mulf %182, %240 : vector<128x64xf32>
    %242 = vector.broadcast %239 : vector<1x64xf32> to vector<128x64xf32>
    %243 = arith.addf %241, %242 : vector<128x64xf32>
    %244 = arith.addf %243, %57 : vector<128x64xf32>
    %cst_120 = arith.constant 0.000000e+00 : f32
    %245 = vector.broadcast %cst_120 : f32 to vector<128x64xf32>
    %246 = arith.maximumf %244, %245 : vector<128x64xf32>
    %247 = vector.shape_cast %246 : vector<128x64xf32> to vector<2x8x8x64xf32>
    %cst_121 = arith.constant 7.500000e-01 : f32
    %248 = vector.broadcast %cst_121 : f32 to vector<2x8x8x64xf32>
    %249 = arith.mulf %248, %247 : vector<2x8x8x64xf32>
    %250 = vector.extract_strided_slice %247 {offsets = [0, 0, 0, 0], sizes = [2, 1, 8, 64], strides = [1, 1, 1, 1]} : vector<2x8x8x64xf32> to vector<2x1x8x64xf32>
    %251 = vector.extract_strided_slice %247 {offsets = [0, 0, 0, 0], sizes = [2, 7, 8, 64], strides = [1, 1, 1, 1]} : vector<2x8x8x64xf32> to vector<2x7x8x64xf32>
    %252 = tpu.concatenate %250, %251 in 1 : vector<2x1x8x64xf32>, vector<2x7x8x64xf32> -> vector<2x8x8x64xf32>
    %cst_122 = arith.constant 2.500000e-01 : f32
    %253 = vector.broadcast %cst_122 : f32 to vector<2x8x8x64xf32>
    %254 = arith.mulf %253, %252 : vector<2x8x8x64xf32>
    %255 = arith.addf %249, %254 : vector<2x8x8x64xf32>
    %cst_123 = arith.constant 7.500000e-01 : f32
    %256 = vector.broadcast %cst_123 : f32 to vector<2x8x8x64xf32>
    %257 = arith.mulf %256, %255 : vector<2x8x8x64xf32>
    %258 = vector.extract_strided_slice %255 {offsets = [0, 0, 0, 0], sizes = [2, 8, 1, 64], strides = [1, 1, 1, 1]} : vector<2x8x8x64xf32> to vector<2x8x1x64xf32>
    %259 = vector.extract_strided_slice %255 {offsets = [0, 0, 0, 0], sizes = [2, 8, 7, 64], strides = [1, 1, 1, 1]} : vector<2x8x8x64xf32> to vector<2x8x7x64xf32>
    %260 = tpu.concatenate %258, %259 in 2 : vector<2x8x1x64xf32>, vector<2x8x7x64xf32> -> vector<2x8x8x64xf32>
    %cst_124 = arith.constant 2.500000e-01 : f32
    %261 = vector.broadcast %cst_124 : f32 to vector<2x8x8x64xf32>
    %262 = arith.mulf %261, %260 : vector<2x8x8x64xf32>
    %263 = arith.addf %257, %262 : vector<2x8x8x64xf32>
    %cst_125 = arith.constant 7.500000e-01 : f32
    %264 = vector.broadcast %cst_125 : f32 to vector<2x8x8x64xf32>
    %265 = arith.mulf %264, %263 : vector<2x8x8x64xf32>
    %266 = vector.extract_strided_slice %263 {offsets = [0, 0, 0, 0], sizes = [2, 8, 8, 8], strides = [1, 1, 1, 1]} : vector<2x8x8x64xf32> to vector<2x8x8x8xf32>
    %267 = vector.extract_strided_slice %263 {offsets = [0, 0, 0, 0], sizes = [2, 8, 8, 56], strides = [1, 1, 1, 1]} : vector<2x8x8x64xf32> to vector<2x8x8x56xf32>
    %268 = tpu.concatenate %266, %267 in 3 : vector<2x8x8x8xf32>, vector<2x8x8x56xf32> -> vector<2x8x8x64xf32>
    %cst_126 = arith.constant 2.500000e-01 : f32
    %269 = vector.broadcast %cst_126 : f32 to vector<2x8x8x64xf32>
    %270 = arith.mulf %269, %268 : vector<2x8x8x64xf32>
    %271 = arith.addf %265, %270 : vector<2x8x8x64xf32>
    %cst_127 = arith.constant 7.500000e-01 : f32
    %272 = vector.broadcast %cst_127 : f32 to vector<2x8x8x64xf32>
    %273 = arith.mulf %272, %263 : vector<2x8x8x64xf32>
    %274 = vector.extract_strided_slice %263 {offsets = [0, 0, 0, 8], sizes = [2, 8, 8, 56], strides = [1, 1, 1, 1]} : vector<2x8x8x64xf32> to vector<2x8x8x56xf32>
    %275 = vector.extract_strided_slice %263 {offsets = [0, 0, 0, 56], sizes = [2, 8, 8, 8], strides = [1, 1, 1, 1]} : vector<2x8x8x64xf32> to vector<2x8x8x8xf32>
    %276 = tpu.concatenate %274, %275 in 3 : vector<2x8x8x56xf32>, vector<2x8x8x8xf32> -> vector<2x8x8x64xf32>
    %cst_128 = arith.constant 2.500000e-01 : f32
    %277 = vector.broadcast %cst_128 : f32 to vector<2x8x8x64xf32>
    %278 = arith.mulf %277, %276 : vector<2x8x8x64xf32>
    %279 = arith.addf %273, %278 : vector<2x8x8x64xf32>
    %280 = vector.extract_strided_slice %271 {offsets = [0, 0, 0, 0], sizes = [2, 8, 8, 8], strides = [1, 1, 1, 1]} : vector<2x8x8x64xf32> to vector<2x8x8x8xf32>
    %281 = vector.extract_strided_slice %279 {offsets = [0, 0, 0, 0], sizes = [2, 8, 8, 8], strides = [1, 1, 1, 1]} : vector<2x8x8x64xf32> to vector<2x8x8x8xf32>
    %282 = vector.extract_strided_slice %271 {offsets = [0, 0, 0, 8], sizes = [2, 8, 8, 8], strides = [1, 1, 1, 1]} : vector<2x8x8x64xf32> to vector<2x8x8x8xf32>
    %283 = vector.extract_strided_slice %279 {offsets = [0, 0, 0, 8], sizes = [2, 8, 8, 8], strides = [1, 1, 1, 1]} : vector<2x8x8x64xf32> to vector<2x8x8x8xf32>
    %284 = vector.extract_strided_slice %271 {offsets = [0, 0, 0, 16], sizes = [2, 8, 8, 8], strides = [1, 1, 1, 1]} : vector<2x8x8x64xf32> to vector<2x8x8x8xf32>
    %285 = vector.extract_strided_slice %279 {offsets = [0, 0, 0, 16], sizes = [2, 8, 8, 8], strides = [1, 1, 1, 1]} : vector<2x8x8x64xf32> to vector<2x8x8x8xf32>
    %286 = vector.extract_strided_slice %271 {offsets = [0, 0, 0, 24], sizes = [2, 8, 8, 8], strides = [1, 1, 1, 1]} : vector<2x8x8x64xf32> to vector<2x8x8x8xf32>
    %287 = vector.extract_strided_slice %279 {offsets = [0, 0, 0, 24], sizes = [2, 8, 8, 8], strides = [1, 1, 1, 1]} : vector<2x8x8x64xf32> to vector<2x8x8x8xf32>
    %288 = vector.extract_strided_slice %271 {offsets = [0, 0, 0, 32], sizes = [2, 8, 8, 8], strides = [1, 1, 1, 1]} : vector<2x8x8x64xf32> to vector<2x8x8x8xf32>
    %289 = vector.extract_strided_slice %279 {offsets = [0, 0, 0, 32], sizes = [2, 8, 8, 8], strides = [1, 1, 1, 1]} : vector<2x8x8x64xf32> to vector<2x8x8x8xf32>
    %290 = vector.extract_strided_slice %271 {offsets = [0, 0, 0, 40], sizes = [2, 8, 8, 8], strides = [1, 1, 1, 1]} : vector<2x8x8x64xf32> to vector<2x8x8x8xf32>
    %291 = vector.extract_strided_slice %279 {offsets = [0, 0, 0, 40], sizes = [2, 8, 8, 8], strides = [1, 1, 1, 1]} : vector<2x8x8x64xf32> to vector<2x8x8x8xf32>
    %292 = vector.extract_strided_slice %271 {offsets = [0, 0, 0, 48], sizes = [2, 8, 8, 8], strides = [1, 1, 1, 1]} : vector<2x8x8x64xf32> to vector<2x8x8x8xf32>
    %293 = vector.extract_strided_slice %279 {offsets = [0, 0, 0, 48], sizes = [2, 8, 8, 8], strides = [1, 1, 1, 1]} : vector<2x8x8x64xf32> to vector<2x8x8x8xf32>
    %294 = vector.extract_strided_slice %271 {offsets = [0, 0, 0, 56], sizes = [2, 8, 8, 8], strides = [1, 1, 1, 1]} : vector<2x8x8x64xf32> to vector<2x8x8x8xf32>
    %295 = vector.extract_strided_slice %279 {offsets = [0, 0, 0, 56], sizes = [2, 8, 8, 8], strides = [1, 1, 1, 1]} : vector<2x8x8x64xf32> to vector<2x8x8x8xf32>
    %296 = tpu.concatenate %280, %281, %282, %283, %284, %285, %286, %287, %288, %289, %290, %291, %292, %293, %294, %295 in 3 : vector<2x8x8x8xf32>, vector<2x8x8x8xf32>, vector<2x8x8x8xf32>, vector<2x8x8x8xf32>, vector<2x8x8x8xf32>, vector<2x8x8x8xf32>, vector<2x8x8x8xf32>, vector<2x8x8x8xf32>, vector<2x8x8x8xf32>, vector<2x8x8x8xf32>, vector<2x8x8x8xf32>, vector<2x8x8x8xf32>, vector<2x8x8x8xf32>, vector<2x8x8x8xf32>, vector<2x8x8x8xf32>, vector<2x8x8x8xf32> -> vector<2x8x8x128xf32>
    %c0_129 = arith.constant 0 : index
    %c0_130 = arith.constant 0 : index
    %c0_131 = arith.constant 0 : index
    %c0_132 = arith.constant 0 : index
    %c0_133 = arith.constant 0 : index
    %297 = vector.load %arg7[%c0_129, %c0_130, %c0_131, %c0_132, %c0_133] : memref<4x2x8x8x128xf32, #tpu.memory_space<vmem>>, vector<1x2x8x8x128xf32>
    %298 = vector.shape_cast %297 : vector<1x2x8x8x128xf32> to vector<2x8x8x128xf32>
    %299 = vector.shape_cast %296 : vector<2x8x8x128xf32> to vector<1x2x8x8x128xf32>
    tpu.vector_store %arg7[%c0_129, %c0_130, %c0_131, %c0_132, %c0_133], %299 {strides = array<i32>} : memref<4x2x8x8x128xf32, #tpu.memory_space<vmem>>, vector<1x2x8x8x128xf32>,
    %cst_134 = arith.constant 7.500000e-01 : f32
    %300 = vector.broadcast %cst_134 : f32 to vector<2x8x8x64xf32>
    %301 = arith.mulf %300, %255 : vector<2x8x8x64xf32>
    %302 = vector.extract_strided_slice %255 {offsets = [0, 0, 1, 0], sizes = [2, 8, 7, 64], strides = [1, 1, 1, 1]} : vector<2x8x8x64xf32> to vector<2x8x7x64xf32>
    %303 = vector.extract_strided_slice %255 {offsets = [0, 0, 7, 0], sizes = [2, 8, 1, 64], strides = [1, 1, 1, 1]} : vector<2x8x8x64xf32> to vector<2x8x1x64xf32>
    %304 = tpu.concatenate %302, %303 in 2 : vector<2x8x7x64xf32>, vector<2x8x1x64xf32> -> vector<2x8x8x64xf32>
    %cst_135 = arith.constant 2.500000e-01 : f32
    %305 = vector.broadcast %cst_135 : f32 to vector<2x8x8x64xf32>
    %306 = arith.mulf %305, %304 : vector<2x8x8x64xf32>
    %307 = arith.addf %301, %306 : vector<2x8x8x64xf32>
    %cst_136 = arith.constant 7.500000e-01 : f32
    %308 = vector.broadcast %cst_136 : f32 to vector<2x8x8x64xf32>
    %309 = arith.mulf %308, %307 : vector<2x8x8x64xf32>
    %310 = vector.extract_strided_slice %307 {offsets = [0, 0, 0, 0], sizes = [2, 8, 8, 8], strides = [1, 1, 1, 1]} : vector<2x8x8x64xf32> to vector<2x8x8x8xf32>
    %311 = vector.extract_strided_slice %307 {offsets = [0, 0, 0, 0], sizes = [2, 8, 8, 56], strides = [1, 1, 1, 1]} : vector<2x8x8x64xf32> to vector<2x8x8x56xf32>
    %312 = tpu.concatenate %310, %311 in 3 : vector<2x8x8x8xf32>, vector<2x8x8x56xf32> -> vector<2x8x8x64xf32>
    %cst_137 = arith.constant 2.500000e-01 : f32
    %313 = vector.broadcast %cst_137 : f32 to vector<2x8x8x64xf32>
    %314 = arith.mulf %313, %312 : vector<2x8x8x64xf32>
    %315 = arith.addf %309, %314 : vector<2x8x8x64xf32>
    %cst_138 = arith.constant 7.500000e-01 : f32
    %316 = vector.broadcast %cst_138 : f32 to vector<2x8x8x64xf32>
    %317 = arith.mulf %316, %307 : vector<2x8x8x64xf32>
    %318 = vector.extract_strided_slice %307 {offsets = [0, 0, 0, 8], sizes = [2, 8, 8, 56], strides = [1, 1, 1, 1]} : vector<2x8x8x64xf32> to vector<2x8x8x56xf32>
    %319 = vector.extract_strided_slice %307 {offsets = [0, 0, 0, 56], sizes = [2, 8, 8, 8], strides = [1, 1, 1, 1]} : vector<2x8x8x64xf32> to vector<2x8x8x8xf32>
    %320 = tpu.concatenate %318, %319 in 3 : vector<2x8x8x56xf32>, vector<2x8x8x8xf32> -> vector<2x8x8x64xf32>
    %cst_139 = arith.constant 2.500000e-01 : f32
    %321 = vector.broadcast %cst_139 : f32 to vector<2x8x8x64xf32>
    %322 = arith.mulf %321, %320 : vector<2x8x8x64xf32>
    %323 = arith.addf %317, %322 : vector<2x8x8x64xf32>
    %324 = vector.extract_strided_slice %315 {offsets = [0, 0, 0, 0], sizes = [2, 8, 8, 8], strides = [1, 1, 1, 1]} : vector<2x8x8x64xf32> to vector<2x8x8x8xf32>
    %325 = vector.extract_strided_slice %323 {offsets = [0, 0, 0, 0], sizes = [2, 8, 8, 8], strides = [1, 1, 1, 1]} : vector<2x8x8x64xf32> to vector<2x8x8x8xf32>
    %326 = vector.extract_strided_slice %315 {offsets = [0, 0, 0, 8], sizes = [2, 8, 8, 8], strides = [1, 1, 1, 1]} : vector<2x8x8x64xf32> to vector<2x8x8x8xf32>
    %327 = vector.extract_strided_slice %323 {offsets = [0, 0, 0, 8], sizes = [2, 8, 8, 8], strides = [1, 1, 1, 1]} : vector<2x8x8x64xf32> to vector<2x8x8x8xf32>
    %328 = vector.extract_strided_slice %315 {offsets = [0, 0, 0, 16], sizes = [2, 8, 8, 8], strides = [1, 1, 1, 1]} : vector<2x8x8x64xf32> to vector<2x8x8x8xf32>
    %329 = vector.extract_strided_slice %323 {offsets = [0, 0, 0, 16], sizes = [2, 8, 8, 8], strides = [1, 1, 1, 1]} : vector<2x8x8x64xf32> to vector<2x8x8x8xf32>
    %330 = vector.extract_strided_slice %315 {offsets = [0, 0, 0, 24], sizes = [2, 8, 8, 8], strides = [1, 1, 1, 1]} : vector<2x8x8x64xf32> to vector<2x8x8x8xf32>
    %331 = vector.extract_strided_slice %323 {offsets = [0, 0, 0, 24], sizes = [2, 8, 8, 8], strides = [1, 1, 1, 1]} : vector<2x8x8x64xf32> to vector<2x8x8x8xf32>
    %332 = vector.extract_strided_slice %315 {offsets = [0, 0, 0, 32], sizes = [2, 8, 8, 8], strides = [1, 1, 1, 1]} : vector<2x8x8x64xf32> to vector<2x8x8x8xf32>
    %333 = vector.extract_strided_slice %323 {offsets = [0, 0, 0, 32], sizes = [2, 8, 8, 8], strides = [1, 1, 1, 1]} : vector<2x8x8x64xf32> to vector<2x8x8x8xf32>
    %334 = vector.extract_strided_slice %315 {offsets = [0, 0, 0, 40], sizes = [2, 8, 8, 8], strides = [1, 1, 1, 1]} : vector<2x8x8x64xf32> to vector<2x8x8x8xf32>
    %335 = vector.extract_strided_slice %323 {offsets = [0, 0, 0, 40], sizes = [2, 8, 8, 8], strides = [1, 1, 1, 1]} : vector<2x8x8x64xf32> to vector<2x8x8x8xf32>
    %336 = vector.extract_strided_slice %315 {offsets = [0, 0, 0, 48], sizes = [2, 8, 8, 8], strides = [1, 1, 1, 1]} : vector<2x8x8x64xf32> to vector<2x8x8x8xf32>
    %337 = vector.extract_strided_slice %323 {offsets = [0, 0, 0, 48], sizes = [2, 8, 8, 8], strides = [1, 1, 1, 1]} : vector<2x8x8x64xf32> to vector<2x8x8x8xf32>
    %338 = vector.extract_strided_slice %315 {offsets = [0, 0, 0, 56], sizes = [2, 8, 8, 8], strides = [1, 1, 1, 1]} : vector<2x8x8x64xf32> to vector<2x8x8x8xf32>
    %339 = vector.extract_strided_slice %323 {offsets = [0, 0, 0, 56], sizes = [2, 8, 8, 8], strides = [1, 1, 1, 1]} : vector<2x8x8x64xf32> to vector<2x8x8x8xf32>
    %340 = tpu.concatenate %324, %325, %326, %327, %328, %329, %330, %331, %332, %333, %334, %335, %336, %337, %338, %339 in 3 : vector<2x8x8x8xf32>, vector<2x8x8x8xf32>, vector<2x8x8x8xf32>, vector<2x8x8x8xf32>, vector<2x8x8x8xf32>, vector<2x8x8x8xf32>, vector<2x8x8x8xf32>, vector<2x8x8x8xf32>, vector<2x8x8x8xf32>, vector<2x8x8x8xf32>, vector<2x8x8x8xf32>, vector<2x8x8x8xf32>, vector<2x8x8x8xf32>, vector<2x8x8x8xf32>, vector<2x8x8x8xf32>, vector<2x8x8x8xf32> -> vector<2x8x8x128xf32>
    %c1_140 = arith.constant 1 : index
    %c0_141 = arith.constant 0 : index
    %c0_142 = arith.constant 0 : index
    %c0_143 = arith.constant 0 : index
    %c0_144 = arith.constant 0 : index
    %341 = vector.load %arg7[%c1_140, %c0_141, %c0_142, %c0_143, %c0_144] : memref<4x2x8x8x128xf32, #tpu.memory_space<vmem>>, vector<1x2x8x8x128xf32>
    %342 = vector.shape_cast %341 : vector<1x2x8x8x128xf32> to vector<2x8x8x128xf32>
    %343 = vector.shape_cast %340 : vector<2x8x8x128xf32> to vector<1x2x8x8x128xf32>
    tpu.vector_store %arg7[%c1_140, %c0_141, %c0_142, %c0_143, %c0_144], %343 {strides = array<i32>} : memref<4x2x8x8x128xf32, #tpu.memory_space<vmem>>, vector<1x2x8x8x128xf32>,
    %cst_145 = arith.constant 7.500000e-01 : f32
    %344 = vector.broadcast %cst_145 : f32 to vector<2x8x8x64xf32>
    %345 = arith.mulf %344, %247 : vector<2x8x8x64xf32>
    %346 = vector.extract_strided_slice %247 {offsets = [0, 1, 0, 0], sizes = [2, 7, 8, 64], strides = [1, 1, 1, 1]} : vector<2x8x8x64xf32> to vector<2x7x8x64xf32>
    %347 = vector.extract_strided_slice %247 {offsets = [0, 7, 0, 0], sizes = [2, 1, 8, 64], strides = [1, 1, 1, 1]} : vector<2x8x8x64xf32> to vector<2x1x8x64xf32>
    %348 = tpu.concatenate %346, %347 in 1 : vector<2x7x8x64xf32>, vector<2x1x8x64xf32> -> vector<2x8x8x64xf32>
    %cst_146 = arith.constant 2.500000e-01 : f32
    %349 = vector.broadcast %cst_146 : f32 to vector<2x8x8x64xf32>
    %350 = arith.mulf %349, %348 : vector<2x8x8x64xf32>
    %351 = arith.addf %345, %350 : vector<2x8x8x64xf32>
    %cst_147 = arith.constant 7.500000e-01 : f32
    %352 = vector.broadcast %cst_147 : f32 to vector<2x8x8x64xf32>
    %353 = arith.mulf %352, %351 : vector<2x8x8x64xf32>
    %354 = vector.extract_strided_slice %351 {offsets = [0, 0, 0, 0], sizes = [2, 8, 1, 64], strides = [1, 1, 1, 1]} : vector<2x8x8x64xf32> to vector<2x8x1x64xf32>
    %355 = vector.extract_strided_slice %351 {offsets = [0, 0, 0, 0], sizes = [2, 8, 7, 64], strides = [1, 1, 1, 1]} : vector<2x8x8x64xf32> to vector<2x8x7x64xf32>
    %356 = tpu.concatenate %354, %355 in 2 : vector<2x8x1x64xf32>, vector<2x8x7x64xf32> -> vector<2x8x8x64xf32>
    %cst_148 = arith.constant 2.500000e-01 : f32
    %357 = vector.broadcast %cst_148 : f32 to vector<2x8x8x64xf32>
    %358 = arith.mulf %357, %356 : vector<2x8x8x64xf32>
    %359 = arith.addf %353, %358 : vector<2x8x8x64xf32>
    %cst_149 = arith.constant 7.500000e-01 : f32
    %360 = vector.broadcast %cst_149 : f32 to vector<2x8x8x64xf32>
    %361 = arith.mulf %360, %359 : vector<2x8x8x64xf32>
    %362 = vector.extract_strided_slice %359 {offsets = [0, 0, 0, 0], sizes = [2, 8, 8, 8], strides = [1, 1, 1, 1]} : vector<2x8x8x64xf32> to vector<2x8x8x8xf32>
    %363 = vector.extract_strided_slice %359 {offsets = [0, 0, 0, 0], sizes = [2, 8, 8, 56], strides = [1, 1, 1, 1]} : vector<2x8x8x64xf32> to vector<2x8x8x56xf32>
    %364 = tpu.concatenate %362, %363 in 3 : vector<2x8x8x8xf32>, vector<2x8x8x56xf32> -> vector<2x8x8x64xf32>
    %cst_150 = arith.constant 2.500000e-01 : f32
    %365 = vector.broadcast %cst_150 : f32 to vector<2x8x8x64xf32>
    %366 = arith.mulf %365, %364 : vector<2x8x8x64xf32>
    %367 = arith.addf %361, %366 : vector<2x8x8x64xf32>
    %cst_151 = arith.constant 7.500000e-01 : f32
    %368 = vector.broadcast %cst_151 : f32 to vector<2x8x8x64xf32>
    %369 = arith.mulf %368, %359 : vector<2x8x8x64xf32>
    %370 = vector.extract_strided_slice %359 {offsets = [0, 0, 0, 8], sizes = [2, 8, 8, 56], strides = [1, 1, 1, 1]} : vector<2x8x8x64xf32> to vector<2x8x8x56xf32>
    %371 = vector.extract_strided_slice %359 {offsets = [0, 0, 0, 56], sizes = [2, 8, 8, 8], strides = [1, 1, 1, 1]} : vector<2x8x8x64xf32> to vector<2x8x8x8xf32>
    %372 = tpu.concatenate %370, %371 in 3 : vector<2x8x8x56xf32>, vector<2x8x8x8xf32> -> vector<2x8x8x64xf32>
    %cst_152 = arith.constant 2.500000e-01 : f32
    %373 = vector.broadcast %cst_152 : f32 to vector<2x8x8x64xf32>
    %374 = arith.mulf %373, %372 : vector<2x8x8x64xf32>
    %375 = arith.addf %369, %374 : vector<2x8x8x64xf32>
    %376 = vector.extract_strided_slice %367 {offsets = [0, 0, 0, 0], sizes = [2, 8, 8, 8], strides = [1, 1, 1, 1]} : vector<2x8x8x64xf32> to vector<2x8x8x8xf32>
    %377 = vector.extract_strided_slice %375 {offsets = [0, 0, 0, 0], sizes = [2, 8, 8, 8], strides = [1, 1, 1, 1]} : vector<2x8x8x64xf32> to vector<2x8x8x8xf32>
    %378 = vector.extract_strided_slice %367 {offsets = [0, 0, 0, 8], sizes = [2, 8, 8, 8], strides = [1, 1, 1, 1]} : vector<2x8x8x64xf32> to vector<2x8x8x8xf32>
    %379 = vector.extract_strided_slice %375 {offsets = [0, 0, 0, 8], sizes = [2, 8, 8, 8], strides = [1, 1, 1, 1]} : vector<2x8x8x64xf32> to vector<2x8x8x8xf32>
    %380 = vector.extract_strided_slice %367 {offsets = [0, 0, 0, 16], sizes = [2, 8, 8, 8], strides = [1, 1, 1, 1]} : vector<2x8x8x64xf32> to vector<2x8x8x8xf32>
    %381 = vector.extract_strided_slice %375 {offsets = [0, 0, 0, 16], sizes = [2, 8, 8, 8], strides = [1, 1, 1, 1]} : vector<2x8x8x64xf32> to vector<2x8x8x8xf32>
    %382 = vector.extract_strided_slice %367 {offsets = [0, 0, 0, 24], sizes = [2, 8, 8, 8], strides = [1, 1, 1, 1]} : vector<2x8x8x64xf32> to vector<2x8x8x8xf32>
    %383 = vector.extract_strided_slice %375 {offsets = [0, 0, 0, 24], sizes = [2, 8, 8, 8], strides = [1, 1, 1, 1]} : vector<2x8x8x64xf32> to vector<2x8x8x8xf32>
    %384 = vector.extract_strided_slice %367 {offsets = [0, 0, 0, 32], sizes = [2, 8, 8, 8], strides = [1, 1, 1, 1]} : vector<2x8x8x64xf32> to vector<2x8x8x8xf32>
    %385 = vector.extract_strided_slice %375 {offsets = [0, 0, 0, 32], sizes = [2, 8, 8, 8], strides = [1, 1, 1, 1]} : vector<2x8x8x64xf32> to vector<2x8x8x8xf32>
    %386 = vector.extract_strided_slice %367 {offsets = [0, 0, 0, 40], sizes = [2, 8, 8, 8], strides = [1, 1, 1, 1]} : vector<2x8x8x64xf32> to vector<2x8x8x8xf32>
    %387 = vector.extract_strided_slice %375 {offsets = [0, 0, 0, 40], sizes = [2, 8, 8, 8], strides = [1, 1, 1, 1]} : vector<2x8x8x64xf32> to vector<2x8x8x8xf32>
    %388 = vector.extract_strided_slice %367 {offsets = [0, 0, 0, 48], sizes = [2, 8, 8, 8], strides = [1, 1, 1, 1]} : vector<2x8x8x64xf32> to vector<2x8x8x8xf32>
    %389 = vector.extract_strided_slice %375 {offsets = [0, 0, 0, 48], sizes = [2, 8, 8, 8], strides = [1, 1, 1, 1]} : vector<2x8x8x64xf32> to vector<2x8x8x8xf32>
    %390 = vector.extract_strided_slice %367 {offsets = [0, 0, 0, 56], sizes = [2, 8, 8, 8], strides = [1, 1, 1, 1]} : vector<2x8x8x64xf32> to vector<2x8x8x8xf32>
    %391 = vector.extract_strided_slice %375 {offsets = [0, 0, 0, 56], sizes = [2, 8, 8, 8], strides = [1, 1, 1, 1]} : vector<2x8x8x64xf32> to vector<2x8x8x8xf32>
    %392 = tpu.concatenate %376, %377, %378, %379, %380, %381, %382, %383, %384, %385, %386, %387, %388, %389, %390, %391 in 3 : vector<2x8x8x8xf32>, vector<2x8x8x8xf32>, vector<2x8x8x8xf32>, vector<2x8x8x8xf32>, vector<2x8x8x8xf32>, vector<2x8x8x8xf32>, vector<2x8x8x8xf32>, vector<2x8x8x8xf32>, vector<2x8x8x8xf32>, vector<2x8x8x8xf32>, vector<2x8x8x8xf32>, vector<2x8x8x8xf32>, vector<2x8x8x8xf32>, vector<2x8x8x8xf32>, vector<2x8x8x8xf32>, vector<2x8x8x8xf32> -> vector<2x8x8x128xf32>
    %c2_153 = arith.constant 2 : index
    %c0_154 = arith.constant 0 : index
    %c0_155 = arith.constant 0 : index
    %c0_156 = arith.constant 0 : index
    %c0_157 = arith.constant 0 : index
    %393 = vector.load %arg7[%c2_153, %c0_154, %c0_155, %c0_156, %c0_157] : memref<4x2x8x8x128xf32, #tpu.memory_space<vmem>>, vector<1x2x8x8x128xf32>
    %394 = vector.shape_cast %393 : vector<1x2x8x8x128xf32> to vector<2x8x8x128xf32>
    %395 = vector.shape_cast %392 : vector<2x8x8x128xf32> to vector<1x2x8x8x128xf32>
    tpu.vector_store %arg7[%c2_153, %c0_154, %c0_155, %c0_156, %c0_157], %395 {strides = array<i32>} : memref<4x2x8x8x128xf32, #tpu.memory_space<vmem>>, vector<1x2x8x8x128xf32>,
    %cst_158 = arith.constant 7.500000e-01 : f32
    %396 = vector.broadcast %cst_158 : f32 to vector<2x8x8x64xf32>
    %397 = arith.mulf %396, %351 : vector<2x8x8x64xf32>
    %398 = vector.extract_strided_slice %351 {offsets = [0, 0, 1, 0], sizes = [2, 8, 7, 64], strides = [1, 1, 1, 1]} : vector<2x8x8x64xf32> to vector<2x8x7x64xf32>
    %399 = vector.extract_strided_slice %351 {offsets = [0, 0, 7, 0], sizes = [2, 8, 1, 64], strides = [1, 1, 1, 1]} : vector<2x8x8x64xf32> to vector<2x8x1x64xf32>
    %400 = tpu.concatenate %398, %399 in 2 : vector<2x8x7x64xf32>, vector<2x8x1x64xf32> -> vector<2x8x8x64xf32>
    %cst_159 = arith.constant 2.500000e-01 : f32
    %401 = vector.broadcast %cst_159 : f32 to vector<2x8x8x64xf32>
    %402 = arith.mulf %401, %400 : vector<2x8x8x64xf32>
    %403 = arith.addf %397, %402 : vector<2x8x8x64xf32>
    %cst_160 = arith.constant 7.500000e-01 : f32
    %404 = vector.broadcast %cst_160 : f32 to vector<2x8x8x64xf32>
    %405 = arith.mulf %404, %403 : vector<2x8x8x64xf32>
    %406 = vector.extract_strided_slice %403 {offsets = [0, 0, 0, 0], sizes = [2, 8, 8, 8], strides = [1, 1, 1, 1]} : vector<2x8x8x64xf32> to vector<2x8x8x8xf32>
    %407 = vector.extract_strided_slice %403 {offsets = [0, 0, 0, 0], sizes = [2, 8, 8, 56], strides = [1, 1, 1, 1]} : vector<2x8x8x64xf32> to vector<2x8x8x56xf32>
    %408 = tpu.concatenate %406, %407 in 3 : vector<2x8x8x8xf32>, vector<2x8x8x56xf32> -> vector<2x8x8x64xf32>
    %cst_161 = arith.constant 2.500000e-01 : f32
    %409 = vector.broadcast %cst_161 : f32 to vector<2x8x8x64xf32>
    %410 = arith.mulf %409, %408 : vector<2x8x8x64xf32>
    %411 = arith.addf %405, %410 : vector<2x8x8x64xf32>
    %cst_162 = arith.constant 7.500000e-01 : f32
    %412 = vector.broadcast %cst_162 : f32 to vector<2x8x8x64xf32>
    %413 = arith.mulf %412, %403 : vector<2x8x8x64xf32>
    %414 = vector.extract_strided_slice %403 {offsets = [0, 0, 0, 8], sizes = [2, 8, 8, 56], strides = [1, 1, 1, 1]} : vector<2x8x8x64xf32> to vector<2x8x8x56xf32>
    %415 = vector.extract_strided_slice %403 {offsets = [0, 0, 0, 56], sizes = [2, 8, 8, 8], strides = [1, 1, 1, 1]} : vector<2x8x8x64xf32> to vector<2x8x8x8xf32>
    %416 = tpu.concatenate %414, %415 in 3 : vector<2x8x8x56xf32>, vector<2x8x8x8xf32> -> vector<2x8x8x64xf32>
    %cst_163 = arith.constant 2.500000e-01 : f32
    %417 = vector.broadcast %cst_163 : f32 to vector<2x8x8x64xf32>
    %418 = arith.mulf %417, %416 : vector<2x8x8x64xf32>
    %419 = arith.addf %413, %418 : vector<2x8x8x64xf32>
    %420 = vector.extract_strided_slice %411 {offsets = [0, 0, 0, 0], sizes = [2, 8, 8, 8], strides = [1, 1, 1, 1]} : vector<2x8x8x64xf32> to vector<2x8x8x8xf32>
    %421 = vector.extract_strided_slice %419 {offsets = [0, 0, 0, 0], sizes = [2, 8, 8, 8], strides = [1, 1, 1, 1]} : vector<2x8x8x64xf32> to vector<2x8x8x8xf32>
    %422 = vector.extract_strided_slice %411 {offsets = [0, 0, 0, 8], sizes = [2, 8, 8, 8], strides = [1, 1, 1, 1]} : vector<2x8x8x64xf32> to vector<2x8x8x8xf32>
    %423 = vector.extract_strided_slice %419 {offsets = [0, 0, 0, 8], sizes = [2, 8, 8, 8], strides = [1, 1, 1, 1]} : vector<2x8x8x64xf32> to vector<2x8x8x8xf32>
    %424 = vector.extract_strided_slice %411 {offsets = [0, 0, 0, 16], sizes = [2, 8, 8, 8], strides = [1, 1, 1, 1]} : vector<2x8x8x64xf32> to vector<2x8x8x8xf32>
    %425 = vector.extract_strided_slice %419 {offsets = [0, 0, 0, 16], sizes = [2, 8, 8, 8], strides = [1, 1, 1, 1]} : vector<2x8x8x64xf32> to vector<2x8x8x8xf32>
    %426 = vector.extract_strided_slice %411 {offsets = [0, 0, 0, 24], sizes = [2, 8, 8, 8], strides = [1, 1, 1, 1]} : vector<2x8x8x64xf32> to vector<2x8x8x8xf32>
    %427 = vector.extract_strided_slice %419 {offsets = [0, 0, 0, 24], sizes = [2, 8, 8, 8], strides = [1, 1, 1, 1]} : vector<2x8x8x64xf32> to vector<2x8x8x8xf32>
    %428 = vector.extract_strided_slice %411 {offsets = [0, 0, 0, 32], sizes = [2, 8, 8, 8], strides = [1, 1, 1, 1]} : vector<2x8x8x64xf32> to vector<2x8x8x8xf32>
    %429 = vector.extract_strided_slice %419 {offsets = [0, 0, 0, 32], sizes = [2, 8, 8, 8], strides = [1, 1, 1, 1]} : vector<2x8x8x64xf32> to vector<2x8x8x8xf32>
    %430 = vector.extract_strided_slice %411 {offsets = [0, 0, 0, 40], sizes = [2, 8, 8, 8], strides = [1, 1, 1, 1]} : vector<2x8x8x64xf32> to vector<2x8x8x8xf32>
    %431 = vector.extract_strided_slice %419 {offsets = [0, 0, 0, 40], sizes = [2, 8, 8, 8], strides = [1, 1, 1, 1]} : vector<2x8x8x64xf32> to vector<2x8x8x8xf32>
    %432 = vector.extract_strided_slice %411 {offsets = [0, 0, 0, 48], sizes = [2, 8, 8, 8], strides = [1, 1, 1, 1]} : vector<2x8x8x64xf32> to vector<2x8x8x8xf32>
    %433 = vector.extract_strided_slice %419 {offsets = [0, 0, 0, 48], sizes = [2, 8, 8, 8], strides = [1, 1, 1, 1]} : vector<2x8x8x64xf32> to vector<2x8x8x8xf32>
    %434 = vector.extract_strided_slice %411 {offsets = [0, 0, 0, 56], sizes = [2, 8, 8, 8], strides = [1, 1, 1, 1]} : vector<2x8x8x64xf32> to vector<2x8x8x8xf32>
    %435 = vector.extract_strided_slice %419 {offsets = [0, 0, 0, 56], sizes = [2, 8, 8, 8], strides = [1, 1, 1, 1]} : vector<2x8x8x64xf32> to vector<2x8x8x8xf32>
    %436 = tpu.concatenate %420, %421, %422, %423, %424, %425, %426, %427, %428, %429, %430, %431, %432, %433, %434, %435 in 3 : vector<2x8x8x8xf32>, vector<2x8x8x8xf32>, vector<2x8x8x8xf32>, vector<2x8x8x8xf32>, vector<2x8x8x8xf32>, vector<2x8x8x8xf32>, vector<2x8x8x8xf32>, vector<2x8x8x8xf32>, vector<2x8x8x8xf32>, vector<2x8x8x8xf32>, vector<2x8x8x8xf32>, vector<2x8x8x8xf32>, vector<2x8x8x8xf32>, vector<2x8x8x8xf32>, vector<2x8x8x8xf32>, vector<2x8x8x8xf32> -> vector<2x8x8x128xf32>
    %c3 = arith.constant 3 : index
    %c0_164 = arith.constant 0 : index
    %c0_165 = arith.constant 0 : index
    %c0_166 = arith.constant 0 : index
    %c0_167 = arith.constant 0 : index
    %437 = vector.load %arg7[%c3, %c0_164, %c0_165, %c0_166, %c0_167] : memref<4x2x8x8x128xf32, #tpu.memory_space<vmem>>, vector<1x2x8x8x128xf32>
    %438 = vector.shape_cast %437 : vector<1x2x8x8x128xf32> to vector<2x8x8x128xf32>
    %439 = vector.shape_cast %436 : vector<2x8x8x128xf32> to vector<1x2x8x8x128xf32>
    tpu.vector_store %arg7[%c3, %c0_164, %c0_165, %c0_166, %c0_167], %439 {strides = array<i32>} : memref<4x2x8x8x128xf32, #tpu.memory_space<vmem>>, vector<1x2x8x8x128xf32>,
    return
  }
}

</mosaic_0001>

<llo_original>
// kernel: tpu_custom_call.1
$region0: #{tpu_custom_call.1}
  #allocation0 [shape = 'u32[]', space=smem, size = 0x4, offset = 0x4, fixed_abs, tag = 'smem constant byte address 0x4 - core index']
  #allocation1 [shape = 'u32[144,128]{1,0:T(1,128)}', space=vmem, size = 0x12000, scoped, tag = 'internal scratch']
  %s0 = inlined_call_operand.vmem [shape: f32[2,10,10,80], index: 0, kind: input, shape index: {}]
  %s1 = inlined_call_operand.vmem [shape: f32[3,3,80,128], index: 1, kind: input, shape index: {}]
  %s2 = inlined_call_operand.vmem [shape: f32[3,3,80,64], index: 2, kind: input, shape index: {}]
  %s3 = inlined_call_operand.vmem [shape: f32[1,8], index: 3, kind: input, shape index: {}]
  %s4 = inlined_call_operand.vmem [shape: f32[1,8], index: 4, kind: input, shape index: {}]
  %s5 = inlined_call_operand.vmem [shape: f32[1,8], index: 5, kind: input, shape index: {}]
  %s6 = inlined_call_operand.vmem [shape: f32[1,8], index: 6, kind: input, shape index: {}]
  %s7 = inlined_call_operand.hbm [shape: f32[4,2,8,8,128], index: 7, kind: output, shape index: {}]
  %s8 = sld [smem:[#allocation0]]
  $region38: #{tpu_custom_call.1} parent=0
    _
  %s10 = ssub.s32 1, %s8
  %s11 = scalar_select 0, %s10, %s8
  $region1: #{tpu_custom_call.1} parent=0
    #allocation2 [shape = 'u8[262144]{0}', space=vmem, size = 0x40000, scoped, tag = 'output window, operand 0, single buffered']
    #allocation3 [shape = 's32[1]{0}', space=sflag, size = 0x4, scoped, tag = 'scoped memory for tpu_custom_call.1']
    %12 = vsyncpa [#allocation3], 0
    // Predicated region
    $region2: #{tpu_custom_call.1} parent=1 // pred_check
      _
    $region3: #{tpu_custom_call.1} parent=1 // pred_check_branch
      %14 = sbr.rel (0) target = $region5
    $region4: #{tpu_custom_call.1} parent=1 // pred_region
      _
    $region5: #{tpu_custom_call.1} parent=1 // pred_fallthru
      _
    // Predicated region
    $region6: #{tpu_custom_call.1} parent=1 // pred_check
      _
    $region7: #{tpu_custom_call.1} parent=1 // pred_check_branch
      %16 = sbr.rel (0) target = $region9
    $region8: #{tpu_custom_call.1} parent=1 // pred_region
      _
    $region9: #{tpu_custom_call.1} parent=1 // pred_fallthru
      _
    // Predicated region
    $region10: #{tpu_custom_call.1} parent=1 // pred_check
      _
    $region11: #{tpu_custom_call.1} parent=1 // pred_check_branch
      %18 = sbr.rel (0) target = $region13
    $region12: #{tpu_custom_call.1} parent=1 // pred_region
      _
    $region13: #{tpu_custom_call.1} parent=1 // pred_fallthru
      _
    // Predicated region
    $region14: #{tpu_custom_call.1} parent=1 // pred_check
      _
    $region15: #{tpu_custom_call.1} parent=1 // pred_check_branch
      %20 = sbr.rel (0) target = $region17
    $region16: #{tpu_custom_call.1} parent=1 // pred_region
      _
    $region17: #{tpu_custom_call.1} parent=1 // pred_fallthru
      _
    // Predicated region
    $region18: #{tpu_custom_call.1} parent=1 // pred_check
      _
    $region19: #{tpu_custom_call.1} parent=1 // pred_check_branch
      %22 = sbr.rel (0) target = $region21
    $region20: #{tpu_custom_call.1} parent=1 // pred_region
      _
    $region21: #{tpu_custom_call.1} parent=1 // pred_fallthru
      _
    // Predicated region
    $region22: #{tpu_custom_call.1} parent=1 // pred_check
      _
    $region23: #{tpu_custom_call.1} parent=1 // pred_check_branch
      %24 = sbr.rel (0) target = $region25
    $region24: #{tpu_custom_call.1} parent=1 // pred_region
      _
    $region25: #{tpu_custom_call.1} parent=1 // pred_fallthru
      _
    // Predicated region
    $region26: #{tpu_custom_call.1} parent=1 // pred_check
      _
    $region27: #{tpu_custom_call.1} parent=1 // pred_check_branch
      %26 = sbr.rel (0) target = $region29
    $region28: #{tpu_custom_call.1} parent=1 // pred_region
      _
    $region29: #{tpu_custom_call.1} parent=1 // pred_fallthru
      _
    %v27 = vld [vmem:[%s0] sm:$0xff]
    %v28 = vld [vmem:[%s0 + $0x8] sm:$0x3]
    %v29 = vld [vmem:[%s0 + $0x10] sm:$0xff]
    %v30 = vld [vmem:[%s0 + $0x18] sm:$0x3]
    %v31 = vld [vmem:[%s0 + $0x20] sm:$0xff]
    %v32 = vld [vmem:[%s0 + $0x28] sm:$0x3]
    %v33 = vld [vmem:[%s0 + $0x30] sm:$0xff]
    %v34 = vld [vmem:[%s0 + $0x38] sm:$0x3]
    %v35 = vld [vmem:[%s0 + $0x40] sm:$0xff]
    %v36 = vld [vmem:[%s0 + $0x48] sm:$0x3]
    %v37 = vld [vmem:[%s0 + $0x50] sm:$0xff]
    %v38 = vld [vmem:[%s0 + $0x58] sm:$0x3]
    %v39 = vld [vmem:[%s0 + $0x60] sm:$0xff]
    %v40 = vld [vmem:[%s0 + $0x68] sm:$0x3]
    %v41 = vld [vmem:[%s0 + $0x70] sm:$0xff]
    %v42 = vld [vmem:[%s0 + $0x78] sm:$0x3]
    %v43 = vld [vmem:[%s0 + $0x80] sm:$0xff]
    %v44 = vld [vmem:[%s0 + $0x88] sm:$0x3]
    %v45 = vld [vmem:[%s0 + $0x90] sm:$0xff]
    %v46 = vld [vmem:[%s0 + $0x98] sm:$0x3]
    %v47 = vld [vmem:[%s0 + $0xa0] sm:$0xff]
    %v48 = vld [vmem:[%s0 + $0xa8] sm:$0x3]
    %v49 = vld [vmem:[%s0 + $0xb0] sm:$0xff]
    %v50 = vld [vmem:[%s0 + $0xb8] sm:$0x3]
    %v51 = vld [vmem:[%s0 + $0xc0] sm:$0xff]
    %v52 = vld [vmem:[%s0 + $0xc8] sm:$0x3]
    %v53 = vld [vmem:[%s0 + $0xd0] sm:$0xff]
    %v54 = vld [vmem:[%s0 + $0xd8] sm:$0x3]
    %v55 = vld [vmem:[%s0 + $0xe0] sm:$0xff]
    %v56 = vld [vmem:[%s0 + $0xe8] sm:$0x3]
    %v57 = vld [vmem:[%s0 + $0xf0] sm:$0xff]
    %v58 = vld [vmem:[%s0 + $0xf8] sm:$0x3]
    %v59 = vld [vmem:[%s0 + $0x100] sm:$0xff]
    %v60 = vld [vmem:[%s0 + $0x108] sm:$0x3]
    %v61 = vld [vmem:[%s0 + $0x110] sm:$0xff]
    %v62 = vld [vmem:[%s0 + $0x118] sm:$0x3]
    %v63 = vld [vmem:[%s0 + $0x120] sm:$0xff]
    %v64 = vld [vmem:[%s0 + $0x128] sm:$0x3]
    %v65 = vld [vmem:[%s0 + $0x130] sm:$0xff]
    %v66 = vld [vmem:[%s0 + $0x138] sm:$0x3]
    %v67 = vld [vmem:[%s1] sm:$0xff]
    %v68 = vld [vmem:[%s1 + $0x8] sm:$0xff]
    %v69 = vld [vmem:[%s1 + $0x10] sm:$0xff]
    %v70 = vld [vmem:[%s1 + $0x18] sm:$0xff]
    %v71 = vld [vmem:[%s1 + $0x20] sm:$0xff]
    %v72 = vld [vmem:[%s1 + $0x28] sm:$0xff]
    %v73 = vld [vmem:[%s1 + $0x30] sm:$0xff]
    %v74 = vld [vmem:[%s1 + $0x38] sm:$0xff]
    %v75 = vld [vmem:[%s1 + $0x40] sm:$0xff]
    %v76 = vld [vmem:[%s1 + $0x48] sm:$0xff]
    %vm109 = vcmask 1046528
    %v110 = vrot.slane %v27, 1
    %v111 = vrot.slane %v28, 1
    %v112 = vsel %vm109, %v110, %v111
    %v113 = vrot.slane %v29, 1
    %v114 = vrot.slane %v30, 1
    %v115 = vsel %vm109, %v113, %v114
    %v116 = vrot.slane %v31, 1
    %v117 = vrot.slane %v32, 1
    %v118 = vsel %vm109, %v116, %v117
    %v119 = vrot.slane %v33, 1
    %v120 = vrot.slane %v34, 1
    %v121 = vsel %vm109, %v119, %v120
    %v122 = vrot.slane %v35, 1
    %v123 = vrot.slane %v36, 1
    %v124 = vsel %vm109, %v122, %v123
    %v125 = vrot.slane %v37, 1
    %v126 = vrot.slane %v38, 1
    %v127 = vsel %vm109, %v125, %v126
    %v128 = vrot.slane %v39, 1
    %v129 = vrot.slane %v40, 1
    %v130 = vsel %vm109, %v128, %v129
    %v131 = vrot.slane %v41, 1
    %v132 = vrot.slane %v42, 1
    %v133 = vsel %vm109, %v131, %v132
    %v134 = vrot.slane %v47, 1
    %v135 = vrot.slane %v48, 1
    %v136 = vsel %vm109, %v134, %v135
    %v137 = vrot.slane %v49, 1
    %v138 = vrot.slane %v50, 1
    %v139 = vsel %vm109, %v137, %v138
    %v140 = vrot.slane %v51, 1
    %v141 = vrot.slane %v52, 1
    %v142 = vsel %vm109, %v140, %v141
    %v143 = vrot.slane %v53, 1
    %v144 = vrot.slane %v54, 1
    %v145 = vsel %vm109, %v143, %v144
    %v146 = vrot.slane %v55, 1
    %v147 = vrot.slane %v56, 1
    %v148 = vsel %vm109, %v146, %v147
    %v149 = vrot.slane %v57, 1
    %v150 = vrot.slane %v58, 1
    %v151 = vsel %vm109, %v149, %v150
    %v152 = vrot.slane %v59, 1
    %v153 = vrot.slane %v60, 1
    %v154 = vsel %vm109, %v152, %v153
    %v155 = vrot.slane %v61, 1
    %v156 = vrot.slane %v62, 1
    %v157 = vsel %vm109, %v155, %v156
    %s158 = scalar_lea.vmem %s1, 80
    %v159 = vld [vmem:[%s158] sm:$0xff]
    %v160 = vld [vmem:[%s158 + $0x8] sm:$0xff]
    %v161 = vld [vmem:[%s158 + $0x10] sm:$0xff]
    %v162 = vld [vmem:[%s158 + $0x18] sm:$0xff]
    %v163 = vld [vmem:[%s158 + $0x20] sm:$0xff]
    %v164 = vld [vmem:[%s158 + $0x28] sm:$0xff]
    %v165 = vld [vmem:[%s158 + $0x30] sm:$0xff]
    %v166 = vld [vmem:[%s158 + $0x38] sm:$0xff]
    %v167 = vld [vmem:[%s158 + $0x40] sm:$0xff]
    %v168 = vld [vmem:[%s158 + $0x48] sm:$0xff]
    %vm169 = vcmask 654336
    %v170 = vsel %vm169, %v112, 0
    %v172 = vsel %vm169, %v115, 0
    %v174 = vsel %vm169, %v118, 0
    %v176 = vsel %vm169, %v121, 0
    %v178 = vsel %vm169, %v124, 0
    %v180 = vsel %vm169, %v127, 0
    %v182 = vsel %vm169, %v130, 0
    %v184 = vsel %vm169, %v133, 0
    %v186 = vsel %vm169, %v136, 0
    %v188 = vsel %vm169, %v139, 0
    %v190 = vsel %vm169, %v142, 0
    %v192 = vsel %vm169, %v145, 0
    %v194 = vsel %vm169, %v148, 0
    %v196 = vsel %vm169, %v151, 0
    %v198 = vsel %vm169, %v154, 0
    %v200 = vsel %vm169, %v157, 0
    %202 = vmatprep.subr.mxu0 0.0
    %203 = vmatpush1.msra.mxu0 %v159
    %204 = vmatprep.subr.mxu0 0.0
    %205 = vmatpush1.msra.mxu0 %v160
    %206 = vmatprep.subr.mxu0 0.0
    %207 = vmatpush1.msra.mxu0 %v161
    %208 = vmatprep.subr.mxu0 0.0
    %209 = vmatpush1.msra.mxu0 %v162
    %210 = vmatprep.subr.mxu0 0.0
    %211 = vmatpush1.msra.mxu0 %v163
    %212 = vmatprep.subr.mxu0 0.0
    %213 = vmatpush1.msra.mxu0 %v164
    %214 = vmatprep.subr.mxu0 0.0
    %215 = vmatpush1.msra.mxu0 %v165
    %216 = vmatprep.subr.mxu0 0.0
    %217 = vmatpush1.msra.mxu0 %v166
    %218 = vmatprep.subr.mxu0 0.0
    %219 = vmatpush1.msra.mxu0 %v167
    %220 = vmatprep.subr.mxu0 0.0
    %221 = vmatpush1.msra.mxu0 %v168
    %222 = vmatprep.subr.mxu0 0.0
    %223 = vmatpush1.msra.mxu0 0.0
    %224 = vmatprep.subr.mxu0 0.0
    %225 = vmatpush1.msra.mxu0 0.0
    %226 = vmatprep.subr.mxu0 0.0
    %227 = vmatpush1.msra.mxu0 0.0
    %228 = vmatprep.subr.mxu0 0.0
    %229 = vmatpush1.msra.mxu0 0.0
    %230 = vmatprep.subr.mxu0 0.0
    %231 = vmatpush1.msra.mxu0 0.0
    %232 = vmatprep.subr.mxu0 0.0
    %233 = vmatpush1.msra.mxu0 0.0
    %234 = vmatprep.subr.mxu0 0.0
    %235 = vmatpush1.msra.mxu0 0.0
    %236 = vmatprep.subr.mxu0 0.0
    %237 = vmatpush1.msra.mxu0 0.0
    %238 = vmatprep.subr.mxu0 0.0
    %239 = vmatpush1.msra.mxu0 0.0
    %240 = vmatprep.subr.mxu0 0.0
    %241 = vmatpush1.msra.mxu0 0.0
    %242 = vmatprep.subr.mxu0 0.0
    %243 = vmatpush1.msra.mxu0 0.0
    %244 = vmatprep.subr.mxu0 0.0
    %245 = vmatpush1.msra.mxu0 0.0
    %246 = vmatprep.subr.mxu0 0.0
    %247 = vmatpush1.msra.mxu0 0.0
    %248 = vmatprep.subr.mxu0 0.0
    %249 = vmatpush1.msra.mxu0 0.0
    %250 = vmatprep.subr.mxu0 0.0
    %251 = vmatpush1.msra.mxu0 0.0
    %252 = vmatprep.subr.mxu0 0.0
    %253 = vmatpush1.msra.mxu0 0.0
    %254 = vmatprep.subr.mxu0 0.0
    %255 = vmatpush1.msra.mxu0 0.0
    %256 = vmatprep.subr.mxu0 0.0
    %257 = vmatpush1.msra.mxu0 0.0
    %258 = vmatprep.subr.mxu0 0.0
    %259 = vmatpush1.msra.mxu0 0.0
    %260 = vmatprep.subr.mxu0 0.0
    %261 = vmatpush1.msra.mxu0 0.0
    %262 = vmatprep.subr.mxu0 0.0
    %263 = vmatpush1.msra.mxu0 0.0
    %264 = vmatprep.subr.mxu0 0.0
    %265 = vmatpush1.msra.mxu0 0.0
    %266 = vmatprep.mubr.f32.mxu0 0.0
    %267 = vmatmul.mubr.f32.gmra.mrb[0].mxu0 %v170
    %v268 = vpop.f32.mrb[0].mxu0
    %v269 = vadd.f32 0.0, %v268
    %v270 = vpop.f32.mrb[0].mxu0
    %271 = vmatprep.mubr.f32.mxu0 0.0
    %272 = vmatmul.mubr.f32.gmra.mrb[0].mxu0 %v172
    %v273 = vpop.f32.mrb[0].mxu0
    %v274 = vadd.f32 0.0, %v273
    %v275 = vpop.f32.mrb[0].mxu0
    %276 = vmatprep.mubr.f32.mxu0 0.0
    %277 = vmatmul.mubr.f32.gmra.mrb[0].mxu0 %v174
    %v278 = vpop.f32.mrb[0].mxu0
    %v279 = vadd.f32 0.0, %v278
    %v280 = vpop.f32.mrb[0].mxu0
    %281 = vmatprep.mubr.f32.mxu0 0.0
    %282 = vmatmul.mubr.f32.gmra.mrb[0].mxu0 %v176
    %v283 = vpop.f32.mrb[0].mxu0
    %v284 = vadd.f32 0.0, %v283
    %v285 = vpop.f32.mrb[0].mxu0
    %286 = vmatprep.mubr.f32.mxu0 0.0
    %287 = vmatmul.mubr.f32.gmra.mrb[0].mxu0 %v178
    %v288 = vpop.f32.mrb[0].mxu0
    %v289 = vadd.f32 0.0, %v288
    %v290 = vpop.f32.mrb[0].mxu0
    %291 = vmatprep.mubr.f32.mxu0 0.0
    %292 = vmatmul.mubr.f32.gmra.mrb[0].mxu0 %v180
    %v293 = vpop.f32.mrb[0].mxu0
    %v294 = vadd.f32 0.0, %v293
    %v295 = vpop.f32.mrb[0].mxu0
    %296 = vmatprep.mubr.f32.mxu0 0.0
    %297 = vmatmul.mubr.f32.gmra.mrb[0].mxu0 %v182
    %v298 = vpop.f32.mrb[0].mxu0
    %v299 = vadd.f32 0.0, %v298
    %v300 = vpop.f32.mrb[0].mxu0
    %301 = vmatprep.mubr.f32.mxu0 0.0
    %302 = vmatmul.mubr.f32.gmra.mrb[0].mxu0 %v184
    %v303 = vpop.f32.mrb[0].mxu0
    %v304 = vadd.f32 0.0, %v303
    %v305 = vpop.f32.mrb[0].mxu0
    %306 = vmatprep.mubr.f32.mxu0 0.0
    %307 = vmatmul.mubr.f32.gmra.mrb[0].mxu0 %v186
    %v308 = vpop.f32.mrb[0].mxu0
    %v309 = vadd.f32 0.0, %v308
    %v310 = vpop.f32.mrb[0].mxu0
    %311 = vmatprep.mubr.f32.mxu0 0.0
    %312 = vmatmul.mubr.f32.gmra.mrb[0].mxu0 %v188
    %v313 = vpop.f32.mrb[0].mxu0
    %v314 = vadd.f32 0.0, %v313
    %v315 = vpop.f32.mrb[0].mxu0
    %316 = vmatprep.mubr.f32.mxu0 0.0
    %317 = vmatmul.mubr.f32.gmra.mrb[0].mxu0 %v190
    %v318 = vpop.f32.mrb[0].mxu0
    %v319 = vadd.f32 0.0, %v318
    %v320 = vpop.f32.mrb[0].mxu0
    %321 = vmatprep.mubr.f32.mxu0 0.0
    %322 = vmatmul.mubr.f32.gmra.mrb[0].mxu0 %v192
    %v323 = vpop.f32.mrb[0].mxu0
    %v324 = vadd.f32 0.0, %v323
    %v325 = vpop.f32.mrb[0].mxu0
    %326 = vmatprep.mubr.f32.mxu0 0.0
    %327 = vmatmul.mubr.f32.gmra.mrb[0].mxu0 %v194
    %v328 = vpop.f32.mrb[0].mxu0
    %v329 = vadd.f32 0.0, %v328
    %v330 = vpop.f32.mrb[0].mxu0
    %331 = vmatprep.mubr.f32.mxu0 0.0
    %332 = vmatmul.mubr.f32.gmra.mrb[0].mxu0 %v196
    %v333 = vpop.f32.mrb[0].mxu0
    %v334 = vadd.f32 0.0, %v333
    %v335 = vpop.f32.mrb[0].mxu0
    %336 = vmatprep.mubr.f32.mxu0 0.0
    %337 = vmatmul.mubr.f32.gmra.mrb[0].mxu0 %v198
    %v338 = vpop.f32.mrb[0].mxu0
    %v339 = vadd.f32 0.0, %v338
    %v340 = vpop.f32.mrb[0].mxu0
    %341 = vmatprep.mubr.f32.mxu0 0.0
    %342 = vmatmul.mubr.f32.gmra.mrb[0].mxu0 %v200
    %v343 = vpop.f32.mrb[0].mxu0
    %v344 = vadd.f32 0.0, %v343
    %v345 = vpop.f32.mrb[0].mxu0
    %346 = vdwg.mxu0
    %v347 = vsel %vm169, %v27, 0
    %v349 = vsel %vm169, %v29, 0
    %v351 = vsel %vm169, %v31, 0
    %v353 = vsel %vm169, %v33, 0
    %v355 = vsel %vm169, %v35, 0
    %v357 = vsel %vm169, %v37, 0
    %v359 = vsel %vm169, %v39, 0
    %v361 = vsel %vm169, %v41, 0
    %v363 = vsel %vm169, %v47, 0
    %v365 = vsel %vm169, %v49, 0
    %v367 = vsel %vm169, %v51, 0
    %v369 = vsel %vm169, %v53, 0
    %v371 = vsel %vm169, %v55, 0
    %v373 = vsel %vm169, %v57, 0
    %v375 = vsel %vm169, %v59, 0
    %v377 = vsel %vm169, %v61, 0
    %379 = vmatprep.subr.mxu0 0.0
    %380 = vmatpush1.msra.mxu0 %v67
    %381 = vmatprep.subr.mxu0 0.0
    %382 = vmatpush1.msra.mxu0 %v68
    %383 = vmatprep.subr.mxu0 0.0
    %384 = vmatpush1.msra.mxu0 %v69
    %385 = vmatprep.subr.mxu0 0.0
    %386 = vmatpush1.msra.mxu0 %v70
    %387 = vmatprep.subr.mxu0 0.0
    %388 = vmatpush1.msra.mxu0 %v71
    %389 = vmatprep.subr.mxu0 0.0
    %390 = vmatpush1.msra.mxu0 %v72
    %391 = vmatprep.subr.mxu0 0.0
    %392 = vmatpush1.msra.mxu0 %v73
    %393 = vmatprep.subr.mxu0 0.0
    %394 = vmatpush1.msra.mxu0 %v74
    %395 = vmatprep.subr.mxu0 0.0
    %396 = vmatpush1.msra.mxu0 %v75
    %397 = vmatprep.subr.mxu0 0.0
    %398 = vmatpush1.msra.mxu0 %v76
    %399 = vmatprep.subr.mxu0 0.0
    %400 = vmatpush1.msra.mxu0 0.0
    %401 = vmatprep.subr.mxu0 0.0
    %402 = vmatpush1.msra.mxu0 0.0
    %403 = vmatprep.subr.mxu0 0.0
    %404 = vmatpush1.msra.mxu0 0.0
    %405 = vmatprep.subr.mxu0 0.0
    %406 = vmatpush1.msra.mxu0 0.0
    %407 = vmatprep.subr.mxu0 0.0
    %408 = vmatpush1.msra.mxu0 0.0
    %409 = vmatprep.subr.mxu0 0.0
    %410 = vmatpush1.msra.mxu0 0.0
    %411 = vmatprep.subr.mxu0 0.0
    %412 = vmatpush1.msra.mxu0 0.0
    %413 = vmatprep.subr.mxu0 0.0
    %414 = vmatpush1.msra.mxu0 0.0
    %415 = vmatprep.subr.mxu0 0.0
    %416 = vmatpush1.msra.mxu0 0.0
    %417 = vmatprep.subr.mxu0 0.0
    %418 = vmatpush1.msra.mxu0 0.0
    %419 = vmatprep.subr.mxu0 0.0
    %420 = vmatpush1.msra.mxu0 0.0
    %421 = vmatprep.subr.mxu0 0.0
    %422 = vmatpush1.msra.mxu0 0.0
    %423 = vmatprep.subr.mxu0 0.0
    %424 = vmatpush1.msra.mxu0 0.0
    %425 = vmatprep.subr.mxu0 0.0
    %426 = vmatpush1.msra.mxu0 0.0
    %427 = vmatprep.subr.mxu0 0.0
    %428 = vmatpush1.msra.mxu0 0.0
    %429 = vmatprep.subr.mxu0 0.0
    %430 = vmatpush1.msra.mxu0 0.0
    %431 = vmatprep.subr.mxu0 0.0
    %432 = vmatpush1.msra.mxu0 0.0
    %433 = vmatprep.subr.mxu0 0.0
    %434 = vmatpush1.msra.mxu0 0.0
    %435 = vmatprep.subr.mxu0 0.0
    %436 = vmatpush1.msra.mxu0 0.0
    %437 = vmatprep.subr.mxu0 0.0
    %438 = vmatpush1.msra.mxu0 0.0
    %439 = vmatprep.subr.mxu0 0.0
    %440 = vmatpush1.msra.mxu0 0.0
    %441 = vmatprep.subr.mxu0 0.0
    %442 = vmatpush1.msra.mxu0 0.0
    %443 = vmatprep.mubr.f32.mxu0 0.0
    %444 = vmatmul.mubr.f32.gmra.mrb[0].mxu0 %v347
    %v445 = vpop.f32.mrb[0].mxu0
    %v446 = vadd.f32 %v269, %v445
    %v447 = vpop.f32.mrb[0].mxu0
    %448 = vmatprep.mubr.f32.mxu0 0.0
    %449 = vmatmul.mubr.f32.gmra.mrb[0].mxu0 %v349
    %v450 = vpop.f32.mrb[0].mxu0
    %v451 = vadd.f32 %v274, %v450
    %v452 = vpop.f32.mrb[0].mxu0
    %453 = vmatprep.mubr.f32.mxu0 0.0
    %454 = vmatmul.mubr.f32.gmra.mrb[0].mxu0 %v351
    %v455 = vpop.f32.mrb[0].mxu0
    %v456 = vadd.f32 %v279, %v455
    %v457 = vpop.f32.mrb[0].mxu0
    %458 = vmatprep.mubr.f32.mxu0 0.0
    %459 = vmatmul.mubr.f32.gmra.mrb[0].mxu0 %v353
    %v460 = vpop.f32.mrb[0].mxu0
    %v461 = vadd.f32 %v284, %v460
    %v462 = vpop.f32.mrb[0].mxu0
    %463 = vmatprep.mubr.f32.mxu0 0.0
    %464 = vmatmul.mubr.f32.gmra.mrb[0].mxu0 %v355
    %v465 = vpop.f32.mrb[0].mxu0
    %v466 = vadd.f32 %v289, %v465
    %v467 = vpop.f32.mrb[0].mxu0
    %468 = vmatprep.mubr.f32.mxu0 0.0
    %469 = vmatmul.mubr.f32.gmra.mrb[0].mxu0 %v357
    %v470 = vpop.f32.mrb[0].mxu0
    %v471 = vadd.f32 %v294, %v470
    %v472 = vpop.f32.mrb[0].mxu0
    %473 = vmatprep.mubr.f32.mxu0 0.0
    %474 = vmatmul.mubr.f32.gmra.mrb[0].mxu0 %v359
    %v475 = vpop.f32.mrb[0].mxu0
    %v476 = vadd.f32 %v299, %v475
    %v477 = vpop.f32.mrb[0].mxu0
    %478 = vmatprep.mubr.f32.mxu0 0.0
    %479 = vmatmul.mubr.f32.gmra.mrb[0].mxu0 %v361
    %v480 = vpop.f32.mrb[0].mxu0
    %v481 = vadd.f32 %v304, %v480
    %v482 = vpop.f32.mrb[0].mxu0
    %483 = vmatprep.mubr.f32.mxu0 0.0
    %484 = vmatmul.mubr.f32.gmra.mrb[0].mxu0 %v363
    %v485 = vpop.f32.mrb[0].mxu0
    %v486 = vadd.f32 %v309, %v485
    %v487 = vpop.f32.mrb[0].mxu0
    %488 = vmatprep.mubr.f32.mxu0 0.0
    %489 = vmatmul.mubr.f32.gmra.mrb[0].mxu0 %v365
    %v490 = vpop.f32.mrb[0].mxu0
    %v491 = vadd.f32 %v314, %v490
    %v492 = vpop.f32.mrb[0].mxu0
    %493 = vmatprep.mubr.f32.mxu0 0.0
    %494 = vmatmul.mubr.f32.gmra.mrb[0].mxu0 %v367
    %v495 = vpop.f32.mrb[0].mxu0
    %v496 = vadd.f32 %v319, %v495
    %v497 = vpop.f32.mrb[0].mxu0
    %498 = vmatprep.mubr.f32.mxu0 0.0
    %499 = vmatmul.mubr.f32.gmra.mrb[0].mxu0 %v369
    %v500 = vpop.f32.mrb[0].mxu0
    %v501 = vadd.f32 %v324, %v500
    %v502 = vpop.f32.mrb[0].mxu0
    %503 = vmatprep.mubr.f32.mxu0 0.0
    %504 = vmatmul.mubr.f32.gmra.mrb[0].mxu0 %v371
    %v505 = vpop.f32.mrb[0].mxu0
    %v506 = vadd.f32 %v329, %v505
    %v507 = vpop.f32.mrb[0].mxu0
    %508 = vmatprep.mubr.f32.mxu0 0.0
    %509 = vmatmul.mubr.f32.gmra.mrb[0].mxu0 %v373
    %v510 = vpop.f32.mrb[0].mxu0
    %v511 = vadd.f32 %v334, %v510
    %v512 = vpop.f32.mrb[0].mxu0
    %513 = vmatprep.mubr.f32.mxu0 0.0
    %514 = vmatmul.mubr.f32.gmra.mrb[0].mxu0 %v375
    %v515 = vpop.f32.mrb[0].mxu0
    %v516 = vadd.f32 %v339, %v515
    %v517 = vpop.f32.mrb[0].mxu0
    %518 = vmatprep.mubr.f32.mxu0 0.0
    %519 = vmatmul.mubr.f32.gmra.mrb[0].mxu0 %v377
    %v520 = vpop.f32.mrb[0].mxu0
    %v521 = vadd.f32 %v344, %v520
    %v522 = vpop.f32.mrb[0].mxu0
    %523 = vdwg.mxu0
    %vm524 = vcmask 1045504
    %v525 = vrot.slane %v27, 2
    %v526 = vrot.slane %v28, 2
    %v527 = vsel %vm524, %v525, %v526
    %v528 = vrot.slane %v29, 2
    %v529 = vrot.slane %v30, 2
    %v530 = vsel %vm524, %v528, %v529
    %v531 = vrot.slane %v31, 2
    %v532 = vrot.slane %v32, 2
    %v533 = vsel %vm524, %v531, %v532
    %v534 = vrot.slane %v33, 2
    %v535 = vrot.slane %v34, 2
    %v536 = vsel %vm524, %v534, %v535
    %v537 = vrot.slane %v35, 2
    %v538 = vrot.slane %v36, 2
    %v539 = vsel %vm524, %v537, %v538
    %v540 = vrot.slane %v37, 2
    %v541 = vrot.slane %v38, 2
    %v542 = vsel %vm524, %v540, %v541
    %v543 = vrot.slane %v39, 2
    %v544 = vrot.slane %v40, 2
    %v545 = vsel %vm524, %v543, %v544
    %v546 = vrot.slane %v41, 2
    %v547 = vrot.slane %v42, 2
    %v548 = vsel %vm524, %v546, %v547
    %v549 = vrot.slane %v47, 2
    %v550 = vrot.slane %v48, 2
    %v551 = vsel %vm524, %v549, %v550
    %v552 = vrot.slane %v49, 2
    %v553 = vrot.slane %v50, 2
    %v554 = vsel %vm524, %v552, %v553
    %v555 = vrot.slane %v51, 2
    %v556 = vrot.slane %v52, 2
    %v557 = vsel %vm524, %v555, %v556
    %v558 = vrot.slane %v53, 2
    %v559 = vrot.slane %v54, 2
    %v560 = vsel %vm524, %v558, %v559
    %v561 = vrot.slane %v55, 2
    %v562 = vrot.slane %v56, 2
    %v563 = vsel %vm524, %v561, %v562
    %v564 = vrot.slane %v57, 2
    %v565 = vrot.slane %v58, 2
    %v566 = vsel %vm524, %v564, %v565
    %v567 = vrot.slane %v59, 2
    %v568 = vrot.slane %v60, 2
    %v569 = vsel %vm524, %v567, %v568
    %v570 = vrot.slane %v61, 2
    %v571 = vrot.slane %v62, 2
    %v572 = vsel %vm524, %v570, %v571
    %s573 = scalar_lea.vmem %s1, 160
    %v574 = vld [vmem:[%s573] sm:$0xff]
    %v575 = vld [vmem:[%s573 + $0x8] sm:$0xff]
    %v576 = vld [vmem:[%s573 + $0x10] sm:$0xff]
    %v577 = vld [vmem:[%s573 + $0x18] sm:$0xff]
    %v578 = vld [vmem:[%s573 + $0x20] sm:$0xff]
    %v579 = vld [vmem:[%s573 + $0x28] sm:$0xff]
    %v580 = vld [vmem:[%s573 + $0x30] sm:$0xff]
    %v581 = vld [vmem:[%s573 + $0x38] sm:$0xff]
    %v582 = vld [vmem:[%s573 + $0x40] sm:$0xff]
    %v583 = vld [vmem:[%s573 + $0x48] sm:$0xff]
    %v584 = vsel %vm169, %v527, 0
    %v586 = vsel %vm169, %v530, 0
    %v588 = vsel %vm169, %v533, 0
    %v590 = vsel %vm169, %v536, 0
    %v592 = vsel %vm169, %v539, 0
    %v594 = vsel %vm169, %v542, 0
    %v596 = vsel %vm169, %v545, 0
    %v598 = vsel %vm169, %v548, 0
    %v600 = vsel %vm169, %v551, 0
    %v602 = vsel %vm169, %v554, 0
    %v604 = vsel %vm169, %v557, 0
    %v606 = vsel %vm169, %v560, 0
    %v608 = vsel %vm169, %v563, 0
    %v610 = vsel %vm169, %v566, 0
    %v612 = vsel %vm169, %v569, 0
    %v614 = vsel %vm169, %v572, 0
    %616 = vmatprep.subr.mxu0 0.0
    %617 = vmatpush1.msra.mxu0 %v574
    %618 = vmatprep.subr.mxu0 0.0
    %619 = vmatpush1.msra.mxu0 %v575
    %620 = vmatprep.subr.mxu0 0.0
    %621 = vmatpush1.msra.mxu0 %v576
    %622 = vmatprep.subr.mxu0 0.0
    %623 = vmatpush1.msra.mxu0 %v577
    %624 = vmatprep.subr.mxu0 0.0
    %625 = vmatpush1.msra.mxu0 %v578
    %626 = vmatprep.subr.mxu0 0.0
    %627 = vmatpush1.msra.mxu0 %v579
    %628 = vmatprep.subr.mxu0 0.0
    %629 = vmatpush1.msra.mxu0 %v580
    %630 = vmatprep.subr.mxu0 0.0
    %631 = vmatpush1.msra.mxu0 %v581
    %632 = vmatprep.subr.mxu0 0.0
    %633 = vmatpush1.msra.mxu0 %v582
    %634 = vmatprep.subr.mxu0 0.0
    %635 = vmatpush1.msra.mxu0 %v583
    %636 = vmatprep.subr.mxu0 0.0
    %637 = vmatpush1.msra.mxu0 0.0
    %638 = vmatprep.subr.mxu0 0.0
    %639 = vmatpush1.msra.mxu0 0.0
    %640 = vmatprep.subr.mxu0 0.0
    %641 = vmatpush1.msra.mxu0 0.0
    %642 = vmatprep.subr.mxu0 0.0
    %643 = vmatpush1.msra.mxu0 0.0
    %644 = vmatprep.subr.mxu0 0.0
    %645 = vmatpush1.msra.mxu0 0.0
    %646 = vmatprep.subr.mxu0 0.0
    %647 = vmatpush1.msra.mxu0 0.0
    %648 = vmatprep.subr.mxu0 0.0
    %649 = vmatpush1.msra.mxu0 0.0
    %650 = vmatprep.subr.mxu0 0.0
    %651 = vmatpush1.msra.mxu0 0.0
    %652 = vmatprep.subr.mxu0 0.0
    %653 = vmatpush1.msra.mxu0 0.0
    %654 = vmatprep.subr.mxu0 0.0
    %655 = vmatpush1.msra.mxu0 0.0
    %656 = vmatprep.subr.mxu0 0.0
    %657 = vmatpush1.msra.mxu0 0.0
    %658 = vmatprep.subr.mxu0 0.0
    %659 = vmatpush1.msra.mxu0 0.0
    %660 = vmatprep.subr.mxu0 0.0
    %661 = vmatpush1.msra.mxu0 0.0
    %662 = vmatprep.subr.mxu0 0.0
    %663 = vmatpush1.msra.mxu0 0.0
    %664 = vmatprep.subr.mxu0 0.0
    %665 = vmatpush1.msra.mxu0 0.0
    %666 = vmatprep.subr.mxu0 0.0
    %667 = vmatpush1.msra.mxu0 0.0
    %668 = vmatprep.subr.mxu0 0.0
    %669 = vmatpush1.msra.mxu0 0.0
    %670 = vmatprep.subr.mxu0 0.0
    %671 = vmatpush1.msra.mxu0 0.0
    %672 = vmatprep.subr.mxu0 0.0
    %673 = vmatpush1.msra.mxu0 0.0
    %674 = vmatprep.subr.mxu0 0.0
    %675 = vmatpush1.msra.mxu0 0.0
    %676 = vmatprep.subr.mxu0 0.0
    %677 = vmatpush1.msra.mxu0 0.0
    %678 = vmatprep.subr.mxu0 0.0
    %679 = vmatpush1.msra.mxu0 0.0
    %680 = vmatprep.mubr.f32.mxu0 0.0
    %681 = vmatmul.mubr.f32.gmra.mrb[0].mxu0 %v584
    %v682 = vpop.f32.mrb[0].mxu0
    %v683 = vadd.f32 0.0, %v682
    %v684 = vpop.f32.mrb[0].mxu0
    %685 = vmatprep.mubr.f32.mxu0 0.0
    %686 = vmatmul.mubr.f32.gmra.mrb[0].mxu0 %v586
    %v687 = vpop.f32.mrb[0].mxu0
    %v688 = vadd.f32 0.0, %v687
    %v689 = vpop.f32.mrb[0].mxu0
    %690 = vmatprep.mubr.f32.mxu0 0.0
    %691 = vmatmul.mubr.f32.gmra.mrb[0].mxu0 %v588
    %v692 = vpop.f32.mrb[0].mxu0
    %v693 = vadd.f32 0.0, %v692
    %v694 = vpop.f32.mrb[0].mxu0
    %695 = vmatprep.mubr.f32.mxu0 0.0
    %696 = vmatmul.mubr.f32.gmra.mrb[0].mxu0 %v590
    %v697 = vpop.f32.mrb[0].mxu0
    %v698 = vadd.f32 0.0, %v697
    %v699 = vpop.f32.mrb[0].mxu0
    %700 = vmatprep.mubr.f32.mxu0 0.0
    %701 = vmatmul.mubr.f32.gmra.mrb[0].mxu0 %v592
    %v702 = vpop.f32.mrb[0].mxu0
    %v703 = vadd.f32 0.0, %v702
    %v704 = vpop.f32.mrb[0].mxu0
    %705 = vmatprep.mubr.f32.mxu0 0.0
    %706 = vmatmul.mubr.f32.gmra.mrb[0].mxu0 %v594
    %v707 = vpop.f32.mrb[0].mxu0
    %v708 = vadd.f32 0.0, %v707
    %v709 = vpop.f32.mrb[0].mxu0
    %710 = vmatprep.mubr.f32.mxu0 0.0
    %711 = vmatmul.mubr.f32.gmra.mrb[0].mxu0 %v596
    %v712 = vpop.f32.mrb[0].mxu0
    %v713 = vadd.f32 0.0, %v712
    %v714 = vpop.f32.mrb[0].mxu0
    %715 = vmatprep.mubr.f32.mxu0 0.0
    %716 = vmatmul.mubr.f32.gmra.mrb[0].mxu0 %v598
    %v717 = vpop.f32.mrb[0].mxu0
    %v718 = vadd.f32 0.0, %v717
    %v719 = vpop.f32.mrb[0].mxu0
    %720 = vmatprep.mubr.f32.mxu0 0.0
    %721 = vmatmul.mubr.f32.gmra.mrb[0].mxu0 %v600
    %v722 = vpop.f32.mrb[0].mxu0
    %v723 = vadd.f32 0.0, %v722
    %v724 = vpop.f32.mrb[0].mxu0
    %725 = vmatprep.mubr.f32.mxu0 0.0
    %726 = vmatmul.mubr.f32.gmra.mrb[0].mxu0 %v602
    %v727 = vpop.f32.mrb[0].mxu0
    %v728 = vadd.f32 0.0, %v727
    %v729 = vpop.f32.mrb[0].mxu0
    %730 = vmatprep.mubr.f32.mxu0 0.0
    %731 = vmatmul.mubr.f32.gmra.mrb[0].mxu0 %v604
    %v732 = vpop.f32.mrb[0].mxu0
    %v733 = vadd.f32 0.0, %v732
    %v734 = vpop.f32.mrb[0].mxu0
    %735 = vmatprep.mubr.f32.mxu0 0.0
    %736 = vmatmul.mubr.f32.gmra.mrb[0].mxu0 %v606
    %v737 = vpop.f32.mrb[0].mxu0
    %v738 = vadd.f32 0.0, %v737
    %v739 = vpop.f32.mrb[0].mxu0
    %740 = vmatprep.mubr.f32.mxu0 0.0
    %741 = vmatmul.mubr.f32.gmra.mrb[0].mxu0 %v608
    %v742 = vpop.f32.mrb[0].mxu0
    %v743 = vadd.f32 0.0, %v742
    %v744 = vpop.f32.mrb[0].mxu0
    %745 = vmatprep.mubr.f32.mxu0 0.0
    %746 = vmatmul.mubr.f32.gmra.mrb[0].mxu0 %v610
    %v747 = vpop.f32.mrb[0].mxu0
    %v748 = vadd.f32 0.0, %v747
    %v749 = vpop.f32.mrb[0].mxu0
    %750 = vmatprep.mubr.f32.mxu0 0.0
    %751 = vmatmul.mubr.f32.gmra.mrb[0].mxu0 %v612
    %v752 = vpop.f32.mrb[0].mxu0
    %v753 = vadd.f32 0.0, %v752
    %v754 = vpop.f32.mrb[0].mxu0
    %755 = vmatprep.mubr.f32.mxu0 0.0
    %756 = vmatmul.mubr.f32.gmra.mrb[0].mxu0 %v614
    %v757 = vpop.f32.mrb[0].mxu0
    %v758 = vadd.f32 0.0, %v757
    %v759 = vpop.f32.mrb[0].mxu0
    %760 = vdwg.mxu0
    %v761 = vadd.f32 %v446, %v683
    %v762 = vadd.f32 %v451, %v688
    %v763 = vadd.f32 %v456, %v693
    %v764 = vadd.f32 %v461, %v698
    %v765 = vadd.f32 %v466, %v703
    %v766 = vadd.f32 %v471, %v708
    %v767 = vadd.f32 %v476, %v713
    %v768 = vadd.f32 %v481, %v718
    %v769 = vadd.f32 %v486, %v723
    %v770 = vadd.f32 %v491, %v728
    %v771 = vadd.f32 %v496, %v733
    %v772 = vadd.f32 %v501, %v738
    %v773 = vadd.f32 %v506, %v743
    %v774 = vadd.f32 %v511, %v748
    %v775 = vadd.f32 %v516, %v753
    %v776 = vadd.f32 %v521, %v758
    %s777 = scalar_lea.vmem %s1, 240
    %v778 = vld [vmem:[%s777] sm:$0xff]
    %v779 = vld [vmem:[%s777 + $0x8] sm:$0xff]
    %v780 = vld [vmem:[%s777 + $0x10] sm:$0xff]
    %v781 = vld [vmem:[%s777 + $0x18] sm:$0xff]
    %v782 = vld [vmem:[%s777 + $0x20] sm:$0xff]
    %v783 = vld [vmem:[%s777 + $0x28] sm:$0xff]
    %v784 = vld [vmem:[%s777 + $0x30] sm:$0xff]
    %v785 = vld [vmem:[%s777 + $0x38] sm:$0xff]
    %v786 = vld [vmem:[%s777 + $0x40] sm:$0xff]
    %v787 = vld [vmem:[%s777 + $0x48] sm:$0xff]
    %v789 = vsel %vm169, %v43, 0
    %v792 = vsel %vm169, %v63, 0
    %794 = vmatprep.subr.mxu0 0.0
    %795 = vmatpush1.msra.mxu0 %v778
    %796 = vmatprep.subr.mxu0 0.0
    %797 = vmatpush1.msra.mxu0 %v779
    %798 = vmatprep.subr.mxu0 0.0
    %799 = vmatpush1.msra.mxu0 %v780
    %800 = vmatprep.subr.mxu0 0.0
    %801 = vmatpush1.msra.mxu0 %v781
    %802 = vmatprep.subr.mxu0 0.0
    %803 = vmatpush1.msra.mxu0 %v782
    %804 = vmatprep.subr.mxu0 0.0
    %805 = vmatpush1.msra.mxu0 %v783
    %806 = vmatprep.subr.mxu0 0.0
    %807 = vmatpush1.msra.mxu0 %v784
    %808 = vmatprep.subr.mxu0 0.0
    %809 = vmatpush1.msra.mxu0 %v785
    %810 = vmatprep.subr.mxu0 0.0
    %811 = vmatpush1.msra.mxu0 %v786
    %812 = vmatprep.subr.mxu0 0.0
    %813 = vmatpush1.msra.mxu0 %v787
    %814 = vmatprep.subr.mxu0 0.0
    %815 = vmatpush1.msra.mxu0 0.0
    %816 = vmatprep.subr.mxu0 0.0
    %817 = vmatpush1.msra.mxu0 0.0
    %818 = vmatprep.subr.mxu0 0.0
    %819 = vmatpush1.msra.mxu0 0.0
    %820 = vmatprep.subr.mxu0 0.0
    %821 = vmatpush1.msra.mxu0 0.0
    %822 = vmatprep.subr.mxu0 0.0
    %823 = vmatpush1.msra.mxu0 0.0
    %824 = vmatprep.subr.mxu0 0.0
    %825 = vmatpush1.msra.mxu0 0.0
    %826 = vmatprep.subr.mxu0 0.0
    %827 = vmatpush1.msra.mxu0 0.0
    %828 = vmatprep.subr.mxu0 0.0
    %829 = vmatpush1.msra.mxu0 0.0
    %830 = vmatprep.subr.mxu0 0.0
    %831 = vmatpush1.msra.mxu0 0.0
    %832 = vmatprep.subr.mxu0 0.0
    %833 = vmatpush1.msra.mxu0 0.0
    %834 = vmatprep.subr.mxu0 0.0
    %835 = vmatpush1.msra.mxu0 0.0
    %836 = vmatprep.subr.mxu0 0.0
    %837 = vmatpush1.msra.mxu0 0.0
    %838 = vmatprep.subr.mxu0 0.0
    %839 = vmatpush1.msra.mxu0 0.0
    %840 = vmatprep.subr.mxu0 0.0
    %841 = vmatpush1.msra.mxu0 0.0
    %842 = vmatprep.subr.mxu0 0.0
    %843 = vmatpush1.msra.mxu0 0.0
    %844 = vmatprep.subr.mxu0 0.0
    %845 = vmatpush1.msra.mxu0 0.0
    %846 = vmatprep.subr.mxu0 0.0
    %847 = vmatpush1.msra.mxu0 0.0
    %848 = vmatprep.subr.mxu0 0.0
    %849 = vmatpush1.msra.mxu0 0.0
    %850 = vmatprep.subr.mxu0 0.0
    %851 = vmatpush1.msra.mxu0 0.0
    %852 = vmatprep.subr.mxu0 0.0
    %853 = vmatpush1.msra.mxu0 0.0
    %854 = vmatprep.subr.mxu0 0.0
    %855 = vmatpush1.msra.mxu0 0.0
    %856 = vmatprep.subr.mxu0 0.0
    %857 = vmatpush1.msra.mxu0 0.0
    %858 = vmatprep.mubr.f32.mxu0 0.0
    %859 = vmatmul.mubr.f32.gmra.mrb[0].mxu0 %v349
    %v860 = vpop.f32.mrb[0].mxu0
    %v861 = vadd.f32 0.0, %v860
    %v862 = vpop.f32.mrb[0].mxu0
    %863 = vmatprep.mubr.f32.mxu0 0.0
    %864 = vmatmul.mubr.f32.gmra.mrb[0].mxu0 %v351
    %v865 = vpop.f32.mrb[0].mxu0
    %v866 = vadd.f32 0.0, %v865
    %v867 = vpop.f32.mrb[0].mxu0
    %868 = vmatprep.mubr.f32.mxu0 0.0
    %869 = vmatmul.mubr.f32.gmra.mrb[0].mxu0 %v353
    %v870 = vpop.f32.mrb[0].mxu0
    %v871 = vadd.f32 0.0, %v870
    %v872 = vpop.f32.mrb[0].mxu0
    %873 = vmatprep.mubr.f32.mxu0 0.0
    %874 = vmatmul.mubr.f32.gmra.mrb[0].mxu0 %v355
    %v875 = vpop.f32.mrb[0].mxu0
    %v876 = vadd.f32 0.0, %v875
    %v877 = vpop.f32.mrb[0].mxu0
    %878 = vmatprep.mubr.f32.mxu0 0.0
    %879 = vmatmul.mubr.f32.gmra.mrb[0].mxu0 %v357
    %v880 = vpop.f32.mrb[0].mxu0
    %v881 = vadd.f32 0.0, %v880
    %v882 = vpop.f32.mrb[0].mxu0
    %883 = vmatprep.mubr.f32.mxu0 0.0
    %884 = vmatmul.mubr.f32.gmra.mrb[0].mxu0 %v359
    %v885 = vpop.f32.mrb[0].mxu0
    %v886 = vadd.f32 0.0, %v885
    %v887 = vpop.f32.mrb[0].mxu0
    %888 = vmatprep.mubr.f32.mxu0 0.0
    %889 = vmatmul.mubr.f32.gmra.mrb[0].mxu0 %v361
    %v890 = vpop.f32.mrb[0].mxu0
    %v891 = vadd.f32 0.0, %v890
    %v892 = vpop.f32.mrb[0].mxu0
    %893 = vmatprep.mubr.f32.mxu0 0.0
    %894 = vmatmul.mubr.f32.gmra.mrb[0].mxu0 %v789
    %v895 = vpop.f32.mrb[0].mxu0
    %v896 = vadd.f32 0.0, %v895
    %v897 = vpop.f32.mrb[0].mxu0
    %898 = vmatprep.mubr.f32.mxu0 0.0
    %899 = vmatmul.mubr.f32.gmra.mrb[0].mxu0 %v365
    %v900 = vpop.f32.mrb[0].mxu0
    %v901 = vadd.f32 0.0, %v900
    %v902 = vpop.f32.mrb[0].mxu0
    %903 = vmatprep.mubr.f32.mxu0 0.0
    %904 = vmatmul.mubr.f32.gmra.mrb[0].mxu0 %v367
    %v905 = vpop.f32.mrb[0].mxu0
    %v906 = vadd.f32 0.0, %v905
    %v907 = vpop.f32.mrb[0].mxu0
    %908 = vmatprep.mubr.f32.mxu0 0.0
    %909 = vmatmul.mubr.f32.gmra.mrb[0].mxu0 %v369
    %v910 = vpop.f32.mrb[0].mxu0
    %v911 = vadd.f32 0.0, %v910
    %v912 = vpop.f32.mrb[0].mxu0
    %913 = vmatprep.mubr.f32.mxu0 0.0
    %914 = vmatmul.mubr.f32.gmra.mrb[0].mxu0 %v371
    %v915 = vpop.f32.mrb[0].mxu0
    %v916 = vadd.f32 0.0, %v915
    %v917 = vpop.f32.mrb[0].mxu0
    %918 = vmatprep.mubr.f32.mxu0 0.0
    %919 = vmatmul.mubr.f32.gmra.mrb[0].mxu0 %v373
    %v920 = vpop.f32.mrb[0].mxu0
    %v921 = vadd.f32 0.0, %v920
    %v922 = vpop.f32.mrb[0].mxu0
    %923 = vmatprep.mubr.f32.mxu0 0.0
    %924 = vmatmul.mubr.f32.gmra.mrb[0].mxu0 %v375
    %v925 = vpop.f32.mrb[0].mxu0
    %v926 = vadd.f32 0.0, %v925
    %v927 = vpop.f32.mrb[0].mxu0
    %928 = vmatprep.mubr.f32.mxu0 0.0
    %929 = vmatmul.mubr.f32.gmra.mrb[0].mxu0 %v377
    %v930 = vpop.f32.mrb[0].mxu0
    %v931 = vadd.f32 0.0, %v930
    %v932 = vpop.f32.mrb[0].mxu0
    %933 = vmatprep.mubr.f32.mxu0 0.0
    %934 = vmatmul.mubr.f32.gmra.mrb[0].mxu0 %v792
    %v935 = vpop.f32.mrb[0].mxu0
    %v936 = vadd.f32 0.0, %v935
    %v937 = vpop.f32.mrb[0].mxu0
    %938 = vdwg.mxu0
    %v939 = vadd.f32 %v761, %v861
    %v940 = vadd.f32 %v762, %v866
    %v941 = vadd.f32 %v763, %v871
    %v942 = vadd.f32 %v764, %v876
    %v943 = vadd.f32 %v765, %v881
    %v944 = vadd.f32 %v766, %v886
    %v945 = vadd.f32 %v767, %v891
    %v946 = vadd.f32 %v768, %v896
    %v947 = vadd.f32 %v769, %v901
    %v948 = vadd.f32 %v770, %v906
    %v949 = vadd.f32 %v771, %v911
    %v950 = vadd.f32 %v772, %v916
    %v951 = vadd.f32 %v773, %v921
    %v952 = vadd.f32 %v774, %v926
    %v953 = vadd.f32 %v775, %v931
    %v954 = vadd.f32 %v776, %v936
    %v957 = vrot.slane %v43, 1
    %v958 = vrot.slane %v44, 1
    %v959 = vsel %vm109, %v957, %v958
    %v960 = vrot.slane %v63, 1
    %v961 = vrot.slane %v64, 1
    %v962 = vsel %vm109, %v960, %v961
    %s963 = scalar_lea.vmem %s1, 320
    %v964 = vld [vmem:[%s963] sm:$0xff]
    %v965 = vld [vmem:[%s963 + $0x8] sm:$0xff]
    %v966 = vld [vmem:[%s963 + $0x10] sm:$0xff]
    %v967 = vld [vmem:[%s963 + $0x18] sm:$0xff]
    %v968 = vld [vmem:[%s963 + $0x20] sm:$0xff]
    %v969 = vld [vmem:[%s963 + $0x28] sm:$0xff]
    %v970 = vld [vmem:[%s963 + $0x30] sm:$0xff]
    %v971 = vld [vmem:[%s963 + $0x38] sm:$0xff]
    %v972 = vld [vmem:[%s963 + $0x40] sm:$0xff]
    %v973 = vld [vmem:[%s963 + $0x48] sm:$0xff]
    %v974 = vsel %vm169, %v959, 0
    %v976 = vsel %vm169, %v962, 0
    %978 = vmatprep.subr.mxu0 0.0
    %979 = vmatpush1.msra.mxu0 %v964
    %980 = vmatprep.subr.mxu0 0.0
    %981 = vmatpush1.msra.mxu0 %v965
    %982 = vmatprep.subr.mxu0 0.0
    %983 = vmatpush1.msra.mxu0 %v966
    %984 = vmatprep.subr.mxu0 0.0
    %985 = vmatpush1.msra.mxu0 %v967
    %986 = vmatprep.subr.mxu0 0.0
    %987 = vmatpush1.msra.mxu0 %v968
    %988 = vmatprep.subr.mxu0 0.0
    %989 = vmatpush1.msra.mxu0 %v969
    %990 = vmatprep.subr.mxu0 0.0
    %991 = vmatpush1.msra.mxu0 %v970
    %992 = vmatprep.subr.mxu0 0.0
    %993 = vmatpush1.msra.mxu0 %v971
    %994 = vmatprep.subr.mxu0 0.0
    %995 = vmatpush1.msra.mxu0 %v972
    %996 = vmatprep.subr.mxu0 0.0
    %997 = vmatpush1.msra.mxu0 %v973
    %998 = vmatprep.subr.mxu0 0.0
    %999 = vmatpush1.msra.mxu0 0.0
    %1000 = vmatprep.subr.mxu0 0.0
    %1001 = vmatpush1.msra.mxu0 0.0
    %1002 = vmatprep.subr.mxu0 0.0
    %1003 = vmatpush1.msra.mxu0 0.0
    %1004 = vmatprep.subr.mxu0 0.0
    %1005 = vmatpush1.msra.mxu0 0.0
    %1006 = vmatprep.subr.mxu0 0.0
    %1007 = vmatpush1.msra.mxu0 0.0
    %1008 = vmatprep.subr.mxu0 0.0
    %1009 = vmatpush1.msra.mxu0 0.0
    %1010 = vmatprep.subr.mxu0 0.0
    %1011 = vmatpush1.msra.mxu0 0.0
    %1012 = vmatprep.subr.mxu0 0.0
    %1013 = vmatpush1.msra.mxu0 0.0
    %1014 = vmatprep.subr.mxu0 0.0
    %1015 = vmatpush1.msra.mxu0 0.0
    %1016 = vmatprep.subr.mxu0 0.0
    %1017 = vmatpush1.msra.mxu0 0.0
    %1018 = vmatprep.subr.mxu0 0.0
    %1019 = vmatpush1.msra.mxu0 0.0
    %1020 = vmatprep.subr.mxu0 0.0
    %1021 = vmatpush1.msra.mxu0 0.0
    %1022 = vmatprep.subr.mxu0 0.0
    %1023 = vmatpush1.msra.mxu0 0.0
    %1024 = vmatprep.subr.mxu0 0.0
    %1025 = vmatpush1.msra.mxu0 0.0
    %1026 = vmatprep.subr.mxu0 0.0
    %1027 = vmatpush1.msra.mxu0 0.0
    %1028 = vmatprep.subr.mxu0 0.0
    %1029 = vmatpush1.msra.mxu0 0.0
    %1030 = vmatprep.subr.mxu0 0.0
    %1031 = vmatpush1.msra.mxu0 0.0
    %1032 = vmatprep.subr.mxu0 0.0
    %1033 = vmatpush1.msra.mxu0 0.0
    %1034 = vmatprep.subr.mxu0 0.0
    %1035 = vmatpush1.msra.mxu0 0.0
    %1036 = vmatprep.subr.mxu0 0.0
    %1037 = vmatpush1.msra.mxu0 0.0
    %1038 = vmatprep.subr.mxu0 0.0
    %1039 = vmatpush1.msra.mxu0 0.0
    %1040 = vmatprep.subr.mxu0 0.0
    %1041 = vmatpush1.msra.mxu0 0.0
    %1042 = vmatprep.mubr.f32.mxu0 0.0
    %1043 = vmatmul.mubr.f32.gmra.mrb[0].mxu0 %v172
    %v1044 = vpop.f32.mrb[0].mxu0
    %v1045 = vadd.f32 0.0, %v1044
    %v1046 = vpop.f32.mrb[0].mxu0
    %1047 = vmatprep.mubr.f32.mxu0 0.0
    %1048 = vmatmul.mubr.f32.gmra.mrb[0].mxu0 %v174
    %v1049 = vpop.f32.mrb[0].mxu0
    %v1050 = vadd.f32 0.0, %v1049
    %v1051 = vpop.f32.mrb[0].mxu0
    %1052 = vmatprep.mubr.f32.mxu0 0.0
    %1053 = vmatmul.mubr.f32.gmra.mrb[0].mxu0 %v176
    %v1054 = vpop.f32.mrb[0].mxu0
    %v1055 = vadd.f32 0.0, %v1054
    %v1056 = vpop.f32.mrb[0].mxu0
    %1057 = vmatprep.mubr.f32.mxu0 0.0
    %1058 = vmatmul.mubr.f32.gmra.mrb[0].mxu0 %v178
    %v1059 = vpop.f32.mrb[0].mxu0
    %v1060 = vadd.f32 0.0, %v1059
    %v1061 = vpop.f32.mrb[0].mxu0
    %1062 = vmatprep.mubr.f32.mxu0 0.0
    %1063 = vmatmul.mubr.f32.gmra.mrb[0].mxu0 %v180
    %v1064 = vpop.f32.mrb[0].mxu0
    %v1065 = vadd.f32 0.0, %v1064
    %v1066 = vpop.f32.mrb[0].mxu0
    %1067 = vmatprep.mubr.f32.mxu0 0.0
    %1068 = vmatmul.mubr.f32.gmra.mrb[0].mxu0 %v182
    %v1069 = vpop.f32.mrb[0].mxu0
    %v1070 = vadd.f32 0.0, %v1069
    %v1071 = vpop.f32.mrb[0].mxu0
    %1072 = vmatprep.mubr.f32.mxu0 0.0
    %1073 = vmatmul.mubr.f32.gmra.mrb[0].mxu0 %v184
    %v1074 = vpop.f32.mrb[0].mxu0
    %v1075 = vadd.f32 0.0, %v1074
    %v1076 = vpop.f32.mrb[0].mxu0
    %1077 = vmatprep.mubr.f32.mxu0 0.0
    %1078 = vmatmul.mubr.f32.gmra.mrb[0].mxu0 %v974
    %v1079 = vpop.f32.mrb[0].mxu0
    %v1080 = vadd.f32 0.0, %v1079
    %v1081 = vpop.f32.mrb[0].mxu0
    %1082 = vmatprep.mubr.f32.mxu0 0.0
    %1083 = vmatmul.mubr.f32.gmra.mrb[0].mxu0 %v188
    %v1084 = vpop.f32.mrb[0].mxu0
    %v1085 = vadd.f32 0.0, %v1084
    %v1086 = vpop.f32.mrb[0].mxu0
    %1087 = vmatprep.mubr.f32.mxu0 0.0
    %1088 = vmatmul.mubr.f32.gmra.mrb[0].mxu0 %v190
    %v1089 = vpop.f32.mrb[0].mxu0
    %v1090 = vadd.f32 0.0, %v1089
    %v1091 = vpop.f32.mrb[0].mxu0
    %1092 = vmatprep.mubr.f32.mxu0 0.0
    %1093 = vmatmul.mubr.f32.gmra.mrb[0].mxu0 %v192
    %v1094 = vpop.f32.mrb[0].mxu0
    %v1095 = vadd.f32 0.0, %v1094
    %v1096 = vpop.f32.mrb[0].mxu0
    %1097 = vmatprep.mubr.f32.mxu0 0.0
    %1098 = vmatmul.mubr.f32.gmra.mrb[0].mxu0 %v194
    %v1099 = vpop.f32.mrb[0].mxu0
    %v1100 = vadd.f32 0.0, %v1099
    %v1101 = vpop.f32.mrb[0].mxu0
    %1102 = vmatprep.mubr.f32.mxu0 0.0
    %1103 = vmatmul.mubr.f32.gmra.mrb[0].mxu0 %v196
    %v1104 = vpop.f32.mrb[0].mxu0
    %v1105 = vadd.f32 0.0, %v1104
    %v1106 = vpop.f32.mrb[0].mxu0
    %1107 = vmatprep.mubr.f32.mxu0 0.0
    %1108 = vmatmul.mubr.f32.gmra.mrb[0].mxu0 %v198
    %v1109 = vpop.f32.mrb[0].mxu0
    %v1110 = vadd.f32 0.0, %v1109
    %v1111 = vpop.f32.mrb[0].mxu0
    %1112 = vmatprep.mubr.f32.mxu0 0.0
    %1113 = vmatmul.mubr.f32.gmra.mrb[0].mxu0 %v200
    %v1114 = vpop.f32.mrb[0].mxu0
    %v1115 = vadd.f32 0.0, %v1114
    %v1116 = vpop.f32.mrb[0].mxu0
    %1117 = vmatprep.mubr.f32.mxu0 0.0
    %1118 = vmatmul.mubr.f32.gmra.mrb[0].mxu0 %v976
    %v1119 = vpop.f32.mrb[0].mxu0
    %v1120 = vadd.f32 0.0, %v1119
    %v1121 = vpop.f32.mrb[0].mxu0
    %1122 = vdwg.mxu0
    %v1123 = vadd.f32 %v939, %v1045
    %v1124 = vadd.f32 %v940, %v1050
    %v1125 = vadd.f32 %v941, %v1055
    %v1126 = vadd.f32 %v942, %v1060
    %v1127 = vadd.f32 %v943, %v1065
    %v1128 = vadd.f32 %v944, %v1070
    %v1129 = vadd.f32 %v945, %v1075
    %v1130 = vadd.f32 %v946, %v1080
    %v1131 = vadd.f32 %v947, %v1085
    %v1132 = vadd.f32 %v948, %v1090
    %v1133 = vadd.f32 %v949, %v1095
    %v1134 = vadd.f32 %v950, %v1100
    %v1135 = vadd.f32 %v951, %v1105
    %v1136 = vadd.f32 %v952, %v1110
    %v1137 = vadd.f32 %v953, %v1115
    %v1138 = vadd.f32 %v954, %v1120
    %v1139 = vrot.slane %v43, 2
    %v1140 = vrot.slane %v44, 2
    %v1141 = vsel %vm524, %v1139, %v1140
    %v1142 = vrot.slane %v63, 2
    %v1143 = vrot.slane %v64, 2
    %v1144 = vsel %vm524, %v1142, %v1143
    %s1145 = scalar_lea.vmem %s1, 400
    %v1146 = vld [vmem:[%s1145] sm:$0xff]
    %v1147 = vld [vmem:[%s1145 + $0x8] sm:$0xff]
    %v1148 = vld [vmem:[%s1145 + $0x10] sm:$0xff]
    %v1149 = vld [vmem:[%s1145 + $0x18] sm:$0xff]
    %v1150 = vld [vmem:[%s1145 + $0x20] sm:$0xff]
    %v1151 = vld [vmem:[%s1145 + $0x28] sm:$0xff]
    %v1152 = vld [vmem:[%s1145 + $0x30] sm:$0xff]
    %v1153 = vld [vmem:[%s1145 + $0x38] sm:$0xff]
    %v1154 = vld [vmem:[%s1145 + $0x40] sm:$0xff]
    %v1155 = vld [vmem:[%s1145 + $0x48] sm:$0xff]
    %v1156 = vsel %vm169, %v1141, 0
    %v1158 = vsel %vm169, %v1144, 0
    %1160 = vmatprep.subr.mxu0 0.0
    %1161 = vmatpush1.msra.mxu0 %v1146
    %1162 = vmatprep.subr.mxu0 0.0
    %1163 = vmatpush1.msra.mxu0 %v1147
    %1164 = vmatprep.subr.mxu0 0.0
    %1165 = vmatpush1.msra.mxu0 %v1148
    %1166 = vmatprep.subr.mxu0 0.0
    %1167 = vmatpush1.msra.mxu0 %v1149
    %1168 = vmatprep.subr.mxu0 0.0
    %1169 = vmatpush1.msra.mxu0 %v1150
    %1170 = vmatprep.subr.mxu0 0.0
    %1171 = vmatpush1.msra.mxu0 %v1151
    %1172 = vmatprep.subr.mxu0 0.0
    %1173 = vmatpush1.msra.mxu0 %v1152
    %1174 = vmatprep.subr.mxu0 0.0
    %1175 = vmatpush1.msra.mxu0 %v1153
    %1176 = vmatprep.subr.mxu0 0.0
    %1177 = vmatpush1.msra.mxu0 %v1154
    %1178 = vmatprep.subr.mxu0 0.0
    %1179 = vmatpush1.msra.mxu0 %v1155
    %1180 = vmatprep.subr.mxu0 0.0
    %1181 = vmatpush1.msra.mxu0 0.0
    %1182 = vmatprep.subr.mxu0 0.0
    %1183 = vmatpush1.msra.mxu0 0.0
    %1184 = vmatprep.subr.mxu0 0.0
    %1185 = vmatpush1.msra.mxu0 0.0
    %1186 = vmatprep.subr.mxu0 0.0
    %1187 = vmatpush1.msra.mxu0 0.0
    %1188 = vmatprep.subr.mxu0 0.0
    %1189 = vmatpush1.msra.mxu0 0.0
    %1190 = vmatprep.subr.mxu0 0.0
    %1191 = vmatpush1.msra.mxu0 0.0
    %1192 = vmatprep.subr.mxu0 0.0
    %1193 = vmatpush1.msra.mxu0 0.0
    %1194 = vmatprep.subr.mxu0 0.0
    %1195 = vmatpush1.msra.mxu0 0.0
    %1196 = vmatprep.subr.mxu0 0.0
    %1197 = vmatpush1.msra.mxu0 0.0
    %1198 = vmatprep.subr.mxu0 0.0
    %1199 = vmatpush1.msra.mxu0 0.0
    %1200 = vmatprep.subr.mxu0 0.0
    %1201 = vmatpush1.msra.mxu0 0.0
    %1202 = vmatprep.subr.mxu0 0.0
    %1203 = vmatpush1.msra.mxu0 0.0
    %1204 = vmatprep.subr.mxu0 0.0
    %1205 = vmatpush1.msra.mxu0 0.0
    %1206 = vmatprep.subr.mxu0 0.0
    %1207 = vmatpush1.msra.mxu0 0.0
    %1208 = vmatprep.subr.mxu0 0.0
    %1209 = vmatpush1.msra.mxu0 0.0
    %1210 = vmatprep.subr.mxu0 0.0
    %1211 = vmatpush1.msra.mxu0 0.0
    %1212 = vmatprep.subr.mxu0 0.0
    %1213 = vmatpush1.msra.mxu0 0.0
    %1214 = vmatprep.subr.mxu0 0.0
    %1215 = vmatpush1.msra.mxu0 0.0
    %1216 = vmatprep.subr.mxu0 0.0
    %1217 = vmatpush1.msra.mxu0 0.0
    %1218 = vmatprep.subr.mxu0 0.0
    %1219 = vmatpush1.msra.mxu0 0.0
    %1220 = vmatprep.subr.mxu0 0.0
    %1221 = vmatpush1.msra.mxu0 0.0
    %1222 = vmatprep.subr.mxu0 0.0
    %1223 = vmatpush1.msra.mxu0 0.0
    %1224 = vmatprep.mubr.f32.mxu0 0.0
    %1225 = vmatmul.mubr.f32.gmra.mrb[0].mxu0 %v586
    %v1226 = vpop.f32.mrb[0].mxu0
    %v1227 = vadd.f32 0.0, %v1226
    %v1228 = vpop.f32.mrb[0].mxu0
    %1229 = vmatprep.mubr.f32.mxu0 0.0
    %1230 = vmatmul.mubr.f32.gmra.mrb[0].mxu0 %v588
    %v1231 = vpop.f32.mrb[0].mxu0
    %v1232 = vadd.f32 0.0, %v1231
    %v1233 = vpop.f32.mrb[0].mxu0
    %1234 = vmatprep.mubr.f32.mxu0 0.0
    %1235 = vmatmul.mubr.f32.gmra.mrb[0].mxu0 %v590
    %v1236 = vpop.f32.mrb[0].mxu0
    %v1237 = vadd.f32 0.0, %v1236
    %v1238 = vpop.f32.mrb[0].mxu0
    %1239 = vmatprep.mubr.f32.mxu0 0.0
    %1240 = vmatmul.mubr.f32.gmra.mrb[0].mxu0 %v592
    %v1241 = vpop.f32.mrb[0].mxu0
    %v1242 = vadd.f32 0.0, %v1241
    %v1243 = vpop.f32.mrb[0].mxu0
    %1244 = vmatprep.mubr.f32.mxu0 0.0
    %1245 = vmatmul.mubr.f32.gmra.mrb[0].mxu0 %v594
    %v1246 = vpop.f32.mrb[0].mxu0
    %v1247 = vadd.f32 0.0, %v1246
    %v1248 = vpop.f32.mrb[0].mxu0
    %1249 = vmatprep.mubr.f32.mxu0 0.0
    %1250 = vmatmul.mubr.f32.gmra.mrb[0].mxu0 %v596
    %v1251 = vpop.f32.mrb[0].mxu0
    %v1252 = vadd.f32 0.0, %v1251
    %v1253 = vpop.f32.mrb[0].mxu0
    %1254 = vmatprep.mubr.f32.mxu0 0.0
    %1255 = vmatmul.mubr.f32.gmra.mrb[0].mxu0 %v598
    %v1256 = vpop.f32.mrb[0].mxu0
    %v1257 = vadd.f32 0.0, %v1256
    %v1258 = vpop.f32.mrb[0].mxu0
    %1259 = vmatprep.mubr.f32.mxu0 0.0
    %1260 = vmatmul.mubr.f32.gmra.mrb[0].mxu0 %v1156
    %v1261 = vpop.f32.mrb[0].mxu0
    %v1262 = vadd.f32 0.0, %v1261
    %v1263 = vpop.f32.mrb[0].mxu0
    %1264 = vmatprep.mubr.f32.mxu0 0.0
    %1265 = vmatmul.mubr.f32.gmra.mrb[0].mxu0 %v602
    %v1266 = vpop.f32.mrb[0].mxu0
    %v1267 = vadd.f32 0.0, %v1266
    %v1268 = vpop.f32.mrb[0].mxu0
    %1269 = vmatprep.mubr.f32.mxu0 0.0
    %1270 = vmatmul.mubr.f32.gmra.mrb[0].mxu0 %v604
    %v1271 = vpop.f32.mrb[0].mxu0
    %v1272 = vadd.f32 0.0, %v1271
    %v1273 = vpop.f32.mrb[0].mxu0
    %1274 = vmatprep.mubr.f32.mxu0 0.0
    %1275 = vmatmul.mubr.f32.gmra.mrb[0].mxu0 %v606
    %v1276 = vpop.f32.mrb[0].mxu0
    %v1277 = vadd.f32 0.0, %v1276
    %v1278 = vpop.f32.mrb[0].mxu0
    %1279 = vmatprep.mubr.f32.mxu0 0.0
    %1280 = vmatmul.mubr.f32.gmra.mrb[0].mxu0 %v608
    %v1281 = vpop.f32.mrb[0].mxu0
    %v1282 = vadd.f32 0.0, %v1281
    %v1283 = vpop.f32.mrb[0].mxu0
    %1284 = vmatprep.mubr.f32.mxu0 0.0
    %1285 = vmatmul.mubr.f32.gmra.mrb[0].mxu0 %v610
    %v1286 = vpop.f32.mrb[0].mxu0
    %v1287 = vadd.f32 0.0, %v1286
    %v1288 = vpop.f32.mrb[0].mxu0
    %1289 = vmatprep.mubr.f32.mxu0 0.0
    %1290 = vmatmul.mubr.f32.gmra.mrb[0].mxu0 %v612
    %v1291 = vpop.f32.mrb[0].mxu0
    %v1292 = vadd.f32 0.0, %v1291
    %v1293 = vpop.f32.mrb[0].mxu0
    %1294 = vmatprep.mubr.f32.mxu0 0.0
    %1295 = vmatmul.mubr.f32.gmra.mrb[0].mxu0 %v614
    %v1296 = vpop.f32.mrb[0].mxu0
    %v1297 = vadd.f32 0.0, %v1296
    %v1298 = vpop.f32.mrb[0].mxu0
    %1299 = vmatprep.mubr.f32.mxu0 0.0
    %1300 = vmatmul.mubr.f32.gmra.mrb[0].mxu0 %v1158
    %v1301 = vpop.f32.mrb[0].mxu0
    %v1302 = vadd.f32 0.0, %v1301
    %v1303 = vpop.f32.mrb[0].mxu0
    %1304 = vdwg.mxu0
    %v1305 = vadd.f32 %v1123, %v1227
    %v1306 = vadd.f32 %v1124, %v1232
    %v1307 = vadd.f32 %v1125, %v1237
    %v1308 = vadd.f32 %v1126, %v1242
    %v1309 = vadd.f32 %v1127, %v1247
    %v1310 = vadd.f32 %v1128, %v1252
    %v1311 = vadd.f32 %v1129, %v1257
    %v1312 = vadd.f32 %v1130, %v1262
    %v1313 = vadd.f32 %v1131, %v1267
    %v1314 = vadd.f32 %v1132, %v1272
    %v1315 = vadd.f32 %v1133, %v1277
    %v1316 = vadd.f32 %v1134, %v1282
    %v1317 = vadd.f32 %v1135, %v1287
    %v1318 = vadd.f32 %v1136, %v1292
    %v1319 = vadd.f32 %v1137, %v1297
    %v1320 = vadd.f32 %v1138, %v1302
    %s1321 = scalar_lea.vmem %s1, 480
    %v1322 = vld [vmem:[%s1321] sm:$0xff]
    %v1323 = vld [vmem:[%s1321 + $0x8] sm:$0xff]
    %v1324 = vld [vmem:[%s1321 + $0x10] sm:$0xff]
    %v1325 = vld [vmem:[%s1321 + $0x18] sm:$0xff]
    %v1326 = vld [vmem:[%s1321 + $0x20] sm:$0xff]
    %v1327 = vld [vmem:[%s1321 + $0x28] sm:$0xff]
    %v1328 = vld [vmem:[%s1321 + $0x30] sm:$0xff]
    %v1329 = vld [vmem:[%s1321 + $0x38] sm:$0xff]
    %v1330 = vld [vmem:[%s1321 + $0x40] sm:$0xff]
    %v1331 = vld [vmem:[%s1321 + $0x48] sm:$0xff]
    %v1333 = vsel %vm169, %v45, 0
    %v1336 = vsel %vm169, %v65, 0
    %1338 = vmatprep.subr.mxu0 0.0
    %1339 = vmatpush1.msra.mxu0 %v1322
    %1340 = vmatprep.subr.mxu0 0.0
    %1341 = vmatpush1.msra.mxu0 %v1323
    %1342 = vmatprep.subr.mxu0 0.0
    %1343 = vmatpush1.msra.mxu0 %v1324
    %1344 = vmatprep.subr.mxu0 0.0
    %1345 = vmatpush1.msra.mxu0 %v1325
    %1346 = vmatprep.subr.mxu0 0.0
    %1347 = vmatpush1.msra.mxu0 %v1326
    %1348 = vmatprep.subr.mxu0 0.0
    %1349 = vmatpush1.msra.mxu0 %v1327
    %1350 = vmatprep.subr.mxu0 0.0
    %1351 = vmatpush1.msra.mxu0 %v1328
    %1352 = vmatprep.subr.mxu0 0.0
    %1353 = vmatpush1.msra.mxu0 %v1329
    %1354 = vmatprep.subr.mxu0 0.0
    %1355 = vmatpush1.msra.mxu0 %v1330
    %1356 = vmatprep.subr.mxu0 0.0
    %1357 = vmatpush1.msra.mxu0 %v1331
    %1358 = vmatprep.subr.mxu0 0.0
    %1359 = vmatpush1.msra.mxu0 0.0
    %1360 = vmatprep.subr.mxu0 0.0
    %1361 = vmatpush1.msra.mxu0 0.0
    %1362 = vmatprep.subr.mxu0 0.0
    %1363 = vmatpush1.msra.mxu0 0.0
    %1364 = vmatprep.subr.mxu0 0.0
    %1365 = vmatpush1.msra.mxu0 0.0
    %1366 = vmatprep.subr.mxu0 0.0
    %1367 = vmatpush1.msra.mxu0 0.0
    %1368 = vmatprep.subr.mxu0 0.0
    %1369 = vmatpush1.msra.mxu0 0.0
    %1370 = vmatprep.subr.mxu0 0.0
    %1371 = vmatpush1.msra.mxu0 0.0
    %1372 = vmatprep.subr.mxu0 0.0
    %1373 = vmatpush1.msra.mxu0 0.0
    %1374 = vmatprep.subr.mxu0 0.0
    %1375 = vmatpush1.msra.mxu0 0.0
    %1376 = vmatprep.subr.mxu0 0.0
    %1377 = vmatpush1.msra.mxu0 0.0
    %1378 = vmatprep.subr.mxu0 0.0
    %1379 = vmatpush1.msra.mxu0 0.0
    %1380 = vmatprep.subr.mxu0 0.0
    %1381 = vmatpush1.msra.mxu0 0.0
    %1382 = vmatprep.subr.mxu0 0.0
    %1383 = vmatpush1.msra.mxu0 0.0
    %1384 = vmatprep.subr.mxu0 0.0
    %1385 = vmatpush1.msra.mxu0 0.0
    %1386 = vmatprep.subr.mxu0 0.0
    %1387 = vmatpush1.msra.mxu0 0.0
    %1388 = vmatprep.subr.mxu0 0.0
    %1389 = vmatpush1.msra.mxu0 0.0
    %1390 = vmatprep.subr.mxu0 0.0
    %1391 = vmatpush1.msra.mxu0 0.0
    %1392 = vmatprep.subr.mxu0 0.0
    %1393 = vmatpush1.msra.mxu0 0.0
    %1394 = vmatprep.subr.mxu0 0.0
    %1395 = vmatpush1.msra.mxu0 0.0
    %1396 = vmatprep.subr.mxu0 0.0
    %1397 = vmatpush1.msra.mxu0 0.0
    %1398 = vmatprep.subr.mxu0 0.0
    %1399 = vmatpush1.msra.mxu0 0.0
    %1400 = vmatprep.subr.mxu0 0.0
    %1401 = vmatpush1.msra.mxu0 0.0
    %1402 = vmatprep.mubr.f32.mxu0 0.0
    %1403 = vmatmul.mubr.f32.gmra.mrb[0].mxu0 %v351
    %v1404 = vpop.f32.mrb[0].mxu0
    %v1405 = vadd.f32 0.0, %v1404
    %v1406 = vpop.f32.mrb[0].mxu0
    %1407 = vmatprep.mubr.f32.mxu0 0.0
    %1408 = vmatmul.mubr.f32.gmra.mrb[0].mxu0 %v353
    %v1409 = vpop.f32.mrb[0].mxu0
    %v1410 = vadd.f32 0.0, %v1409
    %v1411 = vpop.f32.mrb[0].mxu0
    %1412 = vmatprep.mubr.f32.mxu0 0.0
    %1413 = vmatmul.mubr.f32.gmra.mrb[0].mxu0 %v355
    %v1414 = vpop.f32.mrb[0].mxu0
    %v1415 = vadd.f32 0.0, %v1414
    %v1416 = vpop.f32.mrb[0].mxu0
    %1417 = vmatprep.mubr.f32.mxu0 0.0
    %1418 = vmatmul.mubr.f32.gmra.mrb[0].mxu0 %v357
    %v1419 = vpop.f32.mrb[0].mxu0
    %v1420 = vadd.f32 0.0, %v1419
    %v1421 = vpop.f32.mrb[0].mxu0
    %1422 = vmatprep.mubr.f32.mxu0 0.0
    %1423 = vmatmul.mubr.f32.gmra.mrb[0].mxu0 %v359
    %v1424 = vpop.f32.mrb[0].mxu0
    %v1425 = vadd.f32 0.0, %v1424
    %v1426 = vpop.f32.mrb[0].mxu0
    %1427 = vmatprep.mubr.f32.mxu0 0.0
    %1428 = vmatmul.mubr.f32.gmra.mrb[0].mxu0 %v361
    %v1429 = vpop.f32.mrb[0].mxu0
    %v1430 = vadd.f32 0.0, %v1429
    %v1431 = vpop.f32.mrb[0].mxu0
    %1432 = vmatprep.mubr.f32.mxu0 0.0
    %1433 = vmatmul.mubr.f32.gmra.mrb[0].mxu0 %v789
    %v1434 = vpop.f32.mrb[0].mxu0
    %v1435 = vadd.f32 0.0, %v1434
    %v1436 = vpop.f32.mrb[0].mxu0
    %1437 = vmatprep.mubr.f32.mxu0 0.0
    %1438 = vmatmul.mubr.f32.gmra.mrb[0].mxu0 %v1333
    %v1439 = vpop.f32.mrb[0].mxu0
    %v1440 = vadd.f32 0.0, %v1439
    %v1441 = vpop.f32.mrb[0].mxu0
    %1442 = vmatprep.mubr.f32.mxu0 0.0
    %1443 = vmatmul.mubr.f32.gmra.mrb[0].mxu0 %v367
    %v1444 = vpop.f32.mrb[0].mxu0
    %v1445 = vadd.f32 0.0, %v1444
    %v1446 = vpop.f32.mrb[0].mxu0
    %1447 = vmatprep.mubr.f32.mxu0 0.0
    %1448 = vmatmul.mubr.f32.gmra.mrb[0].mxu0 %v369
    %v1449 = vpop.f32.mrb[0].mxu0
    %v1450 = vadd.f32 0.0, %v1449
    %v1451 = vpop.f32.mrb[0].mxu0
    %1452 = vmatprep.mubr.f32.mxu0 0.0
    %1453 = vmatmul.mubr.f32.gmra.mrb[0].mxu0 %v371
    %v1454 = vpop.f32.mrb[0].mxu0
    %v1455 = vadd.f32 0.0, %v1454
    %v1456 = vpop.f32.mrb[0].mxu0
    %1457 = vmatprep.mubr.f32.mxu0 0.0
    %1458 = vmatmul.mubr.f32.gmra.mrb[0].mxu0 %v373
    %v1459 = vpop.f32.mrb[0].mxu0
    %v1460 = vadd.f32 0.0, %v1459
    %v1461 = vpop.f32.mrb[0].mxu0
    %1462 = vmatprep.mubr.f32.mxu0 0.0
    %1463 = vmatmul.mubr.f32.gmra.mrb[0].mxu0 %v375
    %v1464 = vpop.f32.mrb[0].mxu0
    %v1465 = vadd.f32 0.0, %v1464
    %v1466 = vpop.f32.mrb[0].mxu0
    %1467 = vmatprep.mubr.f32.mxu0 0.0
    %1468 = vmatmul.mubr.f32.gmra.mrb[0].mxu0 %v377
    %v1469 = vpop.f32.mrb[0].mxu0
    %v1470 = vadd.f32 0.0, %v1469
    %v1471 = vpop.f32.mrb[0].mxu0
    %1472 = vmatprep.mubr.f32.mxu0 0.0
    %1473 = vmatmul.mubr.f32.gmra.mrb[0].mxu0 %v792
    %v1474 = vpop.f32.mrb[0].mxu0
    %v1475 = vadd.f32 0.0, %v1474
    %v1476 = vpop.f32.mrb[0].mxu0
    %1477 = vmatprep.mubr.f32.mxu0 0.0
    %1478 = vmatmul.mubr.f32.gmra.mrb[0].mxu0 %v1336
    %v1479 = vpop.f32.mrb[0].mxu0
    %v1480 = vadd.f32 0.0, %v1479
    %v1481 = vpop.f32.mrb[0].mxu0
    %1482 = vdwg.mxu0
    %v1483 = vadd.f32 %v1305, %v1405
    %v1484 = vadd.f32 %v1306, %v1410
    %v1485 = vadd.f32 %v1307, %v1415
    %v1486 = vadd.f32 %v1308, %v1420
    %v1487 = vadd.f32 %v1309, %v1425
    %v1488 = vadd.f32 %v1310, %v1430
    %v1489 = vadd.f32 %v1311, %v1435
    %v1490 = vadd.f32 %v1312, %v1440
    %v1491 = vadd.f32 %v1313, %v1445
    %v1492 = vadd.f32 %v1314, %v1450
    %v1493 = vadd.f32 %v1315, %v1455
    %v1494 = vadd.f32 %v1316, %v1460
    %v1495 = vadd.f32 %v1317, %v1465
    %v1496 = vadd.f32 %v1318, %v1470
    %v1497 = vadd.f32 %v1319, %v1475
    %v1498 = vadd.f32 %v1320, %v1480
    %v1501 = vrot.slane %v45, 1
    %v1502 = vrot.slane %v46, 1
    %v1503 = vsel %vm109, %v1501, %v1502
    %v1504 = vrot.slane %v65, 1
    %v1505 = vrot.slane %v66, 1
    %v1506 = vsel %vm109, %v1504, %v1505
    %s1507 = scalar_lea.vmem %s1, 560
    %v1508 = vld [vmem:[%s1507] sm:$0xff]
    %v1509 = vld [vmem:[%s1507 + $0x8] sm:$0xff]
    %v1510 = vld [vmem:[%s1507 + $0x10] sm:$0xff]
    %v1511 = vld [vmem:[%s1507 + $0x18] sm:$0xff]
    %v1512 = vld [vmem:[%s1507 + $0x20] sm:$0xff]
    %v1513 = vld [vmem:[%s1507 + $0x28] sm:$0xff]
    %v1514 = vld [vmem:[%s1507 + $0x30] sm:$0xff]
    %v1515 = vld [vmem:[%s1507 + $0x38] sm:$0xff]
    %v1516 = vld [vmem:[%s1507 + $0x40] sm:$0xff]
    %v1517 = vld [vmem:[%s1507 + $0x48] sm:$0xff]
    %v1518 = vsel %vm169, %v1503, 0
    %v1520 = vsel %vm169, %v1506, 0
    %1522 = vmatprep.subr.mxu0 0.0
    %1523 = vmatpush1.msra.mxu0 %v1508
    %1524 = vmatprep.subr.mxu0 0.0
    %1525 = vmatpush1.msra.mxu0 %v1509
    %1526 = vmatprep.subr.mxu0 0.0
    %1527 = vmatpush1.msra.mxu0 %v1510
    %1528 = vmatprep.subr.mxu0 0.0
    %1529 = vmatpush1.msra.mxu0 %v1511
    %1530 = vmatprep.subr.mxu0 0.0
    %1531 = vmatpush1.msra.mxu0 %v1512
    %1532 = vmatprep.subr.mxu0 0.0
    %1533 = vmatpush1.msra.mxu0 %v1513
    %1534 = vmatprep.subr.mxu0 0.0
    %1535 = vmatpush1.msra.mxu0 %v1514
    %1536 = vmatprep.subr.mxu0 0.0
    %1537 = vmatpush1.msra.mxu0 %v1515
    %1538 = vmatprep.subr.mxu0 0.0
    %1539 = vmatpush1.msra.mxu0 %v1516
    %1540 = vmatprep.subr.mxu0 0.0
    %1541 = vmatpush1.msra.mxu0 %v1517
    %1542 = vmatprep.subr.mxu0 0.0
    %1543 = vmatpush1.msra.mxu0 0.0
    %1544 = vmatprep.subr.mxu0 0.0
    %1545 = vmatpush1.msra.mxu0 0.0
    %1546 = vmatprep.subr.mxu0 0.0
    %1547 = vmatpush1.msra.mxu0 0.0
    %1548 = vmatprep.subr.mxu0 0.0
    %1549 = vmatpush1.msra.mxu0 0.0
    %1550 = vmatprep.subr.mxu0 0.0
    %1551 = vmatpush1.msra.mxu0 0.0
    %1552 = vmatprep.subr.mxu0 0.0
    %1553 = vmatpush1.msra.mxu0 0.0
    %1554 = vmatprep.subr.mxu0 0.0
    %1555 = vmatpush1.msra.mxu0 0.0
    %1556 = vmatprep.subr.mxu0 0.0
    %1557 = vmatpush1.msra.mxu0 0.0
    %1558 = vmatprep.subr.mxu0 0.0
    %1559 = vmatpush1.msra.mxu0 0.0
    %1560 = vmatprep.subr.mxu0 0.0
    %1561 = vmatpush1.msra.mxu0 0.0
    %1562 = vmatprep.subr.mxu0 0.0
    %1563 = vmatpush1.msra.mxu0 0.0
    %1564 = vmatprep.subr.mxu0 0.0
    %1565 = vmatpush1.msra.mxu0 0.0
    %1566 = vmatprep.subr.mxu0 0.0
    %1567 = vmatpush1.msra.mxu0 0.0
    %1568 = vmatprep.subr.mxu0 0.0
    %1569 = vmatpush1.msra.mxu0 0.0
    %1570 = vmatprep.subr.mxu0 0.0
    %1571 = vmatpush1.msra.mxu0 0.0
    %1572 = vmatprep.subr.mxu0 0.0
    %1573 = vmatpush1.msra.mxu0 0.0
    %1574 = vmatprep.subr.mxu0 0.0
    %1575 = vmatpush1.msra.mxu0 0.0
    %1576 = vmatprep.subr.mxu0 0.0
    %1577 = vmatpush1.msra.mxu0 0.0
    %1578 = vmatprep.subr.mxu0 0.0
    %1579 = vmatpush1.msra.mxu0 0.0
    %1580 = vmatprep.subr.mxu0 0.0
    %1581 = vmatpush1.msra.mxu0 0.0
    %1582 = vmatprep.subr.mxu0 0.0
    %1583 = vmatpush1.msra.mxu0 0.0
    %1584 = vmatprep.subr.mxu0 0.0
    %1585 = vmatpush1.msra.mxu0 0.0
    %1586 = vmatprep.mubr.f32.mxu0 0.0
    %1587 = vmatmul.mubr.f32.gmra.mrb[0].mxu0 %v174
    %v1588 = vpop.f32.mrb[0].mxu0
    %v1589 = vadd.f32 0.0, %v1588
    %v1590 = vpop.f32.mrb[0].mxu0
    %1591 = vmatprep.mubr.f32.mxu0 0.0
    %1592 = vmatmul.mubr.f32.gmra.mrb[0].mxu0 %v176
    %v1593 = vpop.f32.mrb[0].mxu0
    %v1594 = vadd.f32 0.0, %v1593
    %v1595 = vpop.f32.mrb[0].mxu0
    %1596 = vmatprep.mubr.f32.mxu0 0.0
    %1597 = vmatmul.mubr.f32.gmra.mrb[0].mxu0 %v178
    %v1598 = vpop.f32.mrb[0].mxu0
    %v1599 = vadd.f32 0.0, %v1598
    %v1600 = vpop.f32.mrb[0].mxu0
    %1601 = vmatprep.mubr.f32.mxu0 0.0
    %1602 = vmatmul.mubr.f32.gmra.mrb[0].mxu0 %v180
    %v1603 = vpop.f32.mrb[0].mxu0
    %v1604 = vadd.f32 0.0, %v1603
    %v1605 = vpop.f32.mrb[0].mxu0
    %1606 = vmatprep.mubr.f32.mxu0 0.0
    %1607 = vmatmul.mubr.f32.gmra.mrb[0].mxu0 %v182
    %v1608 = vpop.f32.mrb[0].mxu0
    %v1609 = vadd.f32 0.0, %v1608
    %v1610 = vpop.f32.mrb[0].mxu0
    %1611 = vmatprep.mubr.f32.mxu0 0.0
    %1612 = vmatmul.mubr.f32.gmra.mrb[0].mxu0 %v184
    %v1613 = vpop.f32.mrb[0].mxu0
    %v1614 = vadd.f32 0.0, %v1613
    %v1615 = vpop.f32.mrb[0].mxu0
    %1616 = vmatprep.mubr.f32.mxu0 0.0
    %1617 = vmatmul.mubr.f32.gmra.mrb[0].mxu0 %v974
    %v1618 = vpop.f32.mrb[0].mxu0
    %v1619 = vadd.f32 0.0, %v1618
    %v1620 = vpop.f32.mrb[0].mxu0
    %1621 = vmatprep.mubr.f32.mxu0 0.0
    %1622 = vmatmul.mubr.f32.gmra.mrb[0].mxu0 %v1518
    %v1623 = vpop.f32.mrb[0].mxu0
    %v1624 = vadd.f32 0.0, %v1623
    %v1625 = vpop.f32.mrb[0].mxu0
    %1626 = vmatprep.mubr.f32.mxu0 0.0
    %1627 = vmatmul.mubr.f32.gmra.mrb[0].mxu0 %v190
    %v1628 = vpop.f32.mrb[0].mxu0
    %v1629 = vadd.f32 0.0, %v1628
    %v1630 = vpop.f32.mrb[0].mxu0
    %1631 = vmatprep.mubr.f32.mxu0 0.0
    %1632 = vmatmul.mubr.f32.gmra.mrb[0].mxu0 %v192
    %v1633 = vpop.f32.mrb[0].mxu0
    %v1634 = vadd.f32 0.0, %v1633
    %v1635 = vpop.f32.mrb[0].mxu0
    %1636 = vmatprep.mubr.f32.mxu0 0.0
    %1637 = vmatmul.mubr.f32.gmra.mrb[0].mxu0 %v194
    %v1638 = vpop.f32.mrb[0].mxu0
    %v1639 = vadd.f32 0.0, %v1638
    %v1640 = vpop.f32.mrb[0].mxu0
    %1641 = vmatprep.mubr.f32.mxu0 0.0
    %1642 = vmatmul.mubr.f32.gmra.mrb[0].mxu0 %v196
    %v1643 = vpop.f32.mrb[0].mxu0
    %v1644 = vadd.f32 0.0, %v1643
    %v1645 = vpop.f32.mrb[0].mxu0
    %1646 = vmatprep.mubr.f32.mxu0 0.0
    %1647 = vmatmul.mubr.f32.gmra.mrb[0].mxu0 %v198
    %v1648 = vpop.f32.mrb[0].mxu0
    %v1649 = vadd.f32 0.0, %v1648
    %v1650 = vpop.f32.mrb[0].mxu0
    %1651 = vmatprep.mubr.f32.mxu0 0.0
    %1652 = vmatmul.mubr.f32.gmra.mrb[0].mxu0 %v200
    %v1653 = vpop.f32.mrb[0].mxu0
    %v1654 = vadd.f32 0.0, %v1653
    %v1655 = vpop.f32.mrb[0].mxu0
    %1656 = vmatprep.mubr.f32.mxu0 0.0
    %1657 = vmatmul.mubr.f32.gmra.mrb[0].mxu0 %v976
    %v1658 = vpop.f32.mrb[0].mxu0
    %v1659 = vadd.f32 0.0, %v1658
    %v1660 = vpop.f32.mrb[0].mxu0
    %1661 = vmatprep.mubr.f32.mxu0 0.0
    %1662 = vmatmul.mubr.f32.gmra.mrb[0].mxu0 %v1520
    %v1663 = vpop.f32.mrb[0].mxu0
    %v1664 = vadd.f32 0.0, %v1663
    %v1665 = vpop.f32.mrb[0].mxu0
    %1666 = vdwg.mxu0
    %v1667 = vadd.f32 %v1483, %v1589
    %v1668 = vadd.f32 %v1484, %v1594
    %v1669 = vadd.f32 %v1485, %v1599
    %v1670 = vadd.f32 %v1486, %v1604
    %v1671 = vadd.f32 %v1487, %v1609
    %v1672 = vadd.f32 %v1488, %v1614
    %v1673 = vadd.f32 %v1489, %v1619
    %v1674 = vadd.f32 %v1490, %v1624
    %v1675 = vadd.f32 %v1491, %v1629
    %v1676 = vadd.f32 %v1492, %v1634
    %v1677 = vadd.f32 %v1493, %v1639
    %v1678 = vadd.f32 %v1494, %v1644
    %v1679 = vadd.f32 %v1495, %v1649
    %v1680 = vadd.f32 %v1496, %v1654
    %v1681 = vadd.f32 %v1497, %v1659
    %v1682 = vadd.f32 %v1498, %v1664
    %v1683 = vrot.slane %v45, 2
    %v1684 = vrot.slane %v46, 2
    %v1685 = vsel %vm524, %v1683, %v1684
    %v1686 = vrot.slane %v65, 2
    %v1687 = vrot.slane %v66, 2
    %v1688 = vsel %vm524, %v1686, %v1687
    %s1689 = scalar_lea.vmem %s1, 640
    %v1690 = vld [vmem:[%s1689] sm:$0xff]
    %v1691 = vld [vmem:[%s1689 + $0x8] sm:$0xff]
    %v1692 = vld [vmem:[%s1689 + $0x10] sm:$0xff]
    %v1693 = vld [vmem:[%s1689 + $0x18] sm:$0xff]
    %v1694 = vld [vmem:[%s1689 + $0x20] sm:$0xff]
    %v1695 = vld [vmem:[%s1689 + $0x28] sm:$0xff]
    %v1696 = vld [vmem:[%s1689 + $0x30] sm:$0xff]
    %v1697 = vld [vmem:[%s1689 + $0x38] sm:$0xff]
    %v1698 = vld [vmem:[%s1689 + $0x40] sm:$0xff]
    %v1699 = vld [vmem:[%s1689 + $0x48] sm:$0xff]
    %v1700 = vsel %vm169, %v1685, 0
    %v1702 = vsel %vm169, %v1688, 0
    %1704 = vmatprep.subr.mxu0 0.0
    %1705 = vmatpush1.msra.mxu0 %v1690
    %1706 = vmatprep.subr.mxu0 0.0
    %1707 = vmatpush1.msra.mxu0 %v1691
    %1708 = vmatprep.subr.mxu0 0.0
    %1709 = vmatpush1.msra.mxu0 %v1692
    %1710 = vmatprep.subr.mxu0 0.0
    %1711 = vmatpush1.msra.mxu0 %v1693
    %1712 = vmatprep.subr.mxu0 0.0
    %1713 = vmatpush1.msra.mxu0 %v1694
    %1714 = vmatprep.subr.mxu0 0.0
    %1715 = vmatpush1.msra.mxu0 %v1695
    %1716 = vmatprep.subr.mxu0 0.0
    %1717 = vmatpush1.msra.mxu0 %v1696
    %1718 = vmatprep.subr.mxu0 0.0
    %1719 = vmatpush1.msra.mxu0 %v1697
    %1720 = vmatprep.subr.mxu0 0.0
    %1721 = vmatpush1.msra.mxu0 %v1698
    %1722 = vmatprep.subr.mxu0 0.0
    %1723 = vmatpush1.msra.mxu0 %v1699
    %1724 = vmatprep.subr.mxu0 0.0
    %1725 = vmatpush1.msra.mxu0 0.0
    %1726 = vmatprep.subr.mxu0 0.0
    %1727 = vmatpush1.msra.mxu0 0.0
    %1728 = vmatprep.subr.mxu0 0.0
    %1729 = vmatpush1.msra.mxu0 0.0
    %1730 = vmatprep.subr.mxu0 0.0
    %1731 = vmatpush1.msra.mxu0 0.0
    %1732 = vmatprep.subr.mxu0 0.0
    %1733 = vmatpush1.msra.mxu0 0.0
    %1734 = vmatprep.subr.mxu0 0.0
    %1735 = vmatpush1.msra.mxu0 0.0
    %1736 = vmatprep.subr.mxu0 0.0
    %1737 = vmatpush1.msra.mxu0 0.0
    %1738 = vmatprep.subr.mxu0 0.0
    %1739 = vmatpush1.msra.mxu0 0.0
    %1740 = vmatprep.subr.mxu0 0.0
    %1741 = vmatpush1.msra.mxu0 0.0
    %1742 = vmatprep.subr.mxu0 0.0
    %1743 = vmatpush1.msra.mxu0 0.0
    %1744 = vmatprep.subr.mxu0 0.0
    %1745 = vmatpush1.msra.mxu0 0.0
    %1746 = vmatprep.subr.mxu0 0.0
    %1747 = vmatpush1.msra.mxu0 0.0
    %1748 = vmatprep.subr.mxu0 0.0
    %1749 = vmatpush1.msra.mxu0 0.0
    %1750 = vmatprep.subr.mxu0 0.0
    %1751 = vmatpush1.msra.mxu0 0.0
    %1752 = vmatprep.subr.mxu0 0.0
    %1753 = vmatpush1.msra.mxu0 0.0
    %1754 = vmatprep.subr.mxu0 0.0
    %1755 = vmatpush1.msra.mxu0 0.0
    %1756 = vmatprep.subr.mxu0 0.0
    %1757 = vmatpush1.msra.mxu0 0.0
    %1758 = vmatprep.subr.mxu0 0.0
    %1759 = vmatpush1.msra.mxu0 0.0
    %1760 = vmatprep.subr.mxu0 0.0
    %1761 = vmatpush1.msra.mxu0 0.0
    %1762 = vmatprep.subr.mxu0 0.0
    %1763 = vmatpush1.msra.mxu0 0.0
    %1764 = vmatprep.subr.mxu0 0.0
    %1765 = vmatpush1.msra.mxu0 0.0
    %1766 = vmatprep.subr.mxu0 0.0
    %1767 = vmatpush1.msra.mxu0 0.0
    %1768 = vmatprep.mubr.f32.mxu0 0.0
    %1769 = vmatmul.mubr.f32.gmra.mrb[0].mxu0 %v588
    %v1770 = vpop.f32.mrb[0].mxu0
    %v1771 = vadd.f32 0.0, %v1770
    %v1772 = vpop.f32.mrb[0].mxu0
    %1773 = vmatprep.mubr.f32.mxu0 0.0
    %1774 = vmatmul.mubr.f32.gmra.mrb[0].mxu0 %v590
    %v1775 = vpop.f32.mrb[0].mxu0
    %v1776 = vadd.f32 0.0, %v1775
    %v1777 = vpop.f32.mrb[0].mxu0
    %1778 = vmatprep.mubr.f32.mxu0 0.0
    %1779 = vmatmul.mubr.f32.gmra.mrb[0].mxu0 %v592
    %v1780 = vpop.f32.mrb[0].mxu0
    %v1781 = vadd.f32 0.0, %v1780
    %v1782 = vpop.f32.mrb[0].mxu0
    %1783 = vmatprep.mubr.f32.mxu0 0.0
    %1784 = vmatmul.mubr.f32.gmra.mrb[0].mxu0 %v594
    %v1785 = vpop.f32.mrb[0].mxu0
    %v1786 = vadd.f32 0.0, %v1785
    %v1787 = vpop.f32.mrb[0].mxu0
    %1788 = vmatprep.mubr.f32.mxu0 0.0
    %1789 = vmatmul.mubr.f32.gmra.mrb[0].mxu0 %v596
    %v1790 = vpop.f32.mrb[0].mxu0
    %v1791 = vadd.f32 0.0, %v1790
    %v1792 = vpop.f32.mrb[0].mxu0
    %1793 = vmatprep.mubr.f32.mxu0 0.0
    %1794 = vmatmul.mubr.f32.gmra.mrb[0].mxu0 %v598
    %v1795 = vpop.f32.mrb[0].mxu0
    %v1796 = vadd.f32 0.0, %v1795
    %v1797 = vpop.f32.mrb[0].mxu0
    %1798 = vmatprep.mubr.f32.mxu0 0.0
    %1799 = vmatmul.mubr.f32.gmra.mrb[0].mxu0 %v1156
    %v1800 = vpop.f32.mrb[0].mxu0
    %v1801 = vadd.f32 0.0, %v1800
    %v1802 = vpop.f32.mrb[0].mxu0
    %1803 = vmatprep.mubr.f32.mxu0 0.0
    %1804 = vmatmul.mubr.f32.gmra.mrb[0].mxu0 %v1700
    %v1805 = vpop.f32.mrb[0].mxu0
    %v1806 = vadd.f32 0.0, %v1805
    %v1807 = vpop.f32.mrb[0].mxu0
    %1808 = vmatprep.mubr.f32.mxu0 0.0
    %1809 = vmatmul.mubr.f32.gmra.mrb[0].mxu0 %v604
    %v1810 = vpop.f32.mrb[0].mxu0
    %v1811 = vadd.f32 0.0, %v1810
    %v1812 = vpop.f32.mrb[0].mxu0
    %1813 = vmatprep.mubr.f32.mxu0 0.0
    %1814 = vmatmul.mubr.f32.gmra.mrb[0].mxu0 %v606
    %v1815 = vpop.f32.mrb[0].mxu0
    %v1816 = vadd.f32 0.0, %v1815
    %v1817 = vpop.f32.mrb[0].mxu0
    %1818 = vmatprep.mubr.f32.mxu0 0.0
    %1819 = vmatmul.mubr.f32.gmra.mrb[0].mxu0 %v608
    %v1820 = vpop.f32.mrb[0].mxu0
    %v1821 = vadd.f32 0.0, %v1820
    %v1822 = vpop.f32.mrb[0].mxu0
    %1823 = vmatprep.mubr.f32.mxu0 0.0
    %1824 = vmatmul.mubr.f32.gmra.mrb[0].mxu0 %v610
    %v1825 = vpop.f32.mrb[0].mxu0
    %v1826 = vadd.f32 0.0, %v1825
    %v1827 = vpop.f32.mrb[0].mxu0
    %1828 = vmatprep.mubr.f32.mxu0 0.0
    %1829 = vmatmul.mubr.f32.gmra.mrb[0].mxu0 %v612
    %v1830 = vpop.f32.mrb[0].mxu0
    %v1831 = vadd.f32 0.0, %v1830
    %v1832 = vpop.f32.mrb[0].mxu0
    %1833 = vmatprep.mubr.f32.mxu0 0.0
    %1834 = vmatmul.mubr.f32.gmra.mrb[0].mxu0 %v614
    %v1835 = vpop.f32.mrb[0].mxu0
    %v1836 = vadd.f32 0.0, %v1835
    %v1837 = vpop.f32.mrb[0].mxu0
    %1838 = vmatprep.mubr.f32.mxu0 0.0
    %1839 = vmatmul.mubr.f32.gmra.mrb[0].mxu0 %v1158
    %v1840 = vpop.f32.mrb[0].mxu0
    %v1841 = vadd.f32 0.0, %v1840
    %v1842 = vpop.f32.mrb[0].mxu0
    %1843 = vmatprep.mubr.f32.mxu0 0.0
    %1844 = vmatmul.mubr.f32.gmra.mrb[0].mxu0 %v1702
    %v1845 = vpop.f32.mrb[0].mxu0
    %v1846 = vadd.f32 0.0, %v1845
    %v1847 = vpop.f32.mrb[0].mxu0
    %1848 = vdwg.mxu0
    %v1849 = vadd.f32 %v1667, %v1771
    %v1850 = vadd.f32 %v1668, %v1776
    %v1851 = vadd.f32 %v1669, %v1781
    %v1852 = vadd.f32 %v1670, %v1786
    %v1853 = vadd.f32 %v1671, %v1791
    %v1854 = vadd.f32 %v1672, %v1796
    %v1855 = vadd.f32 %v1673, %v1801
    %v1856 = vadd.f32 %v1674, %v1806
    %v1857 = vadd.f32 %v1675, %v1811
    %v1858 = vadd.f32 %v1676, %v1816
    %v1859 = vadd.f32 %v1677, %v1821
    %v1860 = vadd.f32 %v1678, %v1826
    %v1861 = vadd.f32 %v1679, %v1831
    %v1862 = vadd.f32 %v1680, %v1836
    %v1863 = vadd.f32 %v1681, %v1841
    %v1864 = vadd.f32 %v1682, %v1846
    %vm1865 = vcmask 523264
    %v1866 = vsel %vm1865, %v1849, 0.0
    %v1867 = vsel %vm1865, %v1850, 0.0
    %v1868 = vadd.f32 %v1866, %v1867
    %v1869 = vsel %vm1865, %v1851, 0.0
    %v1870 = vadd.f32 %v1868, %v1869
    %v1871 = vsel %vm1865, %v1852, 0.0
    %v1872 = vadd.f32 %v1870, %v1871
    %v1873 = vsel %vm1865, %v1853, 0.0
    %v1874 = vadd.f32 %v1872, %v1873
    %v1875 = vsel %vm1865, %v1854, 0.0
    %v1876 = vadd.f32 %v1874, %v1875
    %v1877 = vsel %vm1865, %v1855, 0.0
    %v1878 = vadd.f32 %v1876, %v1877
    %v1879 = vsel %vm1865, %v1856, 0.0
    %v1880 = vadd.f32 %v1878, %v1879
    %v1881 = vsel %vm1865, %v1857, 0.0
    %v1882 = vadd.f32 %v1880, %v1881
    %v1883 = vsel %vm1865, %v1858, 0.0
    %v1884 = vadd.f32 %v1882, %v1883
    %v1885 = vsel %vm1865, %v1859, 0.0
    %v1886 = vadd.f32 %v1884, %v1885
    %v1887 = vsel %vm1865, %v1860, 0.0
    %v1888 = vadd.f32 %v1886, %v1887
    %v1889 = vsel %vm1865, %v1861, 0.0
    %v1890 = vadd.f32 %v1888, %v1889
    %v1891 = vsel %vm1865, %v1862, 0.0
    %v1892 = vadd.f32 %v1890, %v1891
    %v1893 = vsel %vm1865, %v1863, 0.0
    %v1894 = vadd.f32 %v1892, %v1893
    %v1895 = vsel %vm1865, %v1864, 0.0
    %v1896 = vadd.f32 %v1894, %v1895
    %v1897 = vrot.slane %v1896, 4
    %v1898 = vadd.f32 %v1896, %v1897
    %v1899 = vrot.slane %v1898, 2
    %v1900 = vadd.f32 %v1898, %v1899
    %v1901 = vrot.slane %v1900, 1
    %v1902 = vadd.f32 %v1900, %v1901
    %v1903 = vmul.f32 %v1849, %v1849
    %v1904 = vmul.f32 %v1850, %v1850
    %v1905 = vmul.f32 %v1851, %v1851
    %v1906 = vmul.f32 %v1852, %v1852
    %v1907 = vmul.f32 %v1853, %v1853
    %v1908 = vmul.f32 %v1854, %v1854
    %v1909 = vmul.f32 %v1855, %v1855
    %v1910 = vmul.f32 %v1856, %v1856
    %v1911 = vmul.f32 %v1857, %v1857
    %v1912 = vmul.f32 %v1858, %v1858
    %v1913 = vmul.f32 %v1859, %v1859
    %v1914 = vmul.f32 %v1860, %v1860
    %v1915 = vmul.f32 %v1861, %v1861
    %v1916 = vmul.f32 %v1862, %v1862
    %v1917 = vmul.f32 %v1863, %v1863
    %v1918 = vmul.f32 %v1864, %v1864
    %v1919 = vsel %vm1865, %v1903, 0.0
    %v1920 = vsel %vm1865, %v1904, 0.0
    %v1921 = vadd.f32 %v1919, %v1920
    %v1922 = vsel %vm1865, %v1905, 0.0
    %v1923 = vadd.f32 %v1921, %v1922
    %v1924 = vsel %vm1865, %v1906, 0.0
    %v1925 = vadd.f32 %v1923, %v1924
    %v1926 = vsel %vm1865, %v1907, 0.0
    %v1927 = vadd.f32 %v1925, %v1926
    %v1928 = vsel %vm1865, %v1908, 0.0
    %v1929 = vadd.f32 %v1927, %v1928
    %v1930 = vsel %vm1865, %v1909, 0.0
    %v1931 = vadd.f32 %v1929, %v1930
    %v1932 = vsel %vm1865, %v1910, 0.0
    %v1933 = vadd.f32 %v1931, %v1932
    %v1934 = vsel %vm1865, %v1911, 0.0
    %v1935 = vadd.f32 %v1933, %v1934
    %v1936 = vsel %vm1865, %v1912, 0.0
    %v1937 = vadd.f32 %v1935, %v1936
    %v1938 = vsel %vm1865, %v1913, 0.0
    %v1939 = vadd.f32 %v1937, %v1938
    %v1940 = vsel %vm1865, %v1914, 0.0
    %v1941 = vadd.f32 %v1939, %v1940
    %v1942 = vsel %vm1865, %v1915, 0.0
    %v1943 = vadd.f32 %v1941, %v1942
    %v1944 = vsel %vm1865, %v1916, 0.0
    %v1945 = vadd.f32 %v1943, %v1944
    %v1946 = vsel %vm1865, %v1917, 0.0
    %v1947 = vadd.f32 %v1945, %v1946
    %v1948 = vsel %vm1865, %v1918, 0.0
    %v1949 = vadd.f32 %v1947, %v1948
    %v1950 = vrot.slane %v1949, 4
    %v1951 = vadd.f32 %v1949, %v1950
    %v1952 = vrot.slane %v1951, 2
    %v1953 = vadd.f32 %v1951, %v1952
    %v1954 = vrot.slane %v1953, 1
    %v1955 = vadd.f32 %v1953, %v1954
    %v1956 = vadd.f32 %v1902, 0.0
    %v1957 = vadd.f32 %v1955, 0.0
    %1959 = vrot.lane.b32.xlu0 %v1902, 120
    %v1960 = vpop.permute.xlu0 %1959
    %v1962 = vadd.f32 %v1956, %v1960
    %1964 = vrot.lane.b32.xlu0 %v1955, 120
    %v1965 = vpop.permute.xlu0 %1964
    %v1967 = vadd.f32 %v1957, %v1965
    %1968 = vrot.lane.b32.xlu0 %v1902, 112
    %v1969 = vpop.permute.xlu0 %1968
    %v1971 = vadd.f32 %v1962, %v1969
    %1972 = vrot.lane.b32.xlu0 %v1955, 112
    %v1973 = vpop.permute.xlu0 %1972
    %v1975 = vadd.f32 %v1967, %v1973
    %1976 = vrot.lane.b32.xlu0 %v1902, 104
    %v1977 = vpop.permute.xlu0 %1976
    %v1979 = vadd.f32 %v1971, %v1977
    %1980 = vrot.lane.b32.xlu0 %v1955, 104
    %v1981 = vpop.permute.xlu0 %1980
    %v1983 = vadd.f32 %v1975, %v1981
    %1984 = vrot.lane.b32.xlu0 %v1902, 96
    %v1985 = vpop.permute.xlu0 %1984
    %v1987 = vadd.f32 %v1979, %v1985
    %1988 = vrot.lane.b32.xlu0 %v1955, 96
    %v1989 = vpop.permute.xlu0 %1988
    %v1991 = vadd.f32 %v1983, %v1989
    %1992 = vrot.lane.b32.xlu0 %v1902, 88
    %v1993 = vpop.permute.xlu0 %1992
    %v1995 = vadd.f32 %v1987, %v1993
    %1996 = vrot.lane.b32.xlu0 %v1955, 88
    %v1997 = vpop.permute.xlu0 %1996
    %v1999 = vadd.f32 %v1991, %v1997
    %2000 = vrot.lane.b32.xlu0 %v1902, 80
    %v2001 = vpop.permute.xlu0 %2000
    %v2003 = vadd.f32 %v1995, %v2001
    %2004 = vrot.lane.b32.xlu0 %v1955, 80
    %v2005 = vpop.permute.xlu0 %2004
    %v2007 = vadd.f32 %v1999, %v2005
    %2008 = vrot.lane.b32.xlu0 %v1902, 72
    %v2009 = vpop.permute.xlu0 %2008
    %v2011 = vadd.f32 %v2003, %v2009
    %2012 = vrot.lane.b32.xlu0 %v1955, 72
    %v2013 = vpop.permute.xlu0 %2012
    %v2015 = vadd.f32 %v2007, %v2013
    %v2016 = vmul.f32 %v2011, 0.0009765625
    %v2017 = vmul.f32 %v2015, 0.0009765625
    %v2018 = vmul.f32 %v2016, %v2016
    %v2019 = vsub.f32 %v2017, %v2018
    %v2020 = vmax.f32 %v2019, 0.0
    %v2021 = vld [vmem:[%s3] sm:$0x1]
    %v2022 = vadd.f32 %v2020, 1e-05
    %v2023 = vrsqrt.pop %v2022
    %v2024 = vmul.f32 %v2021, %v2023
    %v2025 = vld [vmem:[%s4] sm:$0x1]
    %v2026 = vmul.f32 %v2016, %v2024
    %v2027 = vsub.f32 %v2025, %v2026
    %v2029 = vlaneseq
    %v2030 = vshrl.u32 %v2029, 7
    %v2031 = vsub.s32 0, %v2030
    %v2032 = vrot.slane %v2024, %v2031
    %2033 = vrot.lane.b32.xlu0 %v2032, 8
    %v2034 = vpop.permute.xlu0 %2033
    %2036 = vrot.lane.b32.xlu0 %v2032, 16
    %v2037 = vpop.permute.xlu0 %2036
    %2039 = vrot.lane.b32.xlu0 %v2032, 24
    %v2040 = vpop.permute.xlu0 %2039
    %2042 = vrot.lane.b32.xlu0 %v2032, 32
    %v2043 = vpop.permute.xlu0 %2042
    %2045 = vrot.lane.b32.xlu0 %v2032, 40
    %v2046 = vpop.permute.xlu0 %2045
    %2048 = vrot.lane.b32.xlu0 %v2032, 48
    %v2049 = vpop.permute.xlu0 %2048
    %2051 = vrot.lane.b32.xlu0 %v2032, 56
    %v2052 = vpop.permute.xlu0 %2051
    %vm2054 = vcmask 64512
    %v2055 = vsel %vm2054, %v2024, %v2034
    %vm2056 = vcmask 130048
    %v2057 = vsel %vm2056, %v2055, %v2037
    %vm2058 = vcmask 195584
    %v2059 = vsel %vm2058, %v2057, %v2040
    %vm2060 = vcmask 261120
    %v2061 = vsel %vm2060, %v2059, %v2043
    %vm2062 = vcmask 326656
    %v2063 = vsel %vm2062, %v2061, %v2046
    %vm2064 = vcmask 392192
    %v2065 = vsel %vm2064, %v2063, %v2049
    %vm2066 = vcmask 457728
    %v2067 = vsel %vm2066, %v2065, %v2052
    %v2069 = vlaneseq
    %v2070 = vshrl.u32 %v2069, 7
    %v2071 = vsub.s32 0, %v2070
    %v2072 = vrot.slane %v2027, %v2071
    %2073 = vrot.lane.b32.xlu0 %v2072, 8
    %v2074 = vpop.permute.xlu0 %2073
    %2076 = vrot.lane.b32.xlu0 %v2072, 16
    %v2077 = vpop.permute.xlu0 %2076
    %2079 = vrot.lane.b32.xlu0 %v2072, 24
    %v2080 = vpop.permute.xlu0 %2079
    %2082 = vrot.lane.b32.xlu0 %v2072, 32
    %v2083 = vpop.permute.xlu0 %2082
    %2085 = vrot.lane.b32.xlu0 %v2072, 40
    %v2086 = vpop.permute.xlu0 %2085
    %2088 = vrot.lane.b32.xlu0 %v2072, 48
    %v2089 = vpop.permute.xlu0 %2088
    %2091 = vrot.lane.b32.xlu0 %v2072, 56
    %v2092 = vpop.permute.xlu0 %2091
    %v2094 = vsel %vm2054, %v2027, %v2074
    %v2095 = vsel %vm2056, %v2094, %v2077
    %v2096 = vsel %vm2058, %v2095, %v2080
    %v2097 = vsel %vm2060, %v2096, %v2083
    %v2098 = vsel %vm2062, %v2097, %v2086
    %v2099 = vsel %vm2064, %v2098, %v2089
    %v2100 = vsel %vm2066, %v2099, %v2092
    %v2101 = vlaneseq
    %v2102 = vshrl.u32 %v2101, 7
    %v2103 = vsub.s32 0, %v2102
    %v2104 = vrot.slane %v2067, %v2103
    %v2105 = vmul.f32 %v1849, %v2104
    %v2106 = vmul.f32 %v1850, %v2104
    %v2107 = vmul.f32 %v1851, %v2104
    %v2108 = vmul.f32 %v1852, %v2104
    %v2109 = vmul.f32 %v1853, %v2104
    %v2110 = vmul.f32 %v1854, %v2104
    %v2111 = vmul.f32 %v1855, %v2104
    %v2112 = vmul.f32 %v1856, %v2104
    %v2113 = vmul.f32 %v1857, %v2104
    %v2114 = vmul.f32 %v1858, %v2104
    %v2115 = vmul.f32 %v1859, %v2104
    %v2116 = vmul.f32 %v1860, %v2104
    %v2117 = vmul.f32 %v1861, %v2104
    %v2118 = vmul.f32 %v1862, %v2104
    %v2119 = vmul.f32 %v1863, %v2104
    %v2120 = vmul.f32 %v1864, %v2104
    %v2121 = vlaneseq
    %v2122 = vshrl.u32 %v2121, 7
    %v2123 = vsub.s32 0, %v2122
    %v2124 = vrot.slane %v2100, %v2123
    %v2125 = vadd.f32 %v2105, %v2124
    %v2126 = vadd.f32 %v2106, %v2124
    %v2127 = vadd.f32 %v2107, %v2124
    %v2128 = vadd.f32 %v2108, %v2124
    %v2129 = vadd.f32 %v2109, %v2124
    %v2130 = vadd.f32 %v2110, %v2124
    %v2131 = vadd.f32 %v2111, %v2124
    %v2132 = vadd.f32 %v2112, %v2124
    %v2133 = vadd.f32 %v2113, %v2124
    %v2134 = vadd.f32 %v2114, %v2124
    %v2135 = vadd.f32 %v2115, %v2124
    %v2136 = vadd.f32 %v2116, %v2124
    %v2137 = vadd.f32 %v2117, %v2124
    %v2138 = vadd.f32 %v2118, %v2124
    %v2139 = vadd.f32 %v2119, %v2124
    %v2140 = vadd.f32 %v2120, %v2124
    %v2141 = vmax.f32 %v2125, 0.0
    %v2142 = vmax.f32 %v2126, 0.0
    %v2143 = vmax.f32 %v2127, 0.0
    %v2144 = vmax.f32 %v2128, 0.0
    %v2145 = vmax.f32 %v2129, 0.0
    %v2146 = vmax.f32 %v2130, 0.0
    %v2147 = vmax.f32 %v2131, 0.0
    %v2148 = vmax.f32 %v2132, 0.0
    %v2149 = vmax.f32 %v2133, 0.0
    %v2150 = vmax.f32 %v2134, 0.0
    %v2151 = vmax.f32 %v2135, 0.0
    %v2152 = vmax.f32 %v2136, 0.0
    %v2153 = vmax.f32 %v2137, 0.0
    %v2154 = vmax.f32 %v2138, 0.0
    %v2155 = vmax.f32 %v2139, 0.0
    %v2156 = vmax.f32 %v2140, 0.0
    %2173 = vrot.lane.b32.xlu0 %v2141, 8
    %v2174 = vpop.permute.xlu0 %2173
    %2175 = vrot.lane.b32.xlu0 %v2142, 8
    %v2176 = vpop.permute.xlu0 %2175
    %2177 = vrot.lane.b32.xlu0 %v2143, 8
    %v2178 = vpop.permute.xlu0 %2177
    %2179 = vrot.lane.b32.xlu0 %v2144, 8
    %v2180 = vpop.permute.xlu0 %2179
    %2181 = vrot.lane.b32.xlu0 %v2145, 8
    %v2182 = vpop.permute.xlu0 %2181
    %2183 = vrot.lane.b32.xlu0 %v2146, 8
    %v2184 = vpop.permute.xlu0 %2183
    %2185 = vrot.lane.b32.xlu0 %v2147, 8
    %v2186 = vpop.permute.xlu0 %2185
    %2187 = vrot.lane.b32.xlu0 %v2148, 8
    %v2188 = vpop.permute.xlu0 %2187
    %2189 = vrot.lane.b32.xlu0 %v2149, 8
    %v2190 = vpop.permute.xlu0 %2189
    %2191 = vrot.lane.b32.xlu0 %v2150, 8
    %v2192 = vpop.permute.xlu0 %2191
    %2193 = vrot.lane.b32.xlu0 %v2151, 8
    %v2194 = vpop.permute.xlu0 %2193
    %2195 = vrot.lane.b32.xlu0 %v2152, 8
    %v2196 = vpop.permute.xlu0 %2195
    %2197 = vrot.lane.b32.xlu0 %v2153, 8
    %v2198 = vpop.permute.xlu0 %2197
    %2199 = vrot.lane.b32.xlu0 %v2154, 8
    %v2200 = vpop.permute.xlu0 %2199
    %2201 = vrot.lane.b32.xlu0 %v2155, 8
    %v2202 = vpop.permute.xlu0 %2201
    %2203 = vrot.lane.b32.xlu0 %v2156, 8
    %v2204 = vpop.permute.xlu0 %2203
    %v2221 = vsel %vm2054, 0.0, %v2174
    %v2222 = vsel %vm2054, 0.0, %v2176
    %v2223 = vsel %vm2054, 0.0, %v2178
    %v2224 = vsel %vm2054, 0.0, %v2180
    %v2225 = vsel %vm2054, 0.0, %v2182
    %v2226 = vsel %vm2054, 0.0, %v2184
    %v2227 = vsel %vm2054, 0.0, %v2186
    %v2228 = vsel %vm2054, 0.0, %v2188
    %v2229 = vsel %vm2054, 0.0, %v2190
    %v2230 = vsel %vm2054, 0.0, %v2192
    %v2231 = vsel %vm2054, 0.0, %v2194
    %v2232 = vsel %vm2054, 0.0, %v2196
    %v2233 = vsel %vm2054, 0.0, %v2198
    %v2234 = vsel %vm2054, 0.0, %v2200
    %v2235 = vsel %vm2054, 0.0, %v2202
    %v2236 = vsel %vm2054, 0.0, %v2204
    %vm2237 = vcmask 588800
    %v2238 = vsel %vm2237, %v2221, 0.0
    %v2239 = vsel %vm2237, %v2222, 0.0
    %v2240 = vsel %vm2237, %v2223, 0.0
    %v2241 = vsel %vm2237, %v2224, 0.0
    %v2242 = vsel %vm2237, %v2225, 0.0
    %v2243 = vsel %vm2237, %v2226, 0.0
    %v2244 = vsel %vm2237, %v2227, 0.0
    %v2245 = vsel %vm2237, %v2228, 0.0
    %v2246 = vsel %vm2237, %v2229, 0.0
    %v2247 = vsel %vm2237, %v2230, 0.0
    %v2248 = vsel %vm2237, %v2231, 0.0
    %v2249 = vsel %vm2237, %v2232, 0.0
    %v2250 = vsel %vm2237, %v2233, 0.0
    %v2251 = vsel %vm2237, %v2234, 0.0
    %v2252 = vsel %vm2237, %v2235, 0.0
    %v2253 = vsel %vm2237, %v2236, 0.0
    %v2270 = vrot.slane %v2238, 7
    %v2271 = vrot.slane %v2239, 7
    %v2272 = vrot.slane %v2240, 7
    %v2273 = vrot.slane %v2241, 7
    %v2274 = vrot.slane %v2242, 7
    %v2275 = vrot.slane %v2243, 7
    %v2276 = vrot.slane %v2244, 7
    %v2277 = vrot.slane %v2245, 7
    %v2278 = vrot.slane %v2246, 7
    %v2279 = vrot.slane %v2247, 7
    %v2280 = vrot.slane %v2248, 7
    %v2281 = vrot.slane %v2249, 7
    %v2282 = vrot.slane %v2250, 7
    %v2283 = vrot.slane %v2251, 7
    %v2284 = vrot.slane %v2252, 7
    %v2285 = vrot.slane %v2253, 7
    %vm2302 = vcmask 1040384
    %v2303 = vsel %vm2302, 0.0, %v2270
    %v2304 = vsel %vm2302, 0.0, %v2271
    %v2305 = vsel %vm2302, 0.0, %v2272
    %v2306 = vsel %vm2302, 0.0, %v2273
    %v2307 = vsel %vm2302, 0.0, %v2274
    %v2308 = vsel %vm2302, 0.0, %v2275
    %v2309 = vsel %vm2302, 0.0, %v2276
    %v2310 = vsel %vm2302, 0.0, %v2277
    %v2311 = vsel %vm2302, 0.0, %v2278
    %v2312 = vsel %vm2302, 0.0, %v2279
    %v2313 = vsel %vm2302, 0.0, %v2280
    %v2314 = vsel %vm2302, 0.0, %v2281
    %v2315 = vsel %vm2302, 0.0, %v2282
    %v2316 = vsel %vm2302, 0.0, %v2283
    %v2317 = vsel %vm2302, 0.0, %v2284
    %v2318 = vsel %vm2302, 0.0, %v2285
    %v2319 = vsel %vm2302, %v2270, 0.0
    %v2320 = vsel %vm2302, %v2271, 0.0
    %v2321 = vsel %vm2302, %v2272, 0.0
    %v2322 = vsel %vm2302, %v2273, 0.0
    %v2323 = vsel %vm2302, %v2274, 0.0
    %v2324 = vsel %vm2302, %v2275, 0.0
    %v2325 = vsel %vm2302, %v2276, 0.0
    %v2326 = vsel %vm2302, %v2277, 0.0
    %v2327 = vsel %vm2302, %v2278, 0.0
    %v2328 = vsel %vm2302, %v2279, 0.0
    %v2329 = vsel %vm2302, %v2280, 0.0
    %v2330 = vsel %vm2302, %v2281, 0.0
    %v2331 = vsel %vm2302, %v2282, 0.0
    %v2332 = vsel %vm2302, %v2283, 0.0
    %v2333 = vsel %vm2302, %v2284, 0.0
    %v2334 = vsel %vm2302, %v2285, 0.0
    %v2335 = vld [vmem:[%s2] sm:$0xff]
    %v2336 = vld [vmem:[%s2 + $0x8] sm:$0xff]
    %v2337 = vld [vmem:[%s2 + $0x10] sm:$0xff]
    %v2338 = vld [vmem:[%s2 + $0x18] sm:$0xff]
    %v2339 = vld [vmem:[%s2 + $0x20] sm:$0xff]
    %v2340 = vld [vmem:[%s2 + $0x28] sm:$0xff]
    %v2341 = vld [vmem:[%s2 + $0x30] sm:$0xff]
    %v2342 = vld [vmem:[%s2 + $0x38] sm:$0xff]
    %v2343 = vld [vmem:[%s2 + $0x40] sm:$0xff]
    %v2344 = vld [vmem:[%s2 + $0x48] sm:$0xff]
    %v2374 = vrot.slane 0.0, 1
    %v2375 = vsel %vm109, %v2374, %v2374
    %v2376 = vrot.slane %v2303, 1
    %v2377 = vrot.slane %v2319, 1
    %v2378 = vsel %vm109, %v2376, %v2377
    %v2379 = vrot.slane %v2304, 1
    %v2380 = vrot.slane %v2320, 1
    %v2381 = vsel %vm109, %v2379, %v2380
    %v2382 = vrot.slane %v2305, 1
    %v2383 = vrot.slane %v2321, 1
    %v2384 = vsel %vm109, %v2382, %v2383
    %v2385 = vrot.slane %v2306, 1
    %v2386 = vrot.slane %v2322, 1
    %v2387 = vsel %vm109, %v2385, %v2386
    %v2388 = vrot.slane %v2307, 1
    %v2389 = vrot.slane %v2323, 1
    %v2390 = vsel %vm109, %v2388, %v2389
    %v2391 = vrot.slane %v2308, 1
    %v2392 = vrot.slane %v2324, 1
    %v2393 = vsel %vm109, %v2391, %v2392
    %v2394 = vrot.slane %v2309, 1
    %v2395 = vrot.slane %v2325, 1
    %v2396 = vsel %vm109, %v2394, %v2395
    %v2397 = vrot.slane %v2311, 1
    %v2398 = vrot.slane %v2327, 1
    %v2399 = vsel %vm109, %v2397, %v2398
    %v2400 = vrot.slane %v2312, 1
    %v2401 = vrot.slane %v2328, 1
    %v2402 = vsel %vm109, %v2400, %v2401
    %v2403 = vrot.slane %v2313, 1
    %v2404 = vrot.slane %v2329, 1
    %v2405 = vsel %vm109, %v2403, %v2404
    %v2406 = vrot.slane %v2314, 1
    %v2407 = vrot.slane %v2330, 1
    %v2408 = vsel %vm109, %v2406, %v2407
    %v2409 = vrot.slane %v2315, 1
    %v2410 = vrot.slane %v2331, 1
    %v2411 = vsel %vm109, %v2409, %v2410
    %v2412 = vrot.slane %v2316, 1
    %v2413 = vrot.slane %v2332, 1
    %v2414 = vsel %vm109, %v2412, %v2413
    %v2415 = vrot.slane %v2317, 1
    %v2416 = vrot.slane %v2333, 1
    %v2417 = vsel %vm109, %v2415, %v2416
    %s2418 = scalar_lea.vmem %s2, 80
    %v2419 = vld [vmem:[%s2418] sm:$0xff]
    %v2420 = vld [vmem:[%s2418 + $0x8] sm:$0xff]
    %v2421 = vld [vmem:[%s2418 + $0x10] sm:$0xff]
    %v2422 = vld [vmem:[%s2418 + $0x18] sm:$0xff]
    %v2423 = vld [vmem:[%s2418 + $0x20] sm:$0xff]
    %v2424 = vld [vmem:[%s2418 + $0x28] sm:$0xff]
    %v2425 = vld [vmem:[%s2418 + $0x30] sm:$0xff]
    %v2426 = vld [vmem:[%s2418 + $0x38] sm:$0xff]
    %v2427 = vld [vmem:[%s2418 + $0x40] sm:$0xff]
    %v2428 = vld [vmem:[%s2418 + $0x48] sm:$0xff]
    %v2429 = vsel %vm169, %v2375, 0
    %v2431 = vsel %vm169, %v2378, 0
    %v2433 = vsel %vm169, %v2381, 0
    %v2435 = vsel %vm169, %v2384, 0
    %v2437 = vsel %vm169, %v2387, 0
    %v2439 = vsel %vm169, %v2390, 0
    %v2441 = vsel %vm169, %v2393, 0
    %v2443 = vsel %vm169, %v2396, 0
    %v2445 = vsel %vm169, %v2399, 0
    %v2447 = vsel %vm169, %v2402, 0
    %v2449 = vsel %vm169, %v2405, 0
    %v2451 = vsel %vm169, %v2408, 0
    %v2453 = vsel %vm169, %v2411, 0
    %v2455 = vsel %vm169, %v2414, 0
    %v2457 = vsel %vm169, %v2417, 0
    %2459 = vmatprep.subr.mxu0 0.0
    %2460 = vmatpush1.msra.mxu0 %v2419
    %2461 = vmatprep.subr.mxu0 0.0
    %2462 = vmatpush1.msra.mxu0 %v2420
    %2463 = vmatprep.subr.mxu0 0.0
    %2464 = vmatpush1.msra.mxu0 %v2421
    %2465 = vmatprep.subr.mxu0 0.0
    %2466 = vmatpush1.msra.mxu0 %v2422
    %2467 = vmatprep.subr.mxu0 0.0
    %2468 = vmatpush1.msra.mxu0 %v2423
    %2469 = vmatprep.subr.mxu0 0.0
    %2470 = vmatpush1.msra.mxu0 %v2424
    %2471 = vmatprep.subr.mxu0 0.0
    %2472 = vmatpush1.msra.mxu0 %v2425
    %2473 = vmatprep.subr.mxu0 0.0
    %2474 = vmatpush1.msra.mxu0 %v2426
    %2475 = vmatprep.subr.mxu0 0.0
    %2476 = vmatpush1.msra.mxu0 %v2427
    %2477 = vmatprep.subr.mxu0 0.0
    %2478 = vmatpush1.msra.mxu0 %v2428
    %2479 = vmatprep.subr.mxu0 0.0
    %2480 = vmatpush1.msra.mxu0 0.0
    %2481 = vmatprep.subr.mxu0 0.0
    %2482 = vmatpush1.msra.mxu0 0.0
    %2483 = vmatprep.subr.mxu0 0.0
    %2484 = vmatpush1.msra.mxu0 0.0
    %2485 = vmatprep.subr.mxu0 0.0
    %2486 = vmatpush1.msra.mxu0 0.0
    %2487 = vmatprep.subr.mxu0 0.0
    %2488 = vmatpush1.msra.mxu0 0.0
    %2489 = vmatprep.subr.mxu0 0.0
    %2490 = vmatpush1.msra.mxu0 0.0
    %2491 = vmatprep.subr.mxu0 0.0
    %2492 = vmatpush1.msra.mxu0 0.0
    %2493 = vmatprep.subr.mxu0 0.0
    %2494 = vmatpush1.msra.mxu0 0.0
    %2495 = vmatprep.subr.mxu0 0.0
    %2496 = vmatpush1.msra.mxu0 0.0
    %2497 = vmatprep.subr.mxu0 0.0
    %2498 = vmatpush1.msra.mxu0 0.0
    %2499 = vmatprep.subr.mxu0 0.0
    %2500 = vmatpush1.msra.mxu0 0.0
    %2501 = vmatprep.subr.mxu0 0.0
    %2502 = vmatpush1.msra.mxu0 0.0
    %2503 = vmatprep.subr.mxu0 0.0
    %2504 = vmatpush1.msra.mxu0 0.0
    %2505 = vmatprep.subr.mxu0 0.0
    %2506 = vmatpush1.msra.mxu0 0.0
    %2507 = vmatprep.subr.mxu0 0.0
    %2508 = vmatpush1.msra.mxu0 0.0
    %2509 = vmatprep.subr.mxu0 0.0
    %2510 = vmatpush1.msra.mxu0 0.0
    %2511 = vmatprep.subr.mxu0 0.0
    %2512 = vmatpush1.msra.mxu0 0.0
    %2513 = vmatprep.subr.mxu0 0.0
    %2514 = vmatpush1.msra.mxu0 0.0
    %2515 = vmatprep.subr.mxu0 0.0
    %2516 = vmatpush1.msra.mxu0 0.0
    %2517 = vmatprep.subr.mxu0 0.0
    %2518 = vmatpush1.msra.mxu0 0.0
    %2519 = vmatprep.subr.mxu0 0.0
    %2520 = vmatpush1.msra.mxu0 0.0
    %2521 = vmatprep.subr.mxu0 0.0
    %2522 = vmatpush1.msra.mxu0 0.0
    %2523 = vmatprep.mubr.f32.mxu0 0.0
    %2524 = vmatmul.mubr.f32.gmra.mrb[0].mxu0 %v2429
    %v2525 = vpop.f32.mrb[0].mxu0
    %v2526 = vadd.f32 0.0, %v2525
    %v2527 = vpop.f32.mrb[0].mxu0
    %2528 = vmatprep.mubr.f32.mxu0 0.0
    %2529 = vmatmul.mubr.f32.gmra.mrb[0].mxu0 %v2431
    %v2530 = vpop.f32.mrb[0].mxu0
    %v2531 = vadd.f32 0.0, %v2530
    %v2532 = vpop.f32.mrb[0].mxu0
    %2533 = vmatprep.mubr.f32.mxu0 0.0
    %2534 = vmatmul.mubr.f32.gmra.mrb[0].mxu0 %v2433
    %v2535 = vpop.f32.mrb[0].mxu0
    %v2536 = vadd.f32 0.0, %v2535
    %v2537 = vpop.f32.mrb[0].mxu0
    %2538 = vmatprep.mubr.f32.mxu0 0.0
    %2539 = vmatmul.mubr.f32.gmra.mrb[0].mxu0 %v2435
    %v2540 = vpop.f32.mrb[0].mxu0
    %v2541 = vadd.f32 0.0, %v2540
    %v2542 = vpop.f32.mrb[0].mxu0
    %2543 = vmatprep.mubr.f32.mxu0 0.0
    %2544 = vmatmul.mubr.f32.gmra.mrb[0].mxu0 %v2437
    %v2545 = vpop.f32.mrb[0].mxu0
    %v2546 = vadd.f32 0.0, %v2545
    %v2547 = vpop.f32.mrb[0].mxu0
    %2548 = vmatprep.mubr.f32.mxu0 0.0
    %2549 = vmatmul.mubr.f32.gmra.mrb[0].mxu0 %v2439
    %v2550 = vpop.f32.mrb[0].mxu0
    %v2551 = vadd.f32 0.0, %v2550
    %v2552 = vpop.f32.mrb[0].mxu0
    %2553 = vmatprep.mubr.f32.mxu0 0.0
    %2554 = vmatmul.mubr.f32.gmra.mrb[0].mxu0 %v2441
    %v2555 = vpop.f32.mrb[0].mxu0
    %v2556 = vadd.f32 0.0, %v2555
    %v2557 = vpop.f32.mrb[0].mxu0
    %2558 = vmatprep.mubr.f32.mxu0 0.0
    %2559 = vmatmul.mubr.f32.gmra.mrb[0].mxu0 %v2443
    %v2560 = vpop.f32.mrb[0].mxu0
    %v2561 = vadd.f32 0.0, %v2560
    %v2562 = vpop.f32.mrb[0].mxu0
    %2563 = vmatprep.mubr.f32.mxu0 0.0
    %2564 = vmatmul.mubr.f32.gmra.mrb[0].mxu0 %v2429
    %v2565 = vpop.f32.mrb[0].mxu0
    %v2566 = vadd.f32 0.0, %v2565
    %v2567 = vpop.f32.mrb[0].mxu0
    %2568 = vmatprep.mubr.f32.mxu0 0.0
    %2569 = vmatmul.mubr.f32.gmra.mrb[0].mxu0 %v2445
    %v2570 = vpop.f32.mrb[0].mxu0
    %v2571 = vadd.f32 0.0, %v2570
    %v2572 = vpop.f32.mrb[0].mxu0
    %2573 = vmatprep.mubr.f32.mxu0 0.0
    %2574 = vmatmul.mubr.f32.gmra.mrb[0].mxu0 %v2447
    %v2575 = vpop.f32.mrb[0].mxu0
    %v2576 = vadd.f32 0.0, %v2575
    %v2577 = vpop.f32.mrb[0].mxu0
    %2578 = vmatprep.mubr.f32.mxu0 0.0
    %2579 = vmatmul.mubr.f32.gmra.mrb[0].mxu0 %v2449
    %v2580 = vpop.f32.mrb[0].mxu0
    %v2581 = vadd.f32 0.0, %v2580
    %v2582 = vpop.f32.mrb[0].mxu0
    %2583 = vmatprep.mubr.f32.mxu0 0.0
    %2584 = vmatmul.mubr.f32.gmra.mrb[0].mxu0 %v2451
    %v2585 = vpop.f32.mrb[0].mxu0
    %v2586 = vadd.f32 0.0, %v2585
    %v2587 = vpop.f32.mrb[0].mxu0
    %2588 = vmatprep.mubr.f32.mxu0 0.0
    %2589 = vmatmul.mubr.f32.gmra.mrb[0].mxu0 %v2453
    %v2590 = vpop.f32.mrb[0].mxu0
    %v2591 = vadd.f32 0.0, %v2590
    %v2592 = vpop.f32.mrb[0].mxu0
    %2593 = vmatprep.mubr.f32.mxu0 0.0
    %2594 = vmatmul.mubr.f32.gmra.mrb[0].mxu0 %v2455
    %v2595 = vpop.f32.mrb[0].mxu0
    %v2596 = vadd.f32 0.0, %v2595
    %v2597 = vpop.f32.mrb[0].mxu0
    %2598 = vmatprep.mubr.f32.mxu0 0.0
    %2599 = vmatmul.mubr.f32.gmra.mrb[0].mxu0 %v2457
    %v2600 = vpop.f32.mrb[0].mxu0
    %v2601 = vadd.f32 0.0, %v2600
    %v2602 = vpop.f32.mrb[0].mxu0
    %2603 = vdwg.mxu0
    %v2604 = vsel %vm169, 0.0, 0
    %v2606 = vsel %vm169, %v2303, 0
    %v2608 = vsel %vm169, %v2304, 0
    %v2610 = vsel %vm169, %v2305, 0
    %v2612 = vsel %vm169, %v2306, 0
    %v2614 = vsel %vm169, %v2307, 0
    %v2616 = vsel %vm169, %v2308, 0
    %v2618 = vsel %vm169, %v2309, 0
    %v2620 = vsel %vm169, %v2311, 0
    %v2622 = vsel %vm169, %v2312, 0
    %v2624 = vsel %vm169, %v2313, 0
    %v2626 = vsel %vm169, %v2314, 0
    %v2628 = vsel %vm169, %v2315, 0
    %v2630 = vsel %vm169, %v2316, 0
    %v2632 = vsel %vm169, %v2317, 0
    %2634 = vmatprep.subr.mxu0 0.0
    %2635 = vmatpush1.msra.mxu0 %v2335
    %2636 = vmatprep.subr.mxu0 0.0
    %2637 = vmatpush1.msra.mxu0 %v2336
    %2638 = vmatprep.subr.mxu0 0.0
    %2639 = vmatpush1.msra.mxu0 %v2337
    %2640 = vmatprep.subr.mxu0 0.0
    %2641 = vmatpush1.msra.mxu0 %v2338
    %2642 = vmatprep.subr.mxu0 0.0
    %2643 = vmatpush1.msra.mxu0 %v2339
    %2644 = vmatprep.subr.mxu0 0.0
    %2645 = vmatpush1.msra.mxu0 %v2340
    %2646 = vmatprep.subr.mxu0 0.0
    %2647 = vmatpush1.msra.mxu0 %v2341
    %2648 = vmatprep.subr.mxu0 0.0
    %2649 = vmatpush1.msra.mxu0 %v2342
    %2650 = vmatprep.subr.mxu0 0.0
    %2651 = vmatpush1.msra.mxu0 %v2343
    %2652 = vmatprep.subr.mxu0 0.0
    %2653 = vmatpush1.msra.mxu0 %v2344
    %2654 = vmatprep.subr.mxu0 0.0
    %2655 = vmatpush1.msra.mxu0 0.0
    %2656 = vmatprep.subr.mxu0 0.0
    %2657 = vmatpush1.msra.mxu0 0.0
    %2658 = vmatprep.subr.mxu0 0.0
    %2659 = vmatpush1.msra.mxu0 0.0
    %2660 = vmatprep.subr.mxu0 0.0
    %2661 = vmatpush1.msra.mxu0 0.0
    %2662 = vmatprep.subr.mxu0 0.0
    %2663 = vmatpush1.msra.mxu0 0.0
    %2664 = vmatprep.subr.mxu0 0.0
    %2665 = vmatpush1.msra.mxu0 0.0
    %2666 = vmatprep.subr.mxu0 0.0
    %2667 = vmatpush1.msra.mxu0 0.0
    %2668 = vmatprep.subr.mxu0 0.0
    %2669 = vmatpush1.msra.mxu0 0.0
    %2670 = vmatprep.subr.mxu0 0.0
    %2671 = vmatpush1.msra.mxu0 0.0
    %2672 = vmatprep.subr.mxu0 0.0
    %2673 = vmatpush1.msra.mxu0 0.0
    %2674 = vmatprep.subr.mxu0 0.0
    %2675 = vmatpush1.msra.mxu0 0.0
    %2676 = vmatprep.subr.mxu0 0.0
    %2677 = vmatpush1.msra.mxu0 0.0
    %2678 = vmatprep.subr.mxu0 0.0
    %2679 = vmatpush1.msra.mxu0 0.0
    %2680 = vmatprep.subr.mxu0 0.0
    %2681 = vmatpush1.msra.mxu0 0.0
    %2682 = vmatprep.subr.mxu0 0.0
    %2683 = vmatpush1.msra.mxu0 0.0
    %2684 = vmatprep.subr.mxu0 0.0
    %2685 = vmatpush1.msra.mxu0 0.0
    %2686 = vmatprep.subr.mxu0 0.0
    %2687 = vmatpush1.msra.mxu0 0.0
    %2688 = vmatprep.subr.mxu0 0.0
    %2689 = vmatpush1.msra.mxu0 0.0
    %2690 = vmatprep.subr.mxu0 0.0
    %2691 = vmatpush1.msra.mxu0 0.0
    %2692 = vmatprep.subr.mxu0 0.0
    %2693 = vmatpush1.msra.mxu0 0.0
    %2694 = vmatprep.subr.mxu0 0.0
    %2695 = vmatpush1.msra.mxu0 0.0
    %2696 = vmatprep.subr.mxu0 0.0
    %2697 = vmatpush1.msra.mxu0 0.0
    %2698 = vmatprep.mubr.f32.mxu0 0.0
    %2699 = vmatmul.mubr.f32.gmra.mrb[0].mxu0 %v2604
    %v2700 = vpop.f32.mrb[0].mxu0
    %v2701 = vadd.f32 %v2526, %v2700
    %v2702 = vpop.f32.mrb[0].mxu0
    %2703 = vmatprep.mubr.f32.mxu0 0.0
    %2704 = vmatmul.mubr.f32.gmra.mrb[0].mxu0 %v2606
    %v2705 = vpop.f32.mrb[0].mxu0
    %v2706 = vadd.f32 %v2531, %v2705
    %v2707 = vpop.f32.mrb[0].mxu0
    %2708 = vmatprep.mubr.f32.mxu0 0.0
    %2709 = vmatmul.mubr.f32.gmra.mrb[0].mxu0 %v2608
    %v2710 = vpop.f32.mrb[0].mxu0
    %v2711 = vadd.f32 %v2536, %v2710
    %v2712 = vpop.f32.mrb[0].mxu0
    %2713 = vmatprep.mubr.f32.mxu0 0.0
    %2714 = vmatmul.mubr.f32.gmra.mrb[0].mxu0 %v2610
    %v2715 = vpop.f32.mrb[0].mxu0
    %v2716 = vadd.f32 %v2541, %v2715
    %v2717 = vpop.f32.mrb[0].mxu0
    %2718 = vmatprep.mubr.f32.mxu0 0.0
    %2719 = vmatmul.mubr.f32.gmra.mrb[0].mxu0 %v2612
    %v2720 = vpop.f32.mrb[0].mxu0
    %v2721 = vadd.f32 %v2546, %v2720
    %v2722 = vpop.f32.mrb[0].mxu0
    %2723 = vmatprep.mubr.f32.mxu0 0.0
    %2724 = vmatmul.mubr.f32.gmra.mrb[0].mxu0 %v2614
    %v2725 = vpop.f32.mrb[0].mxu0
    %v2726 = vadd.f32 %v2551, %v2725
    %v2727 = vpop.f32.mrb[0].mxu0
    %2728 = vmatprep.mubr.f32.mxu0 0.0
    %2729 = vmatmul.mubr.f32.gmra.mrb[0].mxu0 %v2616
    %v2730 = vpop.f32.mrb[0].mxu0
    %v2731 = vadd.f32 %v2556, %v2730
    %v2732 = vpop.f32.mrb[0].mxu0
    %2733 = vmatprep.mubr.f32.mxu0 0.0
    %2734 = vmatmul.mubr.f32.gmra.mrb[0].mxu0 %v2618
    %v2735 = vpop.f32.mrb[0].mxu0
    %v2736 = vadd.f32 %v2561, %v2735
    %v2737 = vpop.f32.mrb[0].mxu0
    %2738 = vmatprep.mubr.f32.mxu0 0.0
    %2739 = vmatmul.mubr.f32.gmra.mrb[0].mxu0 %v2604
    %v2740 = vpop.f32.mrb[0].mxu0
    %v2741 = vadd.f32 %v2566, %v2740
    %v2742 = vpop.f32.mrb[0].mxu0
    %2743 = vmatprep.mubr.f32.mxu0 0.0
    %2744 = vmatmul.mubr.f32.gmra.mrb[0].mxu0 %v2620
    %v2745 = vpop.f32.mrb[0].mxu0
    %v2746 = vadd.f32 %v2571, %v2745
    %v2747 = vpop.f32.mrb[0].mxu0
    %2748 = vmatprep.mubr.f32.mxu0 0.0
    %2749 = vmatmul.mubr.f32.gmra.mrb[0].mxu0 %v2622
    %v2750 = vpop.f32.mrb[0].mxu0
    %v2751 = vadd.f32 %v2576, %v2750
    %v2752 = vpop.f32.mrb[0].mxu0
    %2753 = vmatprep.mubr.f32.mxu0 0.0
    %2754 = vmatmul.mubr.f32.gmra.mrb[0].mxu0 %v2624
    %v2755 = vpop.f32.mrb[0].mxu0
    %v2756 = vadd.f32 %v2581, %v2755
    %v2757 = vpop.f32.mrb[0].mxu0
    %2758 = vmatprep.mubr.f32.mxu0 0.0
    %2759 = vmatmul.mubr.f32.gmra.mrb[0].mxu0 %v2626
    %v2760 = vpop.f32.mrb[0].mxu0
    %v2761 = vadd.f32 %v2586, %v2760
    %v2762 = vpop.f32.mrb[0].mxu0
    %2763 = vmatprep.mubr.f32.mxu0 0.0
    %2764 = vmatmul.mubr.f32.gmra.mrb[0].mxu0 %v2628
    %v2765 = vpop.f32.mrb[0].mxu0
    %v2766 = vadd.f32 %v2591, %v2765
    %v2767 = vpop.f32.mrb[0].mxu0
    %2768 = vmatprep.mubr.f32.mxu0 0.0
    %2769 = vmatmul.mubr.f32.gmra.mrb[0].mxu0 %v2630
    %v2770 = vpop.f32.mrb[0].mxu0
    %v2771 = vadd.f32 %v2596, %v2770
    %v2772 = vpop.f32.mrb[0].mxu0
    %2773 = vmatprep.mubr.f32.mxu0 0.0
    %2774 = vmatmul.mubr.f32.gmra.mrb[0].mxu0 %v2632
    %v2775 = vpop.f32.mrb[0].mxu0
    %v2776 = vadd.f32 %v2601, %v2775
    %v2777 = vpop.f32.mrb[0].mxu0
    %2778 = vdwg.mxu0
    %v2779 = vrot.slane 0.0, 2
    %v2780 = vsel %vm524, %v2779, %v2779
    %v2781 = vrot.slane %v2303, 2
    %v2782 = vrot.slane %v2319, 2
    %v2783 = vsel %vm524, %v2781, %v2782
    %v2784 = vrot.slane %v2304, 2
    %v2785 = vrot.slane %v2320, 2
    %v2786 = vsel %vm524, %v2784, %v2785
    %v2787 = vrot.slane %v2305, 2
    %v2788 = vrot.slane %v2321, 2
    %v2789 = vsel %vm524, %v2787, %v2788
    %v2790 = vrot.slane %v2306, 2
    %v2791 = vrot.slane %v2322, 2
    %v2792 = vsel %vm524, %v2790, %v2791
    %v2793 = vrot.slane %v2307, 2
    %v2794 = vrot.slane %v2323, 2
    %v2795 = vsel %vm524, %v2793, %v2794
    %v2796 = vrot.slane %v2308, 2
    %v2797 = vrot.slane %v2324, 2
    %v2798 = vsel %vm524, %v2796, %v2797
    %v2799 = vrot.slane %v2309, 2
    %v2800 = vrot.slane %v2325, 2
    %v2801 = vsel %vm524, %v2799, %v2800
    %v2802 = vrot.slane %v2311, 2
    %v2803 = vrot.slane %v2327, 2
    %v2804 = vsel %vm524, %v2802, %v2803
    %v2805 = vrot.slane %v2312, 2
    %v2806 = vrot.slane %v2328, 2
    %v2807 = vsel %vm524, %v2805, %v2806
    %v2808 = vrot.slane %v2313, 2
    %v2809 = vrot.slane %v2329, 2
    %v2810 = vsel %vm524, %v2808, %v2809
    %v2811 = vrot.slane %v2314, 2
    %v2812 = vrot.slane %v2330, 2
    %v2813 = vsel %vm524, %v2811, %v2812
    %v2814 = vrot.slane %v2315, 2
    %v2815 = vrot.slane %v2331, 2
    %v2816 = vsel %vm524, %v2814, %v2815
    %v2817 = vrot.slane %v2316, 2
    %v2818 = vrot.slane %v2332, 2
    %v2819 = vsel %vm524, %v2817, %v2818
    %v2820 = vrot.slane %v2317, 2
    %v2821 = vrot.slane %v2333, 2
    %v2822 = vsel %vm524, %v2820, %v2821
    %s2823 = scalar_lea.vmem %s2, 160
    %v2824 = vld [vmem:[%s2823] sm:$0xff]
    %v2825 = vld [vmem:[%s2823 + $0x8] sm:$0xff]
    %v2826 = vld [vmem:[%s2823 + $0x10] sm:$0xff]
    %v2827 = vld [vmem:[%s2823 + $0x18] sm:$0xff]
    %v2828 = vld [vmem:[%s2823 + $0x20] sm:$0xff]
    %v2829 = vld [vmem:[%s2823 + $0x28] sm:$0xff]
    %v2830 = vld [vmem:[%s2823 + $0x30] sm:$0xff]
    %v2831 = vld [vmem:[%s2823 + $0x38] sm:$0xff]
    %v2832 = vld [vmem:[%s2823 + $0x40] sm:$0xff]
    %v2833 = vld [vmem:[%s2823 + $0x48] sm:$0xff]
    %v2834 = vsel %vm169, %v2780, 0
    %v2836 = vsel %vm169, %v2783, 0
    %v2838 = vsel %vm169, %v2786, 0
    %v2840 = vsel %vm169, %v2789, 0
    %v2842 = vsel %vm169, %v2792, 0
    %v2844 = vsel %vm169, %v2795, 0
    %v2846 = vsel %vm169, %v2798, 0
    %v2848 = vsel %vm169, %v2801, 0
    %v2850 = vsel %vm169, %v2804, 0
    %v2852 = vsel %vm169, %v2807, 0
    %v2854 = vsel %vm169, %v2810, 0
    %v2856 = vsel %vm169, %v2813, 0
    %v2858 = vsel %vm169, %v2816, 0
    %v2860 = vsel %vm169, %v2819, 0
    %v2862 = vsel %vm169, %v2822, 0
    %2864 = vmatprep.subr.mxu0 0.0
    %2865 = vmatpush1.msra.mxu0 %v2824
    %2866 = vmatprep.subr.mxu0 0.0
    %2867 = vmatpush1.msra.mxu0 %v2825
    %2868 = vmatprep.subr.mxu0 0.0
    %2869 = vmatpush1.msra.mxu0 %v2826
    %2870 = vmatprep.subr.mxu0 0.0
    %2871 = vmatpush1.msra.mxu0 %v2827
    %2872 = vmatprep.subr.mxu0 0.0
    %2873 = vmatpush1.msra.mxu0 %v2828
    %2874 = vmatprep.subr.mxu0 0.0
    %2875 = vmatpush1.msra.mxu0 %v2829
    %2876 = vmatprep.subr.mxu0 0.0
    %2877 = vmatpush1.msra.mxu0 %v2830
    %2878 = vmatprep.subr.mxu0 0.0
    %2879 = vmatpush1.msra.mxu0 %v2831
    %2880 = vmatprep.subr.mxu0 0.0
    %2881 = vmatpush1.msra.mxu0 %v2832
    %2882 = vmatprep.subr.mxu0 0.0
    %2883 = vmatpush1.msra.mxu0 %v2833
    %2884 = vmatprep.subr.mxu0 0.0
    %2885 = vmatpush1.msra.mxu0 0.0
    %2886 = vmatprep.subr.mxu0 0.0
    %2887 = vmatpush1.msra.mxu0 0.0
    %2888 = vmatprep.subr.mxu0 0.0
    %2889 = vmatpush1.msra.mxu0 0.0
    %2890 = vmatprep.subr.mxu0 0.0
    %2891 = vmatpush1.msra.mxu0 0.0
    %2892 = vmatprep.subr.mxu0 0.0
    %2893 = vmatpush1.msra.mxu0 0.0
    %2894 = vmatprep.subr.mxu0 0.0
    %2895 = vmatpush1.msra.mxu0 0.0
    %2896 = vmatprep.subr.mxu0 0.0
    %2897 = vmatpush1.msra.mxu0 0.0
    %2898 = vmatprep.subr.mxu0 0.0
    %2899 = vmatpush1.msra.mxu0 0.0
    %2900 = vmatprep.subr.mxu0 0.0
    %2901 = vmatpush1.msra.mxu0 0.0
    %2902 = vmatprep.subr.mxu0 0.0
    %2903 = vmatpush1.msra.mxu0 0.0
    %2904 = vmatprep.subr.mxu0 0.0
    %2905 = vmatpush1.msra.mxu0 0.0
    %2906 = vmatprep.subr.mxu0 0.0
    %2907 = vmatpush1.msra.mxu0 0.0
    %2908 = vmatprep.subr.mxu0 0.0
    %2909 = vmatpush1.msra.mxu0 0.0
    %2910 = vmatprep.subr.mxu0 0.0
    %2911 = vmatpush1.msra.mxu0 0.0
    %2912 = vmatprep.subr.mxu0 0.0
    %2913 = vmatpush1.msra.mxu0 0.0
    %2914 = vmatprep.subr.mxu0 0.0
    %2915 = vmatpush1.msra.mxu0 0.0
    %2916 = vmatprep.subr.mxu0 0.0
    %2917 = vmatpush1.msra.mxu0 0.0
    %2918 = vmatprep.subr.mxu0 0.0
    %2919 = vmatpush1.msra.mxu0 0.0
    %2920 = vmatprep.subr.mxu0 0.0
    %2921 = vmatpush1.msra.mxu0 0.0
    %2922 = vmatprep.subr.mxu0 0.0
    %2923 = vmatpush1.msra.mxu0 0.0
    %2924 = vmatprep.subr.mxu0 0.0
    %2925 = vmatpush1.msra.mxu0 0.0
    %2926 = vmatprep.subr.mxu0 0.0
    %2927 = vmatpush1.msra.mxu0 0.0
    %2928 = vmatprep.mubr.f32.mxu0 0.0
    %2929 = vmatmul.mubr.f32.gmra.mrb[0].mxu0 %v2834
    %v2930 = vpop.f32.mrb[0].mxu0
    %v2931 = vadd.f32 0.0, %v2930
    %v2932 = vpop.f32.mrb[0].mxu0
    %2933 = vmatprep.mubr.f32.mxu0 0.0
    %2934 = vmatmul.mubr.f32.gmra.mrb[0].mxu0 %v2836
    %v2935 = vpop.f32.mrb[0].mxu0
    %v2936 = vadd.f32 0.0, %v2935
    %v2937 = vpop.f32.mrb[0].mxu0
    %2938 = vmatprep.mubr.f32.mxu0 0.0
    %2939 = vmatmul.mubr.f32.gmra.mrb[0].mxu0 %v2838
    %v2940 = vpop.f32.mrb[0].mxu0
    %v2941 = vadd.f32 0.0, %v2940
    %v2942 = vpop.f32.mrb[0].mxu0
    %2943 = vmatprep.mubr.f32.mxu0 0.0
    %2944 = vmatmul.mubr.f32.gmra.mrb[0].mxu0 %v2840
    %v2945 = vpop.f32.mrb[0].mxu0
    %v2946 = vadd.f32 0.0, %v2945
    %v2947 = vpop.f32.mrb[0].mxu0
    %2948 = vmatprep.mubr.f32.mxu0 0.0
    %2949 = vmatmul.mubr.f32.gmra.mrb[0].mxu0 %v2842
    %v2950 = vpop.f32.mrb[0].mxu0
    %v2951 = vadd.f32 0.0, %v2950
    %v2952 = vpop.f32.mrb[0].mxu0
    %2953 = vmatprep.mubr.f32.mxu0 0.0
    %2954 = vmatmul.mubr.f32.gmra.mrb[0].mxu0 %v2844
    %v2955 = vpop.f32.mrb[0].mxu0
    %v2956 = vadd.f32 0.0, %v2955
    %v2957 = vpop.f32.mrb[0].mxu0
    %2958 = vmatprep.mubr.f32.mxu0 0.0
    %2959 = vmatmul.mubr.f32.gmra.mrb[0].mxu0 %v2846
    %v2960 = vpop.f32.mrb[0].mxu0
    %v2961 = vadd.f32 0.0, %v2960
    %v2962 = vpop.f32.mrb[0].mxu0
    %2963 = vmatprep.mubr.f32.mxu0 0.0
    %2964 = vmatmul.mubr.f32.gmra.mrb[0].mxu0 %v2848
    %v2965 = vpop.f32.mrb[0].mxu0
    %v2966 = vadd.f32 0.0, %v2965
    %v2967 = vpop.f32.mrb[0].mxu0
    %2968 = vmatprep.mubr.f32.mxu0 0.0
    %2969 = vmatmul.mubr.f32.gmra.mrb[0].mxu0 %v2834
    %v2970 = vpop.f32.mrb[0].mxu0
    %v2971 = vadd.f32 0.0, %v2970
    %v2972 = vpop.f32.mrb[0].mxu0
    %2973 = vmatprep.mubr.f32.mxu0 0.0
    %2974 = vmatmul.mubr.f32.gmra.mrb[0].mxu0 %v2850
    %v2975 = vpop.f32.mrb[0].mxu0
    %v2976 = vadd.f32 0.0, %v2975
    %v2977 = vpop.f32.mrb[0].mxu0
    %2978 = vmatprep.mubr.f32.mxu0 0.0
    %2979 = vmatmul.mubr.f32.gmra.mrb[0].mxu0 %v2852
    %v2980 = vpop.f32.mrb[0].mxu0
    %v2981 = vadd.f32 0.0, %v2980
    %v2982 = vpop.f32.mrb[0].mxu0
    %2983 = vmatprep.mubr.f32.mxu0 0.0
    %2984 = vmatmul.mubr.f32.gmra.mrb[0].mxu0 %v2854
    %v2985 = vpop.f32.mrb[0].mxu0
    %v2986 = vadd.f32 0.0, %v2985
    %v2987 = vpop.f32.mrb[0].mxu0
    %2988 = vmatprep.mubr.f32.mxu0 0.0
    %2989 = vmatmul.mubr.f32.gmra.mrb[0].mxu0 %v2856
    %v2990 = vpop.f32.mrb[0].mxu0
    %v2991 = vadd.f32 0.0, %v2990
    %v2992 = vpop.f32.mrb[0].mxu0
    %2993 = vmatprep.mubr.f32.mxu0 0.0
    %2994 = vmatmul.mubr.f32.gmra.mrb[0].mxu0 %v2858
    %v2995 = vpop.f32.mrb[0].mxu0
    %v2996 = vadd.f32 0.0, %v2995
    %v2997 = vpop.f32.mrb[0].mxu0
    %2998 = vmatprep.mubr.f32.mxu0 0.0
    %2999 = vmatmul.mubr.f32.gmra.mrb[0].mxu0 %v2860
    %v3000 = vpop.f32.mrb[0].mxu0
    %v3001 = vadd.f32 0.0, %v3000
    %v3002 = vpop.f32.mrb[0].mxu0
    %3003 = vmatprep.mubr.f32.mxu0 0.0
    %3004 = vmatmul.mubr.f32.gmra.mrb[0].mxu0 %v2862
    %v3005 = vpop.f32.mrb[0].mxu0
    %v3006 = vadd.f32 0.0, %v3005
    %v3007 = vpop.f32.mrb[0].mxu0
    %3008 = vdwg.mxu0
    %v3009 = vadd.f32 %v2701, %v2931
    %v3010 = vadd.f32 %v2706, %v2936
    %v3011 = vadd.f32 %v2711, %v2941
    %v3012 = vadd.f32 %v2716, %v2946
    %v3013 = vadd.f32 %v2721, %v2951
    %v3014 = vadd.f32 %v2726, %v2956
    %v3015 = vadd.f32 %v2731, %v2961
    %v3016 = vadd.f32 %v2736, %v2966
    %v3017 = vadd.f32 %v2741, %v2971
    %v3018 = vadd.f32 %v2746, %v2976
    %v3019 = vadd.f32 %v2751, %v2981
    %v3020 = vadd.f32 %v2756, %v2986
    %v3021 = vadd.f32 %v2761, %v2991
    %v3022 = vadd.f32 %v2766, %v2996
    %v3023 = vadd.f32 %v2771, %v3001
    %v3024 = vadd.f32 %v2776, %v3006
    %s3025 = scalar_lea.vmem %s2, 240
    %v3026 = vld [vmem:[%s3025] sm:$0xff]
    %v3027 = vld [vmem:[%s3025 + $0x8] sm:$0xff]
    %v3028 = vld [vmem:[%s3025 + $0x10] sm:$0xff]
    %v3029 = vld [vmem:[%s3025 + $0x18] sm:$0xff]
    %v3030 = vld [vmem:[%s3025 + $0x20] sm:$0xff]
    %v3031 = vld [vmem:[%s3025 + $0x28] sm:$0xff]
    %v3032 = vld [vmem:[%s3025 + $0x30] sm:$0xff]
    %v3033 = vld [vmem:[%s3025 + $0x38] sm:$0xff]
    %v3034 = vld [vmem:[%s3025 + $0x40] sm:$0xff]
    %v3035 = vld [vmem:[%s3025 + $0x48] sm:$0xff]
    %v3037 = vsel %vm169, %v2310, 0
    %v3040 = vsel %vm169, %v2318, 0
    %3042 = vmatprep.subr.mxu0 0.0
    %3043 = vmatpush1.msra.mxu0 %v3026
    %3044 = vmatprep.subr.mxu0 0.0
    %3045 = vmatpush1.msra.mxu0 %v3027
    %3046 = vmatprep.subr.mxu0 0.0
    %3047 = vmatpush1.msra.mxu0 %v3028
    %3048 = vmatprep.subr.mxu0 0.0
    %3049 = vmatpush1.msra.mxu0 %v3029
    %3050 = vmatprep.subr.mxu0 0.0
    %3051 = vmatpush1.msra.mxu0 %v3030
    %3052 = vmatprep.subr.mxu0 0.0
    %3053 = vmatpush1.msra.mxu0 %v3031
    %3054 = vmatprep.subr.mxu0 0.0
    %3055 = vmatpush1.msra.mxu0 %v3032
    %3056 = vmatprep.subr.mxu0 0.0
    %3057 = vmatpush1.msra.mxu0 %v3033
    %3058 = vmatprep.subr.mxu0 0.0
    %3059 = vmatpush1.msra.mxu0 %v3034
    %3060 = vmatprep.subr.mxu0 0.0
    %3061 = vmatpush1.msra.mxu0 %v3035
    %3062 = vmatprep.subr.mxu0 0.0
    %3063 = vmatpush1.msra.mxu0 0.0
    %3064 = vmatprep.subr.mxu0 0.0
    %3065 = vmatpush1.msra.mxu0 0.0
    %3066 = vmatprep.subr.mxu0 0.0
    %3067 = vmatpush1.msra.mxu0 0.0
    %3068 = vmatprep.subr.mxu0 0.0
    %3069 = vmatpush1.msra.mxu0 0.0
    %3070 = vmatprep.subr.mxu0 0.0
    %3071 = vmatpush1.msra.mxu0 0.0
    %3072 = vmatprep.subr.mxu0 0.0
    %3073 = vmatpush1.msra.mxu0 0.0
    %3074 = vmatprep.subr.mxu0 0.0
    %3075 = vmatpush1.msra.mxu0 0.0
    %3076 = vmatprep.subr.mxu0 0.0
    %3077 = vmatpush1.msra.mxu0 0.0
    %3078 = vmatprep.subr.mxu0 0.0
    %3079 = vmatpush1.msra.mxu0 0.0
    %3080 = vmatprep.subr.mxu0 0.0
    %3081 = vmatpush1.msra.mxu0 0.0
    %3082 = vmatprep.subr.mxu0 0.0
    %3083 = vmatpush1.msra.mxu0 0.0
    %3084 = vmatprep.subr.mxu0 0.0
    %3085 = vmatpush1.msra.mxu0 0.0
    %3086 = vmatprep.subr.mxu0 0.0
    %3087 = vmatpush1.msra.mxu0 0.0
    %3088 = vmatprep.subr.mxu0 0.0
    %3089 = vmatpush1.msra.mxu0 0.0
    %3090 = vmatprep.subr.mxu0 0.0
    %3091 = vmatpush1.msra.mxu0 0.0
    %3092 = vmatprep.subr.mxu0 0.0
    %3093 = vmatpush1.msra.mxu0 0.0
    %3094 = vmatprep.subr.mxu0 0.0
    %3095 = vmatpush1.msra.mxu0 0.0
    %3096 = vmatprep.subr.mxu0 0.0
    %3097 = vmatpush1.msra.mxu0 0.0
    %3098 = vmatprep.subr.mxu0 0.0
    %3099 = vmatpush1.msra.mxu0 0.0
    %3100 = vmatprep.subr.mxu0 0.0
    %3101 = vmatpush1.msra.mxu0 0.0
    %3102 = vmatprep.subr.mxu0 0.0
    %3103 = vmatpush1.msra.mxu0 0.0
    %3104 = vmatprep.subr.mxu0 0.0
    %3105 = vmatpush1.msra.mxu0 0.0
    %3106 = vmatprep.mubr.f32.mxu0 0.0
    %3107 = vmatmul.mubr.f32.gmra.mrb[0].mxu0 %v2606
    %v3108 = vpop.f32.mrb[0].mxu0
    %v3109 = vadd.f32 0.0, %v3108
    %v3110 = vpop.f32.mrb[0].mxu0
    %3111 = vmatprep.mubr.f32.mxu0 0.0
    %3112 = vmatmul.mubr.f32.gmra.mrb[0].mxu0 %v2608
    %v3113 = vpop.f32.mrb[0].mxu0
    %v3114 = vadd.f32 0.0, %v3113
    %v3115 = vpop.f32.mrb[0].mxu0
    %3116 = vmatprep.mubr.f32.mxu0 0.0
    %3117 = vmatmul.mubr.f32.gmra.mrb[0].mxu0 %v2610
    %v3118 = vpop.f32.mrb[0].mxu0
    %v3119 = vadd.f32 0.0, %v3118
    %v3120 = vpop.f32.mrb[0].mxu0
    %3121 = vmatprep.mubr.f32.mxu0 0.0
    %3122 = vmatmul.mubr.f32.gmra.mrb[0].mxu0 %v2612
    %v3123 = vpop.f32.mrb[0].mxu0
    %v3124 = vadd.f32 0.0, %v3123
    %v3125 = vpop.f32.mrb[0].mxu0
    %3126 = vmatprep.mubr.f32.mxu0 0.0
    %3127 = vmatmul.mubr.f32.gmra.mrb[0].mxu0 %v2614
    %v3128 = vpop.f32.mrb[0].mxu0
    %v3129 = vadd.f32 0.0, %v3128
    %v3130 = vpop.f32.mrb[0].mxu0
    %3131 = vmatprep.mubr.f32.mxu0 0.0
    %3132 = vmatmul.mubr.f32.gmra.mrb[0].mxu0 %v2616
    %v3133 = vpop.f32.mrb[0].mxu0
    %v3134 = vadd.f32 0.0, %v3133
    %v3135 = vpop.f32.mrb[0].mxu0
    %3136 = vmatprep.mubr.f32.mxu0 0.0
    %3137 = vmatmul.mubr.f32.gmra.mrb[0].mxu0 %v2618
    %v3138 = vpop.f32.mrb[0].mxu0
    %v3139 = vadd.f32 0.0, %v3138
    %v3140 = vpop.f32.mrb[0].mxu0
    %3141 = vmatprep.mubr.f32.mxu0 0.0
    %3142 = vmatmul.mubr.f32.gmra.mrb[0].mxu0 %v3037
    %v3143 = vpop.f32.mrb[0].mxu0
    %v3144 = vadd.f32 0.0, %v3143
    %v3145 = vpop.f32.mrb[0].mxu0
    %3146 = vmatprep.mubr.f32.mxu0 0.0
    %3147 = vmatmul.mubr.f32.gmra.mrb[0].mxu0 %v2620
    %v3148 = vpop.f32.mrb[0].mxu0
    %v3149 = vadd.f32 0.0, %v3148
    %v3150 = vpop.f32.mrb[0].mxu0
    %3151 = vmatprep.mubr.f32.mxu0 0.0
    %3152 = vmatmul.mubr.f32.gmra.mrb[0].mxu0 %v2622
    %v3153 = vpop.f32.mrb[0].mxu0
    %v3154 = vadd.f32 0.0, %v3153
    %v3155 = vpop.f32.mrb[0].mxu0
    %3156 = vmatprep.mubr.f32.mxu0 0.0
    %3157 = vmatmul.mubr.f32.gmra.mrb[0].mxu0 %v2624
    %v3158 = vpop.f32.mrb[0].mxu0
    %v3159 = vadd.f32 0.0, %v3158
    %v3160 = vpop.f32.mrb[0].mxu0
    %3161 = vmatprep.mubr.f32.mxu0 0.0
    %3162 = vmatmul.mubr.f32.gmra.mrb[0].mxu0 %v2626
    %v3163 = vpop.f32.mrb[0].mxu0
    %v3164 = vadd.f32 0.0, %v3163
    %v3165 = vpop.f32.mrb[0].mxu0
    %3166 = vmatprep.mubr.f32.mxu0 0.0
    %3167 = vmatmul.mubr.f32.gmra.mrb[0].mxu0 %v2628
    %v3168 = vpop.f32.mrb[0].mxu0
    %v3169 = vadd.f32 0.0, %v3168
    %v3170 = vpop.f32.mrb[0].mxu0
    %3171 = vmatprep.mubr.f32.mxu0 0.0
    %3172 = vmatmul.mubr.f32.gmra.mrb[0].mxu0 %v2630
    %v3173 = vpop.f32.mrb[0].mxu0
    %v3174 = vadd.f32 0.0, %v3173
    %v3175 = vpop.f32.mrb[0].mxu0
    %3176 = vmatprep.mubr.f32.mxu0 0.0
    %3177 = vmatmul.mubr.f32.gmra.mrb[0].mxu0 %v2632
    %v3178 = vpop.f32.mrb[0].mxu0
    %v3179 = vadd.f32 0.0, %v3178
    %v3180 = vpop.f32.mrb[0].mxu0
    %3181 = vmatprep.mubr.f32.mxu0 0.0
    %3182 = vmatmul.mubr.f32.gmra.mrb[0].mxu0 %v3040
    %v3183 = vpop.f32.mrb[0].mxu0
    %v3184 = vadd.f32 0.0, %v3183
    %v3185 = vpop.f32.mrb[0].mxu0
    %3186 = vdwg.mxu0
    %v3187 = vadd.f32 %v3009, %v3109
    %v3188 = vadd.f32 %v3010, %v3114
    %v3189 = vadd.f32 %v3011, %v3119
    %v3190 = vadd.f32 %v3012, %v3124
    %v3191 = vadd.f32 %v3013, %v3129
    %v3192 = vadd.f32 %v3014, %v3134
    %v3193 = vadd.f32 %v3015, %v3139
    %v3194 = vadd.f32 %v3016, %v3144
    %v3195 = vadd.f32 %v3017, %v3149
    %v3196 = vadd.f32 %v3018, %v3154
    %v3197 = vadd.f32 %v3019, %v3159
    %v3198 = vadd.f32 %v3020, %v3164
    %v3199 = vadd.f32 %v3021, %v3169
    %v3200 = vadd.f32 %v3022, %v3174
    %v3201 = vadd.f32 %v3023, %v3179
    %v3202 = vadd.f32 %v3024, %v3184
    %v3205 = vrot.slane %v2310, 1
    %v3206 = vrot.slane %v2326, 1
    %v3207 = vsel %vm109, %v3205, %v3206
    %v3208 = vrot.slane %v2318, 1
    %v3209 = vrot.slane %v2334, 1
    %v3210 = vsel %vm109, %v3208, %v3209
    %s3211 = scalar_lea.vmem %s2, 320
    %v3212 = vld [vmem:[%s3211] sm:$0xff]
    %v3213 = vld [vmem:[%s3211 + $0x8] sm:$0xff]
    %v3214 = vld [vmem:[%s3211 + $0x10] sm:$0xff]
    %v3215 = vld [vmem:[%s3211 + $0x18] sm:$0xff]
    %v3216 = vld [vmem:[%s3211 + $0x20] sm:$0xff]
    %v3217 = vld [vmem:[%s3211 + $0x28] sm:$0xff]
    %v3218 = vld [vmem:[%s3211 + $0x30] sm:$0xff]
    %v3219 = vld [vmem:[%s3211 + $0x38] sm:$0xff]
    %v3220 = vld [vmem:[%s3211 + $0x40] sm:$0xff]
    %v3221 = vld [vmem:[%s3211 + $0x48] sm:$0xff]
    %v3222 = vsel %vm169, %v3207, 0
    %v3224 = vsel %vm169, %v3210, 0
    %3226 = vmatprep.subr.mxu0 0.0
    %3227 = vmatpush1.msra.mxu0 %v3212
    %3228 = vmatprep.subr.mxu0 0.0
    %3229 = vmatpush1.msra.mxu0 %v3213
    %3230 = vmatprep.subr.mxu0 0.0
    %3231 = vmatpush1.msra.mxu0 %v3214
    %3232 = vmatprep.subr.mxu0 0.0
    %3233 = vmatpush1.msra.mxu0 %v3215
    %3234 = vmatprep.subr.mxu0 0.0
    %3235 = vmatpush1.msra.mxu0 %v3216
    %3236 = vmatprep.subr.mxu0 0.0
    %3237 = vmatpush1.msra.mxu0 %v3217
    %3238 = vmatprep.subr.mxu0 0.0
    %3239 = vmatpush1.msra.mxu0 %v3218
    %3240 = vmatprep.subr.mxu0 0.0
    %3241 = vmatpush1.msra.mxu0 %v3219
    %3242 = vmatprep.subr.mxu0 0.0
    %3243 = vmatpush1.msra.mxu0 %v3220
    %3244 = vmatprep.subr.mxu0 0.0
    %3245 = vmatpush1.msra.mxu0 %v3221
    %3246 = vmatprep.subr.mxu0 0.0
    %3247 = vmatpush1.msra.mxu0 0.0
    %3248 = vmatprep.subr.mxu0 0.0
    %3249 = vmatpush1.msra.mxu0 0.0
    %3250 = vmatprep.subr.mxu0 0.0
    %3251 = vmatpush1.msra.mxu0 0.0
    %3252 = vmatprep.subr.mxu0 0.0
    %3253 = vmatpush1.msra.mxu0 0.0
    %3254 = vmatprep.subr.mxu0 0.0
    %3255 = vmatpush1.msra.mxu0 0.0
    %3256 = vmatprep.subr.mxu0 0.0
    %3257 = vmatpush1.msra.mxu0 0.0
    %3258 = vmatprep.subr.mxu0 0.0
    %3259 = vmatpush1.msra.mxu0 0.0
    %3260 = vmatprep.subr.mxu0 0.0
    %3261 = vmatpush1.msra.mxu0 0.0
    %3262 = vmatprep.subr.mxu0 0.0
    %3263 = vmatpush1.msra.mxu0 0.0
    %3264 = vmatprep.subr.mxu0 0.0
    %3265 = vmatpush1.msra.mxu0 0.0
    %3266 = vmatprep.subr.mxu0 0.0
    %3267 = vmatpush1.msra.mxu0 0.0
    %3268 = vmatprep.subr.mxu0 0.0
    %3269 = vmatpush1.msra.mxu0 0.0
    %3270 = vmatprep.subr.mxu0 0.0
    %3271 = vmatpush1.msra.mxu0 0.0
    %3272 = vmatprep.subr.mxu0 0.0
    %3273 = vmatpush1.msra.mxu0 0.0
    %3274 = vmatprep.subr.mxu0 0.0
    %3275 = vmatpush1.msra.mxu0 0.0
    %3276 = vmatprep.subr.mxu0 0.0
    %3277 = vmatpush1.msra.mxu0 0.0
    %3278 = vmatprep.subr.mxu0 0.0
    %3279 = vmatpush1.msra.mxu0 0.0
    %3280 = vmatprep.subr.mxu0 0.0
    %3281 = vmatpush1.msra.mxu0 0.0
    %3282 = vmatprep.subr.mxu0 0.0
    %3283 = vmatpush1.msra.mxu0 0.0
    %3284 = vmatprep.subr.mxu0 0.0
    %3285 = vmatpush1.msra.mxu0 0.0
    %3286 = vmatprep.subr.mxu0 0.0
    %3287 = vmatpush1.msra.mxu0 0.0
    %3288 = vmatprep.subr.mxu0 0.0
    %3289 = vmatpush1.msra.mxu0 0.0
    %3290 = vmatprep.mubr.f32.mxu0 0.0
    %3291 = vmatmul.mubr.f32.gmra.mrb[0].mxu0 %v2431
    %v3292 = vpop.f32.mrb[0].mxu0
    %v3293 = vadd.f32 0.0, %v3292
    %v3294 = vpop.f32.mrb[0].mxu0
    %3295 = vmatprep.mubr.f32.mxu0 0.0
    %3296 = vmatmul.mubr.f32.gmra.mrb[0].mxu0 %v2433
    %v3297 = vpop.f32.mrb[0].mxu0
    %v3298 = vadd.f32 0.0, %v3297
    %v3299 = vpop.f32.mrb[0].mxu0
    %3300 = vmatprep.mubr.f32.mxu0 0.0
    %3301 = vmatmul.mubr.f32.gmra.mrb[0].mxu0 %v2435
    %v3302 = vpop.f32.mrb[0].mxu0
    %v3303 = vadd.f32 0.0, %v3302
    %v3304 = vpop.f32.mrb[0].mxu0
    %3305 = vmatprep.mubr.f32.mxu0 0.0
    %3306 = vmatmul.mubr.f32.gmra.mrb[0].mxu0 %v2437
    %v3307 = vpop.f32.mrb[0].mxu0
    %v3308 = vadd.f32 0.0, %v3307
    %v3309 = vpop.f32.mrb[0].mxu0
    %3310 = vmatprep.mubr.f32.mxu0 0.0
    %3311 = vmatmul.mubr.f32.gmra.mrb[0].mxu0 %v2439
    %v3312 = vpop.f32.mrb[0].mxu0
    %v3313 = vadd.f32 0.0, %v3312
    %v3314 = vpop.f32.mrb[0].mxu0
    %3315 = vmatprep.mubr.f32.mxu0 0.0
    %3316 = vmatmul.mubr.f32.gmra.mrb[0].mxu0 %v2441
    %v3317 = vpop.f32.mrb[0].mxu0
    %v3318 = vadd.f32 0.0, %v3317
    %v3319 = vpop.f32.mrb[0].mxu0
    %3320 = vmatprep.mubr.f32.mxu0 0.0
    %3321 = vmatmul.mubr.f32.gmra.mrb[0].mxu0 %v2443
    %v3322 = vpop.f32.mrb[0].mxu0
    %v3323 = vadd.f32 0.0, %v3322
    %v3324 = vpop.f32.mrb[0].mxu0
    %3325 = vmatprep.mubr.f32.mxu0 0.0
    %3326 = vmatmul.mubr.f32.gmra.mrb[0].mxu0 %v3222
    %v3327 = vpop.f32.mrb[0].mxu0
    %v3328 = vadd.f32 0.0, %v3327
    %v3329 = vpop.f32.mrb[0].mxu0
    %3330 = vmatprep.mubr.f32.mxu0 0.0
    %3331 = vmatmul.mubr.f32.gmra.mrb[0].mxu0 %v2445
    %v3332 = vpop.f32.mrb[0].mxu0
    %v3333 = vadd.f32 0.0, %v3332
    %v3334 = vpop.f32.mrb[0].mxu0
    %3335 = vmatprep.mubr.f32.mxu0 0.0
    %3336 = vmatmul.mubr.f32.gmra.mrb[0].mxu0 %v2447
    %v3337 = vpop.f32.mrb[0].mxu0
    %v3338 = vadd.f32 0.0, %v3337
    %v3339 = vpop.f32.mrb[0].mxu0
    %3340 = vmatprep.mubr.f32.mxu0 0.0
    %3341 = vmatmul.mubr.f32.gmra.mrb[0].mxu0 %v2449
    %v3342 = vpop.f32.mrb[0].mxu0
    %v3343 = vadd.f32 0.0, %v3342
    %v3344 = vpop.f32.mrb[0].mxu0
    %3345 = vmatprep.mubr.f32.mxu0 0.0
    %3346 = vmatmul.mubr.f32.gmra.mrb[0].mxu0 %v2451
    %v3347 = vpop.f32.mrb[0].mxu0
    %v3348 = vadd.f32 0.0, %v3347
    %v3349 = vpop.f32.mrb[0].mxu0
    %3350 = vmatprep.mubr.f32.mxu0 0.0
    %3351 = vmatmul.mubr.f32.gmra.mrb[0].mxu0 %v2453
    %v3352 = vpop.f32.mrb[0].mxu0
    %v3353 = vadd.f32 0.0, %v3352
    %v3354 = vpop.f32.mrb[0].mxu0
    %3355 = vmatprep.mubr.f32.mxu0 0.0
    %3356 = vmatmul.mubr.f32.gmra.mrb[0].mxu0 %v2455
    %v3357 = vpop.f32.mrb[0].mxu0
    %v3358 = vadd.f32 0.0, %v3357
    %v3359 = vpop.f32.mrb[0].mxu0
    %3360 = vmatprep.mubr.f32.mxu0 0.0
    %3361 = vmatmul.mubr.f32.gmra.mrb[0].mxu0 %v2457
    %v3362 = vpop.f32.mrb[0].mxu0
    %v3363 = vadd.f32 0.0, %v3362
    %v3364 = vpop.f32.mrb[0].mxu0
    %3365 = vmatprep.mubr.f32.mxu0 0.0
    %3366 = vmatmul.mubr.f32.gmra.mrb[0].mxu0 %v3224
    %v3367 = vpop.f32.mrb[0].mxu0
    %v3368 = vadd.f32 0.0, %v3367
    %v3369 = vpop.f32.mrb[0].mxu0
    %3370 = vdwg.mxu0
    %v3371 = vadd.f32 %v3187, %v3293
    %v3372 = vadd.f32 %v3188, %v3298
    %v3373 = vadd.f32 %v3189, %v3303
    %v3374 = vadd.f32 %v3190, %v3308
    %v3375 = vadd.f32 %v3191, %v3313
    %v3376 = vadd.f32 %v3192, %v3318
    %v3377 = vadd.f32 %v3193, %v3323
    %v3378 = vadd.f32 %v3194, %v3328
    %v3379 = vadd.f32 %v3195, %v3333
    %v3380 = vadd.f32 %v3196, %v3338
    %v3381 = vadd.f32 %v3197, %v3343
    %v3382 = vadd.f32 %v3198, %v3348
    %v3383 = vadd.f32 %v3199, %v3353
    %v3384 = vadd.f32 %v3200, %v3358
    %v3385 = vadd.f32 %v3201, %v3363
    %v3386 = vadd.f32 %v3202, %v3368
    %v3387 = vrot.slane %v2310, 2
    %v3388 = vrot.slane %v2326, 2
    %v3389 = vsel %vm524, %v3387, %v3388
    %v3390 = vrot.slane %v2318, 2
    %v3391 = vrot.slane %v2334, 2
    %v3392 = vsel %vm524, %v3390, %v3391
    %s3393 = scalar_lea.vmem %s2, 400
    %v3394 = vld [vmem:[%s3393] sm:$0xff]
    %v3395 = vld [vmem:[%s3393 + $0x8] sm:$0xff]
    %v3396 = vld [vmem:[%s3393 + $0x10] sm:$0xff]
    %v3397 = vld [vmem:[%s3393 + $0x18] sm:$0xff]
    %v3398 = vld [vmem:[%s3393 + $0x20] sm:$0xff]
    %v3399 = vld [vmem:[%s3393 + $0x28] sm:$0xff]
    %v3400 = vld [vmem:[%s3393 + $0x30] sm:$0xff]
    %v3401 = vld [vmem:[%s3393 + $0x38] sm:$0xff]
    %v3402 = vld [vmem:[%s3393 + $0x40] sm:$0xff]
    %v3403 = vld [vmem:[%s3393 + $0x48] sm:$0xff]
    %v3404 = vsel %vm169, %v3389, 0
    %v3406 = vsel %vm169, %v3392, 0
    %3408 = vmatprep.subr.mxu0 0.0
    %3409 = vmatpush1.msra.mxu0 %v3394
    %3410 = vmatprep.subr.mxu0 0.0
    %3411 = vmatpush1.msra.mxu0 %v3395
    %3412 = vmatprep.subr.mxu0 0.0
    %3413 = vmatpush1.msra.mxu0 %v3396
    %3414 = vmatprep.subr.mxu0 0.0
    %3415 = vmatpush1.msra.mxu0 %v3397
    %3416 = vmatprep.subr.mxu0 0.0
    %3417 = vmatpush1.msra.mxu0 %v3398
    %3418 = vmatprep.subr.mxu0 0.0
    %3419 = vmatpush1.msra.mxu0 %v3399
    %3420 = vmatprep.subr.mxu0 0.0
    %3421 = vmatpush1.msra.mxu0 %v3400
    %3422 = vmatprep.subr.mxu0 0.0
    %3423 = vmatpush1.msra.mxu0 %v3401
    %3424 = vmatprep.subr.mxu0 0.0
    %3425 = vmatpush1.msra.mxu0 %v3402
    %3426 = vmatprep.subr.mxu0 0.0
    %3427 = vmatpush1.msra.mxu0 %v3403
    %3428 = vmatprep.subr.mxu0 0.0
    %3429 = vmatpush1.msra.mxu0 0.0
    %3430 = vmatprep.subr.mxu0 0.0
    %3431 = vmatpush1.msra.mxu0 0.0
    %3432 = vmatprep.subr.mxu0 0.0
    %3433 = vmatpush1.msra.mxu0 0.0
    %3434 = vmatprep.subr.mxu0 0.0
    %3435 = vmatpush1.msra.mxu0 0.0
    %3436 = vmatprep.subr.mxu0 0.0
    %3437 = vmatpush1.msra.mxu0 0.0
    %3438 = vmatprep.subr.mxu0 0.0
    %3439 = vmatpush1.msra.mxu0 0.0
    %3440 = vmatprep.subr.mxu0 0.0
    %3441 = vmatpush1.msra.mxu0 0.0
    %3442 = vmatprep.subr.mxu0 0.0
    %3443 = vmatpush1.msra.mxu0 0.0
    %3444 = vmatprep.subr.mxu0 0.0
    %3445 = vmatpush1.msra.mxu0 0.0
    %3446 = vmatprep.subr.mxu0 0.0
    %3447 = vmatpush1.msra.mxu0 0.0
    %3448 = vmatprep.subr.mxu0 0.0
    %3449 = vmatpush1.msra.mxu0 0.0
    %3450 = vmatprep.subr.mxu0 0.0
    %3451 = vmatpush1.msra.mxu0 0.0
    %3452 = vmatprep.subr.mxu0 0.0
    %3453 = vmatpush1.msra.mxu0 0.0
    %3454 = vmatprep.subr.mxu0 0.0
    %3455 = vmatpush1.msra.mxu0 0.0
    %3456 = vmatprep.subr.mxu0 0.0
    %3457 = vmatpush1.msra.mxu0 0.0
    %3458 = vmatprep.subr.mxu0 0.0
    %3459 = vmatpush1.msra.mxu0 0.0
    %3460 = vmatprep.subr.mxu0 0.0
    %3461 = vmatpush1.msra.mxu0 0.0
    %3462 = vmatprep.subr.mxu0 0.0
    %3463 = vmatpush1.msra.mxu0 0.0
    %3464 = vmatprep.subr.mxu0 0.0
    %3465 = vmatpush1.msra.mxu0 0.0
    %3466 = vmatprep.subr.mxu0 0.0
    %3467 = vmatpush1.msra.mxu0 0.0
    %3468 = vmatprep.subr.mxu0 0.0
    %3469 = vmatpush1.msra.mxu0 0.0
    %3470 = vmatprep.subr.mxu0 0.0
    %3471 = vmatpush1.msra.mxu0 0.0
    %3472 = vmatprep.mubr.f32.mxu0 0.0
    %3473 = vmatmul.mubr.f32.gmra.mrb[0].mxu0 %v2836
    %v3474 = vpop.f32.mrb[0].mxu0
    %v3475 = vadd.f32 0.0, %v3474
    %v3476 = vpop.f32.mrb[0].mxu0
    %3477 = vmatprep.mubr.f32.mxu0 0.0
    %3478 = vmatmul.mubr.f32.gmra.mrb[0].mxu0 %v2838
    %v3479 = vpop.f32.mrb[0].mxu0
    %v3480 = vadd.f32 0.0, %v3479
    %v3481 = vpop.f32.mrb[0].mxu0
    %3482 = vmatprep.mubr.f32.mxu0 0.0
    %3483 = vmatmul.mubr.f32.gmra.mrb[0].mxu0 %v2840
    %v3484 = vpop.f32.mrb[0].mxu0
    %v3485 = vadd.f32 0.0, %v3484
    %v3486 = vpop.f32.mrb[0].mxu0
    %3487 = vmatprep.mubr.f32.mxu0 0.0
    %3488 = vmatmul.mubr.f32.gmra.mrb[0].mxu0 %v2842
    %v3489 = vpop.f32.mrb[0].mxu0
    %v3490 = vadd.f32 0.0, %v3489
    %v3491 = vpop.f32.mrb[0].mxu0
    %3492 = vmatprep.mubr.f32.mxu0 0.0
    %3493 = vmatmul.mubr.f32.gmra.mrb[0].mxu0 %v2844
    %v3494 = vpop.f32.mrb[0].mxu0
    %v3495 = vadd.f32 0.0, %v3494
    %v3496 = vpop.f32.mrb[0].mxu0
    %3497 = vmatprep.mubr.f32.mxu0 0.0
    %3498 = vmatmul.mubr.f32.gmra.mrb[0].mxu0 %v2846
    %v3499 = vpop.f32.mrb[0].mxu0
    %v3500 = vadd.f32 0.0, %v3499
    %v3501 = vpop.f32.mrb[0].mxu0
    %3502 = vmatprep.mubr.f32.mxu0 0.0
    %3503 = vmatmul.mubr.f32.gmra.mrb[0].mxu0 %v2848
    %v3504 = vpop.f32.mrb[0].mxu0
    %v3505 = vadd.f32 0.0, %v3504
    %v3506 = vpop.f32.mrb[0].mxu0
    %3507 = vmatprep.mubr.f32.mxu0 0.0
    %3508 = vmatmul.mubr.f32.gmra.mrb[0].mxu0 %v3404
    %v3509 = vpop.f32.mrb[0].mxu0
    %v3510 = vadd.f32 0.0, %v3509
    %v3511 = vpop.f32.mrb[0].mxu0
    %3512 = vmatprep.mubr.f32.mxu0 0.0
    %3513 = vmatmul.mubr.f32.gmra.mrb[0].mxu0 %v2850
    %v3514 = vpop.f32.mrb[0].mxu0
    %v3515 = vadd.f32 0.0, %v3514
    %v3516 = vpop.f32.mrb[0].mxu0
    %3517 = vmatprep.mubr.f32.mxu0 0.0
    %3518 = vmatmul.mubr.f32.gmra.mrb[0].mxu0 %v2852
    %v3519 = vpop.f32.mrb[0].mxu0
    %v3520 = vadd.f32 0.0, %v3519
    %v3521 = vpop.f32.mrb[0].mxu0
    %3522 = vmatprep.mubr.f32.mxu0 0.0
    %3523 = vmatmul.mubr.f32.gmra.mrb[0].mxu0 %v2854
    %v3524 = vpop.f32.mrb[0].mxu0
    %v3525 = vadd.f32 0.0, %v3524
    %v3526 = vpop.f32.mrb[0].mxu0
    %3527 = vmatprep.mubr.f32.mxu0 0.0
    %3528 = vmatmul.mubr.f32.gmra.mrb[0].mxu0 %v2856
    %v3529 = vpop.f32.mrb[0].mxu0
    %v3530 = vadd.f32 0.0, %v3529
    %v3531 = vpop.f32.mrb[0].mxu0
    %3532 = vmatprep.mubr.f32.mxu0 0.0
    %3533 = vmatmul.mubr.f32.gmra.mrb[0].mxu0 %v2858
    %v3534 = vpop.f32.mrb[0].mxu0
    %v3535 = vadd.f32 0.0, %v3534
    %v3536 = vpop.f32.mrb[0].mxu0
    %3537 = vmatprep.mubr.f32.mxu0 0.0
    %3538 = vmatmul.mubr.f32.gmra.mrb[0].mxu0 %v2860
    %v3539 = vpop.f32.mrb[0].mxu0
    %v3540 = vadd.f32 0.0, %v3539
    %v3541 = vpop.f32.mrb[0].mxu0
    %3542 = vmatprep.mubr.f32.mxu0 0.0
    %3543 = vmatmul.mubr.f32.gmra.mrb[0].mxu0 %v2862
    %v3544 = vpop.f32.mrb[0].mxu0
    %v3545 = vadd.f32 0.0, %v3544
    %v3546 = vpop.f32.mrb[0].mxu0
    %3547 = vmatprep.mubr.f32.mxu0 0.0
    %3548 = vmatmul.mubr.f32.gmra.mrb[0].mxu0 %v3406
    %v3549 = vpop.f32.mrb[0].mxu0
    %v3550 = vadd.f32 0.0, %v3549
    %v3551 = vpop.f32.mrb[0].mxu0
    %3552 = vdwg.mxu0
    %v3553 = vadd.f32 %v3371, %v3475
    %v3554 = vadd.f32 %v3372, %v3480
    %v3555 = vadd.f32 %v3373, %v3485
    %v3556 = vadd.f32 %v3374, %v3490
    %v3557 = vadd.f32 %v3375, %v3495
    %v3558 = vadd.f32 %v3376, %v3500
    %v3559 = vadd.f32 %v3377, %v3505
    %v3560 = vadd.f32 %v3378, %v3510
    %v3561 = vadd.f32 %v3379, %v3515
    %v3562 = vadd.f32 %v3380, %v3520
    %v3563 = vadd.f32 %v3381, %v3525
    %v3564 = vadd.f32 %v3382, %v3530
    %v3565 = vadd.f32 %v3383, %v3535
    %v3566 = vadd.f32 %v3384, %v3540
    %v3567 = vadd.f32 %v3385, %v3545
    %v3568 = vadd.f32 %v3386, %v3550
    %s3569 = scalar_lea.vmem %s2, 480
    %v3570 = vld [vmem:[%s3569] sm:$0xff]
    %v3571 = vld [vmem:[%s3569 + $0x8] sm:$0xff]
    %v3572 = vld [vmem:[%s3569 + $0x10] sm:$0xff]
    %v3573 = vld [vmem:[%s3569 + $0x18] sm:$0xff]
    %v3574 = vld [vmem:[%s3569 + $0x20] sm:$0xff]
    %v3575 = vld [vmem:[%s3569 + $0x28] sm:$0xff]
    %v3576 = vld [vmem:[%s3569 + $0x30] sm:$0xff]
    %v3577 = vld [vmem:[%s3569 + $0x38] sm:$0xff]
    %v3578 = vld [vmem:[%s3569 + $0x40] sm:$0xff]
    %v3579 = vld [vmem:[%s3569 + $0x48] sm:$0xff]
    %3580 = vmatprep.subr.mxu0 0.0
    %3581 = vmatpush1.msra.mxu0 %v3570
    %3582 = vmatprep.subr.mxu0 0.0
    %3583 = vmatpush1.msra.mxu0 %v3571
    %3584 = vmatprep.subr.mxu0 0.0
    %3585 = vmatpush1.msra.mxu0 %v3572
    %3586 = vmatprep.subr.mxu0 0.0
    %3587 = vmatpush1.msra.mxu0 %v3573
    %3588 = vmatprep.subr.mxu0 0.0
    %3589 = vmatpush1.msra.mxu0 %v3574
    %3590 = vmatprep.subr.mxu0 0.0
    %3591 = vmatpush1.msra.mxu0 %v3575
    %3592 = vmatprep.subr.mxu0 0.0
    %3593 = vmatpush1.msra.mxu0 %v3576
    %3594 = vmatprep.subr.mxu0 0.0
    %3595 = vmatpush1.msra.mxu0 %v3577
    %3596 = vmatprep.subr.mxu0 0.0
    %3597 = vmatpush1.msra.mxu0 %v3578
    %3598 = vmatprep.subr.mxu0 0.0
    %3599 = vmatpush1.msra.mxu0 %v3579
    %3600 = vmatprep.subr.mxu0 0.0
    %3601 = vmatpush1.msra.mxu0 0.0
    %3602 = vmatprep.subr.mxu0 0.0
    %3603 = vmatpush1.msra.mxu0 0.0
    %3604 = vmatprep.subr.mxu0 0.0
    %3605 = vmatpush1.msra.mxu0 0.0
    %3606 = vmatprep.subr.mxu0 0.0
    %3607 = vmatpush1.msra.mxu0 0.0
    %3608 = vmatprep.subr.mxu0 0.0
    %3609 = vmatpush1.msra.mxu0 0.0
    %3610 = vmatprep.subr.mxu0 0.0
    %3611 = vmatpush1.msra.mxu0 0.0
    %3612 = vmatprep.subr.mxu0 0.0
    %3613 = vmatpush1.msra.mxu0 0.0
    %3614 = vmatprep.subr.mxu0 0.0
    %3615 = vmatpush1.msra.mxu0 0.0
    %3616 = vmatprep.subr.mxu0 0.0
    %3617 = vmatpush1.msra.mxu0 0.0
    %3618 = vmatprep.subr.mxu0 0.0
    %3619 = vmatpush1.msra.mxu0 0.0
    %3620 = vmatprep.subr.mxu0 0.0
    %3621 = vmatpush1.msra.mxu0 0.0
    %3622 = vmatprep.subr.mxu0 0.0
    %3623 = vmatpush1.msra.mxu0 0.0
    %3624 = vmatprep.subr.mxu0 0.0
    %3625 = vmatpush1.msra.mxu0 0.0
    %3626 = vmatprep.subr.mxu0 0.0
    %3627 = vmatpush1.msra.mxu0 0.0
    %3628 = vmatprep.subr.mxu0 0.0
    %3629 = vmatpush1.msra.mxu0 0.0
    %3630 = vmatprep.subr.mxu0 0.0
    %3631 = vmatpush1.msra.mxu0 0.0
    %3632 = vmatprep.subr.mxu0 0.0
    %3633 = vmatpush1.msra.mxu0 0.0
    %3634 = vmatprep.subr.mxu0 0.0
    %3635 = vmatpush1.msra.mxu0 0.0
    %3636 = vmatprep.subr.mxu0 0.0
    %3637 = vmatpush1.msra.mxu0 0.0
    %3638 = vmatprep.subr.mxu0 0.0
    %3639 = vmatpush1.msra.mxu0 0.0
    %3640 = vmatprep.subr.mxu0 0.0
    %3641 = vmatpush1.msra.mxu0 0.0
    %3642 = vmatprep.subr.mxu0 0.0
    %3643 = vmatpush1.msra.mxu0 0.0
    %3644 = vmatprep.mubr.f32.mxu0 0.0
    %3645 = vmatmul.mubr.f32.gmra.mrb[0].mxu0 %v2608
    %v3646 = vpop.f32.mrb[0].mxu0
    %v3647 = vadd.f32 0.0, %v3646
    %v3648 = vpop.f32.mrb[0].mxu0
    %3649 = vmatprep.mubr.f32.mxu0 0.0
    %3650 = vmatmul.mubr.f32.gmra.mrb[0].mxu0 %v2610
    %v3651 = vpop.f32.mrb[0].mxu0
    %v3652 = vadd.f32 0.0, %v3651
    %v3653 = vpop.f32.mrb[0].mxu0
    %3654 = vmatprep.mubr.f32.mxu0 0.0
    %3655 = vmatmul.mubr.f32.gmra.mrb[0].mxu0 %v2612
    %v3656 = vpop.f32.mrb[0].mxu0
    %v3657 = vadd.f32 0.0, %v3656
    %v3658 = vpop.f32.mrb[0].mxu0
    %3659 = vmatprep.mubr.f32.mxu0 0.0
    %3660 = vmatmul.mubr.f32.gmra.mrb[0].mxu0 %v2614
    %v3661 = vpop.f32.mrb[0].mxu0
    %v3662 = vadd.f32 0.0, %v3661
    %v3663 = vpop.f32.mrb[0].mxu0
    %3664 = vmatprep.mubr.f32.mxu0 0.0
    %3665 = vmatmul.mubr.f32.gmra.mrb[0].mxu0 %v2616
    %v3666 = vpop.f32.mrb[0].mxu0
    %v3667 = vadd.f32 0.0, %v3666
    %v3668 = vpop.f32.mrb[0].mxu0
    %3669 = vmatprep.mubr.f32.mxu0 0.0
    %3670 = vmatmul.mubr.f32.gmra.mrb[0].mxu0 %v2618
    %v3671 = vpop.f32.mrb[0].mxu0
    %v3672 = vadd.f32 0.0, %v3671
    %v3673 = vpop.f32.mrb[0].mxu0
    %3674 = vmatprep.mubr.f32.mxu0 0.0
    %3675 = vmatmul.mubr.f32.gmra.mrb[0].mxu0 %v3037
    %v3676 = vpop.f32.mrb[0].mxu0
    %v3677 = vadd.f32 0.0, %v3676
    %v3678 = vpop.f32.mrb[0].mxu0
    %3679 = vmatprep.mubr.f32.mxu0 0.0
    %3680 = vmatmul.mubr.f32.gmra.mrb[0].mxu0 %v2604
    %v3681 = vpop.f32.mrb[0].mxu0
    %v3682 = vadd.f32 0.0, %v3681
    %v3683 = vpop.f32.mrb[0].mxu0
    %3684 = vmatprep.mubr.f32.mxu0 0.0
    %3685 = vmatmul.mubr.f32.gmra.mrb[0].mxu0 %v2622
    %v3686 = vpop.f32.mrb[0].mxu0
    %v3687 = vadd.f32 0.0, %v3686
    %v3688 = vpop.f32.mrb[0].mxu0
    %3689 = vmatprep.mubr.f32.mxu0 0.0
    %3690 = vmatmul.mubr.f32.gmra.mrb[0].mxu0 %v2624
    %v3691 = vpop.f32.mrb[0].mxu0
    %v3692 = vadd.f32 0.0, %v3691
    %v3693 = vpop.f32.mrb[0].mxu0
    %3694 = vmatprep.mubr.f32.mxu0 0.0
    %3695 = vmatmul.mubr.f32.gmra.mrb[0].mxu0 %v2626
    %v3696 = vpop.f32.mrb[0].mxu0
    %v3697 = vadd.f32 0.0, %v3696
    %v3698 = vpop.f32.mrb[0].mxu0
    %3699 = vmatprep.mubr.f32.mxu0 0.0
    %3700 = vmatmul.mubr.f32.gmra.mrb[0].mxu0 %v2628
    %v3701 = vpop.f32.mrb[0].mxu0
    %v3702 = vadd.f32 0.0, %v3701
    %v3703 = vpop.f32.mrb[0].mxu0
    %3704 = vmatprep.mubr.f32.mxu0 0.0
    %3705 = vmatmul.mubr.f32.gmra.mrb[0].mxu0 %v2630
    %v3706 = vpop.f32.mrb[0].mxu0
    %v3707 = vadd.f32 0.0, %v3706
    %v3708 = vpop.f32.mrb[0].mxu0
    %3709 = vmatprep.mubr.f32.mxu0 0.0
    %3710 = vmatmul.mubr.f32.gmra.mrb[0].mxu0 %v2632
    %v3711 = vpop.f32.mrb[0].mxu0
    %v3712 = vadd.f32 0.0, %v3711
    %v3713 = vpop.f32.mrb[0].mxu0
    %3714 = vmatprep.mubr.f32.mxu0 0.0
    %3715 = vmatmul.mubr.f32.gmra.mrb[0].mxu0 %v3040
    %v3716 = vpop.f32.mrb[0].mxu0
    %v3717 = vadd.f32 0.0, %v3716
    %v3718 = vpop.f32.mrb[0].mxu0
    %3719 = vmatprep.mubr.f32.mxu0 0.0
    %3720 = vmatmul.mubr.f32.gmra.mrb[0].mxu0 %v2604
    %v3721 = vpop.f32.mrb[0].mxu0
    %v3722 = vadd.f32 0.0, %v3721
    %v3723 = vpop.f32.mrb[0].mxu0
    %3724 = vdwg.mxu0
    %v3725 = vadd.f32 %v3553, %v3647
    %v3726 = vadd.f32 %v3554, %v3652
    %v3727 = vadd.f32 %v3555, %v3657
    %v3728 = vadd.f32 %v3556, %v3662
    %v3729 = vadd.f32 %v3557, %v3667
    %v3730 = vadd.f32 %v3558, %v3672
    %v3731 = vadd.f32 %v3559, %v3677
    %v3732 = vadd.f32 %v3560, %v3682
    %v3733 = vadd.f32 %v3561, %v3687
    %v3734 = vadd.f32 %v3562, %v3692
    %v3735 = vadd.f32 %v3563, %v3697
    %v3736 = vadd.f32 %v3564, %v3702
    %v3737 = vadd.f32 %v3565, %v3707
    %v3738 = vadd.f32 %v3566, %v3712
    %v3739 = vadd.f32 %v3567, %v3717
    %v3740 = vadd.f32 %v3568, %v3722
    %s3741 = scalar_lea.vmem %s2, 560
    %v3742 = vld [vmem:[%s3741] sm:$0xff]
    %v3743 = vld [vmem:[%s3741 + $0x8] sm:$0xff]
    %v3744 = vld [vmem:[%s3741 + $0x10] sm:$0xff]
    %v3745 = vld [vmem:[%s3741 + $0x18] sm:$0xff]
    %v3746 = vld [vmem:[%s3741 + $0x20] sm:$0xff]
    %v3747 = vld [vmem:[%s3741 + $0x28] sm:$0xff]
    %v3748 = vld [vmem:[%s3741 + $0x30] sm:$0xff]
    %v3749 = vld [vmem:[%s3741 + $0x38] sm:$0xff]
    %v3750 = vld [vmem:[%s3741 + $0x40] sm:$0xff]
    %v3751 = vld [vmem:[%s3741 + $0x48] sm:$0xff]
    %3752 = vmatprep.subr.mxu0 0.0
    %3753 = vmatpush1.msra.mxu0 %v3742
    %3754 = vmatprep.subr.mxu0 0.0
    %3755 = vmatpush1.msra.mxu0 %v3743
    %3756 = vmatprep.subr.mxu0 0.0
    %3757 = vmatpush1.msra.mxu0 %v3744
    %3758 = vmatprep.subr.mxu0 0.0
    %3759 = vmatpush1.msra.mxu0 %v3745
    %3760 = vmatprep.subr.mxu0 0.0
    %3761 = vmatpush1.msra.mxu0 %v3746
    %3762 = vmatprep.subr.mxu0 0.0
    %3763 = vmatpush1.msra.mxu0 %v3747
    %3764 = vmatprep.subr.mxu0 0.0
    %3765 = vmatpush1.msra.mxu0 %v3748
    %3766 = vmatprep.subr.mxu0 0.0
    %3767 = vmatpush1.msra.mxu0 %v3749
    %3768 = vmatprep.subr.mxu0 0.0
    %3769 = vmatpush1.msra.mxu0 %v3750
    %3770 = vmatprep.subr.mxu0 0.0
    %3771 = vmatpush1.msra.mxu0 %v3751
    %3772 = vmatprep.subr.mxu0 0.0
    %3773 = vmatpush1.msra.mxu0 0.0
    %3774 = vmatprep.subr.mxu0 0.0
    %3775 = vmatpush1.msra.mxu0 0.0
    %3776 = vmatprep.subr.mxu0 0.0
    %3777 = vmatpush1.msra.mxu0 0.0
    %3778 = vmatprep.subr.mxu0 0.0
    %3779 = vmatpush1.msra.mxu0 0.0
    %3780 = vmatprep.subr.mxu0 0.0
    %3781 = vmatpush1.msra.mxu0 0.0
    %3782 = vmatprep.subr.mxu0 0.0
    %3783 = vmatpush1.msra.mxu0 0.0
    %3784 = vmatprep.subr.mxu0 0.0
    %3785 = vmatpush1.msra.mxu0 0.0
    %3786 = vmatprep.subr.mxu0 0.0
    %3787 = vmatpush1.msra.mxu0 0.0
    %3788 = vmatprep.subr.mxu0 0.0
    %3789 = vmatpush1.msra.mxu0 0.0
    %3790 = vmatprep.subr.mxu0 0.0
    %3791 = vmatpush1.msra.mxu0 0.0
    %3792 = vmatprep.subr.mxu0 0.0
    %3793 = vmatpush1.msra.mxu0 0.0
    %3794 = vmatprep.subr.mxu0 0.0
    %3795 = vmatpush1.msra.mxu0 0.0
    %3796 = vmatprep.subr.mxu0 0.0
    %3797 = vmatpush1.msra.mxu0 0.0
    %3798 = vmatprep.subr.mxu0 0.0
    %3799 = vmatpush1.msra.mxu0 0.0
    %3800 = vmatprep.subr.mxu0 0.0
    %3801 = vmatpush1.msra.mxu0 0.0
    %3802 = vmatprep.subr.mxu0 0.0
    %3803 = vmatpush1.msra.mxu0 0.0
    %3804 = vmatprep.subr.mxu0 0.0
    %3805 = vmatpush1.msra.mxu0 0.0
    %3806 = vmatprep.subr.mxu0 0.0
    %3807 = vmatpush1.msra.mxu0 0.0
    %3808 = vmatprep.subr.mxu0 0.0
    %3809 = vmatpush1.msra.mxu0 0.0
    %3810 = vmatprep.subr.mxu0 0.0
    %3811 = vmatpush1.msra.mxu0 0.0
    %3812 = vmatprep.subr.mxu0 0.0
    %3813 = vmatpush1.msra.mxu0 0.0
    %3814 = vmatprep.subr.mxu0 0.0
    %3815 = vmatpush1.msra.mxu0 0.0
    %3816 = vmatprep.mubr.f32.mxu0 0.0
    %3817 = vmatmul.mubr.f32.gmra.mrb[0].mxu0 %v2433
    %v3818 = vpop.f32.mrb[0].mxu0
    %v3819 = vadd.f32 0.0, %v3818
    %v3820 = vpop.f32.mrb[0].mxu0
    %3821 = vmatprep.mubr.f32.mxu0 0.0
    %3822 = vmatmul.mubr.f32.gmra.mrb[0].mxu0 %v2435
    %v3823 = vpop.f32.mrb[0].mxu0
    %v3824 = vadd.f32 0.0, %v3823
    %v3825 = vpop.f32.mrb[0].mxu0
    %3826 = vmatprep.mubr.f32.mxu0 0.0
    %3827 = vmatmul.mubr.f32.gmra.mrb[0].mxu0 %v2437
    %v3828 = vpop.f32.mrb[0].mxu0
    %v3829 = vadd.f32 0.0, %v3828
    %v3830 = vpop.f32.mrb[0].mxu0
    %3831 = vmatprep.mubr.f32.mxu0 0.0
    %3832 = vmatmul.mubr.f32.gmra.mrb[0].mxu0 %v2439
    %v3833 = vpop.f32.mrb[0].mxu0
    %v3834 = vadd.f32 0.0, %v3833
    %v3835 = vpop.f32.mrb[0].mxu0
    %3836 = vmatprep.mubr.f32.mxu0 0.0
    %3837 = vmatmul.mubr.f32.gmra.mrb[0].mxu0 %v2441
    %v3838 = vpop.f32.mrb[0].mxu0
    %v3839 = vadd.f32 0.0, %v3838
    %v3840 = vpop.f32.mrb[0].mxu0
    %3841 = vmatprep.mubr.f32.mxu0 0.0
    %3842 = vmatmul.mubr.f32.gmra.mrb[0].mxu0 %v2443
    %v3843 = vpop.f32.mrb[0].mxu0
    %v3844 = vadd.f32 0.0, %v3843
    %v3845 = vpop.f32.mrb[0].mxu0
    %3846 = vmatprep.mubr.f32.mxu0 0.0
    %3847 = vmatmul.mubr.f32.gmra.mrb[0].mxu0 %v3222
    %v3848 = vpop.f32.mrb[0].mxu0
    %v3849 = vadd.f32 0.0, %v3848
    %v3850 = vpop.f32.mrb[0].mxu0
    %3851 = vmatprep.mubr.f32.mxu0 0.0
    %3852 = vmatmul.mubr.f32.gmra.mrb[0].mxu0 %v2429
    %v3853 = vpop.f32.mrb[0].mxu0
    %v3854 = vadd.f32 0.0, %v3853
    %v3855 = vpop.f32.mrb[0].mxu0
    %3856 = vmatprep.mubr.f32.mxu0 0.0
    %3857 = vmatmul.mubr.f32.gmra.mrb[0].mxu0 %v2447
    %v3858 = vpop.f32.mrb[0].mxu0
    %v3859 = vadd.f32 0.0, %v3858
    %v3860 = vpop.f32.mrb[0].mxu0
    %3861 = vmatprep.mubr.f32.mxu0 0.0
    %3862 = vmatmul.mubr.f32.gmra.mrb[0].mxu0 %v2449
    %v3863 = vpop.f32.mrb[0].mxu0
    %v3864 = vadd.f32 0.0, %v3863
    %v3865 = vpop.f32.mrb[0].mxu0
    %3866 = vmatprep.mubr.f32.mxu0 0.0
    %3867 = vmatmul.mubr.f32.gmra.mrb[0].mxu0 %v2451
    %v3868 = vpop.f32.mrb[0].mxu0
    %v3869 = vadd.f32 0.0, %v3868
    %v3870 = vpop.f32.mrb[0].mxu0
    %3871 = vmatprep.mubr.f32.mxu0 0.0
    %3872 = vmatmul.mubr.f32.gmra.mrb[0].mxu0 %v2453
    %v3873 = vpop.f32.mrb[0].mxu0
    %v3874 = vadd.f32 0.0, %v3873
    %v3875 = vpop.f32.mrb[0].mxu0
    %3876 = vmatprep.mubr.f32.mxu0 0.0
    %3877 = vmatmul.mubr.f32.gmra.mrb[0].mxu0 %v2455
    %v3878 = vpop.f32.mrb[0].mxu0
    %v3879 = vadd.f32 0.0, %v3878
    %v3880 = vpop.f32.mrb[0].mxu0
    %3881 = vmatprep.mubr.f32.mxu0 0.0
    %3882 = vmatmul.mubr.f32.gmra.mrb[0].mxu0 %v2457
    %v3883 = vpop.f32.mrb[0].mxu0
    %v3884 = vadd.f32 0.0, %v3883
    %v3885 = vpop.f32.mrb[0].mxu0
    %3886 = vmatprep.mubr.f32.mxu0 0.0
    %3887 = vmatmul.mubr.f32.gmra.mrb[0].mxu0 %v3224
    %v3888 = vpop.f32.mrb[0].mxu0
    %v3889 = vadd.f32 0.0, %v3888
    %v3890 = vpop.f32.mrb[0].mxu0
    %3891 = vmatprep.mubr.f32.mxu0 0.0
    %3892 = vmatmul.mubr.f32.gmra.mrb[0].mxu0 %v2429
    %v3893 = vpop.f32.mrb[0].mxu0
    %v3894 = vadd.f32 0.0, %v3893
    %v3895 = vpop.f32.mrb[0].mxu0
    %3896 = vdwg.mxu0
    %v3897 = vadd.f32 %v3725, %v3819
    %v3898 = vadd.f32 %v3726, %v3824
    %v3899 = vadd.f32 %v3727, %v3829
    %v3900 = vadd.f32 %v3728, %v3834
    %v3901 = vadd.f32 %v3729, %v3839
    %v3902 = vadd.f32 %v3730, %v3844
    %v3903 = vadd.f32 %v3731, %v3849
    %v3904 = vadd.f32 %v3732, %v3854
    %v3905 = vadd.f32 %v3733, %v3859
    %v3906 = vadd.f32 %v3734, %v3864
    %v3907 = vadd.f32 %v3735, %v3869
    %v3908 = vadd.f32 %v3736, %v3874
    %v3909 = vadd.f32 %v3737, %v3879
    %v3910 = vadd.f32 %v3738, %v3884
    %v3911 = vadd.f32 %v3739, %v3889
    %v3912 = vadd.f32 %v3740, %v3894
    %s3913 = scalar_lea.vmem %s2, 640
    %v3914 = vld [vmem:[%s3913] sm:$0xff]
    %v3915 = vld [vmem:[%s3913 + $0x8] sm:$0xff]
    %v3916 = vld [vmem:[%s3913 + $0x10] sm:$0xff]
    %v3917 = vld [vmem:[%s3913 + $0x18] sm:$0xff]
    %v3918 = vld [vmem:[%s3913 + $0x20] sm:$0xff]
    %v3919 = vld [vmem:[%s3913 + $0x28] sm:$0xff]
    %v3920 = vld [vmem:[%s3913 + $0x30] sm:$0xff]
    %v3921 = vld [vmem:[%s3913 + $0x38] sm:$0xff]
    %v3922 = vld [vmem:[%s3913 + $0x40] sm:$0xff]
    %v3923 = vld [vmem:[%s3913 + $0x48] sm:$0xff]
    %3924 = vmatprep.subr.mxu0 0.0
    %3925 = vmatpush1.msra.mxu0 %v3914
    %3926 = vmatprep.subr.mxu0 0.0
    %3927 = vmatpush1.msra.mxu0 %v3915
    %3928 = vmatprep.subr.mxu0 0.0
    %3929 = vmatpush1.msra.mxu0 %v3916
    %3930 = vmatprep.subr.mxu0 0.0
    %3931 = vmatpush1.msra.mxu0 %v3917
    %3932 = vmatprep.subr.mxu0 0.0
    %3933 = vmatpush1.msra.mxu0 %v3918
    %3934 = vmatprep.subr.mxu0 0.0
    %3935 = vmatpush1.msra.mxu0 %v3919
    %3936 = vmatprep.subr.mxu0 0.0
    %3937 = vmatpush1.msra.mxu0 %v3920
    %3938 = vmatprep.subr.mxu0 0.0
    %3939 = vmatpush1.msra.mxu0 %v3921
    %3940 = vmatprep.subr.mxu0 0.0
    %3941 = vmatpush1.msra.mxu0 %v3922
    %3942 = vmatprep.subr.mxu0 0.0
    %3943 = vmatpush1.msra.mxu0 %v3923
    %3944 = vmatprep.subr.mxu0 0.0
    %3945 = vmatpush1.msra.mxu0 0.0
    %3946 = vmatprep.subr.mxu0 0.0
    %3947 = vmatpush1.msra.mxu0 0.0
    %3948 = vmatprep.subr.mxu0 0.0
    %3949 = vmatpush1.msra.mxu0 0.0
    %3950 = vmatprep.subr.mxu0 0.0
    %3951 = vmatpush1.msra.mxu0 0.0
    %3952 = vmatprep.subr.mxu0 0.0
    %3953 = vmatpush1.msra.mxu0 0.0
    %3954 = vmatprep.subr.mxu0 0.0
    %3955 = vmatpush1.msra.mxu0 0.0
    %3956 = vmatprep.subr.mxu0 0.0
    %3957 = vmatpush1.msra.mxu0 0.0
    %3958 = vmatprep.subr.mxu0 0.0
    %3959 = vmatpush1.msra.mxu0 0.0
    %3960 = vmatprep.subr.mxu0 0.0
    %3961 = vmatpush1.msra.mxu0 0.0
    %3962 = vmatprep.subr.mxu0 0.0
    %3963 = vmatpush1.msra.mxu0 0.0
    %3964 = vmatprep.subr.mxu0 0.0
    %3965 = vmatpush1.msra.mxu0 0.0
    %3966 = vmatprep.subr.mxu0 0.0
    %3967 = vmatpush1.msra.mxu0 0.0
    %3968 = vmatprep.subr.mxu0 0.0
    %3969 = vmatpush1.msra.mxu0 0.0
    %3970 = vmatprep.subr.mxu0 0.0
    %3971 = vmatpush1.msra.mxu0 0.0
    %3972 = vmatprep.subr.mxu0 0.0
    %3973 = vmatpush1.msra.mxu0 0.0
    %3974 = vmatprep.subr.mxu0 0.0
    %3975 = vmatpush1.msra.mxu0 0.0
    %3976 = vmatprep.subr.mxu0 0.0
    %3977 = vmatpush1.msra.mxu0 0.0
    %3978 = vmatprep.subr.mxu0 0.0
    %3979 = vmatpush1.msra.mxu0 0.0
    %3980 = vmatprep.subr.mxu0 0.0
    %3981 = vmatpush1.msra.mxu0 0.0
    %3982 = vmatprep.subr.mxu0 0.0
    %3983 = vmatpush1.msra.mxu0 0.0
    %3984 = vmatprep.subr.mxu0 0.0
    %3985 = vmatpush1.msra.mxu0 0.0
    %3986 = vmatprep.subr.mxu0 0.0
    %3987 = vmatpush1.msra.mxu0 0.0
    %3988 = vmatprep.mubr.f32.mxu0 0.0
    %3989 = vmatmul.mubr.f32.gmra.mrb[0].mxu0 %v2838
    %v3990 = vpop.f32.mrb[0].mxu0
    %v3991 = vadd.f32 0.0, %v3990
    %v3992 = vpop.f32.mrb[0].mxu0
    %3993 = vmatprep.mubr.f32.mxu0 0.0
    %3994 = vmatmul.mubr.f32.gmra.mrb[0].mxu0 %v2840
    %v3995 = vpop.f32.mrb[0].mxu0
    %v3996 = vadd.f32 0.0, %v3995
    %v3997 = vpop.f32.mrb[0].mxu0
    %3998 = vmatprep.mubr.f32.mxu0 0.0
    %3999 = vmatmul.mubr.f32.gmra.mrb[0].mxu0 %v2842
    %v4000 = vpop.f32.mrb[0].mxu0
    %v4001 = vadd.f32 0.0, %v4000
    %v4002 = vpop.f32.mrb[0].mxu0
    %4003 = vmatprep.mubr.f32.mxu0 0.0
    %4004 = vmatmul.mubr.f32.gmra.mrb[0].mxu0 %v2844
    %v4005 = vpop.f32.mrb[0].mxu0
    %v4006 = vadd.f32 0.0, %v4005
    %v4007 = vpop.f32.mrb[0].mxu0
    %4008 = vmatprep.mubr.f32.mxu0 0.0
    %4009 = vmatmul.mubr.f32.gmra.mrb[0].mxu0 %v2846
    %v4010 = vpop.f32.mrb[0].mxu0
    %v4011 = vadd.f32 0.0, %v4010
    %v4012 = vpop.f32.mrb[0].mxu0
    %4013 = vmatprep.mubr.f32.mxu0 0.0
    %4014 = vmatmul.mubr.f32.gmra.mrb[0].mxu0 %v2848
    %v4015 = vpop.f32.mrb[0].mxu0
    %v4016 = vadd.f32 0.0, %v4015
    %v4017 = vpop.f32.mrb[0].mxu0
    %4018 = vmatprep.mubr.f32.mxu0 0.0
    %4019 = vmatmul.mubr.f32.gmra.mrb[0].mxu0 %v3404
    %v4020 = vpop.f32.mrb[0].mxu0
    %v4021 = vadd.f32 0.0, %v4020
    %v4022 = vpop.f32.mrb[0].mxu0
    %4023 = vmatprep.mubr.f32.mxu0 0.0
    %4024 = vmatmul.mubr.f32.gmra.mrb[0].mxu0 %v2834
    %v4025 = vpop.f32.mrb[0].mxu0
    %v4026 = vadd.f32 0.0, %v4025
    %v4027 = vpop.f32.mrb[0].mxu0
    %4028 = vmatprep.mubr.f32.mxu0 0.0
    %4029 = vmatmul.mubr.f32.gmra.mrb[0].mxu0 %v2852
    %v4030 = vpop.f32.mrb[0].mxu0
    %v4031 = vadd.f32 0.0, %v4030
    %v4032 = vpop.f32.mrb[0].mxu0
    %4033 = vmatprep.mubr.f32.mxu0 0.0
    %4034 = vmatmul.mubr.f32.gmra.mrb[0].mxu0 %v2854
    %v4035 = vpop.f32.mrb[0].mxu0
    %v4036 = vadd.f32 0.0, %v4035
    %v4037 = vpop.f32.mrb[0].mxu0
    %4038 = vmatprep.mubr.f32.mxu0 0.0
    %4039 = vmatmul.mubr.f32.gmra.mrb[0].mxu0 %v2856
    %v4040 = vpop.f32.mrb[0].mxu0
    %v4041 = vadd.f32 0.0, %v4040
    %v4042 = vpop.f32.mrb[0].mxu0
    %4043 = vmatprep.mubr.f32.mxu0 0.0
    %4044 = vmatmul.mubr.f32.gmra.mrb[0].mxu0 %v2858
    %v4045 = vpop.f32.mrb[0].mxu0
    %v4046 = vadd.f32 0.0, %v4045
    %v4047 = vpop.f32.mrb[0].mxu0
    %4048 = vmatprep.mubr.f32.mxu0 0.0
    %4049 = vmatmul.mubr.f32.gmra.mrb[0].mxu0 %v2860
    %v4050 = vpop.f32.mrb[0].mxu0
    %v4051 = vadd.f32 0.0, %v4050
    %v4052 = vpop.f32.mrb[0].mxu0
    %4053 = vmatprep.mubr.f32.mxu0 0.0
    %4054 = vmatmul.mubr.f32.gmra.mrb[0].mxu0 %v2862
    %v4055 = vpop.f32.mrb[0].mxu0
    %v4056 = vadd.f32 0.0, %v4055
    %v4057 = vpop.f32.mrb[0].mxu0
    %4058 = vmatprep.mubr.f32.mxu0 0.0
    %4059 = vmatmul.mubr.f32.gmra.mrb[0].mxu0 %v3406
    %v4060 = vpop.f32.mrb[0].mxu0
    %v4061 = vadd.f32 0.0, %v4060
    %v4062 = vpop.f32.mrb[0].mxu0
    %4063 = vmatprep.mubr.f32.mxu0 0.0
    %4064 = vmatmul.mubr.f32.gmra.mrb[0].mxu0 %v2834
    %v4065 = vpop.f32.mrb[0].mxu0
    %v4066 = vadd.f32 0.0, %v4065
    %v4067 = vpop.f32.mrb[0].mxu0
    %4068 = vdwg.mxu0
    %v4069 = vadd.f32 %v3897, %v3991
    %v4070 = vadd.f32 %v3898, %v3996
    %v4071 = vadd.f32 %v3899, %v4001
    %v4072 = vadd.f32 %v3900, %v4006
    %v4073 = vadd.f32 %v3901, %v4011
    %v4074 = vadd.f32 %v3902, %v4016
    %v4075 = vadd.f32 %v3903, %v4021
    %v4076 = vadd.f32 %v3904, %v4026
    %v4077 = vadd.f32 %v3905, %v4031
    %v4078 = vadd.f32 %v3906, %v4036
    %v4079 = vadd.f32 %v3907, %v4041
    %v4080 = vadd.f32 %v3908, %v4046
    %v4081 = vadd.f32 %v3909, %v4051
    %v4082 = vadd.f32 %v3910, %v4056
    %v4083 = vadd.f32 %v3911, %v4061
    %v4084 = vadd.f32 %v3912, %v4066
    %v4085 = vsel %vm1865, %v4069, 0.0
    %v4086 = vsel %vm1865, %v4070, 0.0
    %v4087 = vadd.f32 %v4085, %v4086
    %v4088 = vsel %vm1865, %v4071, 0.0
    %v4089 = vadd.f32 %v4087, %v4088
    %v4090 = vsel %vm1865, %v4072, 0.0
    %v4091 = vadd.f32 %v4089, %v4090
    %v4092 = vsel %vm1865, %v4073, 0.0
    %v4093 = vadd.f32 %v4091, %v4092
    %v4094 = vsel %vm1865, %v4074, 0.0
    %v4095 = vadd.f32 %v4093, %v4094
    %v4096 = vsel %vm1865, %v4075, 0.0
    %v4097 = vadd.f32 %v4095, %v4096
    %v4098 = vsel %vm1865, %v4076, 0.0
    %v4099 = vadd.f32 %v4097, %v4098
    %v4100 = vsel %vm1865, %v4077, 0.0
    %v4101 = vadd.f32 %v4099, %v4100
    %v4102 = vsel %vm1865, %v4078, 0.0
    %v4103 = vadd.f32 %v4101, %v4102
    %v4104 = vsel %vm1865, %v4079, 0.0
    %v4105 = vadd.f32 %v4103, %v4104
    %v4106 = vsel %vm1865, %v4080, 0.0
    %v4107 = vadd.f32 %v4105, %v4106
    %v4108 = vsel %vm1865, %v4081, 0.0
    %v4109 = vadd.f32 %v4107, %v4108
    %v4110 = vsel %vm1865, %v4082, 0.0
    %v4111 = vadd.f32 %v4109, %v4110
    %v4112 = vsel %vm1865, %v4083, 0.0
    %v4113 = vadd.f32 %v4111, %v4112
    %v4114 = vsel %vm1865, %v4084, 0.0
    %v4115 = vadd.f32 %v4113, %v4114
    %v4116 = vrot.slane %v4115, 4
    %v4117 = vadd.f32 %v4115, %v4116
    %v4118 = vrot.slane %v4117, 2
    %v4119 = vadd.f32 %v4117, %v4118
    %v4120 = vrot.slane %v4119, 1
    %v4121 = vadd.f32 %v4119, %v4120
    %v4122 = vmul.f32 %v4069, %v4069
    %v4123 = vmul.f32 %v4070, %v4070
    %v4124 = vmul.f32 %v4071, %v4071
    %v4125 = vmul.f32 %v4072, %v4072
    %v4126 = vmul.f32 %v4073, %v4073
    %v4127 = vmul.f32 %v4074, %v4074
    %v4128 = vmul.f32 %v4075, %v4075
    %v4129 = vmul.f32 %v4076, %v4076
    %v4130 = vmul.f32 %v4077, %v4077
    %v4131 = vmul.f32 %v4078, %v4078
    %v4132 = vmul.f32 %v4079, %v4079
    %v4133 = vmul.f32 %v4080, %v4080
    %v4134 = vmul.f32 %v4081, %v4081
    %v4135 = vmul.f32 %v4082, %v4082
    %v4136 = vmul.f32 %v4083, %v4083
    %v4137 = vmul.f32 %v4084, %v4084
    %v4138 = vsel %vm1865, %v4122, 0.0
    %v4139 = vsel %vm1865, %v4123, 0.0
    %v4140 = vadd.f32 %v4138, %v4139
    %v4141 = vsel %vm1865, %v4124, 0.0
    %v4142 = vadd.f32 %v4140, %v4141
    %v4143 = vsel %vm1865, %v4125, 0.0
    %v4144 = vadd.f32 %v4142, %v4143
    %v4145 = vsel %vm1865, %v4126, 0.0
    %v4146 = vadd.f32 %v4144, %v4145
    %v4147 = vsel %vm1865, %v4127, 0.0
    %v4148 = vadd.f32 %v4146, %v4147
    %v4149 = vsel %vm1865, %v4128, 0.0
    %v4150 = vadd.f32 %v4148, %v4149
    %v4151 = vsel %vm1865, %v4129, 0.0
    %v4152 = vadd.f32 %v4150, %v4151
    %v4153 = vsel %vm1865, %v4130, 0.0
    %v4154 = vadd.f32 %v4152, %v4153
    %v4155 = vsel %vm1865, %v4131, 0.0
    %v4156 = vadd.f32 %v4154, %v4155
    %v4157 = vsel %vm1865, %v4132, 0.0
    %v4158 = vadd.f32 %v4156, %v4157
    %v4159 = vsel %vm1865, %v4133, 0.0
    %v4160 = vadd.f32 %v4158, %v4159
    %v4161 = vsel %vm1865, %v4134, 0.0
    %v4162 = vadd.f32 %v4160, %v4161
    %v4163 = vsel %vm1865, %v4135, 0.0
    %v4164 = vadd.f32 %v4162, %v4163
    %v4165 = vsel %vm1865, %v4136, 0.0
    %v4166 = vadd.f32 %v4164, %v4165
    %v4167 = vsel %vm1865, %v4137, 0.0
    %v4168 = vadd.f32 %v4166, %v4167
    %v4169 = vrot.slane %v4168, 4
    %v4170 = vadd.f32 %v4168, %v4169
    %v4171 = vrot.slane %v4170, 2
    %v4172 = vadd.f32 %v4170, %v4171
    %v4173 = vrot.slane %v4172, 1
    %v4174 = vadd.f32 %v4172, %v4173
    %v4175 = vadd.f32 %v4121, 0.0
    %v4176 = vadd.f32 %v4174, 0.0
    %4178 = vrot.lane.b32.xlu0 %v4121, 120
    %v4179 = vpop.permute.xlu0 %4178
    %v4181 = vadd.f32 %v4175, %v4179
    %4183 = vrot.lane.b32.xlu0 %v4174, 120
    %v4184 = vpop.permute.xlu0 %4183
    %v4186 = vadd.f32 %v4176, %v4184
    %4187 = vrot.lane.b32.xlu0 %v4121, 112
    %v4188 = vpop.permute.xlu0 %4187
    %v4190 = vadd.f32 %v4181, %v4188
    %4191 = vrot.lane.b32.xlu0 %v4174, 112
    %v4192 = vpop.permute.xlu0 %4191
    %v4194 = vadd.f32 %v4186, %v4192
    %4195 = vrot.lane.b32.xlu0 %v4121, 104
    %v4196 = vpop.permute.xlu0 %4195
    %v4198 = vadd.f32 %v4190, %v4196
    %4199 = vrot.lane.b32.xlu0 %v4174, 104
    %v4200 = vpop.permute.xlu0 %4199
    %v4202 = vadd.f32 %v4194, %v4200
    %4203 = vrot.lane.b32.xlu0 %v4121, 96
    %v4204 = vpop.permute.xlu0 %4203
    %v4206 = vadd.f32 %v4198, %v4204
    %4207 = vrot.lane.b32.xlu0 %v4174, 96
    %v4208 = vpop.permute.xlu0 %4207
    %v4210 = vadd.f32 %v4202, %v4208
    %4211 = vrot.lane.b32.xlu0 %v4121, 88
    %v4212 = vpop.permute.xlu0 %4211
    %v4214 = vadd.f32 %v4206, %v4212
    %4215 = vrot.lane.b32.xlu0 %v4174, 88
    %v4216 = vpop.permute.xlu0 %4215
    %v4218 = vadd.f32 %v4210, %v4216
    %4219 = vrot.lane.b32.xlu0 %v4121, 80
    %v4220 = vpop.permute.xlu0 %4219
    %v4222 = vadd.f32 %v4214, %v4220
    %4223 = vrot.lane.b32.xlu0 %v4174, 80
    %v4224 = vpop.permute.xlu0 %4223
    %v4226 = vadd.f32 %v4218, %v4224
    %4227 = vrot.lane.b32.xlu0 %v4121, 72
    %v4228 = vpop.permute.xlu0 %4227
    %v4230 = vadd.f32 %v4222, %v4228
    %4231 = vrot.lane.b32.xlu0 %v4174, 72
    %v4232 = vpop.permute.xlu0 %4231
    %v4234 = vadd.f32 %v4226, %v4232
    %v4235 = vmul.f32 %v4230, 0.0009765625
    %v4236 = vmul.f32 %v4234, 0.0009765625
    %v4237 = vmul.f32 %v4235, %v4235
    %v4238 = vsub.f32 %v4236, %v4237
    %v4239 = vmax.f32 %v4238, 0.0
    %v4240 = vld [vmem:[%s5] sm:$0x1]
    %v4241 = vadd.f32 %v4239, 1e-05
    %v4242 = vrsqrt.pop %v4241
    %v4243 = vmul.f32 %v4240, %v4242
    %v4244 = vld [vmem:[%s6] sm:$0x1]
    %v4245 = vmul.f32 %v4235, %v4243
    %v4246 = vsub.f32 %v4244, %v4245
    %v4248 = vlaneseq
    %v4249 = vshrl.u32 %v4248, 7
    %v4250 = vsub.s32 0, %v4249
    %v4251 = vrot.slane %v4243, %v4250
    %4252 = vrot.lane.b32.xlu0 %v4251, 8
    %v4253 = vpop.permute.xlu0 %4252
    %4255 = vrot.lane.b32.xlu0 %v4251, 16
    %v4256 = vpop.permute.xlu0 %4255
    %4258 = vrot.lane.b32.xlu0 %v4251, 24
    %v4259 = vpop.permute.xlu0 %4258
    %4261 = vrot.lane.b32.xlu0 %v4251, 32
    %v4262 = vpop.permute.xlu0 %4261
    %4264 = vrot.lane.b32.xlu0 %v4251, 40
    %v4265 = vpop.permute.xlu0 %4264
    %4267 = vrot.lane.b32.xlu0 %v4251, 48
    %v4268 = vpop.permute.xlu0 %4267
    %4270 = vrot.lane.b32.xlu0 %v4251, 56
    %v4271 = vpop.permute.xlu0 %4270
    %v4273 = vsel %vm2054, %v4243, %v4253
    %v4274 = vsel %vm2056, %v4273, %v4256
    %v4275 = vsel %vm2058, %v4274, %v4259
    %v4276 = vsel %vm2060, %v4275, %v4262
    %v4277 = vsel %vm2062, %v4276, %v4265
    %v4278 = vsel %vm2064, %v4277, %v4268
    %v4279 = vsel %vm2066, %v4278, %v4271
    %v4281 = vlaneseq
    %v4282 = vshrl.u32 %v4281, 7
    %v4283 = vsub.s32 0, %v4282
    %v4284 = vrot.slane %v4246, %v4283
    %4285 = vrot.lane.b32.xlu0 %v4284, 8
    %v4286 = vpop.permute.xlu0 %4285
    %4288 = vrot.lane.b32.xlu0 %v4284, 16
    %v4289 = vpop.permute.xlu0 %4288
    %4291 = vrot.lane.b32.xlu0 %v4284, 24
    %v4292 = vpop.permute.xlu0 %4291
    %4294 = vrot.lane.b32.xlu0 %v4284, 32
    %v4295 = vpop.permute.xlu0 %4294
    %4297 = vrot.lane.b32.xlu0 %v4284, 40
    %v4298 = vpop.permute.xlu0 %4297
    %4300 = vrot.lane.b32.xlu0 %v4284, 48
    %v4301 = vpop.permute.xlu0 %4300
    %4303 = vrot.lane.b32.xlu0 %v4284, 56
    %v4304 = vpop.permute.xlu0 %4303
    %v4306 = vsel %vm2054, %v4246, %v4286
    %v4307 = vsel %vm2056, %v4306, %v4289
    %v4308 = vsel %vm2058, %v4307, %v4292
    %v4309 = vsel %vm2060, %v4308, %v4295
    %v4310 = vsel %vm2062, %v4309, %v4298
    %v4311 = vsel %vm2064, %v4310, %v4301
    %v4312 = vsel %vm2066, %v4311, %v4304
    %v4313 = vlaneseq
    %v4314 = vshrl.u32 %v4313, 7
    %v4315 = vsub.s32 0, %v4314
    %v4316 = vrot.slane %v4279, %v4315
    %v4317 = vmul.f32 %v4069, %v4316
    %v4318 = vmul.f32 %v4070, %v4316
    %v4319 = vmul.f32 %v4071, %v4316
    %v4320 = vmul.f32 %v4072, %v4316
    %v4321 = vmul.f32 %v4073, %v4316
    %v4322 = vmul.f32 %v4074, %v4316
    %v4323 = vmul.f32 %v4075, %v4316
    %v4324 = vmul.f32 %v4076, %v4316
    %v4325 = vmul.f32 %v4077, %v4316
    %v4326 = vmul.f32 %v4078, %v4316
    %v4327 = vmul.f32 %v4079, %v4316
    %v4328 = vmul.f32 %v4080, %v4316
    %v4329 = vmul.f32 %v4081, %v4316
    %v4330 = vmul.f32 %v4082, %v4316
    %v4331 = vmul.f32 %v4083, %v4316
    %v4332 = vmul.f32 %v4084, %v4316
    %v4333 = vlaneseq
    %v4334 = vshrl.u32 %v4333, 7
    %v4335 = vsub.s32 0, %v4334
    %v4336 = vrot.slane %v4312, %v4335
    %v4337 = vadd.f32 %v4317, %v4336
    %v4338 = vadd.f32 %v4318, %v4336
    %v4339 = vadd.f32 %v4319, %v4336
    %v4340 = vadd.f32 %v4320, %v4336
    %v4341 = vadd.f32 %v4321, %v4336
    %v4342 = vadd.f32 %v4322, %v4336
    %v4343 = vadd.f32 %v4323, %v4336
    %v4344 = vadd.f32 %v4324, %v4336
    %v4345 = vadd.f32 %v4325, %v4336
    %v4346 = vadd.f32 %v4326, %v4336
    %v4347 = vadd.f32 %v4327, %v4336
    %v4348 = vadd.f32 %v4328, %v4336
    %v4349 = vadd.f32 %v4329, %v4336
    %v4350 = vadd.f32 %v4330, %v4336
    %v4351 = vadd.f32 %v4331, %v4336
    %v4352 = vadd.f32 %v4332, %v4336
    %4369 = vrot.lane.b32.xlu0 %v1849, 64
    %v4370 = vpop.permute.xlu0 %4369
    %4371 = vrot.lane.b32.xlu0 %v1850, 64
    %v4372 = vpop.permute.xlu0 %4371
    %4373 = vrot.lane.b32.xlu0 %v1851, 64
    %v4374 = vpop.permute.xlu0 %4373
    %4375 = vrot.lane.b32.xlu0 %v1852, 64
    %v4376 = vpop.permute.xlu0 %4375
    %4377 = vrot.lane.b32.xlu0 %v1853, 64
    %v4378 = vpop.permute.xlu0 %4377
    %4379 = vrot.lane.b32.xlu0 %v1854, 64
    %v4380 = vpop.permute.xlu0 %4379
    %4381 = vrot.lane.b32.xlu0 %v1855, 64
    %v4382 = vpop.permute.xlu0 %4381
    %4383 = vrot.lane.b32.xlu0 %v1856, 64
    %v4384 = vpop.permute.xlu0 %4383
    %4385 = vrot.lane.b32.xlu0 %v1857, 64
    %v4386 = vpop.permute.xlu0 %4385
    %4387 = vrot.lane.b32.xlu0 %v1858, 64
    %v4388 = vpop.permute.xlu0 %4387
    %4389 = vrot.lane.b32.xlu0 %v1859, 64
    %v4390 = vpop.permute.xlu0 %4389
    %4391 = vrot.lane.b32.xlu0 %v1860, 64
    %v4392 = vpop.permute.xlu0 %4391
    %4393 = vrot.lane.b32.xlu0 %v1861, 64
    %v4394 = vpop.permute.xlu0 %4393
    %4395 = vrot.lane.b32.xlu0 %v1862, 64
    %v4396 = vpop.permute.xlu0 %4395
    %4397 = vrot.lane.b32.xlu0 %v1863, 64
    %v4398 = vpop.permute.xlu0 %4397
    %4399 = vrot.lane.b32.xlu0 %v1864, 64
    %v4400 = vpop.permute.xlu0 %4399
    %v4417 = vadd.f32 %v4337, %v4370
    %v4418 = vadd.f32 %v4338, %v4372
    %v4419 = vadd.f32 %v4339, %v4374
    %v4420 = vadd.f32 %v4340, %v4376
    %v4421 = vadd.f32 %v4341, %v4378
    %v4422 = vadd.f32 %v4342, %v4380
    %v4423 = vadd.f32 %v4343, %v4382
    %v4424 = vadd.f32 %v4344, %v4384
    %v4425 = vadd.f32 %v4345, %v4386
    %v4426 = vadd.f32 %v4346, %v4388
    %v4427 = vadd.f32 %v4347, %v4390
    %v4428 = vadd.f32 %v4348, %v4392
    %v4429 = vadd.f32 %v4349, %v4394
    %v4430 = vadd.f32 %v4350, %v4396
    %v4431 = vadd.f32 %v4351, %v4398
    %v4432 = vadd.f32 %v4352, %v4400
    %v4433 = vmax.f32 %v4417, 0.0
    %v4434 = vmax.f32 %v4418, 0.0
    %v4435 = vmax.f32 %v4419, 0.0
    %v4436 = vmax.f32 %v4420, 0.0
    %v4437 = vmax.f32 %v4421, 0.0
    %v4438 = vmax.f32 %v4422, 0.0
    %v4439 = vmax.f32 %v4423, 0.0
    %v4440 = vmax.f32 %v4424, 0.0
    %v4441 = vmax.f32 %v4425, 0.0
    %v4442 = vmax.f32 %v4426, 0.0
    %v4443 = vmax.f32 %v4427, 0.0
    %v4444 = vmax.f32 %v4428, 0.0
    %v4445 = vmax.f32 %v4429, 0.0
    %v4446 = vmax.f32 %v4430, 0.0
    %v4447 = vmax.f32 %v4431, 0.0
    %v4448 = vmax.f32 %v4432, 0.0
    %v4449 = vmul.f32 %v4433, 0.75
    %v4450 = vmul.f32 %v4434, 0.75
    %v4451 = vmul.f32 %v4435, 0.75
    %v4452 = vmul.f32 %v4436, 0.75
    %v4453 = vmul.f32 %v4437, 0.75
    %v4454 = vmul.f32 %v4438, 0.75
    %v4455 = vmul.f32 %v4439, 0.75
    %v4456 = vmul.f32 %v4440, 0.75
    %v4457 = vmul.f32 %v4441, 0.75
    %v4458 = vmul.f32 %v4442, 0.75
    %v4459 = vmul.f32 %v4443, 0.75
    %v4460 = vmul.f32 %v4444, 0.75
    %v4461 = vmul.f32 %v4445, 0.75
    %v4462 = vmul.f32 %v4446, 0.75
    %v4463 = vmul.f32 %v4447, 0.75
    %v4464 = vmul.f32 %v4448, 0.75
    %v4465 = vmul.f32 %v4433, 0.25
    %v4466 = vmul.f32 %v4434, 0.25
    %v4467 = vmul.f32 %v4435, 0.25
    %v4468 = vmul.f32 %v4436, 0.25
    %v4469 = vmul.f32 %v4437, 0.25
    %v4470 = vmul.f32 %v4438, 0.25
    %v4471 = vmul.f32 %v4439, 0.25
    %v4472 = vmul.f32 %v4441, 0.25
    %v4473 = vmul.f32 %v4442, 0.25
    %v4474 = vmul.f32 %v4443, 0.25
    %v4475 = vmul.f32 %v4444, 0.25
    %v4476 = vmul.f32 %v4445, 0.25
    %v4477 = vmul.f32 %v4446, 0.25
    %v4478 = vmul.f32 %v4447, 0.25
    %v4479 = vadd.f32 %v4449, %v4465
    %v4480 = vadd.f32 %v4450, %v4465
    %v4481 = vadd.f32 %v4451, %v4466
    %v4482 = vadd.f32 %v4452, %v4467
    %v4483 = vadd.f32 %v4453, %v4468
    %v4484 = vadd.f32 %v4454, %v4469
    %v4485 = vadd.f32 %v4455, %v4470
    %v4486 = vadd.f32 %v4456, %v4471
    %v4487 = vadd.f32 %v4457, %v4472
    %v4488 = vadd.f32 %v4458, %v4472
    %v4489 = vadd.f32 %v4459, %v4473
    %v4490 = vadd.f32 %v4460, %v4474
    %v4491 = vadd.f32 %v4461, %v4475
    %v4492 = vadd.f32 %v4462, %v4476
    %v4493 = vadd.f32 %v4463, %v4477
    %v4494 = vadd.f32 %v4464, %v4478
    %v4495 = vmul.f32 %v4479, 0.75
    %v4496 = vmul.f32 %v4480, 0.75
    %v4497 = vmul.f32 %v4481, 0.75
    %v4498 = vmul.f32 %v4482, 0.75
    %v4499 = vmul.f32 %v4483, 0.75
    %v4500 = vmul.f32 %v4484, 0.75
    %v4501 = vmul.f32 %v4485, 0.75
    %v4502 = vmul.f32 %v4486, 0.75
    %v4503 = vmul.f32 %v4487, 0.75
    %v4504 = vmul.f32 %v4488, 0.75
    %v4505 = vmul.f32 %v4489, 0.75
    %v4506 = vmul.f32 %v4490, 0.75
    %v4507 = vmul.f32 %v4491, 0.75
    %v4508 = vmul.f32 %v4492, 0.75
    %v4509 = vmul.f32 %v4493, 0.75
    %v4510 = vmul.f32 %v4494, 0.75
    %v4527 = vrot.slane %v4479, 7
    %v4528 = vrot.slane %v4480, 7
    %v4529 = vrot.slane %v4481, 7
    %v4530 = vrot.slane %v4482, 7
    %v4531 = vrot.slane %v4483, 7
    %v4532 = vrot.slane %v4484, 7
    %v4533 = vrot.slane %v4485, 7
    %v4534 = vrot.slane %v4486, 7
    %v4535 = vrot.slane %v4487, 7
    %v4536 = vrot.slane %v4488, 7
    %v4537 = vrot.slane %v4489, 7
    %v4538 = vrot.slane %v4490, 7
    %v4539 = vrot.slane %v4491, 7
    %v4540 = vrot.slane %v4492, 7
    %v4541 = vrot.slane %v4493, 7
    %v4542 = vrot.slane %v4494, 7
    %v4559 = vsel %vm2302, %v4479, %v4527
    %v4560 = vsel %vm2302, %v4480, %v4528
    %v4561 = vsel %vm2302, %v4481, %v4529
    %v4562 = vsel %vm2302, %v4482, %v4530
    %v4563 = vsel %vm2302, %v4483, %v4531
    %v4564 = vsel %vm2302, %v4484, %v4532
    %v4565 = vsel %vm2302, %v4485, %v4533
    %v4566 = vsel %vm2302, %v4486, %v4534
    %v4567 = vsel %vm2302, %v4487, %v4535
    %v4568 = vsel %vm2302, %v4488, %v4536
    %v4569 = vsel %vm2302, %v4489, %v4537
    %v4570 = vsel %vm2302, %v4490, %v4538
    %v4571 = vsel %vm2302, %v4491, %v4539
    %v4572 = vsel %vm2302, %v4492, %v4540
    %v4573 = vsel %vm2302, %v4493, %v4541
    %v4574 = vsel %vm2302, %v4494, %v4542
    %v4575 = vmul.f32 %v4559, 0.25
    %v4576 = vmul.f32 %v4560, 0.25
    %v4577 = vmul.f32 %v4561, 0.25
    %v4578 = vmul.f32 %v4562, 0.25
    %v4579 = vmul.f32 %v4563, 0.25
    %v4580 = vmul.f32 %v4564, 0.25
    %v4581 = vmul.f32 %v4565, 0.25
    %v4582 = vmul.f32 %v4566, 0.25
    %v4583 = vmul.f32 %v4567, 0.25
    %v4584 = vmul.f32 %v4568, 0.25
    %v4585 = vmul.f32 %v4569, 0.25
    %v4586 = vmul.f32 %v4570, 0.25
    %v4587 = vmul.f32 %v4571, 0.25
    %v4588 = vmul.f32 %v4572, 0.25
    %v4589 = vmul.f32 %v4573, 0.25
    %v4590 = vmul.f32 %v4574, 0.25
    %v4591 = vadd.f32 %v4495, %v4575
    %v4592 = vadd.f32 %v4496, %v4576
    %v4593 = vadd.f32 %v4497, %v4577
    %v4594 = vadd.f32 %v4498, %v4578
    %v4595 = vadd.f32 %v4499, %v4579
    %v4596 = vadd.f32 %v4500, %v4580
    %v4597 = vadd.f32 %v4501, %v4581
    %v4598 = vadd.f32 %v4502, %v4582
    %v4599 = vadd.f32 %v4503, %v4583
    %v4600 = vadd.f32 %v4504, %v4584
    %v4601 = vadd.f32 %v4505, %v4585
    %v4602 = vadd.f32 %v4506, %v4586
    %v4603 = vadd.f32 %v4507, %v4587
    %v4604 = vadd.f32 %v4508, %v4588
    %v4605 = vadd.f32 %v4509, %v4589
    %v4606 = vadd.f32 %v4510, %v4590
    %v4607 = vmul.f32 %v4591, 0.75
    %v4608 = vmul.f32 %v4592, 0.75
    %v4609 = vmul.f32 %v4593, 0.75
    %v4610 = vmul.f32 %v4594, 0.75
    %v4611 = vmul.f32 %v4595, 0.75
    %v4612 = vmul.f32 %v4596, 0.75
    %v4613 = vmul.f32 %v4597, 0.75
    %v4614 = vmul.f32 %v4598, 0.75
    %v4615 = vmul.f32 %v4599, 0.75
    %v4616 = vmul.f32 %v4600, 0.75
    %v4617 = vmul.f32 %v4601, 0.75
    %v4618 = vmul.f32 %v4602, 0.75
    %v4619 = vmul.f32 %v4603, 0.75
    %v4620 = vmul.f32 %v4604, 0.75
    %v4621 = vmul.f32 %v4605, 0.75
    %v4622 = vmul.f32 %v4606, 0.75
    %4639 = vrot.lane.b32.xlu0 %v4591, 8
    %v4640 = vpop.permute.xlu0 %4639
    %4641 = vrot.lane.b32.xlu0 %v4592, 8
    %v4642 = vpop.permute.xlu0 %4641
    %4643 = vrot.lane.b32.xlu0 %v4593, 8
    %v4644 = vpop.permute.xlu0 %4643
    %4645 = vrot.lane.b32.xlu0 %v4594, 8
    %v4646 = vpop.permute.xlu0 %4645
    %4647 = vrot.lane.b32.xlu0 %v4595, 8
    %v4648 = vpop.permute.xlu0 %4647
    %4649 = vrot.lane.b32.xlu0 %v4596, 8
    %v4650 = vpop.permute.xlu0 %4649
    %4651 = vrot.lane.b32.xlu0 %v4597, 8
    %v4652 = vpop.permute.xlu0 %4651
    %4653 = vrot.lane.b32.xlu0 %v4598, 8
    %v4654 = vpop.permute.xlu0 %4653
    %4655 = vrot.lane.b32.xlu0 %v4599, 8
    %v4656 = vpop.permute.xlu0 %4655
    %4657 = vrot.lane.b32.xlu0 %v4600, 8
    %v4658 = vpop.permute.xlu0 %4657
    %4659 = vrot.lane.b32.xlu0 %v4601, 8
    %v4660 = vpop.permute.xlu0 %4659
    %4661 = vrot.lane.b32.xlu0 %v4602, 8
    %v4662 = vpop.permute.xlu0 %4661
    %4663 = vrot.lane.b32.xlu0 %v4603, 8
    %v4664 = vpop.permute.xlu0 %4663
    %4665 = vrot.lane.b32.xlu0 %v4604, 8
    %v4666 = vpop.permute.xlu0 %4665
    %4667 = vrot.lane.b32.xlu0 %v4605, 8
    %v4668 = vpop.permute.xlu0 %4667
    %4669 = vrot.lane.b32.xlu0 %v4606, 8
    %v4670 = vpop.permute.xlu0 %4669
    %v4687 = vsel %vm2054, %v4591, %v4640
    %v4688 = vsel %vm2054, %v4592, %v4642
    %v4689 = vsel %vm2054, %v4593, %v4644
    %v4690 = vsel %vm2054, %v4594, %v4646
    %v4691 = vsel %vm2054, %v4595, %v4648
    %v4692 = vsel %vm2054, %v4596, %v4650
    %v4693 = vsel %vm2054, %v4597, %v4652
    %v4694 = vsel %vm2054, %v4598, %v4654
    %v4695 = vsel %vm2054, %v4599, %v4656
    %v4696 = vsel %vm2054, %v4600, %v4658
    %v4697 = vsel %vm2054, %v4601, %v4660
    %v4698 = vsel %vm2054, %v4602, %v4662
    %v4699 = vsel %vm2054, %v4603, %v4664
    %v4700 = vsel %vm2054, %v4604, %v4666
    %v4701 = vsel %vm2054, %v4605, %v4668
    %v4702 = vsel %vm2054, %v4606, %v4670
    %v4703 = vmul.f32 %v4687, 0.25
    %v4704 = vmul.f32 %v4688, 0.25
    %v4705 = vmul.f32 %v4689, 0.25
    %v4706 = vmul.f32 %v4690, 0.25
    %v4707 = vmul.f32 %v4691, 0.25
    %v4708 = vmul.f32 %v4692, 0.25
    %v4709 = vmul.f32 %v4693, 0.25
    %v4710 = vmul.f32 %v4694, 0.25
    %v4711 = vmul.f32 %v4695, 0.25
    %v4712 = vmul.f32 %v4696, 0.25
    %v4713 = vmul.f32 %v4697, 0.25
    %v4714 = vmul.f32 %v4698, 0.25
    %v4715 = vmul.f32 %v4699, 0.25
    %v4716 = vmul.f32 %v4700, 0.25
    %v4717 = vmul.f32 %v4701, 0.25
    %v4718 = vmul.f32 %v4702, 0.25
    %v4719 = vadd.f32 %v4607, %v4703
    %v4720 = vadd.f32 %v4608, %v4704
    %v4721 = vadd.f32 %v4609, %v4705
    %v4722 = vadd.f32 %v4610, %v4706
    %v4723 = vadd.f32 %v4611, %v4707
    %v4724 = vadd.f32 %v4612, %v4708
    %v4725 = vadd.f32 %v4613, %v4709
    %v4726 = vadd.f32 %v4614, %v4710
    %v4727 = vadd.f32 %v4615, %v4711
    %v4728 = vadd.f32 %v4616, %v4712
    %v4729 = vadd.f32 %v4617, %v4713
    %v4730 = vadd.f32 %v4618, %v4714
    %v4731 = vadd.f32 %v4619, %v4715
    %v4732 = vadd.f32 %v4620, %v4716
    %v4733 = vadd.f32 %v4621, %v4717
    %v4734 = vadd.f32 %v4622, %v4718
    %4735 = vrot.lane.b32.xlu0 %v4591, 120
    %v4736 = vpop.permute.xlu0 %4735
    %4737 = vrot.lane.b32.xlu0 %v4592, 120
    %v4738 = vpop.permute.xlu0 %4737
    %4739 = vrot.lane.b32.xlu0 %v4593, 120
    %v4740 = vpop.permute.xlu0 %4739
    %4741 = vrot.lane.b32.xlu0 %v4594, 120
    %v4742 = vpop.permute.xlu0 %4741
    %4743 = vrot.lane.b32.xlu0 %v4595, 120
    %v4744 = vpop.permute.xlu0 %4743
    %4745 = vrot.lane.b32.xlu0 %v4596, 120
    %v4746 = vpop.permute.xlu0 %4745
    %4747 = vrot.lane.b32.xlu0 %v4597, 120
    %v4748 = vpop.permute.xlu0 %4747
    %4749 = vrot.lane.b32.xlu0 %v4598, 120
    %v4750 = vpop.permute.xlu0 %4749
    %4751 = vrot.lane.b32.xlu0 %v4599, 120
    %v4752 = vpop.permute.xlu0 %4751
    %4753 = vrot.lane.b32.xlu0 %v4600, 120
    %v4754 = vpop.permute.xlu0 %4753
    %4755 = vrot.lane.b32.xlu0 %v4601, 120
    %v4756 = vpop.permute.xlu0 %4755
    %4757 = vrot.lane.b32.xlu0 %v4602, 120
    %v4758 = vpop.permute.xlu0 %4757
    %4759 = vrot.lane.b32.xlu0 %v4603, 120
    %v4760 = vpop.permute.xlu0 %4759
    %4761 = vrot.lane.b32.xlu0 %v4604, 120
    %v4762 = vpop.permute.xlu0 %4761
    %4763 = vrot.lane.b32.xlu0 %v4605, 120
    %v4764 = vpop.permute.xlu0 %4763
    %4765 = vrot.lane.b32.xlu0 %v4606, 120
    %v4766 = vpop.permute.xlu0 %4765
    %v4783 = vsel %vm2066, %v4736, %v4591
    %v4784 = vsel %vm2066, %v4738, %v4592
    %v4785 = vsel %vm2066, %v4740, %v4593
    %v4786 = vsel %vm2066, %v4742, %v4594
    %v4787 = vsel %vm2066, %v4744, %v4595
    %v4788 = vsel %vm2066, %v4746, %v4596
    %v4789 = vsel %vm2066, %v4748, %v4597
    %v4790 = vsel %vm2066, %v4750, %v4598
    %v4791 = vsel %vm2066, %v4752, %v4599
    %v4792 = vsel %vm2066, %v4754, %v4600
    %v4793 = vsel %vm2066, %v4756, %v4601
    %v4794 = vsel %vm2066, %v4758, %v4602
    %v4795 = vsel %vm2066, %v4760, %v4603
    %v4796 = vsel %vm2066, %v4762, %v4604
    %v4797 = vsel %vm2066, %v4764, %v4605
    %v4798 = vsel %vm2066, %v4766, %v4606
    %v4799 = vmul.f32 %v4783, 0.25
    %v4800 = vmul.f32 %v4784, 0.25
    %v4801 = vmul.f32 %v4785, 0.25
    %v4802 = vmul.f32 %v4786, 0.25
    %v4803 = vmul.f32 %v4787, 0.25
    %v4804 = vmul.f32 %v4788, 0.25
    %v4805 = vmul.f32 %v4789, 0.25
    %v4806 = vmul.f32 %v4790, 0.25
    %v4807 = vmul.f32 %v4791, 0.25
    %v4808 = vmul.f32 %v4792, 0.25
    %v4809 = vmul.f32 %v4793, 0.25
    %v4810 = vmul.f32 %v4794, 0.25
    %v4811 = vmul.f32 %v4795, 0.25
    %v4812 = vmul.f32 %v4796, 0.25
    %v4813 = vmul.f32 %v4797, 0.25
    %v4814 = vmul.f32 %v4798, 0.25
    %v4815 = vadd.f32 %v4607, %v4799
    %v4816 = vadd.f32 %v4608, %v4800
    %v4817 = vadd.f32 %v4609, %v4801
    %v4818 = vadd.f32 %v4610, %v4802
    %v4819 = vadd.f32 %v4611, %v4803
    %v4820 = vadd.f32 %v4612, %v4804
    %v4821 = vadd.f32 %v4613, %v4805
    %v4822 = vadd.f32 %v4614, %v4806
    %v4823 = vadd.f32 %v4615, %v4807
    %v4824 = vadd.f32 %v4616, %v4808
    %v4825 = vadd.f32 %v4617, %v4809
    %v4826 = vadd.f32 %v4618, %v4810
    %v4827 = vadd.f32 %v4619, %v4811
    %v4828 = vadd.f32 %v4620, %v4812
    %v4829 = vadd.f32 %v4621, %v4813
    %v4830 = vadd.f32 %v4622, %v4814
    %4847 = vrot.lane.b32.xlu0 %v4815, 8
    %v4848 = vpop.permute.xlu0 %4847
    %4849 = vrot.lane.b32.xlu0 %v4816, 8
    %v4850 = vpop.permute.xlu0 %4849
    %4851 = vrot.lane.b32.xlu0 %v4817, 8
    %v4852 = vpop.permute.xlu0 %4851
    %4853 = vrot.lane.b32.xlu0 %v4818, 8
    %v4854 = vpop.permute.xlu0 %4853
    %4855 = vrot.lane.b32.xlu0 %v4819, 8
    %v4856 = vpop.permute.xlu0 %4855
    %4857 = vrot.lane.b32.xlu0 %v4820, 8
    %v4858 = vpop.permute.xlu0 %4857
    %4859 = vrot.lane.b32.xlu0 %v4821, 8
    %v4860 = vpop.permute.xlu0 %4859
    %4861 = vrot.lane.b32.xlu0 %v4822, 8
    %v4862 = vpop.permute.xlu0 %4861
    %4863 = vrot.lane.b32.xlu0 %v4823, 8
    %v4864 = vpop.permute.xlu0 %4863
    %4865 = vrot.lane.b32.xlu0 %v4824, 8
    %v4866 = vpop.permute.xlu0 %4865
    %4867 = vrot.lane.b32.xlu0 %v4825, 8
    %v4868 = vpop.permute.xlu0 %4867
    %4869 = vrot.lane.b32.xlu0 %v4826, 8
    %v4870 = vpop.permute.xlu0 %4869
    %4871 = vrot.lane.b32.xlu0 %v4827, 8
    %v4872 = vpop.permute.xlu0 %4871
    %4873 = vrot.lane.b32.xlu0 %v4828, 8
    %v4874 = vpop.permute.xlu0 %4873
    %4875 = vrot.lane.b32.xlu0 %v4829, 8
    %v4876 = vpop.permute.xlu0 %4875
    %4877 = vrot.lane.b32.xlu0 %v4830, 8
    %v4878 = vpop.permute.xlu0 %4877
    %4911 = vrot.lane.b32.xlu0 %v4719, 8
    %v4912 = vpop.permute.xlu0 %4911
    %4913 = vrot.lane.b32.xlu0 %v4720, 8
    %v4914 = vpop.permute.xlu0 %4913
    %4915 = vrot.lane.b32.xlu0 %v4721, 8
    %v4916 = vpop.permute.xlu0 %4915
    %4917 = vrot.lane.b32.xlu0 %v4722, 8
    %v4918 = vpop.permute.xlu0 %4917
    %4919 = vrot.lane.b32.xlu0 %v4723, 8
    %v4920 = vpop.permute.xlu0 %4919
    %4921 = vrot.lane.b32.xlu0 %v4724, 8
    %v4922 = vpop.permute.xlu0 %4921
    %4923 = vrot.lane.b32.xlu0 %v4725, 8
    %v4924 = vpop.permute.xlu0 %4923
    %4925 = vrot.lane.b32.xlu0 %v4726, 8
    %v4926 = vpop.permute.xlu0 %4925
    %4927 = vrot.lane.b32.xlu0 %v4727, 8
    %v4928 = vpop.permute.xlu0 %4927
    %4929 = vrot.lane.b32.xlu0 %v4728, 8
    %v4930 = vpop.permute.xlu0 %4929
    %4931 = vrot.lane.b32.xlu0 %v4729, 8
    %v4932 = vpop.permute.xlu0 %4931
    %4933 = vrot.lane.b32.xlu0 %v4730, 8
    %v4934 = vpop.permute.xlu0 %4933
    %4935 = vrot.lane.b32.xlu0 %v4731, 8
    %v4936 = vpop.permute.xlu0 %4935
    %4937 = vrot.lane.b32.xlu0 %v4732, 8
    %v4938 = vpop.permute.xlu0 %4937
    %4939 = vrot.lane.b32.xlu0 %v4733, 8
    %v4940 = vpop.permute.xlu0 %4939
    %4941 = vrot.lane.b32.xlu0 %v4734, 8
    %v4942 = vpop.permute.xlu0 %4941
    %4959 = vrot.lane.b32.xlu0 %v4815, 16
    %v4960 = vpop.permute.xlu0 %4959
    %4961 = vrot.lane.b32.xlu0 %v4816, 16
    %v4962 = vpop.permute.xlu0 %4961
    %4963 = vrot.lane.b32.xlu0 %v4817, 16
    %v4964 = vpop.permute.xlu0 %4963
    %4965 = vrot.lane.b32.xlu0 %v4818, 16
    %v4966 = vpop.permute.xlu0 %4965
    %4967 = vrot.lane.b32.xlu0 %v4819, 16
    %v4968 = vpop.permute.xlu0 %4967
    %4969 = vrot.lane.b32.xlu0 %v4820, 16
    %v4970 = vpop.permute.xlu0 %4969
    %4971 = vrot.lane.b32.xlu0 %v4821, 16
    %v4972 = vpop.permute.xlu0 %4971
    %4973 = vrot.lane.b32.xlu0 %v4822, 16
    %v4974 = vpop.permute.xlu0 %4973
    %4975 = vrot.lane.b32.xlu0 %v4823, 16
    %v4976 = vpop.permute.xlu0 %4975
    %4977 = vrot.lane.b32.xlu0 %v4824, 16
    %v4978 = vpop.permute.xlu0 %4977
    %4979 = vrot.lane.b32.xlu0 %v4825, 16
    %v4980 = vpop.permute.xlu0 %4979
    %4981 = vrot.lane.b32.xlu0 %v4826, 16
    %v4982 = vpop.permute.xlu0 %4981
    %4983 = vrot.lane.b32.xlu0 %v4827, 16
    %v4984 = vpop.permute.xlu0 %4983
    %4985 = vrot.lane.b32.xlu0 %v4828, 16
    %v4986 = vpop.permute.xlu0 %4985
    %4987 = vrot.lane.b32.xlu0 %v4829, 16
    %v4988 = vpop.permute.xlu0 %4987
    %4989 = vrot.lane.b32.xlu0 %v4830, 16
    %v4990 = vpop.permute.xlu0 %4989
    %5007 = vrot.lane.b32.xlu0 %v4719, 16
    %v5008 = vpop.permute.xlu0 %5007
    %5009 = vrot.lane.b32.xlu0 %v4720, 16
    %v5010 = vpop.permute.xlu0 %5009
    %5011 = vrot.lane.b32.xlu0 %v4721, 16
    %v5012 = vpop.permute.xlu0 %5011
    %5013 = vrot.lane.b32.xlu0 %v4722, 16
    %v5014 = vpop.permute.xlu0 %5013
    %5015 = vrot.lane.b32.xlu0 %v4723, 16
    %v5016 = vpop.permute.xlu0 %5015
    %5017 = vrot.lane.b32.xlu0 %v4724, 16
    %v5018 = vpop.permute.xlu0 %5017
    %5019 = vrot.lane.b32.xlu0 %v4725, 16
    %v5020 = vpop.permute.xlu0 %5019
    %5021 = vrot.lane.b32.xlu0 %v4726, 16
    %v5022 = vpop.permute.xlu0 %5021
    %5023 = vrot.lane.b32.xlu0 %v4727, 16
    %v5024 = vpop.permute.xlu0 %5023
    %5025 = vrot.lane.b32.xlu0 %v4728, 16
    %v5026 = vpop.permute.xlu0 %5025
    %5027 = vrot.lane.b32.xlu0 %v4729, 16
    %v5028 = vpop.permute.xlu0 %5027
    %5029 = vrot.lane.b32.xlu0 %v4730, 16
    %v5030 = vpop.permute.xlu0 %5029
    %5031 = vrot.lane.b32.xlu0 %v4731, 16
    %v5032 = vpop.permute.xlu0 %5031
    %5033 = vrot.lane.b32.xlu0 %v4732, 16
    %v5034 = vpop.permute.xlu0 %5033
    %5035 = vrot.lane.b32.xlu0 %v4733, 16
    %v5036 = vpop.permute.xlu0 %5035
    %5037 = vrot.lane.b32.xlu0 %v4734, 16
    %v5038 = vpop.permute.xlu0 %5037
    %5055 = vrot.lane.b32.xlu0 %v4815, 24
    %v5056 = vpop.permute.xlu0 %5055
    %5057 = vrot.lane.b32.xlu0 %v4816, 24
    %v5058 = vpop.permute.xlu0 %5057
    %5059 = vrot.lane.b32.xlu0 %v4817, 24
    %v5060 = vpop.permute.xlu0 %5059
    %5061 = vrot.lane.b32.xlu0 %v4818, 24
    %v5062 = vpop.permute.xlu0 %5061
    %5063 = vrot.lane.b32.xlu0 %v4819, 24
    %v5064 = vpop.permute.xlu0 %5063
    %5065 = vrot.lane.b32.xlu0 %v4820, 24
    %v5066 = vpop.permute.xlu0 %5065
    %5067 = vrot.lane.b32.xlu0 %v4821, 24
    %v5068 = vpop.permute.xlu0 %5067
    %5069 = vrot.lane.b32.xlu0 %v4822, 24
    %v5070 = vpop.permute.xlu0 %5069
    %5071 = vrot.lane.b32.xlu0 %v4823, 24
    %v5072 = vpop.permute.xlu0 %5071
    %5073 = vrot.lane.b32.xlu0 %v4824, 24
    %v5074 = vpop.permute.xlu0 %5073
    %5075 = vrot.lane.b32.xlu0 %v4825, 24
    %v5076 = vpop.permute.xlu0 %5075
    %5077 = vrot.lane.b32.xlu0 %v4826, 24
    %v5078 = vpop.permute.xlu0 %5077
    %5079 = vrot.lane.b32.xlu0 %v4827, 24
    %v5080 = vpop.permute.xlu0 %5079
    %5081 = vrot.lane.b32.xlu0 %v4828, 24
    %v5082 = vpop.permute.xlu0 %5081
    %5083 = vrot.lane.b32.xlu0 %v4829, 24
    %v5084 = vpop.permute.xlu0 %5083
    %5085 = vrot.lane.b32.xlu0 %v4830, 24
    %v5086 = vpop.permute.xlu0 %5085
    %5103 = vrot.lane.b32.xlu0 %v4719, 24
    %v5104 = vpop.permute.xlu0 %5103
    %5105 = vrot.lane.b32.xlu0 %v4720, 24
    %v5106 = vpop.permute.xlu0 %5105
    %5107 = vrot.lane.b32.xlu0 %v4721, 24
    %v5108 = vpop.permute.xlu0 %5107
    %5109 = vrot.lane.b32.xlu0 %v4722, 24
    %v5110 = vpop.permute.xlu0 %5109
    %5111 = vrot.lane.b32.xlu0 %v4723, 24
    %v5112 = vpop.permute.xlu0 %5111
    %5113 = vrot.lane.b32.xlu0 %v4724, 24
    %v5114 = vpop.permute.xlu0 %5113
    %5115 = vrot.lane.b32.xlu0 %v4725, 24
    %v5116 = vpop.permute.xlu0 %5115
    %5117 = vrot.lane.b32.xlu0 %v4726, 24
    %v5118 = vpop.permute.xlu0 %5117
    %5119 = vrot.lane.b32.xlu0 %v4727, 24
    %v5120 = vpop.permute.xlu0 %5119
    %5121 = vrot.lane.b32.xlu0 %v4728, 24
    %v5122 = vpop.permute.xlu0 %5121
    %5123 = vrot.lane.b32.xlu0 %v4729, 24
    %v5124 = vpop.permute.xlu0 %5123
    %5125 = vrot.lane.b32.xlu0 %v4730, 24
    %v5126 = vpop.permute.xlu0 %5125
    %5127 = vrot.lane.b32.xlu0 %v4731, 24
    %v5128 = vpop.permute.xlu0 %5127
    %5129 = vrot.lane.b32.xlu0 %v4732, 24
    %v5130 = vpop.permute.xlu0 %5129
    %5131 = vrot.lane.b32.xlu0 %v4733, 24
    %v5132 = vpop.permute.xlu0 %5131
    %5133 = vrot.lane.b32.xlu0 %v4734, 24
    %v5134 = vpop.permute.xlu0 %5133
    %5151 = vrot.lane.b32.xlu0 %v4815, 32
    %v5152 = vpop.permute.xlu0 %5151
    %5153 = vrot.lane.b32.xlu0 %v4816, 32
    %v5154 = vpop.permute.xlu0 %5153
    %5155 = vrot.lane.b32.xlu0 %v4817, 32
    %v5156 = vpop.permute.xlu0 %5155
    %5157 = vrot.lane.b32.xlu0 %v4818, 32
    %v5158 = vpop.permute.xlu0 %5157
    %5159 = vrot.lane.b32.xlu0 %v4819, 32
    %v5160 = vpop.permute.xlu0 %5159
    %5161 = vrot.lane.b32.xlu0 %v4820, 32
    %v5162 = vpop.permute.xlu0 %5161
    %5163 = vrot.lane.b32.xlu0 %v4821, 32
    %v5164 = vpop.permute.xlu0 %5163
    %5165 = vrot.lane.b32.xlu0 %v4822, 32
    %v5166 = vpop.permute.xlu0 %5165
    %5167 = vrot.lane.b32.xlu0 %v4823, 32
    %v5168 = vpop.permute.xlu0 %5167
    %5169 = vrot.lane.b32.xlu0 %v4824, 32
    %v5170 = vpop.permute.xlu0 %5169
    %5171 = vrot.lane.b32.xlu0 %v4825, 32
    %v5172 = vpop.permute.xlu0 %5171
    %5173 = vrot.lane.b32.xlu0 %v4826, 32
    %v5174 = vpop.permute.xlu0 %5173
    %5175 = vrot.lane.b32.xlu0 %v4827, 32
    %v5176 = vpop.permute.xlu0 %5175
    %5177 = vrot.lane.b32.xlu0 %v4828, 32
    %v5178 = vpop.permute.xlu0 %5177
    %5179 = vrot.lane.b32.xlu0 %v4829, 32
    %v5180 = vpop.permute.xlu0 %5179
    %5181 = vrot.lane.b32.xlu0 %v4830, 32
    %v5182 = vpop.permute.xlu0 %5181
    %5199 = vrot.lane.b32.xlu0 %v4719, 32
    %v5200 = vpop.permute.xlu0 %5199
    %5201 = vrot.lane.b32.xlu0 %v4720, 32
    %v5202 = vpop.permute.xlu0 %5201
    %5203 = vrot.lane.b32.xlu0 %v4721, 32
    %v5204 = vpop.permute.xlu0 %5203
    %5205 = vrot.lane.b32.xlu0 %v4722, 32
    %v5206 = vpop.permute.xlu0 %5205
    %5207 = vrot.lane.b32.xlu0 %v4723, 32
    %v5208 = vpop.permute.xlu0 %5207
    %5209 = vrot.lane.b32.xlu0 %v4724, 32
    %v5210 = vpop.permute.xlu0 %5209
    %5211 = vrot.lane.b32.xlu0 %v4725, 32
    %v5212 = vpop.permute.xlu0 %5211
    %5213 = vrot.lane.b32.xlu0 %v4726, 32
    %v5214 = vpop.permute.xlu0 %5213
    %5215 = vrot.lane.b32.xlu0 %v4727, 32
    %v5216 = vpop.permute.xlu0 %5215
    %5217 = vrot.lane.b32.xlu0 %v4728, 32
    %v5218 = vpop.permute.xlu0 %5217
    %5219 = vrot.lane.b32.xlu0 %v4729, 32
    %v5220 = vpop.permute.xlu0 %5219
    %5221 = vrot.lane.b32.xlu0 %v4730, 32
    %v5222 = vpop.permute.xlu0 %5221
    %5223 = vrot.lane.b32.xlu0 %v4731, 32
    %v5224 = vpop.permute.xlu0 %5223
    %5225 = vrot.lane.b32.xlu0 %v4732, 32
    %v5226 = vpop.permute.xlu0 %5225
    %5227 = vrot.lane.b32.xlu0 %v4733, 32
    %v5228 = vpop.permute.xlu0 %5227
    %5229 = vrot.lane.b32.xlu0 %v4734, 32
    %v5230 = vpop.permute.xlu0 %5229
    %5247 = vrot.lane.b32.xlu0 %v4815, 40
    %v5248 = vpop.permute.xlu0 %5247
    %5249 = vrot.lane.b32.xlu0 %v4816, 40
    %v5250 = vpop.permute.xlu0 %5249
    %5251 = vrot.lane.b32.xlu0 %v4817, 40
    %v5252 = vpop.permute.xlu0 %5251
    %5253 = vrot.lane.b32.xlu0 %v4818, 40
    %v5254 = vpop.permute.xlu0 %5253
    %5255 = vrot.lane.b32.xlu0 %v4819, 40
    %v5256 = vpop.permute.xlu0 %5255
    %5257 = vrot.lane.b32.xlu0 %v4820, 40
    %v5258 = vpop.permute.xlu0 %5257
    %5259 = vrot.lane.b32.xlu0 %v4821, 40
    %v5260 = vpop.permute.xlu0 %5259
    %5261 = vrot.lane.b32.xlu0 %v4822, 40
    %v5262 = vpop.permute.xlu0 %5261
    %5263 = vrot.lane.b32.xlu0 %v4823, 40
    %v5264 = vpop.permute.xlu0 %5263
    %5265 = vrot.lane.b32.xlu0 %v4824, 40
    %v5266 = vpop.permute.xlu0 %5265
    %5267 = vrot.lane.b32.xlu0 %v4825, 40
    %v5268 = vpop.permute.xlu0 %5267
    %5269 = vrot.lane.b32.xlu0 %v4826, 40
    %v5270 = vpop.permute.xlu0 %5269
    %5271 = vrot.lane.b32.xlu0 %v4827, 40
    %v5272 = vpop.permute.xlu0 %5271
    %5273 = vrot.lane.b32.xlu0 %v4828, 40
    %v5274 = vpop.permute.xlu0 %5273
    %5275 = vrot.lane.b32.xlu0 %v4829, 40
    %v5276 = vpop.permute.xlu0 %5275
    %5277 = vrot.lane.b32.xlu0 %v4830, 40
    %v5278 = vpop.permute.xlu0 %5277
    %5295 = vrot.lane.b32.xlu0 %v4719, 40
    %v5296 = vpop.permute.xlu0 %5295
    %5297 = vrot.lane.b32.xlu0 %v4720, 40
    %v5298 = vpop.permute.xlu0 %5297
    %5299 = vrot.lane.b32.xlu0 %v4721, 40
    %v5300 = vpop.permute.xlu0 %5299
    %5301 = vrot.lane.b32.xlu0 %v4722, 40
    %v5302 = vpop.permute.xlu0 %5301
    %5303 = vrot.lane.b32.xlu0 %v4723, 40
    %v5304 = vpop.permute.xlu0 %5303
    %5305 = vrot.lane.b32.xlu0 %v4724, 40
    %v5306 = vpop.permute.xlu0 %5305
    %5307 = vrot.lane.b32.xlu0 %v4725, 40
    %v5308 = vpop.permute.xlu0 %5307
    %5309 = vrot.lane.b32.xlu0 %v4726, 40
    %v5310 = vpop.permute.xlu0 %5309
    %5311 = vrot.lane.b32.xlu0 %v4727, 40
    %v5312 = vpop.permute.xlu0 %5311
    %5313 = vrot.lane.b32.xlu0 %v4728, 40
    %v5314 = vpop.permute.xlu0 %5313
    %5315 = vrot.lane.b32.xlu0 %v4729, 40
    %v5316 = vpop.permute.xlu0 %5315
    %5317 = vrot.lane.b32.xlu0 %v4730, 40
    %v5318 = vpop.permute.xlu0 %5317
    %5319 = vrot.lane.b32.xlu0 %v4731, 40
    %v5320 = vpop.permute.xlu0 %5319
    %5321 = vrot.lane.b32.xlu0 %v4732, 40
    %v5322 = vpop.permute.xlu0 %5321
    %5323 = vrot.lane.b32.xlu0 %v4733, 40
    %v5324 = vpop.permute.xlu0 %5323
    %5325 = vrot.lane.b32.xlu0 %v4734, 40
    %v5326 = vpop.permute.xlu0 %5325
    %5343 = vrot.lane.b32.xlu0 %v4815, 48
    %v5344 = vpop.permute.xlu0 %5343
    %5345 = vrot.lane.b32.xlu0 %v4816, 48
    %v5346 = vpop.permute.xlu0 %5345
    %5347 = vrot.lane.b32.xlu0 %v4817, 48
    %v5348 = vpop.permute.xlu0 %5347
    %5349 = vrot.lane.b32.xlu0 %v4818, 48
    %v5350 = vpop.permute.xlu0 %5349
    %5351 = vrot.lane.b32.xlu0 %v4819, 48
    %v5352 = vpop.permute.xlu0 %5351
    %5353 = vrot.lane.b32.xlu0 %v4820, 48
    %v5354 = vpop.permute.xlu0 %5353
    %5355 = vrot.lane.b32.xlu0 %v4821, 48
    %v5356 = vpop.permute.xlu0 %5355
    %5357 = vrot.lane.b32.xlu0 %v4822, 48
    %v5358 = vpop.permute.xlu0 %5357
    %5359 = vrot.lane.b32.xlu0 %v4823, 48
    %v5360 = vpop.permute.xlu0 %5359
    %5361 = vrot.lane.b32.xlu0 %v4824, 48
    %v5362 = vpop.permute.xlu0 %5361
    %5363 = vrot.lane.b32.xlu0 %v4825, 48
    %v5364 = vpop.permute.xlu0 %5363
    %5365 = vrot.lane.b32.xlu0 %v4826, 48
    %v5366 = vpop.permute.xlu0 %5365
    %5367 = vrot.lane.b32.xlu0 %v4827, 48
    %v5368 = vpop.permute.xlu0 %5367
    %5369 = vrot.lane.b32.xlu0 %v4828, 48
    %v5370 = vpop.permute.xlu0 %5369
    %5371 = vrot.lane.b32.xlu0 %v4829, 48
    %v5372 = vpop.permute.xlu0 %5371
    %5373 = vrot.lane.b32.xlu0 %v4830, 48
    %v5374 = vpop.permute.xlu0 %5373
    %5391 = vrot.lane.b32.xlu0 %v4719, 48
    %v5392 = vpop.permute.xlu0 %5391
    %5393 = vrot.lane.b32.xlu0 %v4720, 48
    %v5394 = vpop.permute.xlu0 %5393
    %5395 = vrot.lane.b32.xlu0 %v4721, 48
    %v5396 = vpop.permute.xlu0 %5395
    %5397 = vrot.lane.b32.xlu0 %v4722, 48
    %v5398 = vpop.permute.xlu0 %5397
    %5399 = vrot.lane.b32.xlu0 %v4723, 48
    %v5400 = vpop.permute.xlu0 %5399
    %5401 = vrot.lane.b32.xlu0 %v4724, 48
    %v5402 = vpop.permute.xlu0 %5401
    %5403 = vrot.lane.b32.xlu0 %v4725, 48
    %v5404 = vpop.permute.xlu0 %5403
    %5405 = vrot.lane.b32.xlu0 %v4726, 48
    %v5406 = vpop.permute.xlu0 %5405
    %5407 = vrot.lane.b32.xlu0 %v4727, 48
    %v5408 = vpop.permute.xlu0 %5407
    %5409 = vrot.lane.b32.xlu0 %v4728, 48
    %v5410 = vpop.permute.xlu0 %5409
    %5411 = vrot.lane.b32.xlu0 %v4729, 48
    %v5412 = vpop.permute.xlu0 %5411
    %5413 = vrot.lane.b32.xlu0 %v4730, 48
    %v5414 = vpop.permute.xlu0 %5413
    %5415 = vrot.lane.b32.xlu0 %v4731, 48
    %v5416 = vpop.permute.xlu0 %5415
    %5417 = vrot.lane.b32.xlu0 %v4732, 48
    %v5418 = vpop.permute.xlu0 %5417
    %5419 = vrot.lane.b32.xlu0 %v4733, 48
    %v5420 = vpop.permute.xlu0 %5419
    %5421 = vrot.lane.b32.xlu0 %v4734, 48
    %v5422 = vpop.permute.xlu0 %5421
    %5439 = vrot.lane.b32.xlu0 %v4815, 56
    %v5440 = vpop.permute.xlu0 %5439
    %5441 = vrot.lane.b32.xlu0 %v4816, 56
    %v5442 = vpop.permute.xlu0 %5441
    %5443 = vrot.lane.b32.xlu0 %v4817, 56
    %v5444 = vpop.permute.xlu0 %5443
    %5445 = vrot.lane.b32.xlu0 %v4818, 56
    %v5446 = vpop.permute.xlu0 %5445
    %5447 = vrot.lane.b32.xlu0 %v4819, 56
    %v5448 = vpop.permute.xlu0 %5447
    %5449 = vrot.lane.b32.xlu0 %v4820, 56
    %v5450 = vpop.permute.xlu0 %5449
    %5451 = vrot.lane.b32.xlu0 %v4821, 56
    %v5452 = vpop.permute.xlu0 %5451
    %5453 = vrot.lane.b32.xlu0 %v4822, 56
    %v5454 = vpop.permute.xlu0 %5453
    %5455 = vrot.lane.b32.xlu0 %v4823, 56
    %v5456 = vpop.permute.xlu0 %5455
    %5457 = vrot.lane.b32.xlu0 %v4824, 56
    %v5458 = vpop.permute.xlu0 %5457
    %5459 = vrot.lane.b32.xlu0 %v4825, 56
    %v5460 = vpop.permute.xlu0 %5459
    %5461 = vrot.lane.b32.xlu0 %v4826, 56
    %v5462 = vpop.permute.xlu0 %5461
    %5463 = vrot.lane.b32.xlu0 %v4827, 56
    %v5464 = vpop.permute.xlu0 %5463
    %5465 = vrot.lane.b32.xlu0 %v4828, 56
    %v5466 = vpop.permute.xlu0 %5465
    %5467 = vrot.lane.b32.xlu0 %v4829, 56
    %v5468 = vpop.permute.xlu0 %5467
    %5469 = vrot.lane.b32.xlu0 %v4830, 56
    %v5470 = vpop.permute.xlu0 %5469
    %5487 = vrot.lane.b32.xlu0 %v4719, 56
    %v5488 = vpop.permute.xlu0 %5487
    %5489 = vrot.lane.b32.xlu0 %v4720, 56
    %v5490 = vpop.permute.xlu0 %5489
    %5491 = vrot.lane.b32.xlu0 %v4721, 56
    %v5492 = vpop.permute.xlu0 %5491
    %5493 = vrot.lane.b32.xlu0 %v4722, 56
    %v5494 = vpop.permute.xlu0 %5493
    %5495 = vrot.lane.b32.xlu0 %v4723, 56
    %v5496 = vpop.permute.xlu0 %5495
    %5497 = vrot.lane.b32.xlu0 %v4724, 56
    %v5498 = vpop.permute.xlu0 %5497
    %5499 = vrot.lane.b32.xlu0 %v4725, 56
    %v5500 = vpop.permute.xlu0 %5499
    %5501 = vrot.lane.b32.xlu0 %v4726, 56
    %v5502 = vpop.permute.xlu0 %5501
    %5503 = vrot.lane.b32.xlu0 %v4727, 56
    %v5504 = vpop.permute.xlu0 %5503
    %5505 = vrot.lane.b32.xlu0 %v4728, 56
    %v5506 = vpop.permute.xlu0 %5505
    %5507 = vrot.lane.b32.xlu0 %v4729, 56
    %v5508 = vpop.permute.xlu0 %5507
    %5509 = vrot.lane.b32.xlu0 %v4730, 56
    %v5510 = vpop.permute.xlu0 %5509
    %5511 = vrot.lane.b32.xlu0 %v4731, 56
    %v5512 = vpop.permute.xlu0 %5511
    %5513 = vrot.lane.b32.xlu0 %v4732, 56
    %v5514 = vpop.permute.xlu0 %5513
    %5515 = vrot.lane.b32.xlu0 %v4733, 56
    %v5516 = vpop.permute.xlu0 %5515
    %5517 = vrot.lane.b32.xlu0 %v4734, 56
    %v5518 = vpop.permute.xlu0 %5517
    %5535 = vrot.lane.b32.xlu0 %v4815, 64
    %v5536 = vpop.permute.xlu0 %5535
    %5537 = vrot.lane.b32.xlu0 %v4816, 64
    %v5538 = vpop.permute.xlu0 %5537
    %5539 = vrot.lane.b32.xlu0 %v4817, 64
    %v5540 = vpop.permute.xlu0 %5539
    %5541 = vrot.lane.b32.xlu0 %v4818, 64
    %v5542 = vpop.permute.xlu0 %5541
    %5543 = vrot.lane.b32.xlu0 %v4819, 64
    %v5544 = vpop.permute.xlu0 %5543
    %5545 = vrot.lane.b32.xlu0 %v4820, 64
    %v5546 = vpop.permute.xlu0 %5545
    %5547 = vrot.lane.b32.xlu0 %v4821, 64
    %v5548 = vpop.permute.xlu0 %5547
    %5549 = vrot.lane.b32.xlu0 %v4822, 64
    %v5550 = vpop.permute.xlu0 %5549
    %5551 = vrot.lane.b32.xlu0 %v4823, 64
    %v5552 = vpop.permute.xlu0 %5551
    %5553 = vrot.lane.b32.xlu0 %v4824, 64
    %v5554 = vpop.permute.xlu0 %5553
    %5555 = vrot.lane.b32.xlu0 %v4825, 64
    %v5556 = vpop.permute.xlu0 %5555
    %5557 = vrot.lane.b32.xlu0 %v4826, 64
    %v5558 = vpop.permute.xlu0 %5557
    %5559 = vrot.lane.b32.xlu0 %v4827, 64
    %v5560 = vpop.permute.xlu0 %5559
    %5561 = vrot.lane.b32.xlu0 %v4828, 64
    %v5562 = vpop.permute.xlu0 %5561
    %5563 = vrot.lane.b32.xlu0 %v4829, 64
    %v5564 = vpop.permute.xlu0 %5563
    %5565 = vrot.lane.b32.xlu0 %v4830, 64
    %v5566 = vpop.permute.xlu0 %5565
    %v5583 = vsel %vm2054, %v4719, %v4848
    %v5584 = vsel %vm2054, %v4720, %v4850
    %v5585 = vsel %vm2054, %v4721, %v4852
    %v5586 = vsel %vm2054, %v4722, %v4854
    %v5587 = vsel %vm2054, %v4723, %v4856
    %v5588 = vsel %vm2054, %v4724, %v4858
    %v5589 = vsel %vm2054, %v4725, %v4860
    %v5590 = vsel %vm2054, %v4726, %v4862
    %v5591 = vsel %vm2054, %v4727, %v4864
    %v5592 = vsel %vm2054, %v4728, %v4866
    %v5593 = vsel %vm2054, %v4729, %v4868
    %v5594 = vsel %vm2054, %v4730, %v4870
    %v5595 = vsel %vm2054, %v4731, %v4872
    %v5596 = vsel %vm2054, %v4732, %v4874
    %v5597 = vsel %vm2054, %v4733, %v4876
    %v5598 = vsel %vm2054, %v4734, %v4878
    %v5599 = vsel %vm2056, %v5583, %v4912
    %v5600 = vsel %vm2056, %v5584, %v4914
    %v5601 = vsel %vm2056, %v5585, %v4916
    %v5602 = vsel %vm2056, %v5586, %v4918
    %v5603 = vsel %vm2056, %v5587, %v4920
    %v5604 = vsel %vm2056, %v5588, %v4922
    %v5605 = vsel %vm2056, %v5589, %v4924
    %v5606 = vsel %vm2056, %v5590, %v4926
    %v5607 = vsel %vm2056, %v5591, %v4928
    %v5608 = vsel %vm2056, %v5592, %v4930
    %v5609 = vsel %vm2056, %v5593, %v4932
    %v5610 = vsel %vm2056, %v5594, %v4934
    %v5611 = vsel %vm2056, %v5595, %v4936
    %v5612 = vsel %vm2056, %v5596, %v4938
    %v5613 = vsel %vm2056, %v5597, %v4940
    %v5614 = vsel %vm2056, %v5598, %v4942
    %v5615 = vsel %vm2058, %v5599, %v4960
    %v5616 = vsel %vm2058, %v5600, %v4962
    %v5617 = vsel %vm2058, %v5601, %v4964
    %v5618 = vsel %vm2058, %v5602, %v4966
    %v5619 = vsel %vm2058, %v5603, %v4968
    %v5620 = vsel %vm2058, %v5604, %v4970
    %v5621 = vsel %vm2058, %v5605, %v4972
    %v5622 = vsel %vm2058, %v5606, %v4974
    %v5623 = vsel %vm2058, %v5607, %v4976
    %v5624 = vsel %vm2058, %v5608, %v4978
    %v5625 = vsel %vm2058, %v5609, %v4980
    %v5626 = vsel %vm2058, %v5610, %v4982
    %v5627 = vsel %vm2058, %v5611, %v4984
    %v5628 = vsel %vm2058, %v5612, %v4986
    %v5629 = vsel %vm2058, %v5613, %v4988
    %v5630 = vsel %vm2058, %v5614, %v4990
    %v5631 = vsel %vm2060, %v5615, %v5008
    %v5632 = vsel %vm2060, %v5616, %v5010
    %v5633 = vsel %vm2060, %v5617, %v5012
    %v5634 = vsel %vm2060, %v5618, %v5014
    %v5635 = vsel %vm2060, %v5619, %v5016
    %v5636 = vsel %vm2060, %v5620, %v5018
    %v5637 = vsel %vm2060, %v5621, %v5020
    %v5638 = vsel %vm2060, %v5622, %v5022
    %v5639 = vsel %vm2060, %v5623, %v5024
    %v5640 = vsel %vm2060, %v5624, %v5026
    %v5641 = vsel %vm2060, %v5625, %v5028
    %v5642 = vsel %vm2060, %v5626, %v5030
    %v5643 = vsel %vm2060, %v5627, %v5032
    %v5644 = vsel %vm2060, %v5628, %v5034
    %v5645 = vsel %vm2060, %v5629, %v5036
    %v5646 = vsel %vm2060, %v5630, %v5038
    %v5647 = vsel %vm2062, %v5631, %v5056
    %v5648 = vsel %vm2062, %v5632, %v5058
    %v5649 = vsel %vm2062, %v5633, %v5060
    %v5650 = vsel %vm2062, %v5634, %v5062
    %v5651 = vsel %vm2062, %v5635, %v5064
    %v5652 = vsel %vm2062, %v5636, %v5066
    %v5653 = vsel %vm2062, %v5637, %v5068
    %v5654 = vsel %vm2062, %v5638, %v5070
    %v5655 = vsel %vm2062, %v5639, %v5072
    %v5656 = vsel %vm2062, %v5640, %v5074
    %v5657 = vsel %vm2062, %v5641, %v5076
    %v5658 = vsel %vm2062, %v5642, %v5078
    %v5659 = vsel %vm2062, %v5643, %v5080
    %v5660 = vsel %vm2062, %v5644, %v5082
    %v5661 = vsel %vm2062, %v5645, %v5084
    %v5662 = vsel %vm2062, %v5646, %v5086
    %v5663 = vsel %vm2064, %v5647, %v5104
    %v5664 = vsel %vm2064, %v5648, %v5106
    %v5665 = vsel %vm2064, %v5649, %v5108
    %v5666 = vsel %vm2064, %v5650, %v5110
    %v5667 = vsel %vm2064, %v5651, %v5112
    %v5668 = vsel %vm2064, %v5652, %v5114
    %v5669 = vsel %vm2064, %v5653, %v5116
    %v5670 = vsel %vm2064, %v5654, %v5118
    %v5671 = vsel %vm2064, %v5655, %v5120
    %v5672 = vsel %vm2064, %v5656, %v5122
    %v5673 = vsel %vm2064, %v5657, %v5124
    %v5674 = vsel %vm2064, %v5658, %v5126
    %v5675 = vsel %vm2064, %v5659, %v5128
    %v5676 = vsel %vm2064, %v5660, %v5130
    %v5677 = vsel %vm2064, %v5661, %v5132
    %v5678 = vsel %vm2064, %v5662, %v5134
    %v5679 = vsel %vm2066, %v5663, %v5152
    %v5680 = vsel %vm2066, %v5664, %v5154
    %v5681 = vsel %vm2066, %v5665, %v5156
    %v5682 = vsel %vm2066, %v5666, %v5158
    %v5683 = vsel %vm2066, %v5667, %v5160
    %v5684 = vsel %vm2066, %v5668, %v5162
    %v5685 = vsel %vm2066, %v5669, %v5164
    %v5686 = vsel %vm2066, %v5670, %v5166
    %v5687 = vsel %vm2066, %v5671, %v5168
    %v5688 = vsel %vm2066, %v5672, %v5170
    %v5689 = vsel %vm2066, %v5673, %v5172
    %v5690 = vsel %vm2066, %v5674, %v5174
    %v5691 = vsel %vm2066, %v5675, %v5176
    %v5692 = vsel %vm2066, %v5676, %v5178
    %v5693 = vsel %vm2066, %v5677, %v5180
    %v5694 = vsel %vm2066, %v5678, %v5182
    %v5695 = vsel %vm1865, %v5679, %v5200
    %v5696 = vsel %vm1865, %v5680, %v5202
    %v5697 = vsel %vm1865, %v5681, %v5204
    %v5698 = vsel %vm1865, %v5682, %v5206
    %v5699 = vsel %vm1865, %v5683, %v5208
    %v5700 = vsel %vm1865, %v5684, %v5210
    %v5701 = vsel %vm1865, %v5685, %v5212
    %v5702 = vsel %vm1865, %v5686, %v5214
    %v5703 = vsel %vm1865, %v5687, %v5216
    %v5704 = vsel %vm1865, %v5688, %v5218
    %v5705 = vsel %vm1865, %v5689, %v5220
    %v5706 = vsel %vm1865, %v5690, %v5222
    %v5707 = vsel %vm1865, %v5691, %v5224
    %v5708 = vsel %vm1865, %v5692, %v5226
    %v5709 = vsel %vm1865, %v5693, %v5228
    %v5710 = vsel %vm1865, %v5694, %v5230
    %v5711 = vsel %vm2237, %v5695, %v5248
    %v5712 = vsel %vm2237, %v5696, %v5250
    %v5713 = vsel %vm2237, %v5697, %v5252
    %v5714 = vsel %vm2237, %v5698, %v5254
    %v5715 = vsel %vm2237, %v5699, %v5256
    %v5716 = vsel %vm2237, %v5700, %v5258
    %v5717 = vsel %vm2237, %v5701, %v5260
    %v5718 = vsel %vm2237, %v5702, %v5262
    %v5719 = vsel %vm2237, %v5703, %v5264
    %v5720 = vsel %vm2237, %v5704, %v5266
    %v5721 = vsel %vm2237, %v5705, %v5268
    %v5722 = vsel %vm2237, %v5706, %v5270
    %v5723 = vsel %vm2237, %v5707, %v5272
    %v5724 = vsel %vm2237, %v5708, %v5274
    %v5725 = vsel %vm2237, %v5709, %v5276
    %v5726 = vsel %vm2237, %v5710, %v5278
    %v5727 = vsel %vm169, %v5711, %v5296
    %v5728 = vsel %vm169, %v5712, %v5298
    %v5729 = vsel %vm169, %v5713, %v5300
    %v5730 = vsel %vm169, %v5714, %v5302
    %v5731 = vsel %vm169, %v5715, %v5304
    %v5732 = vsel %vm169, %v5716, %v5306
    %v5733 = vsel %vm169, %v5717, %v5308
    %v5734 = vsel %vm169, %v5718, %v5310
    %v5735 = vsel %vm169, %v5719, %v5312
    %v5736 = vsel %vm169, %v5720, %v5314
    %v5737 = vsel %vm169, %v5721, %v5316
    %v5738 = vsel %vm169, %v5722, %v5318
    %v5739 = vsel %vm169, %v5723, %v5320
    %v5740 = vsel %vm169, %v5724, %v5322
    %v5741 = vsel %vm169, %v5725, %v5324
    %v5742 = vsel %vm169, %v5726, %v5326
    %vm5743 = vcmask 719872
    %v5744 = vsel %vm5743, %v5727, %v5344
    %v5745 = vsel %vm5743, %v5728, %v5346
    %v5746 = vsel %vm5743, %v5729, %v5348
    %v5747 = vsel %vm5743, %v5730, %v5350
    %v5748 = vsel %vm5743, %v5731, %v5352
    %v5749 = vsel %vm5743, %v5732, %v5354
    %v5750 = vsel %vm5743, %v5733, %v5356
    %v5751 = vsel %vm5743, %v5734, %v5358
    %v5752 = vsel %vm5743, %v5735, %v5360
    %v5753 = vsel %vm5743, %v5736, %v5362
    %v5754 = vsel %vm5743, %v5737, %v5364
    %v5755 = vsel %vm5743, %v5738, %v5366
    %v5756 = vsel %vm5743, %v5739, %v5368
    %v5757 = vsel %vm5743, %v5740, %v5370
    %v5758 = vsel %vm5743, %v5741, %v5372
    %v5759 = vsel %vm5743, %v5742, %v5374
    %vm5760 = vcmask 785408
    %v5761 = vsel %vm5760, %v5744, %v5392
    %v5762 = vsel %vm5760, %v5745, %v5394
    %v5763 = vsel %vm5760, %v5746, %v5396
    %v5764 = vsel %vm5760, %v5747, %v5398
    %v5765 = vsel %vm5760, %v5748, %v5400
    %v5766 = vsel %vm5760, %v5749, %v5402
    %v5767 = vsel %vm5760, %v5750, %v5404
    %v5768 = vsel %vm5760, %v5751, %v5406
    %v5769 = vsel %vm5760, %v5752, %v5408
    %v5770 = vsel %vm5760, %v5753, %v5410
    %v5771 = vsel %vm5760, %v5754, %v5412
    %v5772 = vsel %vm5760, %v5755, %v5414
    %v5773 = vsel %vm5760, %v5756, %v5416
    %v5774 = vsel %vm5760, %v5757, %v5418
    %v5775 = vsel %vm5760, %v5758, %v5420
    %v5776 = vsel %vm5760, %v5759, %v5422
    %vm5777 = vcmask 850944
    %v5778 = vsel %vm5777, %v5761, %v5440
    %v5779 = vsel %vm5777, %v5762, %v5442
    %v5780 = vsel %vm5777, %v5763, %v5444
    %v5781 = vsel %vm5777, %v5764, %v5446
    %v5782 = vsel %vm5777, %v5765, %v5448
    %v5783 = vsel %vm5777, %v5766, %v5450
    %v5784 = vsel %vm5777, %v5767, %v5452
    %v5785 = vsel %vm5777, %v5768, %v5454
    %v5786 = vsel %vm5777, %v5769, %v5456
    %v5787 = vsel %vm5777, %v5770, %v5458
    %v5788 = vsel %vm5777, %v5771, %v5460
    %v5789 = vsel %vm5777, %v5772, %v5462
    %v5790 = vsel %vm5777, %v5773, %v5464
    %v5791 = vsel %vm5777, %v5774, %v5466
    %v5792 = vsel %vm5777, %v5775, %v5468
    %v5793 = vsel %vm5777, %v5776, %v5470
    %vm5794 = vcmask 916480
    %v5795 = vsel %vm5794, %v5778, %v5488
    %v5796 = vsel %vm5794, %v5779, %v5490
    %v5797 = vsel %vm5794, %v5780, %v5492
    %v5798 = vsel %vm5794, %v5781, %v5494
    %v5799 = vsel %vm5794, %v5782, %v5496
    %v5800 = vsel %vm5794, %v5783, %v5498
    %v5801 = vsel %vm5794, %v5784, %v5500
    %v5802 = vsel %vm5794, %v5785, %v5502
    %v5803 = vsel %vm5794, %v5786, %v5504
    %v5804 = vsel %vm5794, %v5787, %v5506
    %v5805 = vsel %vm5794, %v5788, %v5508
    %v5806 = vsel %vm5794, %v5789, %v5510
    %v5807 = vsel %vm5794, %v5790, %v5512
    %v5808 = vsel %vm5794, %v5791, %v5514
    %v5809 = vsel %vm5794, %v5792, %v5516
    %v5810 = vsel %vm5794, %v5793, %v5518
    %vm5811 = vcmask 982016
    %v5812 = vsel %vm5811, %v5795, %v5536
    %v5813 = vsel %vm5811, %v5796, %v5538
    %v5814 = vsel %vm5811, %v5797, %v5540
    %v5815 = vsel %vm5811, %v5798, %v5542
    %v5816 = vsel %vm5811, %v5799, %v5544
    %v5817 = vsel %vm5811, %v5800, %v5546
    %v5818 = vsel %vm5811, %v5801, %v5548
    %v5819 = vsel %vm5811, %v5802, %v5550
    %v5820 = vsel %vm5811, %v5803, %v5552
    %v5821 = vsel %vm5811, %v5804, %v5554
    %v5822 = vsel %vm5811, %v5805, %v5556
    %v5823 = vsel %vm5811, %v5806, %v5558
    %v5824 = vsel %vm5811, %v5807, %v5560
    %v5825 = vsel %vm5811, %v5808, %v5562
    %v5826 = vsel %vm5811, %v5809, %v5564
    %v5827 = vsel %vm5811, %v5810, %v5566
    %5828 = vst [vmem:[#allocation2] sm:$0xff] %v5812
    %5829 = vst [vmem:[#allocation2 + $0x8] sm:$0xff] %v5813
    %5830 = vst [vmem:[#allocation2 + $0x10] sm:$0xff] %v5814
    %5831 = vst [vmem:[#allocation2 + $0x18] sm:$0xff] %v5815
    %5832 = vst [vmem:[#allocation2 + $0x20] sm:$0xff] %v5816
    %5833 = vst [vmem:[#allocation2 + $0x28] sm:$0xff] %v5817
    %5834 = vst [vmem:[#allocation2 + $0x30] sm:$0xff] %v5818
    %5835 = vst [vmem:[#allocation2 + $0x38] sm:$0xff] %v5819
    %5836 = vst [vmem:[#allocation2 + $0x40] sm:$0xff] %v5820
    %5837 = vst [vmem:[#allocation2 + $0x48] sm:$0xff] %v5821
    %5838 = vst [vmem:[#allocation2 + $0x50] sm:$0xff] %v5822
    %5839 = vst [vmem:[#allocation2 + $0x58] sm:$0xff] %v5823
    %5840 = vst [vmem:[#allocation2 + $0x60] sm:$0xff] %v5824
    %5841 = vst [vmem:[#allocation2 + $0x68] sm:$0xff] %v5825
    %5842 = vst [vmem:[#allocation2 + $0x70] sm:$0xff] %v5826
    %5843 = vst [vmem:[#allocation2 + $0x78] sm:$0xff] %v5827
    %v5844 = vrot.slane %v4479, 1
    %v5845 = vrot.slane %v4480, 1
    %v5846 = vrot.slane %v4481, 1
    %v5847 = vrot.slane %v4482, 1
    %v5848 = vrot.slane %v4483, 1
    %v5849 = vrot.slane %v4484, 1
    %v5850 = vrot.slane %v4485, 1
    %v5851 = vrot.slane %v4486, 1
    %v5852 = vrot.slane %v4487, 1
    %v5853 = vrot.slane %v4488, 1
    %v5854 = vrot.slane %v4489, 1
    %v5855 = vrot.slane %v4490, 1
    %v5856 = vrot.slane %v4491, 1
    %v5857 = vrot.slane %v4492, 1
    %v5858 = vrot.slane %v4493, 1
    %v5859 = vrot.slane %v4494, 1
    %v5876 = vsel %vm109, %v5844, %v4479
    %v5877 = vsel %vm109, %v5845, %v4480
    %v5878 = vsel %vm109, %v5846, %v4481
    %v5879 = vsel %vm109, %v5847, %v4482
    %v5880 = vsel %vm109, %v5848, %v4483
    %v5881 = vsel %vm109, %v5849, %v4484
    %v5882 = vsel %vm109, %v5850, %v4485
    %v5883 = vsel %vm109, %v5851, %v4486
    %v5884 = vsel %vm109, %v5852, %v4487
    %v5885 = vsel %vm109, %v5853, %v4488
    %v5886 = vsel %vm109, %v5854, %v4489
    %v5887 = vsel %vm109, %v5855, %v4490
    %v5888 = vsel %vm109, %v5856, %v4491
    %v5889 = vsel %vm109, %v5857, %v4492
    %v5890 = vsel %vm109, %v5858, %v4493
    %v5891 = vsel %vm109, %v5859, %v4494
    %v5892 = vmul.f32 %v5876, 0.25
    %v5893 = vmul.f32 %v5877, 0.25
    %v5894 = vmul.f32 %v5878, 0.25
    %v5895 = vmul.f32 %v5879, 0.25
    %v5896 = vmul.f32 %v5880, 0.25
    %v5897 = vmul.f32 %v5881, 0.25
    %v5898 = vmul.f32 %v5882, 0.25
    %v5899 = vmul.f32 %v5883, 0.25
    %v5900 = vmul.f32 %v5884, 0.25
    %v5901 = vmul.f32 %v5885, 0.25
    %v5902 = vmul.f32 %v5886, 0.25
    %v5903 = vmul.f32 %v5887, 0.25
    %v5904 = vmul.f32 %v5888, 0.25
    %v5905 = vmul.f32 %v5889, 0.25
    %v5906 = vmul.f32 %v5890, 0.25
    %v5907 = vmul.f32 %v5891, 0.25
    %v5908 = vadd.f32 %v4495, %v5892
    %v5909 = vadd.f32 %v4496, %v5893
    %v5910 = vadd.f32 %v4497, %v5894
    %v5911 = vadd.f32 %v4498, %v5895
    %v5912 = vadd.f32 %v4499, %v5896
    %v5913 = vadd.f32 %v4500, %v5897
    %v5914 = vadd.f32 %v4501, %v5898
    %v5915 = vadd.f32 %v4502, %v5899
    %v5916 = vadd.f32 %v4503, %v5900
    %v5917 = vadd.f32 %v4504, %v5901
    %v5918 = vadd.f32 %v4505, %v5902
    %v5919 = vadd.f32 %v4506, %v5903
    %v5920 = vadd.f32 %v4507, %v5904
    %v5921 = vadd.f32 %v4508, %v5905
    %v5922 = vadd.f32 %v4509, %v5906
    %v5923 = vadd.f32 %v4510, %v5907
    %v5924 = vmul.f32 %v5908, 0.75
    %v5925 = vmul.f32 %v5909, 0.75
    %v5926 = vmul.f32 %v5910, 0.75
    %v5927 = vmul.f32 %v5911, 0.75
    %v5928 = vmul.f32 %v5912, 0.75
    %v5929 = vmul.f32 %v5913, 0.75
    %v5930 = vmul.f32 %v5914, 0.75
    %v5931 = vmul.f32 %v5915, 0.75
    %v5932 = vmul.f32 %v5916, 0.75
    %v5933 = vmul.f32 %v5917, 0.75
    %v5934 = vmul.f32 %v5918, 0.75
    %v5935 = vmul.f32 %v5919, 0.75
    %v5936 = vmul.f32 %v5920, 0.75
    %v5937 = vmul.f32 %v5921, 0.75
    %v5938 = vmul.f32 %v5922, 0.75
    %v5939 = vmul.f32 %v5923, 0.75
    %5956 = vrot.lane.b32.xlu0 %v5908, 8
    %v5957 = vpop.permute.xlu0 %5956
    %5958 = vrot.lane.b32.xlu0 %v5909, 8
    %v5959 = vpop.permute.xlu0 %5958
    %5960 = vrot.lane.b32.xlu0 %v5910, 8
    %v5961 = vpop.permute.xlu0 %5960
    %5962 = vrot.lane.b32.xlu0 %v5911, 8
    %v5963 = vpop.permute.xlu0 %5962
    %5964 = vrot.lane.b32.xlu0 %v5912, 8
    %v5965 = vpop.permute.xlu0 %5964
    %5966 = vrot.lane.b32.xlu0 %v5913, 8
    %v5967 = vpop.permute.xlu0 %5966
    %5968 = vrot.lane.b32.xlu0 %v5914, 8
    %v5969 = vpop.permute.xlu0 %5968
    %5970 = vrot.lane.b32.xlu0 %v5915, 8
    %v5971 = vpop.permute.xlu0 %5970
    %5972 = vrot.lane.b32.xlu0 %v5916, 8
    %v5973 = vpop.permute.xlu0 %5972
    %5974 = vrot.lane.b32.xlu0 %v5917, 8
    %v5975 = vpop.permute.xlu0 %5974
    %5976 = vrot.lane.b32.xlu0 %v5918, 8
    %v5977 = vpop.permute.xlu0 %5976
    %5978 = vrot.lane.b32.xlu0 %v5919, 8
    %v5979 = vpop.permute.xlu0 %5978
    %5980 = vrot.lane.b32.xlu0 %v5920, 8
    %v5981 = vpop.permute.xlu0 %5980
    %5982 = vrot.lane.b32.xlu0 %v5921, 8
    %v5983 = vpop.permute.xlu0 %5982
    %5984 = vrot.lane.b32.xlu0 %v5922, 8
    %v5985 = vpop.permute.xlu0 %5984
    %5986 = vrot.lane.b32.xlu0 %v5923, 8
    %v5987 = vpop.permute.xlu0 %5986
    %v6004 = vsel %vm2054, %v5908, %v5957
    %v6005 = vsel %vm2054, %v5909, %v5959
    %v6006 = vsel %vm2054, %v5910, %v5961
    %v6007 = vsel %vm2054, %v5911, %v5963
    %v6008 = vsel %vm2054, %v5912, %v5965
    %v6009 = vsel %vm2054, %v5913, %v5967
    %v6010 = vsel %vm2054, %v5914, %v5969
    %v6011 = vsel %vm2054, %v5915, %v5971
    %v6012 = vsel %vm2054, %v5916, %v5973
    %v6013 = vsel %vm2054, %v5917, %v5975
    %v6014 = vsel %vm2054, %v5918, %v5977
    %v6015 = vsel %vm2054, %v5919, %v5979
    %v6016 = vsel %vm2054, %v5920, %v5981
    %v6017 = vsel %vm2054, %v5921, %v5983
    %v6018 = vsel %vm2054, %v5922, %v5985
    %v6019 = vsel %vm2054, %v5923, %v5987
    %v6020 = vmul.f32 %v6004, 0.25
    %v6021 = vmul.f32 %v6005, 0.25
    %v6022 = vmul.f32 %v6006, 0.25
    %v6023 = vmul.f32 %v6007, 0.25
    %v6024 = vmul.f32 %v6008, 0.25
    %v6025 = vmul.f32 %v6009, 0.25
    %v6026 = vmul.f32 %v6010, 0.25
    %v6027 = vmul.f32 %v6011, 0.25
    %v6028 = vmul.f32 %v6012, 0.25
    %v6029 = vmul.f32 %v6013, 0.25
    %v6030 = vmul.f32 %v6014, 0.25
    %v6031 = vmul.f32 %v6015, 0.25
    %v6032 = vmul.f32 %v6016, 0.25
    %v6033 = vmul.f32 %v6017, 0.25
    %v6034 = vmul.f32 %v6018, 0.25
    %v6035 = vmul.f32 %v6019, 0.25
    %v6036 = vadd.f32 %v5924, %v6020
    %v6037 = vadd.f32 %v5925, %v6021
    %v6038 = vadd.f32 %v5926, %v6022
    %v6039 = vadd.f32 %v5927, %v6023
    %v6040 = vadd.f32 %v5928, %v6024
    %v6041 = vadd.f32 %v5929, %v6025
    %v6042 = vadd.f32 %v5930, %v6026
    %v6043 = vadd.f32 %v5931, %v6027
    %v6044 = vadd.f32 %v5932, %v6028
    %v6045 = vadd.f32 %v5933, %v6029
    %v6046 = vadd.f32 %v5934, %v6030
    %v6047 = vadd.f32 %v5935, %v6031
    %v6048 = vadd.f32 %v5936, %v6032
    %v6049 = vadd.f32 %v5937, %v6033
    %v6050 = vadd.f32 %v5938, %v6034
    %v6051 = vadd.f32 %v5939, %v6035
    %6052 = vrot.lane.b32.xlu0 %v5908, 120
    %v6053 = vpop.permute.xlu0 %6052
    %6054 = vrot.lane.b32.xlu0 %v5909, 120
    %v6055 = vpop.permute.xlu0 %6054
    %6056 = vrot.lane.b32.xlu0 %v5910, 120
    %v6057 = vpop.permute.xlu0 %6056
    %6058 = vrot.lane.b32.xlu0 %v5911, 120
    %v6059 = vpop.permute.xlu0 %6058
    %6060 = vrot.lane.b32.xlu0 %v5912, 120
    %v6061 = vpop.permute.xlu0 %6060
    %6062 = vrot.lane.b32.xlu0 %v5913, 120
    %v6063 = vpop.permute.xlu0 %6062
    %6064 = vrot.lane.b32.xlu0 %v5914, 120
    %v6065 = vpop.permute.xlu0 %6064
    %6066 = vrot.lane.b32.xlu0 %v5915, 120
    %v6067 = vpop.permute.xlu0 %6066
    %6068 = vrot.lane.b32.xlu0 %v5916, 120
    %v6069 = vpop.permute.xlu0 %6068
    %6070 = vrot.lane.b32.xlu0 %v5917, 120
    %v6071 = vpop.permute.xlu0 %6070
    %6072 = vrot.lane.b32.xlu0 %v5918, 120
    %v6073 = vpop.permute.xlu0 %6072
    %6074 = vrot.lane.b32.xlu0 %v5919, 120
    %v6075 = vpop.permute.xlu0 %6074
    %6076 = vrot.lane.b32.xlu0 %v5920, 120
    %v6077 = vpop.permute.xlu0 %6076
    %6078 = vrot.lane.b32.xlu0 %v5921, 120
    %v6079 = vpop.permute.xlu0 %6078
    %6080 = vrot.lane.b32.xlu0 %v5922, 120
    %v6081 = vpop.permute.xlu0 %6080
    %6082 = vrot.lane.b32.xlu0 %v5923, 120
    %v6083 = vpop.permute.xlu0 %6082
    %v6100 = vsel %vm2066, %v6053, %v5908
    %v6101 = vsel %vm2066, %v6055, %v5909
    %v6102 = vsel %vm2066, %v6057, %v5910
    %v6103 = vsel %vm2066, %v6059, %v5911
    %v6104 = vsel %vm2066, %v6061, %v5912
    %v6105 = vsel %vm2066, %v6063, %v5913
    %v6106 = vsel %vm2066, %v6065, %v5914
    %v6107 = vsel %vm2066, %v6067, %v5915
    %v6108 = vsel %vm2066, %v6069, %v5916
    %v6109 = vsel %vm2066, %v6071, %v5917
    %v6110 = vsel %vm2066, %v6073, %v5918
    %v6111 = vsel %vm2066, %v6075, %v5919
    %v6112 = vsel %vm2066, %v6077, %v5920
    %v6113 = vsel %vm2066, %v6079, %v5921
    %v6114 = vsel %vm2066, %v6081, %v5922
    %v6115 = vsel %vm2066, %v6083, %v5923
    %v6116 = vmul.f32 %v6100, 0.25
    %v6117 = vmul.f32 %v6101, 0.25
    %v6118 = vmul.f32 %v6102, 0.25
    %v6119 = vmul.f32 %v6103, 0.25
    %v6120 = vmul.f32 %v6104, 0.25
    %v6121 = vmul.f32 %v6105, 0.25
    %v6122 = vmul.f32 %v6106, 0.25
    %v6123 = vmul.f32 %v6107, 0.25
    %v6124 = vmul.f32 %v6108, 0.25
    %v6125 = vmul.f32 %v6109, 0.25
    %v6126 = vmul.f32 %v6110, 0.25
    %v6127 = vmul.f32 %v6111, 0.25
    %v6128 = vmul.f32 %v6112, 0.25
    %v6129 = vmul.f32 %v6113, 0.25
    %v6130 = vmul.f32 %v6114, 0.25
    %v6131 = vmul.f32 %v6115, 0.25
    %v6132 = vadd.f32 %v5924, %v6116
    %v6133 = vadd.f32 %v5925, %v6117
    %v6134 = vadd.f32 %v5926, %v6118
    %v6135 = vadd.f32 %v5927, %v6119
    %v6136 = vadd.f32 %v5928, %v6120
    %v6137 = vadd.f32 %v5929, %v6121
    %v6138 = vadd.f32 %v5930, %v6122
    %v6139 = vadd.f32 %v5931, %v6123
    %v6140 = vadd.f32 %v5932, %v6124
    %v6141 = vadd.f32 %v5933, %v6125
    %v6142 = vadd.f32 %v5934, %v6126
    %v6143 = vadd.f32 %v5935, %v6127
    %v6144 = vadd.f32 %v5936, %v6128
    %v6145 = vadd.f32 %v5937, %v6129
    %v6146 = vadd.f32 %v5938, %v6130
    %v6147 = vadd.f32 %v5939, %v6131
    %6164 = vrot.lane.b32.xlu0 %v6132, 8
    %v6165 = vpop.permute.xlu0 %6164
    %6166 = vrot.lane.b32.xlu0 %v6133, 8
    %v6167 = vpop.permute.xlu0 %6166
    %6168 = vrot.lane.b32.xlu0 %v6134, 8
    %v6169 = vpop.permute.xlu0 %6168
    %6170 = vrot.lane.b32.xlu0 %v6135, 8
    %v6171 = vpop.permute.xlu0 %6170
    %6172 = vrot.lane.b32.xlu0 %v6136, 8
    %v6173 = vpop.permute.xlu0 %6172
    %6174 = vrot.lane.b32.xlu0 %v6137, 8
    %v6175 = vpop.permute.xlu0 %6174
    %6176 = vrot.lane.b32.xlu0 %v6138, 8
    %v6177 = vpop.permute.xlu0 %6176
    %6178 = vrot.lane.b32.xlu0 %v6139, 8
    %v6179 = vpop.permute.xlu0 %6178
    %6180 = vrot.lane.b32.xlu0 %v6140, 8
    %v6181 = vpop.permute.xlu0 %6180
    %6182 = vrot.lane.b32.xlu0 %v6141, 8
    %v6183 = vpop.permute.xlu0 %6182
    %6184 = vrot.lane.b32.xlu0 %v6142, 8
    %v6185 = vpop.permute.xlu0 %6184
    %6186 = vrot.lane.b32.xlu0 %v6143, 8
    %v6187 = vpop.permute.xlu0 %6186
    %6188 = vrot.lane.b32.xlu0 %v6144, 8
    %v6189 = vpop.permute.xlu0 %6188
    %6190 = vrot.lane.b32.xlu0 %v6145, 8
    %v6191 = vpop.permute.xlu0 %6190
    %6192 = vrot.lane.b32.xlu0 %v6146, 8
    %v6193 = vpop.permute.xlu0 %6192
    %6194 = vrot.lane.b32.xlu0 %v6147, 8
    %v6195 = vpop.permute.xlu0 %6194
    %6228 = vrot.lane.b32.xlu0 %v6036, 8
    %v6229 = vpop.permute.xlu0 %6228
    %6230 = vrot.lane.b32.xlu0 %v6037, 8
    %v6231 = vpop.permute.xlu0 %6230
    %6232 = vrot.lane.b32.xlu0 %v6038, 8
    %v6233 = vpop.permute.xlu0 %6232
    %6234 = vrot.lane.b32.xlu0 %v6039, 8
    %v6235 = vpop.permute.xlu0 %6234
    %6236 = vrot.lane.b32.xlu0 %v6040, 8
    %v6237 = vpop.permute.xlu0 %6236
    %6238 = vrot.lane.b32.xlu0 %v6041, 8
    %v6239 = vpop.permute.xlu0 %6238
    %6240 = vrot.lane.b32.xlu0 %v6042, 8
    %v6241 = vpop.permute.xlu0 %6240
    %6242 = vrot.lane.b32.xlu0 %v6043, 8
    %v6243 = vpop.permute.xlu0 %6242
    %6244 = vrot.lane.b32.xlu0 %v6044, 8
    %v6245 = vpop.permute.xlu0 %6244
    %6246 = vrot.lane.b32.xlu0 %v6045, 8
    %v6247 = vpop.permute.xlu0 %6246
    %6248 = vrot.lane.b32.xlu0 %v6046, 8
    %v6249 = vpop.permute.xlu0 %6248
    %6250 = vrot.lane.b32.xlu0 %v6047, 8
    %v6251 = vpop.permute.xlu0 %6250
    %6252 = vrot.lane.b32.xlu0 %v6048, 8
    %v6253 = vpop.permute.xlu0 %6252
    %6254 = vrot.lane.b32.xlu0 %v6049, 8
    %v6255 = vpop.permute.xlu0 %6254
    %6256 = vrot.lane.b32.xlu0 %v6050, 8
    %v6257 = vpop.permute.xlu0 %6256
    %6258 = vrot.lane.b32.xlu0 %v6051, 8
    %v6259 = vpop.permute.xlu0 %6258
    %6276 = vrot.lane.b32.xlu0 %v6132, 16
    %v6277 = vpop.permute.xlu0 %6276
    %6278 = vrot.lane.b32.xlu0 %v6133, 16
    %v6279 = vpop.permute.xlu0 %6278
    %6280 = vrot.lane.b32.xlu0 %v6134, 16
    %v6281 = vpop.permute.xlu0 %6280
    %6282 = vrot.lane.b32.xlu0 %v6135, 16
    %v6283 = vpop.permute.xlu0 %6282
    %6284 = vrot.lane.b32.xlu0 %v6136, 16
    %v6285 = vpop.permute.xlu0 %6284
    %6286 = vrot.lane.b32.xlu0 %v6137, 16
    %v6287 = vpop.permute.xlu0 %6286
    %6288 = vrot.lane.b32.xlu0 %v6138, 16
    %v6289 = vpop.permute.xlu0 %6288
    %6290 = vrot.lane.b32.xlu0 %v6139, 16
    %v6291 = vpop.permute.xlu0 %6290
    %6292 = vrot.lane.b32.xlu0 %v6140, 16
    %v6293 = vpop.permute.xlu0 %6292
    %6294 = vrot.lane.b32.xlu0 %v6141, 16
    %v6295 = vpop.permute.xlu0 %6294
    %6296 = vrot.lane.b32.xlu0 %v6142, 16
    %v6297 = vpop.permute.xlu0 %6296
    %6298 = vrot.lane.b32.xlu0 %v6143, 16
    %v6299 = vpop.permute.xlu0 %6298
    %6300 = vrot.lane.b32.xlu0 %v6144, 16
    %v6301 = vpop.permute.xlu0 %6300
    %6302 = vrot.lane.b32.xlu0 %v6145, 16
    %v6303 = vpop.permute.xlu0 %6302
    %6304 = vrot.lane.b32.xlu0 %v6146, 16
    %v6305 = vpop.permute.xlu0 %6304
    %6306 = vrot.lane.b32.xlu0 %v6147, 16
    %v6307 = vpop.permute.xlu0 %6306
    %6324 = vrot.lane.b32.xlu0 %v6036, 16
    %v6325 = vpop.permute.xlu0 %6324
    %6326 = vrot.lane.b32.xlu0 %v6037, 16
    %v6327 = vpop.permute.xlu0 %6326
    %6328 = vrot.lane.b32.xlu0 %v6038, 16
    %v6329 = vpop.permute.xlu0 %6328
    %6330 = vrot.lane.b32.xlu0 %v6039, 16
    %v6331 = vpop.permute.xlu0 %6330
    %6332 = vrot.lane.b32.xlu0 %v6040, 16
    %v6333 = vpop.permute.xlu0 %6332
    %6334 = vrot.lane.b32.xlu0 %v6041, 16
    %v6335 = vpop.permute.xlu0 %6334
    %6336 = vrot.lane.b32.xlu0 %v6042, 16
    %v6337 = vpop.permute.xlu0 %6336
    %6338 = vrot.lane.b32.xlu0 %v6043, 16
    %v6339 = vpop.permute.xlu0 %6338
    %6340 = vrot.lane.b32.xlu0 %v6044, 16
    %v6341 = vpop.permute.xlu0 %6340
    %6342 = vrot.lane.b32.xlu0 %v6045, 16
    %v6343 = vpop.permute.xlu0 %6342
    %6344 = vrot.lane.b32.xlu0 %v6046, 16
    %v6345 = vpop.permute.xlu0 %6344
    %6346 = vrot.lane.b32.xlu0 %v6047, 16
    %v6347 = vpop.permute.xlu0 %6346
    %6348 = vrot.lane.b32.xlu0 %v6048, 16
    %v6349 = vpop.permute.xlu0 %6348
    %6350 = vrot.lane.b32.xlu0 %v6049, 16
    %v6351 = vpop.permute.xlu0 %6350
    %6352 = vrot.lane.b32.xlu0 %v6050, 16
    %v6353 = vpop.permute.xlu0 %6352
    %6354 = vrot.lane.b32.xlu0 %v6051, 16
    %v6355 = vpop.permute.xlu0 %6354
    %6372 = vrot.lane.b32.xlu0 %v6132, 24
    %v6373 = vpop.permute.xlu0 %6372
    %6374 = vrot.lane.b32.xlu0 %v6133, 24
    %v6375 = vpop.permute.xlu0 %6374
    %6376 = vrot.lane.b32.xlu0 %v6134, 24
    %v6377 = vpop.permute.xlu0 %6376
    %6378 = vrot.lane.b32.xlu0 %v6135, 24
    %v6379 = vpop.permute.xlu0 %6378
    %6380 = vrot.lane.b32.xlu0 %v6136, 24
    %v6381 = vpop.permute.xlu0 %6380
    %6382 = vrot.lane.b32.xlu0 %v6137, 24
    %v6383 = vpop.permute.xlu0 %6382
    %6384 = vrot.lane.b32.xlu0 %v6138, 24
    %v6385 = vpop.permute.xlu0 %6384
    %6386 = vrot.lane.b32.xlu0 %v6139, 24
    %v6387 = vpop.permute.xlu0 %6386
    %6388 = vrot.lane.b32.xlu0 %v6140, 24
    %v6389 = vpop.permute.xlu0 %6388
    %6390 = vrot.lane.b32.xlu0 %v6141, 24
    %v6391 = vpop.permute.xlu0 %6390
    %6392 = vrot.lane.b32.xlu0 %v6142, 24
    %v6393 = vpop.permute.xlu0 %6392
    %6394 = vrot.lane.b32.xlu0 %v6143, 24
    %v6395 = vpop.permute.xlu0 %6394
    %6396 = vrot.lane.b32.xlu0 %v6144, 24
    %v6397 = vpop.permute.xlu0 %6396
    %6398 = vrot.lane.b32.xlu0 %v6145, 24
    %v6399 = vpop.permute.xlu0 %6398
    %6400 = vrot.lane.b32.xlu0 %v6146, 24
    %v6401 = vpop.permute.xlu0 %6400
    %6402 = vrot.lane.b32.xlu0 %v6147, 24
    %v6403 = vpop.permute.xlu0 %6402
    %6420 = vrot.lane.b32.xlu0 %v6036, 24
    %v6421 = vpop.permute.xlu0 %6420
    %6422 = vrot.lane.b32.xlu0 %v6037, 24
    %v6423 = vpop.permute.xlu0 %6422
    %6424 = vrot.lane.b32.xlu0 %v6038, 24
    %v6425 = vpop.permute.xlu0 %6424
    %6426 = vrot.lane.b32.xlu0 %v6039, 24
    %v6427 = vpop.permute.xlu0 %6426
    %6428 = vrot.lane.b32.xlu0 %v6040, 24
    %v6429 = vpop.permute.xlu0 %6428
    %6430 = vrot.lane.b32.xlu0 %v6041, 24
    %v6431 = vpop.permute.xlu0 %6430
    %6432 = vrot.lane.b32.xlu0 %v6042, 24
    %v6433 = vpop.permute.xlu0 %6432
    %6434 = vrot.lane.b32.xlu0 %v6043, 24
    %v6435 = vpop.permute.xlu0 %6434
    %6436 = vrot.lane.b32.xlu0 %v6044, 24
    %v6437 = vpop.permute.xlu0 %6436
    %6438 = vrot.lane.b32.xlu0 %v6045, 24
    %v6439 = vpop.permute.xlu0 %6438
    %6440 = vrot.lane.b32.xlu0 %v6046, 24
    %v6441 = vpop.permute.xlu0 %6440
    %6442 = vrot.lane.b32.xlu0 %v6047, 24
    %v6443 = vpop.permute.xlu0 %6442
    %6444 = vrot.lane.b32.xlu0 %v6048, 24
    %v6445 = vpop.permute.xlu0 %6444
    %6446 = vrot.lane.b32.xlu0 %v6049, 24
    %v6447 = vpop.permute.xlu0 %6446
    %6448 = vrot.lane.b32.xlu0 %v6050, 24
    %v6449 = vpop.permute.xlu0 %6448
    %6450 = vrot.lane.b32.xlu0 %v6051, 24
    %v6451 = vpop.permute.xlu0 %6450
    %6468 = vrot.lane.b32.xlu0 %v6132, 32
    %v6469 = vpop.permute.xlu0 %6468
    %6470 = vrot.lane.b32.xlu0 %v6133, 32
    %v6471 = vpop.permute.xlu0 %6470
    %6472 = vrot.lane.b32.xlu0 %v6134, 32
    %v6473 = vpop.permute.xlu0 %6472
    %6474 = vrot.lane.b32.xlu0 %v6135, 32
    %v6475 = vpop.permute.xlu0 %6474
    %6476 = vrot.lane.b32.xlu0 %v6136, 32
    %v6477 = vpop.permute.xlu0 %6476
    %6478 = vrot.lane.b32.xlu0 %v6137, 32
    %v6479 = vpop.permute.xlu0 %6478
    %6480 = vrot.lane.b32.xlu0 %v6138, 32
    %v6481 = vpop.permute.xlu0 %6480
    %6482 = vrot.lane.b32.xlu0 %v6139, 32
    %v6483 = vpop.permute.xlu0 %6482
    %6484 = vrot.lane.b32.xlu0 %v6140, 32
    %v6485 = vpop.permute.xlu0 %6484
    %6486 = vrot.lane.b32.xlu0 %v6141, 32
    %v6487 = vpop.permute.xlu0 %6486
    %6488 = vrot.lane.b32.xlu0 %v6142, 32
    %v6489 = vpop.permute.xlu0 %6488
    %6490 = vrot.lane.b32.xlu0 %v6143, 32
    %v6491 = vpop.permute.xlu0 %6490
    %6492 = vrot.lane.b32.xlu0 %v6144, 32
    %v6493 = vpop.permute.xlu0 %6492
    %6494 = vrot.lane.b32.xlu0 %v6145, 32
    %v6495 = vpop.permute.xlu0 %6494
    %6496 = vrot.lane.b32.xlu0 %v6146, 32
    %v6497 = vpop.permute.xlu0 %6496
    %6498 = vrot.lane.b32.xlu0 %v6147, 32
    %v6499 = vpop.permute.xlu0 %6498
    %6516 = vrot.lane.b32.xlu0 %v6036, 32
    %v6517 = vpop.permute.xlu0 %6516
    %6518 = vrot.lane.b32.xlu0 %v6037, 32
    %v6519 = vpop.permute.xlu0 %6518
    %6520 = vrot.lane.b32.xlu0 %v6038, 32
    %v6521 = vpop.permute.xlu0 %6520
    %6522 = vrot.lane.b32.xlu0 %v6039, 32
    %v6523 = vpop.permute.xlu0 %6522
    %6524 = vrot.lane.b32.xlu0 %v6040, 32
    %v6525 = vpop.permute.xlu0 %6524
    %6526 = vrot.lane.b32.xlu0 %v6041, 32
    %v6527 = vpop.permute.xlu0 %6526
    %6528 = vrot.lane.b32.xlu0 %v6042, 32
    %v6529 = vpop.permute.xlu0 %6528
    %6530 = vrot.lane.b32.xlu0 %v6043, 32
    %v6531 = vpop.permute.xlu0 %6530
    %6532 = vrot.lane.b32.xlu0 %v6044, 32
    %v6533 = vpop.permute.xlu0 %6532
    %6534 = vrot.lane.b32.xlu0 %v6045, 32
    %v6535 = vpop.permute.xlu0 %6534
    %6536 = vrot.lane.b32.xlu0 %v6046, 32
    %v6537 = vpop.permute.xlu0 %6536
    %6538 = vrot.lane.b32.xlu0 %v6047, 32
    %v6539 = vpop.permute.xlu0 %6538
    %6540 = vrot.lane.b32.xlu0 %v6048, 32
    %v6541 = vpop.permute.xlu0 %6540
    %6542 = vrot.lane.b32.xlu0 %v6049, 32
    %v6543 = vpop.permute.xlu0 %6542
    %6544 = vrot.lane.b32.xlu0 %v6050, 32
    %v6545 = vpop.permute.xlu0 %6544
    %6546 = vrot.lane.b32.xlu0 %v6051, 32
    %v6547 = vpop.permute.xlu0 %6546
    %6564 = vrot.lane.b32.xlu0 %v6132, 40
    %v6565 = vpop.permute.xlu0 %6564
    %6566 = vrot.lane.b32.xlu0 %v6133, 40
    %v6567 = vpop.permute.xlu0 %6566
    %6568 = vrot.lane.b32.xlu0 %v6134, 40
    %v6569 = vpop.permute.xlu0 %6568
    %6570 = vrot.lane.b32.xlu0 %v6135, 40
    %v6571 = vpop.permute.xlu0 %6570
    %6572 = vrot.lane.b32.xlu0 %v6136, 40
    %v6573 = vpop.permute.xlu0 %6572
    %6574 = vrot.lane.b32.xlu0 %v6137, 40
    %v6575 = vpop.permute.xlu0 %6574
    %6576 = vrot.lane.b32.xlu0 %v6138, 40
    %v6577 = vpop.permute.xlu0 %6576
    %6578 = vrot.lane.b32.xlu0 %v6139, 40
    %v6579 = vpop.permute.xlu0 %6578
    %6580 = vrot.lane.b32.xlu0 %v6140, 40
    %v6581 = vpop.permute.xlu0 %6580
    %6582 = vrot.lane.b32.xlu0 %v6141, 40
    %v6583 = vpop.permute.xlu0 %6582
    %6584 = vrot.lane.b32.xlu0 %v6142, 40
    %v6585 = vpop.permute.xlu0 %6584
    %6586 = vrot.lane.b32.xlu0 %v6143, 40
    %v6587 = vpop.permute.xlu0 %6586
    %6588 = vrot.lane.b32.xlu0 %v6144, 40
    %v6589 = vpop.permute.xlu0 %6588
    %6590 = vrot.lane.b32.xlu0 %v6145, 40
    %v6591 = vpop.permute.xlu0 %6590
    %6592 = vrot.lane.b32.xlu0 %v6146, 40
    %v6593 = vpop.permute.xlu0 %6592
    %6594 = vrot.lane.b32.xlu0 %v6147, 40
    %v6595 = vpop.permute.xlu0 %6594
    %6612 = vrot.lane.b32.xlu0 %v6036, 40
    %v6613 = vpop.permute.xlu0 %6612
    %6614 = vrot.lane.b32.xlu0 %v6037, 40
    %v6615 = vpop.permute.xlu0 %6614
    %6616 = vrot.lane.b32.xlu0 %v6038, 40
    %v6617 = vpop.permute.xlu0 %6616
    %6618 = vrot.lane.b32.xlu0 %v6039, 40
    %v6619 = vpop.permute.xlu0 %6618
    %6620 = vrot.lane.b32.xlu0 %v6040, 40
    %v6621 = vpop.permute.xlu0 %6620
    %6622 = vrot.lane.b32.xlu0 %v6041, 40
    %v6623 = vpop.permute.xlu0 %6622
    %6624 = vrot.lane.b32.xlu0 %v6042, 40
    %v6625 = vpop.permute.xlu0 %6624
    %6626 = vrot.lane.b32.xlu0 %v6043, 40
    %v6627 = vpop.permute.xlu0 %6626
    %6628 = vrot.lane.b32.xlu0 %v6044, 40
    %v6629 = vpop.permute.xlu0 %6628
    %6630 = vrot.lane.b32.xlu0 %v6045, 40
    %v6631 = vpop.permute.xlu0 %6630
    %6632 = vrot.lane.b32.xlu0 %v6046, 40
    %v6633 = vpop.permute.xlu0 %6632
    %6634 = vrot.lane.b32.xlu0 %v6047, 40
    %v6635 = vpop.permute.xlu0 %6634
    %6636 = vrot.lane.b32.xlu0 %v6048, 40
    %v6637 = vpop.permute.xlu0 %6636
    %6638 = vrot.lane.b32.xlu0 %v6049, 40
    %v6639 = vpop.permute.xlu0 %6638
    %6640 = vrot.lane.b32.xlu0 %v6050, 40
    %v6641 = vpop.permute.xlu0 %6640
    %6642 = vrot.lane.b32.xlu0 %v6051, 40
    %v6643 = vpop.permute.xlu0 %6642
    %6660 = vrot.lane.b32.xlu0 %v6132, 48
    %v6661 = vpop.permute.xlu0 %6660
    %6662 = vrot.lane.b32.xlu0 %v6133, 48
    %v6663 = vpop.permute.xlu0 %6662
    %6664 = vrot.lane.b32.xlu0 %v6134, 48
    %v6665 = vpop.permute.xlu0 %6664
    %6666 = vrot.lane.b32.xlu0 %v6135, 48
    %v6667 = vpop.permute.xlu0 %6666
    %6668 = vrot.lane.b32.xlu0 %v6136, 48
    %v6669 = vpop.permute.xlu0 %6668
    %6670 = vrot.lane.b32.xlu0 %v6137, 48
    %v6671 = vpop.permute.xlu0 %6670
    %6672 = vrot.lane.b32.xlu0 %v6138, 48
    %v6673 = vpop.permute.xlu0 %6672
    %6674 = vrot.lane.b32.xlu0 %v6139, 48
    %v6675 = vpop.permute.xlu0 %6674
    %6676 = vrot.lane.b32.xlu0 %v6140, 48
    %v6677 = vpop.permute.xlu0 %6676
    %6678 = vrot.lane.b32.xlu0 %v6141, 48
    %v6679 = vpop.permute.xlu0 %6678
    %6680 = vrot.lane.b32.xlu0 %v6142, 48
    %v6681 = vpop.permute.xlu0 %6680
    %6682 = vrot.lane.b32.xlu0 %v6143, 48
    %v6683 = vpop.permute.xlu0 %6682
    %6684 = vrot.lane.b32.xlu0 %v6144, 48
    %v6685 = vpop.permute.xlu0 %6684
    %6686 = vrot.lane.b32.xlu0 %v6145, 48
    %v6687 = vpop.permute.xlu0 %6686
    %6688 = vrot.lane.b32.xlu0 %v6146, 48
    %v6689 = vpop.permute.xlu0 %6688
    %6690 = vrot.lane.b32.xlu0 %v6147, 48
    %v6691 = vpop.permute.xlu0 %6690
    %6708 = vrot.lane.b32.xlu0 %v6036, 48
    %v6709 = vpop.permute.xlu0 %6708
    %6710 = vrot.lane.b32.xlu0 %v6037, 48
    %v6711 = vpop.permute.xlu0 %6710
    %6712 = vrot.lane.b32.xlu0 %v6038, 48
    %v6713 = vpop.permute.xlu0 %6712
    %6714 = vrot.lane.b32.xlu0 %v6039, 48
    %v6715 = vpop.permute.xlu0 %6714
    %6716 = vrot.lane.b32.xlu0 %v6040, 48
    %v6717 = vpop.permute.xlu0 %6716
    %6718 = vrot.lane.b32.xlu0 %v6041, 48
    %v6719 = vpop.permute.xlu0 %6718
    %6720 = vrot.lane.b32.xlu0 %v6042, 48
    %v6721 = vpop.permute.xlu0 %6720
    %6722 = vrot.lane.b32.xlu0 %v6043, 48
    %v6723 = vpop.permute.xlu0 %6722
    %6724 = vrot.lane.b32.xlu0 %v6044, 48
    %v6725 = vpop.permute.xlu0 %6724
    %6726 = vrot.lane.b32.xlu0 %v6045, 48
    %v6727 = vpop.permute.xlu0 %6726
    %6728 = vrot.lane.b32.xlu0 %v6046, 48
    %v6729 = vpop.permute.xlu0 %6728
    %6730 = vrot.lane.b32.xlu0 %v6047, 48
    %v6731 = vpop.permute.xlu0 %6730
    %6732 = vrot.lane.b32.xlu0 %v6048, 48
    %v6733 = vpop.permute.xlu0 %6732
    %6734 = vrot.lane.b32.xlu0 %v6049, 48
    %v6735 = vpop.permute.xlu0 %6734
    %6736 = vrot.lane.b32.xlu0 %v6050, 48
    %v6737 = vpop.permute.xlu0 %6736
    %6738 = vrot.lane.b32.xlu0 %v6051, 48
    %v6739 = vpop.permute.xlu0 %6738
    %6756 = vrot.lane.b32.xlu0 %v6132, 56
    %v6757 = vpop.permute.xlu0 %6756
    %6758 = vrot.lane.b32.xlu0 %v6133, 56
    %v6759 = vpop.permute.xlu0 %6758
    %6760 = vrot.lane.b32.xlu0 %v6134, 56
    %v6761 = vpop.permute.xlu0 %6760
    %6762 = vrot.lane.b32.xlu0 %v6135, 56
    %v6763 = vpop.permute.xlu0 %6762
    %6764 = vrot.lane.b32.xlu0 %v6136, 56
    %v6765 = vpop.permute.xlu0 %6764
    %6766 = vrot.lane.b32.xlu0 %v6137, 56
    %v6767 = vpop.permute.xlu0 %6766
    %6768 = vrot.lane.b32.xlu0 %v6138, 56
    %v6769 = vpop.permute.xlu0 %6768
    %6770 = vrot.lane.b32.xlu0 %v6139, 56
    %v6771 = vpop.permute.xlu0 %6770
    %6772 = vrot.lane.b32.xlu0 %v6140, 56
    %v6773 = vpop.permute.xlu0 %6772
    %6774 = vrot.lane.b32.xlu0 %v6141, 56
    %v6775 = vpop.permute.xlu0 %6774
    %6776 = vrot.lane.b32.xlu0 %v6142, 56
    %v6777 = vpop.permute.xlu0 %6776
    %6778 = vrot.lane.b32.xlu0 %v6143, 56
    %v6779 = vpop.permute.xlu0 %6778
    %6780 = vrot.lane.b32.xlu0 %v6144, 56
    %v6781 = vpop.permute.xlu0 %6780
    %6782 = vrot.lane.b32.xlu0 %v6145, 56
    %v6783 = vpop.permute.xlu0 %6782
    %6784 = vrot.lane.b32.xlu0 %v6146, 56
    %v6785 = vpop.permute.xlu0 %6784
    %6786 = vrot.lane.b32.xlu0 %v6147, 56
    %v6787 = vpop.permute.xlu0 %6786
    %6804 = vrot.lane.b32.xlu0 %v6036, 56
    %v6805 = vpop.permute.xlu0 %6804
    %6806 = vrot.lane.b32.xlu0 %v6037, 56
    %v6807 = vpop.permute.xlu0 %6806
    %6808 = vrot.lane.b32.xlu0 %v6038, 56
    %v6809 = vpop.permute.xlu0 %6808
    %6810 = vrot.lane.b32.xlu0 %v6039, 56
    %v6811 = vpop.permute.xlu0 %6810
    %6812 = vrot.lane.b32.xlu0 %v6040, 56
    %v6813 = vpop.permute.xlu0 %6812
    %6814 = vrot.lane.b32.xlu0 %v6041, 56
    %v6815 = vpop.permute.xlu0 %6814
    %6816 = vrot.lane.b32.xlu0 %v6042, 56
    %v6817 = vpop.permute.xlu0 %6816
    %6818 = vrot.lane.b32.xlu0 %v6043, 56
    %v6819 = vpop.permute.xlu0 %6818
    %6820 = vrot.lane.b32.xlu0 %v6044, 56
    %v6821 = vpop.permute.xlu0 %6820
    %6822 = vrot.lane.b32.xlu0 %v6045, 56
    %v6823 = vpop.permute.xlu0 %6822
    %6824 = vrot.lane.b32.xlu0 %v6046, 56
    %v6825 = vpop.permute.xlu0 %6824
    %6826 = vrot.lane.b32.xlu0 %v6047, 56
    %v6827 = vpop.permute.xlu0 %6826
    %6828 = vrot.lane.b32.xlu0 %v6048, 56
    %v6829 = vpop.permute.xlu0 %6828
    %6830 = vrot.lane.b32.xlu0 %v6049, 56
    %v6831 = vpop.permute.xlu0 %6830
    %6832 = vrot.lane.b32.xlu0 %v6050, 56
    %v6833 = vpop.permute.xlu0 %6832
    %6834 = vrot.lane.b32.xlu0 %v6051, 56
    %v6835 = vpop.permute.xlu0 %6834
    %6852 = vrot.lane.b32.xlu0 %v6132, 64
    %v6853 = vpop.permute.xlu0 %6852
    %6854 = vrot.lane.b32.xlu0 %v6133, 64
    %v6855 = vpop.permute.xlu0 %6854
    %6856 = vrot.lane.b32.xlu0 %v6134, 64
    %v6857 = vpop.permute.xlu0 %6856
    %6858 = vrot.lane.b32.xlu0 %v6135, 64
    %v6859 = vpop.permute.xlu0 %6858
    %6860 = vrot.lane.b32.xlu0 %v6136, 64
    %v6861 = vpop.permute.xlu0 %6860
    %6862 = vrot.lane.b32.xlu0 %v6137, 64
    %v6863 = vpop.permute.xlu0 %6862
    %6864 = vrot.lane.b32.xlu0 %v6138, 64
    %v6865 = vpop.permute.xlu0 %6864
    %6866 = vrot.lane.b32.xlu0 %v6139, 64
    %v6867 = vpop.permute.xlu0 %6866
    %6868 = vrot.lane.b32.xlu0 %v6140, 64
    %v6869 = vpop.permute.xlu0 %6868
    %6870 = vrot.lane.b32.xlu0 %v6141, 64
    %v6871 = vpop.permute.xlu0 %6870
    %6872 = vrot.lane.b32.xlu0 %v6142, 64
    %v6873 = vpop.permute.xlu0 %6872
    %6874 = vrot.lane.b32.xlu0 %v6143, 64
    %v6875 = vpop.permute.xlu0 %6874
    %6876 = vrot.lane.b32.xlu0 %v6144, 64
    %v6877 = vpop.permute.xlu0 %6876
    %6878 = vrot.lane.b32.xlu0 %v6145, 64
    %v6879 = vpop.permute.xlu0 %6878
    %6880 = vrot.lane.b32.xlu0 %v6146, 64
    %v6881 = vpop.permute.xlu0 %6880
    %6882 = vrot.lane.b32.xlu0 %v6147, 64
    %v6883 = vpop.permute.xlu0 %6882
    %v6900 = vsel %vm2054, %v6036, %v6165
    %v6901 = vsel %vm2054, %v6037, %v6167
    %v6902 = vsel %vm2054, %v6038, %v6169
    %v6903 = vsel %vm2054, %v6039, %v6171
    %v6904 = vsel %vm2054, %v6040, %v6173
    %v6905 = vsel %vm2054, %v6041, %v6175
    %v6906 = vsel %vm2054, %v6042, %v6177
    %v6907 = vsel %vm2054, %v6043, %v6179
    %v6908 = vsel %vm2054, %v6044, %v6181
    %v6909 = vsel %vm2054, %v6045, %v6183
    %v6910 = vsel %vm2054, %v6046, %v6185
    %v6911 = vsel %vm2054, %v6047, %v6187
    %v6912 = vsel %vm2054, %v6048, %v6189
    %v6913 = vsel %vm2054, %v6049, %v6191
    %v6914 = vsel %vm2054, %v6050, %v6193
    %v6915 = vsel %vm2054, %v6051, %v6195
    %v6916 = vsel %vm2056, %v6900, %v6229
    %v6917 = vsel %vm2056, %v6901, %v6231
    %v6918 = vsel %vm2056, %v6902, %v6233
    %v6919 = vsel %vm2056, %v6903, %v6235
    %v6920 = vsel %vm2056, %v6904, %v6237
    %v6921 = vsel %vm2056, %v6905, %v6239
    %v6922 = vsel %vm2056, %v6906, %v6241
    %v6923 = vsel %vm2056, %v6907, %v6243
    %v6924 = vsel %vm2056, %v6908, %v6245
    %v6925 = vsel %vm2056, %v6909, %v6247
    %v6926 = vsel %vm2056, %v6910, %v6249
    %v6927 = vsel %vm2056, %v6911, %v6251
    %v6928 = vsel %vm2056, %v6912, %v6253
    %v6929 = vsel %vm2056, %v6913, %v6255
    %v6930 = vsel %vm2056, %v6914, %v6257
    %v6931 = vsel %vm2056, %v6915, %v6259
    %v6932 = vsel %vm2058, %v6916, %v6277
    %v6933 = vsel %vm2058, %v6917, %v6279
    %v6934 = vsel %vm2058, %v6918, %v6281
    %v6935 = vsel %vm2058, %v6919, %v6283
    %v6936 = vsel %vm2058, %v6920, %v6285
    %v6937 = vsel %vm2058, %v6921, %v6287
    %v6938 = vsel %vm2058, %v6922, %v6289
    %v6939 = vsel %vm2058, %v6923, %v6291
    %v6940 = vsel %vm2058, %v6924, %v6293
    %v6941 = vsel %vm2058, %v6925, %v6295
    %v6942 = vsel %vm2058, %v6926, %v6297
    %v6943 = vsel %vm2058, %v6927, %v6299
    %v6944 = vsel %vm2058, %v6928, %v6301
    %v6945 = vsel %vm2058, %v6929, %v6303
    %v6946 = vsel %vm2058, %v6930, %v6305
    %v6947 = vsel %vm2058, %v6931, %v6307
    %v6948 = vsel %vm2060, %v6932, %v6325
    %v6949 = vsel %vm2060, %v6933, %v6327
    %v6950 = vsel %vm2060, %v6934, %v6329
    %v6951 = vsel %vm2060, %v6935, %v6331
    %v6952 = vsel %vm2060, %v6936, %v6333
    %v6953 = vsel %vm2060, %v6937, %v6335
    %v6954 = vsel %vm2060, %v6938, %v6337
    %v6955 = vsel %vm2060, %v6939, %v6339
    %v6956 = vsel %vm2060, %v6940, %v6341
    %v6957 = vsel %vm2060, %v6941, %v6343
    %v6958 = vsel %vm2060, %v6942, %v6345
    %v6959 = vsel %vm2060, %v6943, %v6347
    %v6960 = vsel %vm2060, %v6944, %v6349
    %v6961 = vsel %vm2060, %v6945, %v6351
    %v6962 = vsel %vm2060, %v6946, %v6353
    %v6963 = vsel %vm2060, %v6947, %v6355
    %v6964 = vsel %vm2062, %v6948, %v6373
    %v6965 = vsel %vm2062, %v6949, %v6375
    %v6966 = vsel %vm2062, %v6950, %v6377
    %v6967 = vsel %vm2062, %v6951, %v6379
    %v6968 = vsel %vm2062, %v6952, %v6381
    %v6969 = vsel %vm2062, %v6953, %v6383
    %v6970 = vsel %vm2062, %v6954, %v6385
    %v6971 = vsel %vm2062, %v6955, %v6387
    %v6972 = vsel %vm2062, %v6956, %v6389
    %v6973 = vsel %vm2062, %v6957, %v6391
    %v6974 = vsel %vm2062, %v6958, %v6393
    %v6975 = vsel %vm2062, %v6959, %v6395
    %v6976 = vsel %vm2062, %v6960, %v6397
    %v6977 = vsel %vm2062, %v6961, %v6399
    %v6978 = vsel %vm2062, %v6962, %v6401
    %v6979 = vsel %vm2062, %v6963, %v6403
    %v6980 = vsel %vm2064, %v6964, %v6421
    %v6981 = vsel %vm2064, %v6965, %v6423
    %v6982 = vsel %vm2064, %v6966, %v6425
    %v6983 = vsel %vm2064, %v6967, %v6427
    %v6984 = vsel %vm2064, %v6968, %v6429
    %v6985 = vsel %vm2064, %v6969, %v6431
    %v6986 = vsel %vm2064, %v6970, %v6433
    %v6987 = vsel %vm2064, %v6971, %v6435
    %v6988 = vsel %vm2064, %v6972, %v6437
    %v6989 = vsel %vm2064, %v6973, %v6439
    %v6990 = vsel %vm2064, %v6974, %v6441
    %v6991 = vsel %vm2064, %v6975, %v6443
    %v6992 = vsel %vm2064, %v6976, %v6445
    %v6993 = vsel %vm2064, %v6977, %v6447
    %v6994 = vsel %vm2064, %v6978, %v6449
    %v6995 = vsel %vm2064, %v6979, %v6451
    %v6996 = vsel %vm2066, %v6980, %v6469
    %v6997 = vsel %vm2066, %v6981, %v6471
    %v6998 = vsel %vm2066, %v6982, %v6473
    %v6999 = vsel %vm2066, %v6983, %v6475
    %v7000 = vsel %vm2066, %v6984, %v6477
    %v7001 = vsel %vm2066, %v6985, %v6479
    %v7002 = vsel %vm2066, %v6986, %v6481
    %v7003 = vsel %vm2066, %v6987, %v6483
    %v7004 = vsel %vm2066, %v6988, %v6485
    %v7005 = vsel %vm2066, %v6989, %v6487
    %v7006 = vsel %vm2066, %v6990, %v6489
    %v7007 = vsel %vm2066, %v6991, %v6491
    %v7008 = vsel %vm2066, %v6992, %v6493
    %v7009 = vsel %vm2066, %v6993, %v6495
    %v7010 = vsel %vm2066, %v6994, %v6497
    %v7011 = vsel %vm2066, %v6995, %v6499
    %v7012 = vsel %vm1865, %v6996, %v6517
    %v7013 = vsel %vm1865, %v6997, %v6519
    %v7014 = vsel %vm1865, %v6998, %v6521
    %v7015 = vsel %vm1865, %v6999, %v6523
    %v7016 = vsel %vm1865, %v7000, %v6525
    %v7017 = vsel %vm1865, %v7001, %v6527
    %v7018 = vsel %vm1865, %v7002, %v6529
    %v7019 = vsel %vm1865, %v7003, %v6531
    %v7020 = vsel %vm1865, %v7004, %v6533
    %v7021 = vsel %vm1865, %v7005, %v6535
    %v7022 = vsel %vm1865, %v7006, %v6537
    %v7023 = vsel %vm1865, %v7007, %v6539
    %v7024 = vsel %vm1865, %v7008, %v6541
    %v7025 = vsel %vm1865, %v7009, %v6543
    %v7026 = vsel %vm1865, %v7010, %v6545
    %v7027 = vsel %vm1865, %v7011, %v6547
    %v7028 = vsel %vm2237, %v7012, %v6565
    %v7029 = vsel %vm2237, %v7013, %v6567
    %v7030 = vsel %vm2237, %v7014, %v6569
    %v7031 = vsel %vm2237, %v7015, %v6571
    %v7032 = vsel %vm2237, %v7016, %v6573
    %v7033 = vsel %vm2237, %v7017, %v6575
    %v7034 = vsel %vm2237, %v7018, %v6577
    %v7035 = vsel %vm2237, %v7019, %v6579
    %v7036 = vsel %vm2237, %v7020, %v6581
    %v7037 = vsel %vm2237, %v7021, %v6583
    %v7038 = vsel %vm2237, %v7022, %v6585
    %v7039 = vsel %vm2237, %v7023, %v6587
    %v7040 = vsel %vm2237, %v7024, %v6589
    %v7041 = vsel %vm2237, %v7025, %v6591
    %v7042 = vsel %vm2237, %v7026, %v6593
    %v7043 = vsel %vm2237, %v7027, %v6595
    %v7044 = vsel %vm169, %v7028, %v6613
    %v7045 = vsel %vm169, %v7029, %v6615
    %v7046 = vsel %vm169, %v7030, %v6617
    %v7047 = vsel %vm169, %v7031, %v6619
    %v7048 = vsel %vm169, %v7032, %v6621
    %v7049 = vsel %vm169, %v7033, %v6623
    %v7050 = vsel %vm169, %v7034, %v6625
    %v7051 = vsel %vm169, %v7035, %v6627
    %v7052 = vsel %vm169, %v7036, %v6629
    %v7053 = vsel %vm169, %v7037, %v6631
    %v7054 = vsel %vm169, %v7038, %v6633
    %v7055 = vsel %vm169, %v7039, %v6635
    %v7056 = vsel %vm169, %v7040, %v6637
    %v7057 = vsel %vm169, %v7041, %v6639
    %v7058 = vsel %vm169, %v7042, %v6641
    %v7059 = vsel %vm169, %v7043, %v6643
    %v7060 = vsel %vm5743, %v7044, %v6661
    %v7061 = vsel %vm5743, %v7045, %v6663
    %v7062 = vsel %vm5743, %v7046, %v6665
    %v7063 = vsel %vm5743, %v7047, %v6667
    %v7064 = vsel %vm5743, %v7048, %v6669
    %v7065 = vsel %vm5743, %v7049, %v6671
    %v7066 = vsel %vm5743, %v7050, %v6673
    %v7067 = vsel %vm5743, %v7051, %v6675
    %v7068 = vsel %vm5743, %v7052, %v6677
    %v7069 = vsel %vm5743, %v7053, %v6679
    %v7070 = vsel %vm5743, %v7054, %v6681
    %v7071 = vsel %vm5743, %v7055, %v6683
    %v7072 = vsel %vm5743, %v7056, %v6685
    %v7073 = vsel %vm5743, %v7057, %v6687
    %v7074 = vsel %vm5743, %v7058, %v6689
    %v7075 = vsel %vm5743, %v7059, %v6691
    %v7076 = vsel %vm5760, %v7060, %v6709
    %v7077 = vsel %vm5760, %v7061, %v6711
    %v7078 = vsel %vm5760, %v7062, %v6713
    %v7079 = vsel %vm5760, %v7063, %v6715
    %v7080 = vsel %vm5760, %v7064, %v6717
    %v7081 = vsel %vm5760, %v7065, %v6719
    %v7082 = vsel %vm5760, %v7066, %v6721
    %v7083 = vsel %vm5760, %v7067, %v6723
    %v7084 = vsel %vm5760, %v7068, %v6725
    %v7085 = vsel %vm5760, %v7069, %v6727
    %v7086 = vsel %vm5760, %v7070, %v6729
    %v7087 = vsel %vm5760, %v7071, %v6731
    %v7088 = vsel %vm5760, %v7072, %v6733
    %v7089 = vsel %vm5760, %v7073, %v6735
    %v7090 = vsel %vm5760, %v7074, %v6737
    %v7091 = vsel %vm5760, %v7075, %v6739
    %v7092 = vsel %vm5777, %v7076, %v6757
    %v7093 = vsel %vm5777, %v7077, %v6759
    %v7094 = vsel %vm5777, %v7078, %v6761
    %v7095 = vsel %vm5777, %v7079, %v6763
    %v7096 = vsel %vm5777, %v7080, %v6765
    %v7097 = vsel %vm5777, %v7081, %v6767
    %v7098 = vsel %vm5777, %v7082, %v6769
    %v7099 = vsel %vm5777, %v7083, %v6771
    %v7100 = vsel %vm5777, %v7084, %v6773
    %v7101 = vsel %vm5777, %v7085, %v6775
    %v7102 = vsel %vm5777, %v7086, %v6777
    %v7103 = vsel %vm5777, %v7087, %v6779
    %v7104 = vsel %vm5777, %v7088, %v6781
    %v7105 = vsel %vm5777, %v7089, %v6783
    %v7106 = vsel %vm5777, %v7090, %v6785
    %v7107 = vsel %vm5777, %v7091, %v6787
    %v7108 = vsel %vm5794, %v7092, %v6805
    %v7109 = vsel %vm5794, %v7093, %v6807
    %v7110 = vsel %vm5794, %v7094, %v6809
    %v7111 = vsel %vm5794, %v7095, %v6811
    %v7112 = vsel %vm5794, %v7096, %v6813
    %v7113 = vsel %vm5794, %v7097, %v6815
    %v7114 = vsel %vm5794, %v7098, %v6817
    %v7115 = vsel %vm5794, %v7099, %v6819
    %v7116 = vsel %vm5794, %v7100, %v6821
    %v7117 = vsel %vm5794, %v7101, %v6823
    %v7118 = vsel %vm5794, %v7102, %v6825
    %v7119 = vsel %vm5794, %v7103, %v6827
    %v7120 = vsel %vm5794, %v7104, %v6829
    %v7121 = vsel %vm5794, %v7105, %v6831
    %v7122 = vsel %vm5794, %v7106, %v6833
    %v7123 = vsel %vm5794, %v7107, %v6835
    %v7124 = vsel %vm5811, %v7108, %v6853
    %v7125 = vsel %vm5811, %v7109, %v6855
    %v7126 = vsel %vm5811, %v7110, %v6857
    %v7127 = vsel %vm5811, %v7111, %v6859
    %v7128 = vsel %vm5811, %v7112, %v6861
    %v7129 = vsel %vm5811, %v7113, %v6863
    %v7130 = vsel %vm5811, %v7114, %v6865
    %v7131 = vsel %vm5811, %v7115, %v6867
    %v7132 = vsel %vm5811, %v7116, %v6869
    %v7133 = vsel %vm5811, %v7117, %v6871
    %v7134 = vsel %vm5811, %v7118, %v6873
    %v7135 = vsel %vm5811, %v7119, %v6875
    %v7136 = vsel %vm5811, %v7120, %v6877
    %v7137 = vsel %vm5811, %v7121, %v6879
    %v7138 = vsel %vm5811, %v7122, %v6881
    %v7139 = vsel %vm5811, %v7123, %v6883
    %s7140 = scalar_lea.vmem [#allocation2], 128
    %7141 = vst [vmem:[%s7140] sm:$0xff] %v7124
    %7142 = vst [vmem:[%s7140 + $0x8] sm:$0xff] %v7125
    %7143 = vst [vmem:[%s7140 + $0x10] sm:$0xff] %v7126
    %7144 = vst [vmem:[%s7140 + $0x18] sm:$0xff] %v7127
    %7145 = vst [vmem:[%s7140 + $0x20] sm:$0xff] %v7128
    %7146 = vst [vmem:[%s7140 + $0x28] sm:$0xff] %v7129
    %7147 = vst [vmem:[%s7140 + $0x30] sm:$0xff] %v7130
    %7148 = vst [vmem:[%s7140 + $0x38] sm:$0xff] %v7131
    %7149 = vst [vmem:[%s7140 + $0x40] sm:$0xff] %v7132
    %7150 = vst [vmem:[%s7140 + $0x48] sm:$0xff] %v7133
    %7151 = vst [vmem:[%s7140 + $0x50] sm:$0xff] %v7134
    %7152 = vst [vmem:[%s7140 + $0x58] sm:$0xff] %v7135
    %7153 = vst [vmem:[%s7140 + $0x60] sm:$0xff] %v7136
    %7154 = vst [vmem:[%s7140 + $0x68] sm:$0xff] %v7137
    %7155 = vst [vmem:[%s7140 + $0x70] sm:$0xff] %v7138
    %7156 = vst [vmem:[%s7140 + $0x78] sm:$0xff] %v7139
    %v7157 = vmul.f32 %v4440, 0.25
    %v7158 = vmul.f32 %v4448, 0.25
    %v7159 = vadd.f32 %v4449, %v4466
    %v7160 = vadd.f32 %v4450, %v4467
    %v7161 = vadd.f32 %v4451, %v4468
    %v7162 = vadd.f32 %v4452, %v4469
    %v7163 = vadd.f32 %v4453, %v4470
    %v7164 = vadd.f32 %v4454, %v4471
    %v7165 = vadd.f32 %v4455, %v7157
    %v7166 = vadd.f32 %v4456, %v7157
    %v7167 = vadd.f32 %v4457, %v4473
    %v7168 = vadd.f32 %v4458, %v4474
    %v7169 = vadd.f32 %v4459, %v4475
    %v7170 = vadd.f32 %v4460, %v4476
    %v7171 = vadd.f32 %v4461, %v4477
    %v7172 = vadd.f32 %v4462, %v4478
    %v7173 = vadd.f32 %v4463, %v7158
    %v7174 = vadd.f32 %v4464, %v7158
    %v7175 = vmul.f32 %v7159, 0.75
    %v7176 = vmul.f32 %v7160, 0.75
    %v7177 = vmul.f32 %v7161, 0.75
    %v7178 = vmul.f32 %v7162, 0.75
    %v7179 = vmul.f32 %v7163, 0.75
    %v7180 = vmul.f32 %v7164, 0.75
    %v7181 = vmul.f32 %v7165, 0.75
    %v7182 = vmul.f32 %v7166, 0.75
    %v7183 = vmul.f32 %v7167, 0.75
    %v7184 = vmul.f32 %v7168, 0.75
    %v7185 = vmul.f32 %v7169, 0.75
    %v7186 = vmul.f32 %v7170, 0.75
    %v7187 = vmul.f32 %v7171, 0.75
    %v7188 = vmul.f32 %v7172, 0.75
    %v7189 = vmul.f32 %v7173, 0.75
    %v7190 = vmul.f32 %v7174, 0.75
    %v7207 = vrot.slane %v7159, 7
    %v7208 = vrot.slane %v7160, 7
    %v7209 = vrot.slane %v7161, 7
    %v7210 = vrot.slane %v7162, 7
    %v7211 = vrot.slane %v7163, 7
    %v7212 = vrot.slane %v7164, 7
    %v7213 = vrot.slane %v7165, 7
    %v7214 = vrot.slane %v7166, 7
    %v7215 = vrot.slane %v7167, 7
    %v7216 = vrot.slane %v7168, 7
    %v7217 = vrot.slane %v7169, 7
    %v7218 = vrot.slane %v7170, 7
    %v7219 = vrot.slane %v7171, 7
    %v7220 = vrot.slane %v7172, 7
    %v7221 = vrot.slane %v7173, 7
    %v7222 = vrot.slane %v7174, 7
    %v7239 = vsel %vm2302, %v7159, %v7207
    %v7240 = vsel %vm2302, %v7160, %v7208
    %v7241 = vsel %vm2302, %v7161, %v7209
    %v7242 = vsel %vm2302, %v7162, %v7210
    %v7243 = vsel %vm2302, %v7163, %v7211
    %v7244 = vsel %vm2302, %v7164, %v7212
    %v7245 = vsel %vm2302, %v7165, %v7213
    %v7246 = vsel %vm2302, %v7166, %v7214
    %v7247 = vsel %vm2302, %v7167, %v7215
    %v7248 = vsel %vm2302, %v7168, %v7216
    %v7249 = vsel %vm2302, %v7169, %v7217
    %v7250 = vsel %vm2302, %v7170, %v7218
    %v7251 = vsel %vm2302, %v7171, %v7219
    %v7252 = vsel %vm2302, %v7172, %v7220
    %v7253 = vsel %vm2302, %v7173, %v7221
    %v7254 = vsel %vm2302, %v7174, %v7222
    %v7255 = vmul.f32 %v7239, 0.25
    %v7256 = vmul.f32 %v7240, 0.25
    %v7257 = vmul.f32 %v7241, 0.25
    %v7258 = vmul.f32 %v7242, 0.25
    %v7259 = vmul.f32 %v7243, 0.25
    %v7260 = vmul.f32 %v7244, 0.25
    %v7261 = vmul.f32 %v7245, 0.25
    %v7262 = vmul.f32 %v7246, 0.25
    %v7263 = vmul.f32 %v7247, 0.25
    %v7264 = vmul.f32 %v7248, 0.25
    %v7265 = vmul.f32 %v7249, 0.25
    %v7266 = vmul.f32 %v7250, 0.25
    %v7267 = vmul.f32 %v7251, 0.25
    %v7268 = vmul.f32 %v7252, 0.25
    %v7269 = vmul.f32 %v7253, 0.25
    %v7270 = vmul.f32 %v7254, 0.25
    %v7271 = vadd.f32 %v7175, %v7255
    %v7272 = vadd.f32 %v7176, %v7256
    %v7273 = vadd.f32 %v7177, %v7257
    %v7274 = vadd.f32 %v7178, %v7258
    %v7275 = vadd.f32 %v7179, %v7259
    %v7276 = vadd.f32 %v7180, %v7260
    %v7277 = vadd.f32 %v7181, %v7261
    %v7278 = vadd.f32 %v7182, %v7262
    %v7279 = vadd.f32 %v7183, %v7263
    %v7280 = vadd.f32 %v7184, %v7264
    %v7281 = vadd.f32 %v7185, %v7265
    %v7282 = vadd.f32 %v7186, %v7266
    %v7283 = vadd.f32 %v7187, %v7267
    %v7284 = vadd.f32 %v7188, %v7268
    %v7285 = vadd.f32 %v7189, %v7269
    %v7286 = vadd.f32 %v7190, %v7270
    %v7287 = vmul.f32 %v7271, 0.75
    %v7288 = vmul.f32 %v7272, 0.75
    %v7289 = vmul.f32 %v7273, 0.75
    %v7290 = vmul.f32 %v7274, 0.75
    %v7291 = vmul.f32 %v7275, 0.75
    %v7292 = vmul.f32 %v7276, 0.75
    %v7293 = vmul.f32 %v7277, 0.75
    %v7294 = vmul.f32 %v7278, 0.75
    %v7295 = vmul.f32 %v7279, 0.75
    %v7296 = vmul.f32 %v7280, 0.75
    %v7297 = vmul.f32 %v7281, 0.75
    %v7298 = vmul.f32 %v7282, 0.75
    %v7299 = vmul.f32 %v7283, 0.75
    %v7300 = vmul.f32 %v7284, 0.75
    %v7301 = vmul.f32 %v7285, 0.75
    %v7302 = vmul.f32 %v7286, 0.75
    %7319 = vrot.lane.b32.xlu0 %v7271, 8
    %v7320 = vpop.permute.xlu0 %7319
    %7321 = vrot.lane.b32.xlu0 %v7272, 8
    %v7322 = vpop.permute.xlu0 %7321
    %7323 = vrot.lane.b32.xlu0 %v7273, 8
    %v7324 = vpop.permute.xlu0 %7323
    %7325 = vrot.lane.b32.xlu0 %v7274, 8
    %v7326 = vpop.permute.xlu0 %7325
    %7327 = vrot.lane.b32.xlu0 %v7275, 8
    %v7328 = vpop.permute.xlu0 %7327
    %7329 = vrot.lane.b32.xlu0 %v7276, 8
    %v7330 = vpop.permute.xlu0 %7329
    %7331 = vrot.lane.b32.xlu0 %v7277, 8
    %v7332 = vpop.permute.xlu0 %7331
    %7333 = vrot.lane.b32.xlu0 %v7278, 8
    %v7334 = vpop.permute.xlu0 %7333
    %7335 = vrot.lane.b32.xlu0 %v7279, 8
    %v7336 = vpop.permute.xlu0 %7335
    %7337 = vrot.lane.b32.xlu0 %v7280, 8
    %v7338 = vpop.permute.xlu0 %7337
    %7339 = vrot.lane.b32.xlu0 %v7281, 8
    %v7340 = vpop.permute.xlu0 %7339
    %7341 = vrot.lane.b32.xlu0 %v7282, 8
    %v7342 = vpop.permute.xlu0 %7341
    %7343 = vrot.lane.b32.xlu0 %v7283, 8
    %v7344 = vpop.permute.xlu0 %7343
    %7345 = vrot.lane.b32.xlu0 %v7284, 8
    %v7346 = vpop.permute.xlu0 %7345
    %7347 = vrot.lane.b32.xlu0 %v7285, 8
    %v7348 = vpop.permute.xlu0 %7347
    %7349 = vrot.lane.b32.xlu0 %v7286, 8
    %v7350 = vpop.permute.xlu0 %7349
    %v7367 = vsel %vm2054, %v7271, %v7320
    %v7368 = vsel %vm2054, %v7272, %v7322
    %v7369 = vsel %vm2054, %v7273, %v7324
    %v7370 = vsel %vm2054, %v7274, %v7326
    %v7371 = vsel %vm2054, %v7275, %v7328
    %v7372 = vsel %vm2054, %v7276, %v7330
    %v7373 = vsel %vm2054, %v7277, %v7332
    %v7374 = vsel %vm2054, %v7278, %v7334
    %v7375 = vsel %vm2054, %v7279, %v7336
    %v7376 = vsel %vm2054, %v7280, %v7338
    %v7377 = vsel %vm2054, %v7281, %v7340
    %v7378 = vsel %vm2054, %v7282, %v7342
    %v7379 = vsel %vm2054, %v7283, %v7344
    %v7380 = vsel %vm2054, %v7284, %v7346
    %v7381 = vsel %vm2054, %v7285, %v7348
    %v7382 = vsel %vm2054, %v7286, %v7350
    %v7383 = vmul.f32 %v7367, 0.25
    %v7384 = vmul.f32 %v7368, 0.25
    %v7385 = vmul.f32 %v7369, 0.25
    %v7386 = vmul.f32 %v7370, 0.25
    %v7387 = vmul.f32 %v7371, 0.25
    %v7388 = vmul.f32 %v7372, 0.25
    %v7389 = vmul.f32 %v7373, 0.25
    %v7390 = vmul.f32 %v7374, 0.25
    %v7391 = vmul.f32 %v7375, 0.25
    %v7392 = vmul.f32 %v7376, 0.25
    %v7393 = vmul.f32 %v7377, 0.25
    %v7394 = vmul.f32 %v7378, 0.25
    %v7395 = vmul.f32 %v7379, 0.25
    %v7396 = vmul.f32 %v7380, 0.25
    %v7397 = vmul.f32 %v7381, 0.25
    %v7398 = vmul.f32 %v7382, 0.25
    %v7399 = vadd.f32 %v7287, %v7383
    %v7400 = vadd.f32 %v7288, %v7384
    %v7401 = vadd.f32 %v7289, %v7385
    %v7402 = vadd.f32 %v7290, %v7386
    %v7403 = vadd.f32 %v7291, %v7387
    %v7404 = vadd.f32 %v7292, %v7388
    %v7405 = vadd.f32 %v7293, %v7389
    %v7406 = vadd.f32 %v7294, %v7390
    %v7407 = vadd.f32 %v7295, %v7391
    %v7408 = vadd.f32 %v7296, %v7392
    %v7409 = vadd.f32 %v7297, %v7393
    %v7410 = vadd.f32 %v7298, %v7394
    %v7411 = vadd.f32 %v7299, %v7395
    %v7412 = vadd.f32 %v7300, %v7396
    %v7413 = vadd.f32 %v7301, %v7397
    %v7414 = vadd.f32 %v7302, %v7398
    %7415 = vrot.lane.b32.xlu0 %v7271, 120
    %v7416 = vpop.permute.xlu0 %7415
    %7417 = vrot.lane.b32.xlu0 %v7272, 120
    %v7418 = vpop.permute.xlu0 %7417
    %7419 = vrot.lane.b32.xlu0 %v7273, 120
    %v7420 = vpop.permute.xlu0 %7419
    %7421 = vrot.lane.b32.xlu0 %v7274, 120
    %v7422 = vpop.permute.xlu0 %7421
    %7423 = vrot.lane.b32.xlu0 %v7275, 120
    %v7424 = vpop.permute.xlu0 %7423
    %7425 = vrot.lane.b32.xlu0 %v7276, 120
    %v7426 = vpop.permute.xlu0 %7425
    %7427 = vrot.lane.b32.xlu0 %v7277, 120
    %v7428 = vpop.permute.xlu0 %7427
    %7429 = vrot.lane.b32.xlu0 %v7278, 120
    %v7430 = vpop.permute.xlu0 %7429
    %7431 = vrot.lane.b32.xlu0 %v7279, 120
    %v7432 = vpop.permute.xlu0 %7431
    %7433 = vrot.lane.b32.xlu0 %v7280, 120
    %v7434 = vpop.permute.xlu0 %7433
    %7435 = vrot.lane.b32.xlu0 %v7281, 120
    %v7436 = vpop.permute.xlu0 %7435
    %7437 = vrot.lane.b32.xlu0 %v7282, 120
    %v7438 = vpop.permute.xlu0 %7437
    %7439 = vrot.lane.b32.xlu0 %v7283, 120
    %v7440 = vpop.permute.xlu0 %7439
    %7441 = vrot.lane.b32.xlu0 %v7284, 120
    %v7442 = vpop.permute.xlu0 %7441
    %7443 = vrot.lane.b32.xlu0 %v7285, 120
    %v7444 = vpop.permute.xlu0 %7443
    %7445 = vrot.lane.b32.xlu0 %v7286, 120
    %v7446 = vpop.permute.xlu0 %7445
    %v7463 = vsel %vm2066, %v7416, %v7271
    %v7464 = vsel %vm2066, %v7418, %v7272
    %v7465 = vsel %vm2066, %v7420, %v7273
    %v7466 = vsel %vm2066, %v7422, %v7274
    %v7467 = vsel %vm2066, %v7424, %v7275
    %v7468 = vsel %vm2066, %v7426, %v7276
    %v7469 = vsel %vm2066, %v7428, %v7277
    %v7470 = vsel %vm2066, %v7430, %v7278
    %v7471 = vsel %vm2066, %v7432, %v7279
    %v7472 = vsel %vm2066, %v7434, %v7280
    %v7473 = vsel %vm2066, %v7436, %v7281
    %v7474 = vsel %vm2066, %v7438, %v7282
    %v7475 = vsel %vm2066, %v7440, %v7283
    %v7476 = vsel %vm2066, %v7442, %v7284
    %v7477 = vsel %vm2066, %v7444, %v7285
    %v7478 = vsel %vm2066, %v7446, %v7286
    %v7479 = vmul.f32 %v7463, 0.25
    %v7480 = vmul.f32 %v7464, 0.25
    %v7481 = vmul.f32 %v7465, 0.25
    %v7482 = vmul.f32 %v7466, 0.25
    %v7483 = vmul.f32 %v7467, 0.25
    %v7484 = vmul.f32 %v7468, 0.25
    %v7485 = vmul.f32 %v7469, 0.25
    %v7486 = vmul.f32 %v7470, 0.25
    %v7487 = vmul.f32 %v7471, 0.25
    %v7488 = vmul.f32 %v7472, 0.25
    %v7489 = vmul.f32 %v7473, 0.25
    %v7490 = vmul.f32 %v7474, 0.25
    %v7491 = vmul.f32 %v7475, 0.25
    %v7492 = vmul.f32 %v7476, 0.25
    %v7493 = vmul.f32 %v7477, 0.25
    %v7494 = vmul.f32 %v7478, 0.25
    %v7495 = vadd.f32 %v7287, %v7479
    %v7496 = vadd.f32 %v7288, %v7480
    %v7497 = vadd.f32 %v7289, %v7481
    %v7498 = vadd.f32 %v7290, %v7482
    %v7499 = vadd.f32 %v7291, %v7483
    %v7500 = vadd.f32 %v7292, %v7484
    %v7501 = vadd.f32 %v7293, %v7485
    %v7502 = vadd.f32 %v7294, %v7486
    %v7503 = vadd.f32 %v7295, %v7487
    %v7504 = vadd.f32 %v7296, %v7488
    %v7505 = vadd.f32 %v7297, %v7489
    %v7506 = vadd.f32 %v7298, %v7490
    %v7507 = vadd.f32 %v7299, %v7491
    %v7508 = vadd.f32 %v7300, %v7492
    %v7509 = vadd.f32 %v7301, %v7493
    %v7510 = vadd.f32 %v7302, %v7494
    %7527 = vrot.lane.b32.xlu0 %v7495, 8
    %v7528 = vpop.permute.xlu0 %7527
    %7529 = vrot.lane.b32.xlu0 %v7496, 8
    %v7530 = vpop.permute.xlu0 %7529
    %7531 = vrot.lane.b32.xlu0 %v7497, 8
    %v7532 = vpop.permute.xlu0 %7531
    %7533 = vrot.lane.b32.xlu0 %v7498, 8
    %v7534 = vpop.permute.xlu0 %7533
    %7535 = vrot.lane.b32.xlu0 %v7499, 8
    %v7536 = vpop.permute.xlu0 %7535
    %7537 = vrot.lane.b32.xlu0 %v7500, 8
    %v7538 = vpop.permute.xlu0 %7537
    %7539 = vrot.lane.b32.xlu0 %v7501, 8
    %v7540 = vpop.permute.xlu0 %7539
    %7541 = vrot.lane.b32.xlu0 %v7502, 8
    %v7542 = vpop.permute.xlu0 %7541
    %7543 = vrot.lane.b32.xlu0 %v7503, 8
    %v7544 = vpop.permute.xlu0 %7543
    %7545 = vrot.lane.b32.xlu0 %v7504, 8
    %v7546 = vpop.permute.xlu0 %7545
    %7547 = vrot.lane.b32.xlu0 %v7505, 8
    %v7548 = vpop.permute.xlu0 %7547
    %7549 = vrot.lane.b32.xlu0 %v7506, 8
    %v7550 = vpop.permute.xlu0 %7549
    %7551 = vrot.lane.b32.xlu0 %v7507, 8
    %v7552 = vpop.permute.xlu0 %7551
    %7553 = vrot.lane.b32.xlu0 %v7508, 8
    %v7554 = vpop.permute.xlu0 %7553
    %7555 = vrot.lane.b32.xlu0 %v7509, 8
    %v7556 = vpop.permute.xlu0 %7555
    %7557 = vrot.lane.b32.xlu0 %v7510, 8
    %v7558 = vpop.permute.xlu0 %7557
    %7591 = vrot.lane.b32.xlu0 %v7399, 8
    %v7592 = vpop.permute.xlu0 %7591
    %7593 = vrot.lane.b32.xlu0 %v7400, 8
    %v7594 = vpop.permute.xlu0 %7593
    %7595 = vrot.lane.b32.xlu0 %v7401, 8
    %v7596 = vpop.permute.xlu0 %7595
    %7597 = vrot.lane.b32.xlu0 %v7402, 8
    %v7598 = vpop.permute.xlu0 %7597
    %7599 = vrot.lane.b32.xlu0 %v7403, 8
    %v7600 = vpop.permute.xlu0 %7599
    %7601 = vrot.lane.b32.xlu0 %v7404, 8
    %v7602 = vpop.permute.xlu0 %7601
    %7603 = vrot.lane.b32.xlu0 %v7405, 8
    %v7604 = vpop.permute.xlu0 %7603
    %7605 = vrot.lane.b32.xlu0 %v7406, 8
    %v7606 = vpop.permute.xlu0 %7605
    %7607 = vrot.lane.b32.xlu0 %v7407, 8
    %v7608 = vpop.permute.xlu0 %7607
    %7609 = vrot.lane.b32.xlu0 %v7408, 8
    %v7610 = vpop.permute.xlu0 %7609
    %7611 = vrot.lane.b32.xlu0 %v7409, 8
    %v7612 = vpop.permute.xlu0 %7611
    %7613 = vrot.lane.b32.xlu0 %v7410, 8
    %v7614 = vpop.permute.xlu0 %7613
    %7615 = vrot.lane.b32.xlu0 %v7411, 8
    %v7616 = vpop.permute.xlu0 %7615
    %7617 = vrot.lane.b32.xlu0 %v7412, 8
    %v7618 = vpop.permute.xlu0 %7617
    %7619 = vrot.lane.b32.xlu0 %v7413, 8
    %v7620 = vpop.permute.xlu0 %7619
    %7621 = vrot.lane.b32.xlu0 %v7414, 8
    %v7622 = vpop.permute.xlu0 %7621
    %7639 = vrot.lane.b32.xlu0 %v7495, 16
    %v7640 = vpop.permute.xlu0 %7639
    %7641 = vrot.lane.b32.xlu0 %v7496, 16
    %v7642 = vpop.permute.xlu0 %7641
    %7643 = vrot.lane.b32.xlu0 %v7497, 16
    %v7644 = vpop.permute.xlu0 %7643
    %7645 = vrot.lane.b32.xlu0 %v7498, 16
    %v7646 = vpop.permute.xlu0 %7645
    %7647 = vrot.lane.b32.xlu0 %v7499, 16
    %v7648 = vpop.permute.xlu0 %7647
    %7649 = vrot.lane.b32.xlu0 %v7500, 16
    %v7650 = vpop.permute.xlu0 %7649
    %7651 = vrot.lane.b32.xlu0 %v7501, 16
    %v7652 = vpop.permute.xlu0 %7651
    %7653 = vrot.lane.b32.xlu0 %v7502, 16
    %v7654 = vpop.permute.xlu0 %7653
    %7655 = vrot.lane.b32.xlu0 %v7503, 16
    %v7656 = vpop.permute.xlu0 %7655
    %7657 = vrot.lane.b32.xlu0 %v7504, 16
    %v7658 = vpop.permute.xlu0 %7657
    %7659 = vrot.lane.b32.xlu0 %v7505, 16
    %v7660 = vpop.permute.xlu0 %7659
    %7661 = vrot.lane.b32.xlu0 %v7506, 16
    %v7662 = vpop.permute.xlu0 %7661
    %7663 = vrot.lane.b32.xlu0 %v7507, 16
    %v7664 = vpop.permute.xlu0 %7663
    %7665 = vrot.lane.b32.xlu0 %v7508, 16
    %v7666 = vpop.permute.xlu0 %7665
    %7667 = vrot.lane.b32.xlu0 %v7509, 16
    %v7668 = vpop.permute.xlu0 %7667
    %7669 = vrot.lane.b32.xlu0 %v7510, 16
    %v7670 = vpop.permute.xlu0 %7669
    %7687 = vrot.lane.b32.xlu0 %v7399, 16
    %v7688 = vpop.permute.xlu0 %7687
    %7689 = vrot.lane.b32.xlu0 %v7400, 16
    %v7690 = vpop.permute.xlu0 %7689
    %7691 = vrot.lane.b32.xlu0 %v7401, 16
    %v7692 = vpop.permute.xlu0 %7691
    %7693 = vrot.lane.b32.xlu0 %v7402, 16
    %v7694 = vpop.permute.xlu0 %7693
    %7695 = vrot.lane.b32.xlu0 %v7403, 16
    %v7696 = vpop.permute.xlu0 %7695
    %7697 = vrot.lane.b32.xlu0 %v7404, 16
    %v7698 = vpop.permute.xlu0 %7697
    %7699 = vrot.lane.b32.xlu0 %v7405, 16
    %v7700 = vpop.permute.xlu0 %7699
    %7701 = vrot.lane.b32.xlu0 %v7406, 16
    %v7702 = vpop.permute.xlu0 %7701
    %7703 = vrot.lane.b32.xlu0 %v7407, 16
    %v7704 = vpop.permute.xlu0 %7703
    %7705 = vrot.lane.b32.xlu0 %v7408, 16
    %v7706 = vpop.permute.xlu0 %7705
    %7707 = vrot.lane.b32.xlu0 %v7409, 16
    %v7708 = vpop.permute.xlu0 %7707
    %7709 = vrot.lane.b32.xlu0 %v7410, 16
    %v7710 = vpop.permute.xlu0 %7709
    %7711 = vrot.lane.b32.xlu0 %v7411, 16
    %v7712 = vpop.permute.xlu0 %7711
    %7713 = vrot.lane.b32.xlu0 %v7412, 16
    %v7714 = vpop.permute.xlu0 %7713
    %7715 = vrot.lane.b32.xlu0 %v7413, 16
    %v7716 = vpop.permute.xlu0 %7715
    %7717 = vrot.lane.b32.xlu0 %v7414, 16
    %v7718 = vpop.permute.xlu0 %7717
    %7735 = vrot.lane.b32.xlu0 %v7495, 24
    %v7736 = vpop.permute.xlu0 %7735
    %7737 = vrot.lane.b32.xlu0 %v7496, 24
    %v7738 = vpop.permute.xlu0 %7737
    %7739 = vrot.lane.b32.xlu0 %v7497, 24
    %v7740 = vpop.permute.xlu0 %7739
    %7741 = vrot.lane.b32.xlu0 %v7498, 24
    %v7742 = vpop.permute.xlu0 %7741
    %7743 = vrot.lane.b32.xlu0 %v7499, 24
    %v7744 = vpop.permute.xlu0 %7743
    %7745 = vrot.lane.b32.xlu0 %v7500, 24
    %v7746 = vpop.permute.xlu0 %7745
    %7747 = vrot.lane.b32.xlu0 %v7501, 24
    %v7748 = vpop.permute.xlu0 %7747
    %7749 = vrot.lane.b32.xlu0 %v7502, 24
    %v7750 = vpop.permute.xlu0 %7749
    %7751 = vrot.lane.b32.xlu0 %v7503, 24
    %v7752 = vpop.permute.xlu0 %7751
    %7753 = vrot.lane.b32.xlu0 %v7504, 24
    %v7754 = vpop.permute.xlu0 %7753
    %7755 = vrot.lane.b32.xlu0 %v7505, 24
    %v7756 = vpop.permute.xlu0 %7755
    %7757 = vrot.lane.b32.xlu0 %v7506, 24
    %v7758 = vpop.permute.xlu0 %7757
    %7759 = vrot.lane.b32.xlu0 %v7507, 24
    %v7760 = vpop.permute.xlu0 %7759
    %7761 = vrot.lane.b32.xlu0 %v7508, 24
    %v7762 = vpop.permute.xlu0 %7761
    %7763 = vrot.lane.b32.xlu0 %v7509, 24
    %v7764 = vpop.permute.xlu0 %7763
    %7765 = vrot.lane.b32.xlu0 %v7510, 24
    %v7766 = vpop.permute.xlu0 %7765
    %7783 = vrot.lane.b32.xlu0 %v7399, 24
    %v7784 = vpop.permute.xlu0 %7783
    %7785 = vrot.lane.b32.xlu0 %v7400, 24
    %v7786 = vpop.permute.xlu0 %7785
    %7787 = vrot.lane.b32.xlu0 %v7401, 24
    %v7788 = vpop.permute.xlu0 %7787
    %7789 = vrot.lane.b32.xlu0 %v7402, 24
    %v7790 = vpop.permute.xlu0 %7789
    %7791 = vrot.lane.b32.xlu0 %v7403, 24
    %v7792 = vpop.permute.xlu0 %7791
    %7793 = vrot.lane.b32.xlu0 %v7404, 24
    %v7794 = vpop.permute.xlu0 %7793
    %7795 = vrot.lane.b32.xlu0 %v7405, 24
    %v7796 = vpop.permute.xlu0 %7795
    %7797 = vrot.lane.b32.xlu0 %v7406, 24
    %v7798 = vpop.permute.xlu0 %7797
    %7799 = vrot.lane.b32.xlu0 %v7407, 24
    %v7800 = vpop.permute.xlu0 %7799
    %7801 = vrot.lane.b32.xlu0 %v7408, 24
    %v7802 = vpop.permute.xlu0 %7801
    %7803 = vrot.lane.b32.xlu0 %v7409, 24
    %v7804 = vpop.permute.xlu0 %7803
    %7805 = vrot.lane.b32.xlu0 %v7410, 24
    %v7806 = vpop.permute.xlu0 %7805
    %7807 = vrot.lane.b32.xlu0 %v7411, 24
    %v7808 = vpop.permute.xlu0 %7807
    %7809 = vrot.lane.b32.xlu0 %v7412, 24
    %v7810 = vpop.permute.xlu0 %7809
    %7811 = vrot.lane.b32.xlu0 %v7413, 24
    %v7812 = vpop.permute.xlu0 %7811
    %7813 = vrot.lane.b32.xlu0 %v7414, 24
    %v7814 = vpop.permute.xlu0 %7813
    %7831 = vrot.lane.b32.xlu0 %v7495, 32
    %v7832 = vpop.permute.xlu0 %7831
    %7833 = vrot.lane.b32.xlu0 %v7496, 32
    %v7834 = vpop.permute.xlu0 %7833
    %7835 = vrot.lane.b32.xlu0 %v7497, 32
    %v7836 = vpop.permute.xlu0 %7835
    %7837 = vrot.lane.b32.xlu0 %v7498, 32
    %v7838 = vpop.permute.xlu0 %7837
    %7839 = vrot.lane.b32.xlu0 %v7499, 32
    %v7840 = vpop.permute.xlu0 %7839
    %7841 = vrot.lane.b32.xlu0 %v7500, 32
    %v7842 = vpop.permute.xlu0 %7841
    %7843 = vrot.lane.b32.xlu0 %v7501, 32
    %v7844 = vpop.permute.xlu0 %7843
    %7845 = vrot.lane.b32.xlu0 %v7502, 32
    %v7846 = vpop.permute.xlu0 %7845
    %7847 = vrot.lane.b32.xlu0 %v7503, 32
    %v7848 = vpop.permute.xlu0 %7847
    %7849 = vrot.lane.b32.xlu0 %v7504, 32
    %v7850 = vpop.permute.xlu0 %7849
    %7851 = vrot.lane.b32.xlu0 %v7505, 32
    %v7852 = vpop.permute.xlu0 %7851
    %7853 = vrot.lane.b32.xlu0 %v7506, 32
    %v7854 = vpop.permute.xlu0 %7853
    %7855 = vrot.lane.b32.xlu0 %v7507, 32
    %v7856 = vpop.permute.xlu0 %7855
    %7857 = vrot.lane.b32.xlu0 %v7508, 32
    %v7858 = vpop.permute.xlu0 %7857
    %7859 = vrot.lane.b32.xlu0 %v7509, 32
    %v7860 = vpop.permute.xlu0 %7859
    %7861 = vrot.lane.b32.xlu0 %v7510, 32
    %v7862 = vpop.permute.xlu0 %7861
    %7879 = vrot.lane.b32.xlu0 %v7399, 32
    %v7880 = vpop.permute.xlu0 %7879
    %7881 = vrot.lane.b32.xlu0 %v7400, 32
    %v7882 = vpop.permute.xlu0 %7881
    %7883 = vrot.lane.b32.xlu0 %v7401, 32
    %v7884 = vpop.permute.xlu0 %7883
    %7885 = vrot.lane.b32.xlu0 %v7402, 32
    %v7886 = vpop.permute.xlu0 %7885
    %7887 = vrot.lane.b32.xlu0 %v7403, 32
    %v7888 = vpop.permute.xlu0 %7887
    %7889 = vrot.lane.b32.xlu0 %v7404, 32
    %v7890 = vpop.permute.xlu0 %7889
    %7891 = vrot.lane.b32.xlu0 %v7405, 32
    %v7892 = vpop.permute.xlu0 %7891
    %7893 = vrot.lane.b32.xlu0 %v7406, 32
    %v7894 = vpop.permute.xlu0 %7893
    %7895 = vrot.lane.b32.xlu0 %v7407, 32
    %v7896 = vpop.permute.xlu0 %7895
    %7897 = vrot.lane.b32.xlu0 %v7408, 32
    %v7898 = vpop.permute.xlu0 %7897
    %7899 = vrot.lane.b32.xlu0 %v7409, 32
    %v7900 = vpop.permute.xlu0 %7899
    %7901 = vrot.lane.b32.xlu0 %v7410, 32
    %v7902 = vpop.permute.xlu0 %7901
    %7903 = vrot.lane.b32.xlu0 %v7411, 32
    %v7904 = vpop.permute.xlu0 %7903
    %7905 = vrot.lane.b32.xlu0 %v7412, 32
    %v7906 = vpop.permute.xlu0 %7905
    %7907 = vrot.lane.b32.xlu0 %v7413, 32
    %v7908 = vpop.permute.xlu0 %7907
    %7909 = vrot.lane.b32.xlu0 %v7414, 32
    %v7910 = vpop.permute.xlu0 %7909
    %7927 = vrot.lane.b32.xlu0 %v7495, 40
    %v7928 = vpop.permute.xlu0 %7927
    %7929 = vrot.lane.b32.xlu0 %v7496, 40
    %v7930 = vpop.permute.xlu0 %7929
    %7931 = vrot.lane.b32.xlu0 %v7497, 40
    %v7932 = vpop.permute.xlu0 %7931
    %7933 = vrot.lane.b32.xlu0 %v7498, 40
    %v7934 = vpop.permute.xlu0 %7933
    %7935 = vrot.lane.b32.xlu0 %v7499, 40
    %v7936 = vpop.permute.xlu0 %7935
    %7937 = vrot.lane.b32.xlu0 %v7500, 40
    %v7938 = vpop.permute.xlu0 %7937
    %7939 = vrot.lane.b32.xlu0 %v7501, 40
    %v7940 = vpop.permute.xlu0 %7939
    %7941 = vrot.lane.b32.xlu0 %v7502, 40
    %v7942 = vpop.permute.xlu0 %7941
    %7943 = vrot.lane.b32.xlu0 %v7503, 40
    %v7944 = vpop.permute.xlu0 %7943
    %7945 = vrot.lane.b32.xlu0 %v7504, 40
    %v7946 = vpop.permute.xlu0 %7945
    %7947 = vrot.lane.b32.xlu0 %v7505, 40
    %v7948 = vpop.permute.xlu0 %7947
    %7949 = vrot.lane.b32.xlu0 %v7506, 40
    %v7950 = vpop.permute.xlu0 %7949
    %7951 = vrot.lane.b32.xlu0 %v7507, 40
    %v7952 = vpop.permute.xlu0 %7951
    %7953 = vrot.lane.b32.xlu0 %v7508, 40
    %v7954 = vpop.permute.xlu0 %7953
    %7955 = vrot.lane.b32.xlu0 %v7509, 40
    %v7956 = vpop.permute.xlu0 %7955
    %7957 = vrot.lane.b32.xlu0 %v7510, 40
    %v7958 = vpop.permute.xlu0 %7957
    %7975 = vrot.lane.b32.xlu0 %v7399, 40
    %v7976 = vpop.permute.xlu0 %7975
    %7977 = vrot.lane.b32.xlu0 %v7400, 40
    %v7978 = vpop.permute.xlu0 %7977
    %7979 = vrot.lane.b32.xlu0 %v7401, 40
    %v7980 = vpop.permute.xlu0 %7979
    %7981 = vrot.lane.b32.xlu0 %v7402, 40
    %v7982 = vpop.permute.xlu0 %7981
    %7983 = vrot.lane.b32.xlu0 %v7403, 40
    %v7984 = vpop.permute.xlu0 %7983
    %7985 = vrot.lane.b32.xlu0 %v7404, 40
    %v7986 = vpop.permute.xlu0 %7985
    %7987 = vrot.lane.b32.xlu0 %v7405, 40
    %v7988 = vpop.permute.xlu0 %7987
    %7989 = vrot.lane.b32.xlu0 %v7406, 40
    %v7990 = vpop.permute.xlu0 %7989
    %7991 = vrot.lane.b32.xlu0 %v7407, 40
    %v7992 = vpop.permute.xlu0 %7991
    %7993 = vrot.lane.b32.xlu0 %v7408, 40
    %v7994 = vpop.permute.xlu0 %7993
    %7995 = vrot.lane.b32.xlu0 %v7409, 40
    %v7996 = vpop.permute.xlu0 %7995
    %7997 = vrot.lane.b32.xlu0 %v7410, 40
    %v7998 = vpop.permute.xlu0 %7997
    %7999 = vrot.lane.b32.xlu0 %v7411, 40
    %v8000 = vpop.permute.xlu0 %7999
    %8001 = vrot.lane.b32.xlu0 %v7412, 40
    %v8002 = vpop.permute.xlu0 %8001
    %8003 = vrot.lane.b32.xlu0 %v7413, 40
    %v8004 = vpop.permute.xlu0 %8003
    %8005 = vrot.lane.b32.xlu0 %v7414, 40
    %v8006 = vpop.permute.xlu0 %8005
    %8023 = vrot.lane.b32.xlu0 %v7495, 48
    %v8024 = vpop.permute.xlu0 %8023
    %8025 = vrot.lane.b32.xlu0 %v7496, 48
    %v8026 = vpop.permute.xlu0 %8025
    %8027 = vrot.lane.b32.xlu0 %v7497, 48
    %v8028 = vpop.permute.xlu0 %8027
    %8029 = vrot.lane.b32.xlu0 %v7498, 48
    %v8030 = vpop.permute.xlu0 %8029
    %8031 = vrot.lane.b32.xlu0 %v7499, 48
    %v8032 = vpop.permute.xlu0 %8031
    %8033 = vrot.lane.b32.xlu0 %v7500, 48
    %v8034 = vpop.permute.xlu0 %8033
    %8035 = vrot.lane.b32.xlu0 %v7501, 48
    %v8036 = vpop.permute.xlu0 %8035
    %8037 = vrot.lane.b32.xlu0 %v7502, 48
    %v8038 = vpop.permute.xlu0 %8037
    %8039 = vrot.lane.b32.xlu0 %v7503, 48
    %v8040 = vpop.permute.xlu0 %8039
    %8041 = vrot.lane.b32.xlu0 %v7504, 48
    %v8042 = vpop.permute.xlu0 %8041
    %8043 = vrot.lane.b32.xlu0 %v7505, 48
    %v8044 = vpop.permute.xlu0 %8043
    %8045 = vrot.lane.b32.xlu0 %v7506, 48
    %v8046 = vpop.permute.xlu0 %8045
    %8047 = vrot.lane.b32.xlu0 %v7507, 48
    %v8048 = vpop.permute.xlu0 %8047
    %8049 = vrot.lane.b32.xlu0 %v7508, 48
    %v8050 = vpop.permute.xlu0 %8049
    %8051 = vrot.lane.b32.xlu0 %v7509, 48
    %v8052 = vpop.permute.xlu0 %8051
    %8053 = vrot.lane.b32.xlu0 %v7510, 48
    %v8054 = vpop.permute.xlu0 %8053
    %8071 = vrot.lane.b32.xlu0 %v7399, 48
    %v8072 = vpop.permute.xlu0 %8071
    %8073 = vrot.lane.b32.xlu0 %v7400, 48
    %v8074 = vpop.permute.xlu0 %8073
    %8075 = vrot.lane.b32.xlu0 %v7401, 48
    %v8076 = vpop.permute.xlu0 %8075
    %8077 = vrot.lane.b32.xlu0 %v7402, 48
    %v8078 = vpop.permute.xlu0 %8077
    %8079 = vrot.lane.b32.xlu0 %v7403, 48
    %v8080 = vpop.permute.xlu0 %8079
    %8081 = vrot.lane.b32.xlu0 %v7404, 48
    %v8082 = vpop.permute.xlu0 %8081
    %8083 = vrot.lane.b32.xlu0 %v7405, 48
    %v8084 = vpop.permute.xlu0 %8083
    %8085 = vrot.lane.b32.xlu0 %v7406, 48
    %v8086 = vpop.permute.xlu0 %8085
    %8087 = vrot.lane.b32.xlu0 %v7407, 48
    %v8088 = vpop.permute.xlu0 %8087
    %8089 = vrot.lane.b32.xlu0 %v7408, 48
    %v8090 = vpop.permute.xlu0 %8089
    %8091 = vrot.lane.b32.xlu0 %v7409, 48
    %v8092 = vpop.permute.xlu0 %8091
    %8093 = vrot.lane.b32.xlu0 %v7410, 48
    %v8094 = vpop.permute.xlu0 %8093
    %8095 = vrot.lane.b32.xlu0 %v7411, 48
    %v8096 = vpop.permute.xlu0 %8095
    %8097 = vrot.lane.b32.xlu0 %v7412, 48
    %v8098 = vpop.permute.xlu0 %8097
    %8099 = vrot.lane.b32.xlu0 %v7413, 48
    %v8100 = vpop.permute.xlu0 %8099
    %8101 = vrot.lane.b32.xlu0 %v7414, 48
    %v8102 = vpop.permute.xlu0 %8101
    %8119 = vrot.lane.b32.xlu0 %v7495, 56
    %v8120 = vpop.permute.xlu0 %8119
    %8121 = vrot.lane.b32.xlu0 %v7496, 56
    %v8122 = vpop.permute.xlu0 %8121
    %8123 = vrot.lane.b32.xlu0 %v7497, 56
    %v8124 = vpop.permute.xlu0 %8123
    %8125 = vrot.lane.b32.xlu0 %v7498, 56
    %v8126 = vpop.permute.xlu0 %8125
    %8127 = vrot.lane.b32.xlu0 %v7499, 56
    %v8128 = vpop.permute.xlu0 %8127
    %8129 = vrot.lane.b32.xlu0 %v7500, 56
    %v8130 = vpop.permute.xlu0 %8129
    %8131 = vrot.lane.b32.xlu0 %v7501, 56
    %v8132 = vpop.permute.xlu0 %8131
    %8133 = vrot.lane.b32.xlu0 %v7502, 56
    %v8134 = vpop.permute.xlu0 %8133
    %8135 = vrot.lane.b32.xlu0 %v7503, 56
    %v8136 = vpop.permute.xlu0 %8135
    %8137 = vrot.lane.b32.xlu0 %v7504, 56
    %v8138 = vpop.permute.xlu0 %8137
    %8139 = vrot.lane.b32.xlu0 %v7505, 56
    %v8140 = vpop.permute.xlu0 %8139
    %8141 = vrot.lane.b32.xlu0 %v7506, 56
    %v8142 = vpop.permute.xlu0 %8141
    %8143 = vrot.lane.b32.xlu0 %v7507, 56
    %v8144 = vpop.permute.xlu0 %8143
    %8145 = vrot.lane.b32.xlu0 %v7508, 56
    %v8146 = vpop.permute.xlu0 %8145
    %8147 = vrot.lane.b32.xlu0 %v7509, 56
    %v8148 = vpop.permute.xlu0 %8147
    %8149 = vrot.lane.b32.xlu0 %v7510, 56
    %v8150 = vpop.permute.xlu0 %8149
    %8167 = vrot.lane.b32.xlu0 %v7399, 56
    %v8168 = vpop.permute.xlu0 %8167
    %8169 = vrot.lane.b32.xlu0 %v7400, 56
    %v8170 = vpop.permute.xlu0 %8169
    %8171 = vrot.lane.b32.xlu0 %v7401, 56
    %v8172 = vpop.permute.xlu0 %8171
    %8173 = vrot.lane.b32.xlu0 %v7402, 56
    %v8174 = vpop.permute.xlu0 %8173
    %8175 = vrot.lane.b32.xlu0 %v7403, 56
    %v8176 = vpop.permute.xlu0 %8175
    %8177 = vrot.lane.b32.xlu0 %v7404, 56
    %v8178 = vpop.permute.xlu0 %8177
    %8179 = vrot.lane.b32.xlu0 %v7405, 56
    %v8180 = vpop.permute.xlu0 %8179
    %8181 = vrot.lane.b32.xlu0 %v7406, 56
    %v8182 = vpop.permute.xlu0 %8181
    %8183 = vrot.lane.b32.xlu0 %v7407, 56
    %v8184 = vpop.permute.xlu0 %8183
    %8185 = vrot.lane.b32.xlu0 %v7408, 56
    %v8186 = vpop.permute.xlu0 %8185
    %8187 = vrot.lane.b32.xlu0 %v7409, 56
    %v8188 = vpop.permute.xlu0 %8187
    %8189 = vrot.lane.b32.xlu0 %v7410, 56
    %v8190 = vpop.permute.xlu0 %8189
    %8191 = vrot.lane.b32.xlu0 %v7411, 56
    %v8192 = vpop.permute.xlu0 %8191
    %8193 = vrot.lane.b32.xlu0 %v7412, 56
    %v8194 = vpop.permute.xlu0 %8193
    %8195 = vrot.lane.b32.xlu0 %v7413, 56
    %v8196 = vpop.permute.xlu0 %8195
    %8197 = vrot.lane.b32.xlu0 %v7414, 56
    %v8198 = vpop.permute.xlu0 %8197
    %8215 = vrot.lane.b32.xlu0 %v7495, 64
    %v8216 = vpop.permute.xlu0 %8215
    %8217 = vrot.lane.b32.xlu0 %v7496, 64
    %v8218 = vpop.permute.xlu0 %8217
    %8219 = vrot.lane.b32.xlu0 %v7497, 64
    %v8220 = vpop.permute.xlu0 %8219
    %8221 = vrot.lane.b32.xlu0 %v7498, 64
    %v8222 = vpop.permute.xlu0 %8221
    %8223 = vrot.lane.b32.xlu0 %v7499, 64
    %v8224 = vpop.permute.xlu0 %8223
    %8225 = vrot.lane.b32.xlu0 %v7500, 64
    %v8226 = vpop.permute.xlu0 %8225
    %8227 = vrot.lane.b32.xlu0 %v7501, 64
    %v8228 = vpop.permute.xlu0 %8227
    %8229 = vrot.lane.b32.xlu0 %v7502, 64
    %v8230 = vpop.permute.xlu0 %8229
    %8231 = vrot.lane.b32.xlu0 %v7503, 64
    %v8232 = vpop.permute.xlu0 %8231
    %8233 = vrot.lane.b32.xlu0 %v7504, 64
    %v8234 = vpop.permute.xlu0 %8233
    %8235 = vrot.lane.b32.xlu0 %v7505, 64
    %v8236 = vpop.permute.xlu0 %8235
    %8237 = vrot.lane.b32.xlu0 %v7506, 64
    %v8238 = vpop.permute.xlu0 %8237
    %8239 = vrot.lane.b32.xlu0 %v7507, 64
    %v8240 = vpop.permute.xlu0 %8239
    %8241 = vrot.lane.b32.xlu0 %v7508, 64
    %v8242 = vpop.permute.xlu0 %8241
    %8243 = vrot.lane.b32.xlu0 %v7509, 64
    %v8244 = vpop.permute.xlu0 %8243
    %8245 = vrot.lane.b32.xlu0 %v7510, 64
    %v8246 = vpop.permute.xlu0 %8245
    %v8263 = vsel %vm2054, %v7399, %v7528
    %v8264 = vsel %vm2054, %v7400, %v7530
    %v8265 = vsel %vm2054, %v7401, %v7532
    %v8266 = vsel %vm2054, %v7402, %v7534
    %v8267 = vsel %vm2054, %v7403, %v7536
    %v8268 = vsel %vm2054, %v7404, %v7538
    %v8269 = vsel %vm2054, %v7405, %v7540
    %v8270 = vsel %vm2054, %v7406, %v7542
    %v8271 = vsel %vm2054, %v7407, %v7544
    %v8272 = vsel %vm2054, %v7408, %v7546
    %v8273 = vsel %vm2054, %v7409, %v7548
    %v8274 = vsel %vm2054, %v7410, %v7550
    %v8275 = vsel %vm2054, %v7411, %v7552
    %v8276 = vsel %vm2054, %v7412, %v7554
    %v8277 = vsel %vm2054, %v7413, %v7556
    %v8278 = vsel %vm2054, %v7414, %v7558
    %v8279 = vsel %vm2056, %v8263, %v7592
    %v8280 = vsel %vm2056, %v8264, %v7594
    %v8281 = vsel %vm2056, %v8265, %v7596
    %v8282 = vsel %vm2056, %v8266, %v7598
    %v8283 = vsel %vm2056, %v8267, %v7600
    %v8284 = vsel %vm2056, %v8268, %v7602
    %v8285 = vsel %vm2056, %v8269, %v7604
    %v8286 = vsel %vm2056, %v8270, %v7606
    %v8287 = vsel %vm2056, %v8271, %v7608
    %v8288 = vsel %vm2056, %v8272, %v7610
    %v8289 = vsel %vm2056, %v8273, %v7612
    %v8290 = vsel %vm2056, %v8274, %v7614
    %v8291 = vsel %vm2056, %v8275, %v7616
    %v8292 = vsel %vm2056, %v8276, %v7618
    %v8293 = vsel %vm2056, %v8277, %v7620
    %v8294 = vsel %vm2056, %v8278, %v7622
    %v8295 = vsel %vm2058, %v8279, %v7640
    %v8296 = vsel %vm2058, %v8280, %v7642
    %v8297 = vsel %vm2058, %v8281, %v7644
    %v8298 = vsel %vm2058, %v8282, %v7646
    %v8299 = vsel %vm2058, %v8283, %v7648
    %v8300 = vsel %vm2058, %v8284, %v7650
    %v8301 = vsel %vm2058, %v8285, %v7652
    %v8302 = vsel %vm2058, %v8286, %v7654
    %v8303 = vsel %vm2058, %v8287, %v7656
    %v8304 = vsel %vm2058, %v8288, %v7658
    %v8305 = vsel %vm2058, %v8289, %v7660
    %v8306 = vsel %vm2058, %v8290, %v7662
    %v8307 = vsel %vm2058, %v8291, %v7664
    %v8308 = vsel %vm2058, %v8292, %v7666
    %v8309 = vsel %vm2058, %v8293, %v7668
    %v8310 = vsel %vm2058, %v8294, %v7670
    %v8311 = vsel %vm2060, %v8295, %v7688
    %v8312 = vsel %vm2060, %v8296, %v7690
    %v8313 = vsel %vm2060, %v8297, %v7692
    %v8314 = vsel %vm2060, %v8298, %v7694
    %v8315 = vsel %vm2060, %v8299, %v7696
    %v8316 = vsel %vm2060, %v8300, %v7698
    %v8317 = vsel %vm2060, %v8301, %v7700
    %v8318 = vsel %vm2060, %v8302, %v7702
    %v8319 = vsel %vm2060, %v8303, %v7704
    %v8320 = vsel %vm2060, %v8304, %v7706
    %v8321 = vsel %vm2060, %v8305, %v7708
    %v8322 = vsel %vm2060, %v8306, %v7710
    %v8323 = vsel %vm2060, %v8307, %v7712
    %v8324 = vsel %vm2060, %v8308, %v7714
    %v8325 = vsel %vm2060, %v8309, %v7716
    %v8326 = vsel %vm2060, %v8310, %v7718
    %v8327 = vsel %vm2062, %v8311, %v7736
    %v8328 = vsel %vm2062, %v8312, %v7738
    %v8329 = vsel %vm2062, %v8313, %v7740
    %v8330 = vsel %vm2062, %v8314, %v7742
    %v8331 = vsel %vm2062, %v8315, %v7744
    %v8332 = vsel %vm2062, %v8316, %v7746
    %v8333 = vsel %vm2062, %v8317, %v7748
    %v8334 = vsel %vm2062, %v8318, %v7750
    %v8335 = vsel %vm2062, %v8319, %v7752
    %v8336 = vsel %vm2062, %v8320, %v7754
    %v8337 = vsel %vm2062, %v8321, %v7756
    %v8338 = vsel %vm2062, %v8322, %v7758
    %v8339 = vsel %vm2062, %v8323, %v7760
    %v8340 = vsel %vm2062, %v8324, %v7762
    %v8341 = vsel %vm2062, %v8325, %v7764
    %v8342 = vsel %vm2062, %v8326, %v7766
    %v8343 = vsel %vm2064, %v8327, %v7784
    %v8344 = vsel %vm2064, %v8328, %v7786
    %v8345 = vsel %vm2064, %v8329, %v7788
    %v8346 = vsel %vm2064, %v8330, %v7790
    %v8347 = vsel %vm2064, %v8331, %v7792
    %v8348 = vsel %vm2064, %v8332, %v7794
    %v8349 = vsel %vm2064, %v8333, %v7796
    %v8350 = vsel %vm2064, %v8334, %v7798
    %v8351 = vsel %vm2064, %v8335, %v7800
    %v8352 = vsel %vm2064, %v8336, %v7802
    %v8353 = vsel %vm2064, %v8337, %v7804
    %v8354 = vsel %vm2064, %v8338, %v7806
    %v8355 = vsel %vm2064, %v8339, %v7808
    %v8356 = vsel %vm2064, %v8340, %v7810
    %v8357 = vsel %vm2064, %v8341, %v7812
    %v8358 = vsel %vm2064, %v8342, %v7814
    %v8359 = vsel %vm2066, %v8343, %v7832
    %v8360 = vsel %vm2066, %v8344, %v7834
    %v8361 = vsel %vm2066, %v8345, %v7836
    %v8362 = vsel %vm2066, %v8346, %v7838
    %v8363 = vsel %vm2066, %v8347, %v7840
    %v8364 = vsel %vm2066, %v8348, %v7842
    %v8365 = vsel %vm2066, %v8349, %v7844
    %v8366 = vsel %vm2066, %v8350, %v7846
    %v8367 = vsel %vm2066, %v8351, %v7848
    %v8368 = vsel %vm2066, %v8352, %v7850
    %v8369 = vsel %vm2066, %v8353, %v7852
    %v8370 = vsel %vm2066, %v8354, %v7854
    %v8371 = vsel %vm2066, %v8355, %v7856
    %v8372 = vsel %vm2066, %v8356, %v7858
    %v8373 = vsel %vm2066, %v8357, %v7860
    %v8374 = vsel %vm2066, %v8358, %v7862
    %v8375 = vsel %vm1865, %v8359, %v7880
    %v8376 = vsel %vm1865, %v8360, %v7882
    %v8377 = vsel %vm1865, %v8361, %v7884
    %v8378 = vsel %vm1865, %v8362, %v7886
    %v8379 = vsel %vm1865, %v8363, %v7888
    %v8380 = vsel %vm1865, %v8364, %v7890
    %v8381 = vsel %vm1865, %v8365, %v7892
    %v8382 = vsel %vm1865, %v8366, %v7894
    %v8383 = vsel %vm1865, %v8367, %v7896
    %v8384 = vsel %vm1865, %v8368, %v7898
    %v8385 = vsel %vm1865, %v8369, %v7900
    %v8386 = vsel %vm1865, %v8370, %v7902
    %v8387 = vsel %vm1865, %v8371, %v7904
    %v8388 = vsel %vm1865, %v8372, %v7906
    %v8389 = vsel %vm1865, %v8373, %v7908
    %v8390 = vsel %vm1865, %v8374, %v7910
    %v8391 = vsel %vm2237, %v8375, %v7928
    %v8392 = vsel %vm2237, %v8376, %v7930
    %v8393 = vsel %vm2237, %v8377, %v7932
    %v8394 = vsel %vm2237, %v8378, %v7934
    %v8395 = vsel %vm2237, %v8379, %v7936
    %v8396 = vsel %vm2237, %v8380, %v7938
    %v8397 = vsel %vm2237, %v8381, %v7940
    %v8398 = vsel %vm2237, %v8382, %v7942
    %v8399 = vsel %vm2237, %v8383, %v7944
    %v8400 = vsel %vm2237, %v8384, %v7946
    %v8401 = vsel %vm2237, %v8385, %v7948
    %v8402 = vsel %vm2237, %v8386, %v7950
    %v8403 = vsel %vm2237, %v8387, %v7952
    %v8404 = vsel %vm2237, %v8388, %v7954
    %v8405 = vsel %vm2237, %v8389, %v7956
    %v8406 = vsel %vm2237, %v8390, %v7958
    %v8407 = vsel %vm169, %v8391, %v7976
    %v8408 = vsel %vm169, %v8392, %v7978
    %v8409 = vsel %vm169, %v8393, %v7980
    %v8410 = vsel %vm169, %v8394, %v7982
    %v8411 = vsel %vm169, %v8395, %v7984
    %v8412 = vsel %vm169, %v8396, %v7986
    %v8413 = vsel %vm169, %v8397, %v7988
    %v8414 = vsel %vm169, %v8398, %v7990
    %v8415 = vsel %vm169, %v8399, %v7992
    %v8416 = vsel %vm169, %v8400, %v7994
    %v8417 = vsel %vm169, %v8401, %v7996
    %v8418 = vsel %vm169, %v8402, %v7998
    %v8419 = vsel %vm169, %v8403, %v8000
    %v8420 = vsel %vm169, %v8404, %v8002
    %v8421 = vsel %vm169, %v8405, %v8004
    %v8422 = vsel %vm169, %v8406, %v8006
    %v8423 = vsel %vm5743, %v8407, %v8024
    %v8424 = vsel %vm5743, %v8408, %v8026
    %v8425 = vsel %vm5743, %v8409, %v8028
    %v8426 = vsel %vm5743, %v8410, %v8030
    %v8427 = vsel %vm5743, %v8411, %v8032
    %v8428 = vsel %vm5743, %v8412, %v8034
    %v8429 = vsel %vm5743, %v8413, %v8036
    %v8430 = vsel %vm5743, %v8414, %v8038
    %v8431 = vsel %vm5743, %v8415, %v8040
    %v8432 = vsel %vm5743, %v8416, %v8042
    %v8433 = vsel %vm5743, %v8417, %v8044
    %v8434 = vsel %vm5743, %v8418, %v8046
    %v8435 = vsel %vm5743, %v8419, %v8048
    %v8436 = vsel %vm5743, %v8420, %v8050
    %v8437 = vsel %vm5743, %v8421, %v8052
    %v8438 = vsel %vm5743, %v8422, %v8054
    %v8439 = vsel %vm5760, %v8423, %v8072
    %v8440 = vsel %vm5760, %v8424, %v8074
    %v8441 = vsel %vm5760, %v8425, %v8076
    %v8442 = vsel %vm5760, %v8426, %v8078
    %v8443 = vsel %vm5760, %v8427, %v8080
    %v8444 = vsel %vm5760, %v8428, %v8082
    %v8445 = vsel %vm5760, %v8429, %v8084
    %v8446 = vsel %vm5760, %v8430, %v8086
    %v8447 = vsel %vm5760, %v8431, %v8088
    %v8448 = vsel %vm5760, %v8432, %v8090
    %v8449 = vsel %vm5760, %v8433, %v8092
    %v8450 = vsel %vm5760, %v8434, %v8094
    %v8451 = vsel %vm5760, %v8435, %v8096
    %v8452 = vsel %vm5760, %v8436, %v8098
    %v8453 = vsel %vm5760, %v8437, %v8100
    %v8454 = vsel %vm5760, %v8438, %v8102
    %v8455 = vsel %vm5777, %v8439, %v8120
    %v8456 = vsel %vm5777, %v8440, %v8122
    %v8457 = vsel %vm5777, %v8441, %v8124
    %v8458 = vsel %vm5777, %v8442, %v8126
    %v8459 = vsel %vm5777, %v8443, %v8128
    %v8460 = vsel %vm5777, %v8444, %v8130
    %v8461 = vsel %vm5777, %v8445, %v8132
    %v8462 = vsel %vm5777, %v8446, %v8134
    %v8463 = vsel %vm5777, %v8447, %v8136
    %v8464 = vsel %vm5777, %v8448, %v8138
    %v8465 = vsel %vm5777, %v8449, %v8140
    %v8466 = vsel %vm5777, %v8450, %v8142
    %v8467 = vsel %vm5777, %v8451, %v8144
    %v8468 = vsel %vm5777, %v8452, %v8146
    %v8469 = vsel %vm5777, %v8453, %v8148
    %v8470 = vsel %vm5777, %v8454, %v8150
    %v8471 = vsel %vm5794, %v8455, %v8168
    %v8472 = vsel %vm5794, %v8456, %v8170
    %v8473 = vsel %vm5794, %v8457, %v8172
    %v8474 = vsel %vm5794, %v8458, %v8174
    %v8475 = vsel %vm5794, %v8459, %v8176
    %v8476 = vsel %vm5794, %v8460, %v8178
    %v8477 = vsel %vm5794, %v8461, %v8180
    %v8478 = vsel %vm5794, %v8462, %v8182
    %v8479 = vsel %vm5794, %v8463, %v8184
    %v8480 = vsel %vm5794, %v8464, %v8186
    %v8481 = vsel %vm5794, %v8465, %v8188
    %v8482 = vsel %vm5794, %v8466, %v8190
    %v8483 = vsel %vm5794, %v8467, %v8192
    %v8484 = vsel %vm5794, %v8468, %v8194
    %v8485 = vsel %vm5794, %v8469, %v8196
    %v8486 = vsel %vm5794, %v8470, %v8198
    %v8487 = vsel %vm5811, %v8471, %v8216
    %v8488 = vsel %vm5811, %v8472, %v8218
    %v8489 = vsel %vm5811, %v8473, %v8220
    %v8490 = vsel %vm5811, %v8474, %v8222
    %v8491 = vsel %vm5811, %v8475, %v8224
    %v8492 = vsel %vm5811, %v8476, %v8226
    %v8493 = vsel %vm5811, %v8477, %v8228
    %v8494 = vsel %vm5811, %v8478, %v8230
    %v8495 = vsel %vm5811, %v8479, %v8232
    %v8496 = vsel %vm5811, %v8480, %v8234
    %v8497 = vsel %vm5811, %v8481, %v8236
    %v8498 = vsel %vm5811, %v8482, %v8238
    %v8499 = vsel %vm5811, %v8483, %v8240
    %v8500 = vsel %vm5811, %v8484, %v8242
    %v8501 = vsel %vm5811, %v8485, %v8244
    %v8502 = vsel %vm5811, %v8486, %v8246
    %s8503 = scalar_lea.vmem [#allocation2], 256
    %8504 = vst [vmem:[%s8503] sm:$0xff] %v8487
    %8505 = vst [vmem:[%s8503 + $0x8] sm:$0xff] %v8488
    %8506 = vst [vmem:[%s8503 + $0x10] sm:$0xff] %v8489
    %8507 = vst [vmem:[%s8503 + $0x18] sm:$0xff] %v8490
    %8508 = vst [vmem:[%s8503 + $0x20] sm:$0xff] %v8491
    %8509 = vst [vmem:[%s8503 + $0x28] sm:$0xff] %v8492
    %8510 = vst [vmem:[%s8503 + $0x30] sm:$0xff] %v8493
    %8511 = vst [vmem:[%s8503 + $0x38] sm:$0xff] %v8494
    %8512 = vst [vmem:[%s8503 + $0x40] sm:$0xff] %v8495
    %8513 = vst [vmem:[%s8503 + $0x48] sm:$0xff] %v8496
    %8514 = vst [vmem:[%s8503 + $0x50] sm:$0xff] %v8497
    %8515 = vst [vmem:[%s8503 + $0x58] sm:$0xff] %v8498
    %8516 = vst [vmem:[%s8503 + $0x60] sm:$0xff] %v8499
    %8517 = vst [vmem:[%s8503 + $0x68] sm:$0xff] %v8500
    %8518 = vst [vmem:[%s8503 + $0x70] sm:$0xff] %v8501
    %8519 = vst [vmem:[%s8503 + $0x78] sm:$0xff] %v8502
    %v8520 = vrot.slane %v7159, 1
    %v8521 = vrot.slane %v7160, 1
    %v8522 = vrot.slane %v7161, 1
    %v8523 = vrot.slane %v7162, 1
    %v8524 = vrot.slane %v7163, 1
    %v8525 = vrot.slane %v7164, 1
    %v8526 = vrot.slane %v7165, 1
    %v8527 = vrot.slane %v7166, 1
    %v8528 = vrot.slane %v7167, 1
    %v8529 = vrot.slane %v7168, 1
    %v8530 = vrot.slane %v7169, 1
    %v8531 = vrot.slane %v7170, 1
    %v8532 = vrot.slane %v7171, 1
    %v8533 = vrot.slane %v7172, 1
    %v8534 = vrot.slane %v7173, 1
    %v8535 = vrot.slane %v7174, 1
    %v8552 = vsel %vm109, %v8520, %v7159
    %v8553 = vsel %vm109, %v8521, %v7160
    %v8554 = vsel %vm109, %v8522, %v7161
    %v8555 = vsel %vm109, %v8523, %v7162
    %v8556 = vsel %vm109, %v8524, %v7163
    %v8557 = vsel %vm109, %v8525, %v7164
    %v8558 = vsel %vm109, %v8526, %v7165
    %v8559 = vsel %vm109, %v8527, %v7166
    %v8560 = vsel %vm109, %v8528, %v7167
    %v8561 = vsel %vm109, %v8529, %v7168
    %v8562 = vsel %vm109, %v8530, %v7169
    %v8563 = vsel %vm109, %v8531, %v7170
    %v8564 = vsel %vm109, %v8532, %v7171
    %v8565 = vsel %vm109, %v8533, %v7172
    %v8566 = vsel %vm109, %v8534, %v7173
    %v8567 = vsel %vm109, %v8535, %v7174
    %v8568 = vmul.f32 %v8552, 0.25
    %v8569 = vmul.f32 %v8553, 0.25
    %v8570 = vmul.f32 %v8554, 0.25
    %v8571 = vmul.f32 %v8555, 0.25
    %v8572 = vmul.f32 %v8556, 0.25
    %v8573 = vmul.f32 %v8557, 0.25
    %v8574 = vmul.f32 %v8558, 0.25
    %v8575 = vmul.f32 %v8559, 0.25
    %v8576 = vmul.f32 %v8560, 0.25
    %v8577 = vmul.f32 %v8561, 0.25
    %v8578 = vmul.f32 %v8562, 0.25
    %v8579 = vmul.f32 %v8563, 0.25
    %v8580 = vmul.f32 %v8564, 0.25
    %v8581 = vmul.f32 %v8565, 0.25
    %v8582 = vmul.f32 %v8566, 0.25
    %v8583 = vmul.f32 %v8567, 0.25
    %v8584 = vadd.f32 %v7175, %v8568
    %v8585 = vadd.f32 %v7176, %v8569
    %v8586 = vadd.f32 %v7177, %v8570
    %v8587 = vadd.f32 %v7178, %v8571
    %v8588 = vadd.f32 %v7179, %v8572
    %v8589 = vadd.f32 %v7180, %v8573
    %v8590 = vadd.f32 %v7181, %v8574
    %v8591 = vadd.f32 %v7182, %v8575
    %v8592 = vadd.f32 %v7183, %v8576
    %v8593 = vadd.f32 %v7184, %v8577
    %v8594 = vadd.f32 %v7185, %v8578
    %v8595 = vadd.f32 %v7186, %v8579
    %v8596 = vadd.f32 %v7187, %v8580
    %v8597 = vadd.f32 %v7188, %v8581
    %v8598 = vadd.f32 %v7189, %v8582
    %v8599 = vadd.f32 %v7190, %v8583
    %v8600 = vmul.f32 %v8584, 0.75
    %v8601 = vmul.f32 %v8585, 0.75
    %v8602 = vmul.f32 %v8586, 0.75
    %v8603 = vmul.f32 %v8587, 0.75
    %v8604 = vmul.f32 %v8588, 0.75
    %v8605 = vmul.f32 %v8589, 0.75
    %v8606 = vmul.f32 %v8590, 0.75
    %v8607 = vmul.f32 %v8591, 0.75
    %v8608 = vmul.f32 %v8592, 0.75
    %v8609 = vmul.f32 %v8593, 0.75
    %v8610 = vmul.f32 %v8594, 0.75
    %v8611 = vmul.f32 %v8595, 0.75
    %v8612 = vmul.f32 %v8596, 0.75
    %v8613 = vmul.f32 %v8597, 0.75
    %v8614 = vmul.f32 %v8598, 0.75
    %v8615 = vmul.f32 %v8599, 0.75
    %8632 = vrot.lane.b32.xlu0 %v8584, 8
    %v8633 = vpop.permute.xlu0 %8632
    %8634 = vrot.lane.b32.xlu0 %v8585, 8
    %v8635 = vpop.permute.xlu0 %8634
    %8636 = vrot.lane.b32.xlu0 %v8586, 8
    %v8637 = vpop.permute.xlu0 %8636
    %8638 = vrot.lane.b32.xlu0 %v8587, 8
    %v8639 = vpop.permute.xlu0 %8638
    %8640 = vrot.lane.b32.xlu0 %v8588, 8
    %v8641 = vpop.permute.xlu0 %8640
    %8642 = vrot.lane.b32.xlu0 %v8589, 8
    %v8643 = vpop.permute.xlu0 %8642
    %8644 = vrot.lane.b32.xlu0 %v8590, 8
    %v8645 = vpop.permute.xlu0 %8644
    %8646 = vrot.lane.b32.xlu0 %v8591, 8
    %v8647 = vpop.permute.xlu0 %8646
    %8648 = vrot.lane.b32.xlu0 %v8592, 8
    %v8649 = vpop.permute.xlu0 %8648
    %8650 = vrot.lane.b32.xlu0 %v8593, 8
    %v8651 = vpop.permute.xlu0 %8650
    %8652 = vrot.lane.b32.xlu0 %v8594, 8
    %v8653 = vpop.permute.xlu0 %8652
    %8654 = vrot.lane.b32.xlu0 %v8595, 8
    %v8655 = vpop.permute.xlu0 %8654
    %8656 = vrot.lane.b32.xlu0 %v8596, 8
    %v8657 = vpop.permute.xlu0 %8656
    %8658 = vrot.lane.b32.xlu0 %v8597, 8
    %v8659 = vpop.permute.xlu0 %8658
    %8660 = vrot.lane.b32.xlu0 %v8598, 8
    %v8661 = vpop.permute.xlu0 %8660
    %8662 = vrot.lane.b32.xlu0 %v8599, 8
    %v8663 = vpop.permute.xlu0 %8662
    %v8680 = vsel %vm2054, %v8584, %v8633
    %v8681 = vsel %vm2054, %v8585, %v8635
    %v8682 = vsel %vm2054, %v8586, %v8637
    %v8683 = vsel %vm2054, %v8587, %v8639
    %v8684 = vsel %vm2054, %v8588, %v8641
    %v8685 = vsel %vm2054, %v8589, %v8643
    %v8686 = vsel %vm2054, %v8590, %v8645
    %v8687 = vsel %vm2054, %v8591, %v8647
    %v8688 = vsel %vm2054, %v8592, %v8649
    %v8689 = vsel %vm2054, %v8593, %v8651
    %v8690 = vsel %vm2054, %v8594, %v8653
    %v8691 = vsel %vm2054, %v8595, %v8655
    %v8692 = vsel %vm2054, %v8596, %v8657
    %v8693 = vsel %vm2054, %v8597, %v8659
    %v8694 = vsel %vm2054, %v8598, %v8661
    %v8695 = vsel %vm2054, %v8599, %v8663
    %v8696 = vmul.f32 %v8680, 0.25
    %v8697 = vmul.f32 %v8681, 0.25
    %v8698 = vmul.f32 %v8682, 0.25
    %v8699 = vmul.f32 %v8683, 0.25
    %v8700 = vmul.f32 %v8684, 0.25
    %v8701 = vmul.f32 %v8685, 0.25
    %v8702 = vmul.f32 %v8686, 0.25
    %v8703 = vmul.f32 %v8687, 0.25
    %v8704 = vmul.f32 %v8688, 0.25
    %v8705 = vmul.f32 %v8689, 0.25
    %v8706 = vmul.f32 %v8690, 0.25
    %v8707 = vmul.f32 %v8691, 0.25
    %v8708 = vmul.f32 %v8692, 0.25
    %v8709 = vmul.f32 %v8693, 0.25
    %v8710 = vmul.f32 %v8694, 0.25
    %v8711 = vmul.f32 %v8695, 0.25
    %v8712 = vadd.f32 %v8600, %v8696
    %v8713 = vadd.f32 %v8601, %v8697
    %v8714 = vadd.f32 %v8602, %v8698
    %v8715 = vadd.f32 %v8603, %v8699
    %v8716 = vadd.f32 %v8604, %v8700
    %v8717 = vadd.f32 %v8605, %v8701
    %v8718 = vadd.f32 %v8606, %v8702
    %v8719 = vadd.f32 %v8607, %v8703
    %v8720 = vadd.f32 %v8608, %v8704
    %v8721 = vadd.f32 %v8609, %v8705
    %v8722 = vadd.f32 %v8610, %v8706
    %v8723 = vadd.f32 %v8611, %v8707
    %v8724 = vadd.f32 %v8612, %v8708
    %v8725 = vadd.f32 %v8613, %v8709
    %v8726 = vadd.f32 %v8614, %v8710
    %v8727 = vadd.f32 %v8615, %v8711
    %8728 = vrot.lane.b32.xlu0 %v8584, 120
    %v8729 = vpop.permute.xlu0 %8728
    %8730 = vrot.lane.b32.xlu0 %v8585, 120
    %v8731 = vpop.permute.xlu0 %8730
    %8732 = vrot.lane.b32.xlu0 %v8586, 120
    %v8733 = vpop.permute.xlu0 %8732
    %8734 = vrot.lane.b32.xlu0 %v8587, 120
    %v8735 = vpop.permute.xlu0 %8734
    %8736 = vrot.lane.b32.xlu0 %v8588, 120
    %v8737 = vpop.permute.xlu0 %8736
    %8738 = vrot.lane.b32.xlu0 %v8589, 120
    %v8739 = vpop.permute.xlu0 %8738
    %8740 = vrot.lane.b32.xlu0 %v8590, 120
    %v8741 = vpop.permute.xlu0 %8740
    %8742 = vrot.lane.b32.xlu0 %v8591, 120
    %v8743 = vpop.permute.xlu0 %8742
    %8744 = vrot.lane.b32.xlu0 %v8592, 120
    %v8745 = vpop.permute.xlu0 %8744
    %8746 = vrot.lane.b32.xlu0 %v8593, 120
    %v8747 = vpop.permute.xlu0 %8746
    %8748 = vrot.lane.b32.xlu0 %v8594, 120
    %v8749 = vpop.permute.xlu0 %8748
    %8750 = vrot.lane.b32.xlu0 %v8595, 120
    %v8751 = vpop.permute.xlu0 %8750
    %8752 = vrot.lane.b32.xlu0 %v8596, 120
    %v8753 = vpop.permute.xlu0 %8752
    %8754 = vrot.lane.b32.xlu0 %v8597, 120
    %v8755 = vpop.permute.xlu0 %8754
    %8756 = vrot.lane.b32.xlu0 %v8598, 120
    %v8757 = vpop.permute.xlu0 %8756
    %8758 = vrot.lane.b32.xlu0 %v8599, 120
    %v8759 = vpop.permute.xlu0 %8758
    %v8776 = vsel %vm2066, %v8729, %v8584
    %v8777 = vsel %vm2066, %v8731, %v8585
    %v8778 = vsel %vm2066, %v8733, %v8586
    %v8779 = vsel %vm2066, %v8735, %v8587
    %v8780 = vsel %vm2066, %v8737, %v8588
    %v8781 = vsel %vm2066, %v8739, %v8589
    %v8782 = vsel %vm2066, %v8741, %v8590
    %v8783 = vsel %vm2066, %v8743, %v8591
    %v8784 = vsel %vm2066, %v8745, %v8592
    %v8785 = vsel %vm2066, %v8747, %v8593
    %v8786 = vsel %vm2066, %v8749, %v8594
    %v8787 = vsel %vm2066, %v8751, %v8595
    %v8788 = vsel %vm2066, %v8753, %v8596
    %v8789 = vsel %vm2066, %v8755, %v8597
    %v8790 = vsel %vm2066, %v8757, %v8598
    %v8791 = vsel %vm2066, %v8759, %v8599
    %v8792 = vmul.f32 %v8776, 0.25
    %v8793 = vmul.f32 %v8777, 0.25
    %v8794 = vmul.f32 %v8778, 0.25
    %v8795 = vmul.f32 %v8779, 0.25
    %v8796 = vmul.f32 %v8780, 0.25
    %v8797 = vmul.f32 %v8781, 0.25
    %v8798 = vmul.f32 %v8782, 0.25
    %v8799 = vmul.f32 %v8783, 0.25
    %v8800 = vmul.f32 %v8784, 0.25
    %v8801 = vmul.f32 %v8785, 0.25
    %v8802 = vmul.f32 %v8786, 0.25
    %v8803 = vmul.f32 %v8787, 0.25
    %v8804 = vmul.f32 %v8788, 0.25
    %v8805 = vmul.f32 %v8789, 0.25
    %v8806 = vmul.f32 %v8790, 0.25
    %v8807 = vmul.f32 %v8791, 0.25
    %v8808 = vadd.f32 %v8600, %v8792
    %v8809 = vadd.f32 %v8601, %v8793
    %v8810 = vadd.f32 %v8602, %v8794
    %v8811 = vadd.f32 %v8603, %v8795
    %v8812 = vadd.f32 %v8604, %v8796
    %v8813 = vadd.f32 %v8605, %v8797
    %v8814 = vadd.f32 %v8606, %v8798
    %v8815 = vadd.f32 %v8607, %v8799
    %v8816 = vadd.f32 %v8608, %v8800
    %v8817 = vadd.f32 %v8609, %v8801
    %v8818 = vadd.f32 %v8610, %v8802
    %v8819 = vadd.f32 %v8611, %v8803
    %v8820 = vadd.f32 %v8612, %v8804
    %v8821 = vadd.f32 %v8613, %v8805
    %v8822 = vadd.f32 %v8614, %v8806
    %v8823 = vadd.f32 %v8615, %v8807
    %8840 = vrot.lane.b32.xlu0 %v8808, 8
    %v8841 = vpop.permute.xlu0 %8840
    %8842 = vrot.lane.b32.xlu0 %v8809, 8
    %v8843 = vpop.permute.xlu0 %8842
    %8844 = vrot.lane.b32.xlu0 %v8810, 8
    %v8845 = vpop.permute.xlu0 %8844
    %8846 = vrot.lane.b32.xlu0 %v8811, 8
    %v8847 = vpop.permute.xlu0 %8846
    %8848 = vrot.lane.b32.xlu0 %v8812, 8
    %v8849 = vpop.permute.xlu0 %8848
    %8850 = vrot.lane.b32.xlu0 %v8813, 8
    %v8851 = vpop.permute.xlu0 %8850
    %8852 = vrot.lane.b32.xlu0 %v8814, 8
    %v8853 = vpop.permute.xlu0 %8852
    %8854 = vrot.lane.b32.xlu0 %v8815, 8
    %v8855 = vpop.permute.xlu0 %8854
    %8856 = vrot.lane.b32.xlu0 %v8816, 8
    %v8857 = vpop.permute.xlu0 %8856
    %8858 = vrot.lane.b32.xlu0 %v8817, 8
    %v8859 = vpop.permute.xlu0 %8858
    %8860 = vrot.lane.b32.xlu0 %v8818, 8
    %v8861 = vpop.permute.xlu0 %8860
    %8862 = vrot.lane.b32.xlu0 %v8819, 8
    %v8863 = vpop.permute.xlu0 %8862
    %8864 = vrot.lane.b32.xlu0 %v8820, 8
    %v8865 = vpop.permute.xlu0 %8864
    %8866 = vrot.lane.b32.xlu0 %v8821, 8
    %v8867 = vpop.permute.xlu0 %8866
    %8868 = vrot.lane.b32.xlu0 %v8822, 8
    %v8869 = vpop.permute.xlu0 %8868
    %8870 = vrot.lane.b32.xlu0 %v8823, 8
    %v8871 = vpop.permute.xlu0 %8870
    %8904 = vrot.lane.b32.xlu0 %v8712, 8
    %v8905 = vpop.permute.xlu0 %8904
    %8906 = vrot.lane.b32.xlu0 %v8713, 8
    %v8907 = vpop.permute.xlu0 %8906
    %8908 = vrot.lane.b32.xlu0 %v8714, 8
    %v8909 = vpop.permute.xlu0 %8908
    %8910 = vrot.lane.b32.xlu0 %v8715, 8
    %v8911 = vpop.permute.xlu0 %8910
    %8912 = vrot.lane.b32.xlu0 %v8716, 8
    %v8913 = vpop.permute.xlu0 %8912
    %8914 = vrot.lane.b32.xlu0 %v8717, 8
    %v8915 = vpop.permute.xlu0 %8914
    %8916 = vrot.lane.b32.xlu0 %v8718, 8
    %v8917 = vpop.permute.xlu0 %8916
    %8918 = vrot.lane.b32.xlu0 %v8719, 8
    %v8919 = vpop.permute.xlu0 %8918
    %8920 = vrot.lane.b32.xlu0 %v8720, 8
    %v8921 = vpop.permute.xlu0 %8920
    %8922 = vrot.lane.b32.xlu0 %v8721, 8
    %v8923 = vpop.permute.xlu0 %8922
    %8924 = vrot.lane.b32.xlu0 %v8722, 8
    %v8925 = vpop.permute.xlu0 %8924
    %8926 = vrot.lane.b32.xlu0 %v8723, 8
    %v8927 = vpop.permute.xlu0 %8926
    %8928 = vrot.lane.b32.xlu0 %v8724, 8
    %v8929 = vpop.permute.xlu0 %8928
    %8930 = vrot.lane.b32.xlu0 %v8725, 8
    %v8931 = vpop.permute.xlu0 %8930
    %8932 = vrot.lane.b32.xlu0 %v8726, 8
    %v8933 = vpop.permute.xlu0 %8932
    %8934 = vrot.lane.b32.xlu0 %v8727, 8
    %v8935 = vpop.permute.xlu0 %8934
    %8952 = vrot.lane.b32.xlu0 %v8808, 16
    %v8953 = vpop.permute.xlu0 %8952
    %8954 = vrot.lane.b32.xlu0 %v8809, 16
    %v8955 = vpop.permute.xlu0 %8954
    %8956 = vrot.lane.b32.xlu0 %v8810, 16
    %v8957 = vpop.permute.xlu0 %8956
    %8958 = vrot.lane.b32.xlu0 %v8811, 16
    %v8959 = vpop.permute.xlu0 %8958
    %8960 = vrot.lane.b32.xlu0 %v8812, 16
    %v8961 = vpop.permute.xlu0 %8960
    %8962 = vrot.lane.b32.xlu0 %v8813, 16
    %v8963 = vpop.permute.xlu0 %8962
    %8964 = vrot.lane.b32.xlu0 %v8814, 16
    %v8965 = vpop.permute.xlu0 %8964
    %8966 = vrot.lane.b32.xlu0 %v8815, 16
    %v8967 = vpop.permute.xlu0 %8966
    %8968 = vrot.lane.b32.xlu0 %v8816, 16
    %v8969 = vpop.permute.xlu0 %8968
    %8970 = vrot.lane.b32.xlu0 %v8817, 16
    %v8971 = vpop.permute.xlu0 %8970
    %8972 = vrot.lane.b32.xlu0 %v8818, 16
    %v8973 = vpop.permute.xlu0 %8972
    %8974 = vrot.lane.b32.xlu0 %v8819, 16
    %v8975 = vpop.permute.xlu0 %8974
    %8976 = vrot.lane.b32.xlu0 %v8820, 16
    %v8977 = vpop.permute.xlu0 %8976
    %8978 = vrot.lane.b32.xlu0 %v8821, 16
    %v8979 = vpop.permute.xlu0 %8978
    %8980 = vrot.lane.b32.xlu0 %v8822, 16
    %v8981 = vpop.permute.xlu0 %8980
    %8982 = vrot.lane.b32.xlu0 %v8823, 16
    %v8983 = vpop.permute.xlu0 %8982
    %9000 = vrot.lane.b32.xlu0 %v8712, 16
    %v9001 = vpop.permute.xlu0 %9000
    %9002 = vrot.lane.b32.xlu0 %v8713, 16
    %v9003 = vpop.permute.xlu0 %9002
    %9004 = vrot.lane.b32.xlu0 %v8714, 16
    %v9005 = vpop.permute.xlu0 %9004
    %9006 = vrot.lane.b32.xlu0 %v8715, 16
    %v9007 = vpop.permute.xlu0 %9006
    %9008 = vrot.lane.b32.xlu0 %v8716, 16
    %v9009 = vpop.permute.xlu0 %9008
    %9010 = vrot.lane.b32.xlu0 %v8717, 16
    %v9011 = vpop.permute.xlu0 %9010
    %9012 = vrot.lane.b32.xlu0 %v8718, 16
    %v9013 = vpop.permute.xlu0 %9012
    %9014 = vrot.lane.b32.xlu0 %v8719, 16
    %v9015 = vpop.permute.xlu0 %9014
    %9016 = vrot.lane.b32.xlu0 %v8720, 16
    %v9017 = vpop.permute.xlu0 %9016
    %9018 = vrot.lane.b32.xlu0 %v8721, 16
    %v9019 = vpop.permute.xlu0 %9018
    %9020 = vrot.lane.b32.xlu0 %v8722, 16
    %v9021 = vpop.permute.xlu0 %9020
    %9022 = vrot.lane.b32.xlu0 %v8723, 16
    %v9023 = vpop.permute.xlu0 %9022
    %9024 = vrot.lane.b32.xlu0 %v8724, 16
    %v9025 = vpop.permute.xlu0 %9024
    %9026 = vrot.lane.b32.xlu0 %v8725, 16
    %v9027 = vpop.permute.xlu0 %9026
    %9028 = vrot.lane.b32.xlu0 %v8726, 16
    %v9029 = vpop.permute.xlu0 %9028
    %9030 = vrot.lane.b32.xlu0 %v8727, 16
    %v9031 = vpop.permute.xlu0 %9030
    %9048 = vrot.lane.b32.xlu0 %v8808, 24
    %v9049 = vpop.permute.xlu0 %9048
    %9050 = vrot.lane.b32.xlu0 %v8809, 24
    %v9051 = vpop.permute.xlu0 %9050
    %9052 = vrot.lane.b32.xlu0 %v8810, 24
    %v9053 = vpop.permute.xlu0 %9052
    %9054 = vrot.lane.b32.xlu0 %v8811, 24
    %v9055 = vpop.permute.xlu0 %9054
    %9056 = vrot.lane.b32.xlu0 %v8812, 24
    %v9057 = vpop.permute.xlu0 %9056
    %9058 = vrot.lane.b32.xlu0 %v8813, 24
    %v9059 = vpop.permute.xlu0 %9058
    %9060 = vrot.lane.b32.xlu0 %v8814, 24
    %v9061 = vpop.permute.xlu0 %9060
    %9062 = vrot.lane.b32.xlu0 %v8815, 24
    %v9063 = vpop.permute.xlu0 %9062
    %9064 = vrot.lane.b32.xlu0 %v8816, 24
    %v9065 = vpop.permute.xlu0 %9064
    %9066 = vrot.lane.b32.xlu0 %v8817, 24
    %v9067 = vpop.permute.xlu0 %9066
    %9068 = vrot.lane.b32.xlu0 %v8818, 24
    %v9069 = vpop.permute.xlu0 %9068
    %9070 = vrot.lane.b32.xlu0 %v8819, 24
    %v9071 = vpop.permute.xlu0 %9070
    %9072 = vrot.lane.b32.xlu0 %v8820, 24
    %v9073 = vpop.permute.xlu0 %9072
    %9074 = vrot.lane.b32.xlu0 %v8821, 24
    %v9075 = vpop.permute.xlu0 %9074
    %9076 = vrot.lane.b32.xlu0 %v8822, 24
    %v9077 = vpop.permute.xlu0 %9076
    %9078 = vrot.lane.b32.xlu0 %v8823, 24
    %v9079 = vpop.permute.xlu0 %9078
    %9096 = vrot.lane.b32.xlu0 %v8712, 24
    %v9097 = vpop.permute.xlu0 %9096
    %9098 = vrot.lane.b32.xlu0 %v8713, 24
    %v9099 = vpop.permute.xlu0 %9098
    %9100 = vrot.lane.b32.xlu0 %v8714, 24
    %v9101 = vpop.permute.xlu0 %9100
    %9102 = vrot.lane.b32.xlu0 %v8715, 24
    %v9103 = vpop.permute.xlu0 %9102
    %9104 = vrot.lane.b32.xlu0 %v8716, 24
    %v9105 = vpop.permute.xlu0 %9104
    %9106 = vrot.lane.b32.xlu0 %v8717, 24
    %v9107 = vpop.permute.xlu0 %9106
    %9108 = vrot.lane.b32.xlu0 %v8718, 24
    %v9109 = vpop.permute.xlu0 %9108
    %9110 = vrot.lane.b32.xlu0 %v8719, 24
    %v9111 = vpop.permute.xlu0 %9110
    %9112 = vrot.lane.b32.xlu0 %v8720, 24
    %v9113 = vpop.permute.xlu0 %9112
    %9114 = vrot.lane.b32.xlu0 %v8721, 24
    %v9115 = vpop.permute.xlu0 %9114
    %9116 = vrot.lane.b32.xlu0 %v8722, 24
    %v9117 = vpop.permute.xlu0 %9116
    %9118 = vrot.lane.b32.xlu0 %v8723, 24
    %v9119 = vpop.permute.xlu0 %9118
    %9120 = vrot.lane.b32.xlu0 %v8724, 24
    %v9121 = vpop.permute.xlu0 %9120
    %9122 = vrot.lane.b32.xlu0 %v8725, 24
    %v9123 = vpop.permute.xlu0 %9122
    %9124 = vrot.lane.b32.xlu0 %v8726, 24
    %v9125 = vpop.permute.xlu0 %9124
    %9126 = vrot.lane.b32.xlu0 %v8727, 24
    %v9127 = vpop.permute.xlu0 %9126
    %9144 = vrot.lane.b32.xlu0 %v8808, 32
    %v9145 = vpop.permute.xlu0 %9144
    %9146 = vrot.lane.b32.xlu0 %v8809, 32
    %v9147 = vpop.permute.xlu0 %9146
    %9148 = vrot.lane.b32.xlu0 %v8810, 32
    %v9149 = vpop.permute.xlu0 %9148
    %9150 = vrot.lane.b32.xlu0 %v8811, 32
    %v9151 = vpop.permute.xlu0 %9150
    %9152 = vrot.lane.b32.xlu0 %v8812, 32
    %v9153 = vpop.permute.xlu0 %9152
    %9154 = vrot.lane.b32.xlu0 %v8813, 32
    %v9155 = vpop.permute.xlu0 %9154
    %9156 = vrot.lane.b32.xlu0 %v8814, 32
    %v9157 = vpop.permute.xlu0 %9156
    %9158 = vrot.lane.b32.xlu0 %v8815, 32
    %v9159 = vpop.permute.xlu0 %9158
    %9160 = vrot.lane.b32.xlu0 %v8816, 32
    %v9161 = vpop.permute.xlu0 %9160
    %9162 = vrot.lane.b32.xlu0 %v8817, 32
    %v9163 = vpop.permute.xlu0 %9162
    %9164 = vrot.lane.b32.xlu0 %v8818, 32
    %v9165 = vpop.permute.xlu0 %9164
    %9166 = vrot.lane.b32.xlu0 %v8819, 32
    %v9167 = vpop.permute.xlu0 %9166
    %9168 = vrot.lane.b32.xlu0 %v8820, 32
    %v9169 = vpop.permute.xlu0 %9168
    %9170 = vrot.lane.b32.xlu0 %v8821, 32
    %v9171 = vpop.permute.xlu0 %9170
    %9172 = vrot.lane.b32.xlu0 %v8822, 32
    %v9173 = vpop.permute.xlu0 %9172
    %9174 = vrot.lane.b32.xlu0 %v8823, 32
    %v9175 = vpop.permute.xlu0 %9174
    %9192 = vrot.lane.b32.xlu0 %v8712, 32
    %v9193 = vpop.permute.xlu0 %9192
    %9194 = vrot.lane.b32.xlu0 %v8713, 32
    %v9195 = vpop.permute.xlu0 %9194
    %9196 = vrot.lane.b32.xlu0 %v8714, 32
    %v9197 = vpop.permute.xlu0 %9196
    %9198 = vrot.lane.b32.xlu0 %v8715, 32
    %v9199 = vpop.permute.xlu0 %9198
    %9200 = vrot.lane.b32.xlu0 %v8716, 32
    %v9201 = vpop.permute.xlu0 %9200
    %9202 = vrot.lane.b32.xlu0 %v8717, 32
    %v9203 = vpop.permute.xlu0 %9202
    %9204 = vrot.lane.b32.xlu0 %v8718, 32
    %v9205 = vpop.permute.xlu0 %9204
    %9206 = vrot.lane.b32.xlu0 %v8719, 32
    %v9207 = vpop.permute.xlu0 %9206
    %9208 = vrot.lane.b32.xlu0 %v8720, 32
    %v9209 = vpop.permute.xlu0 %9208
    %9210 = vrot.lane.b32.xlu0 %v8721, 32
    %v9211 = vpop.permute.xlu0 %9210
    %9212 = vrot.lane.b32.xlu0 %v8722, 32
    %v9213 = vpop.permute.xlu0 %9212
    %9214 = vrot.lane.b32.xlu0 %v8723, 32
    %v9215 = vpop.permute.xlu0 %9214
    %9216 = vrot.lane.b32.xlu0 %v8724, 32
    %v9217 = vpop.permute.xlu0 %9216
    %9218 = vrot.lane.b32.xlu0 %v8725, 32
    %v9219 = vpop.permute.xlu0 %9218
    %9220 = vrot.lane.b32.xlu0 %v8726, 32
    %v9221 = vpop.permute.xlu0 %9220
    %9222 = vrot.lane.b32.xlu0 %v8727, 32
    %v9223 = vpop.permute.xlu0 %9222
    %9240 = vrot.lane.b32.xlu0 %v8808, 40
    %v9241 = vpop.permute.xlu0 %9240
    %9242 = vrot.lane.b32.xlu0 %v8809, 40
    %v9243 = vpop.permute.xlu0 %9242
    %9244 = vrot.lane.b32.xlu0 %v8810, 40
    %v9245 = vpop.permute.xlu0 %9244
    %9246 = vrot.lane.b32.xlu0 %v8811, 40
    %v9247 = vpop.permute.xlu0 %9246
    %9248 = vrot.lane.b32.xlu0 %v8812, 40
    %v9249 = vpop.permute.xlu0 %9248
    %9250 = vrot.lane.b32.xlu0 %v8813, 40
    %v9251 = vpop.permute.xlu0 %9250
    %9252 = vrot.lane.b32.xlu0 %v8814, 40
    %v9253 = vpop.permute.xlu0 %9252
    %9254 = vrot.lane.b32.xlu0 %v8815, 40
    %v9255 = vpop.permute.xlu0 %9254
    %9256 = vrot.lane.b32.xlu0 %v8816, 40
    %v9257 = vpop.permute.xlu0 %9256
    %9258 = vrot.lane.b32.xlu0 %v8817, 40
    %v9259 = vpop.permute.xlu0 %9258
    %9260 = vrot.lane.b32.xlu0 %v8818, 40
    %v9261 = vpop.permute.xlu0 %9260
    %9262 = vrot.lane.b32.xlu0 %v8819, 40
    %v9263 = vpop.permute.xlu0 %9262
    %9264 = vrot.lane.b32.xlu0 %v8820, 40
    %v9265 = vpop.permute.xlu0 %9264
    %9266 = vrot.lane.b32.xlu0 %v8821, 40
    %v9267 = vpop.permute.xlu0 %9266
    %9268 = vrot.lane.b32.xlu0 %v8822, 40
    %v9269 = vpop.permute.xlu0 %9268
    %9270 = vrot.lane.b32.xlu0 %v8823, 40
    %v9271 = vpop.permute.xlu0 %9270
    %9288 = vrot.lane.b32.xlu0 %v8712, 40
    %v9289 = vpop.permute.xlu0 %9288
    %9290 = vrot.lane.b32.xlu0 %v8713, 40
    %v9291 = vpop.permute.xlu0 %9290
    %9292 = vrot.lane.b32.xlu0 %v8714, 40
    %v9293 = vpop.permute.xlu0 %9292
    %9294 = vrot.lane.b32.xlu0 %v8715, 40
    %v9295 = vpop.permute.xlu0 %9294
    %9296 = vrot.lane.b32.xlu0 %v8716, 40
    %v9297 = vpop.permute.xlu0 %9296
    %9298 = vrot.lane.b32.xlu0 %v8717, 40
    %v9299 = vpop.permute.xlu0 %9298
    %9300 = vrot.lane.b32.xlu0 %v8718, 40
    %v9301 = vpop.permute.xlu0 %9300
    %9302 = vrot.lane.b32.xlu0 %v8719, 40
    %v9303 = vpop.permute.xlu0 %9302
    %9304 = vrot.lane.b32.xlu0 %v8720, 40
    %v9305 = vpop.permute.xlu0 %9304
    %9306 = vrot.lane.b32.xlu0 %v8721, 40
    %v9307 = vpop.permute.xlu0 %9306
    %9308 = vrot.lane.b32.xlu0 %v8722, 40
    %v9309 = vpop.permute.xlu0 %9308
    %9310 = vrot.lane.b32.xlu0 %v8723, 40
    %v9311 = vpop.permute.xlu0 %9310
    %9312 = vrot.lane.b32.xlu0 %v8724, 40
    %v9313 = vpop.permute.xlu0 %9312
    %9314 = vrot.lane.b32.xlu0 %v8725, 40
    %v9315 = vpop.permute.xlu0 %9314
    %9316 = vrot.lane.b32.xlu0 %v8726, 40
    %v9317 = vpop.permute.xlu0 %9316
    %9318 = vrot.lane.b32.xlu0 %v8727, 40
    %v9319 = vpop.permute.xlu0 %9318
    %9336 = vrot.lane.b32.xlu0 %v8808, 48
    %v9337 = vpop.permute.xlu0 %9336
    %9338 = vrot.lane.b32.xlu0 %v8809, 48
    %v9339 = vpop.permute.xlu0 %9338
    %9340 = vrot.lane.b32.xlu0 %v8810, 48
    %v9341 = vpop.permute.xlu0 %9340
    %9342 = vrot.lane.b32.xlu0 %v8811, 48
    %v9343 = vpop.permute.xlu0 %9342
    %9344 = vrot.lane.b32.xlu0 %v8812, 48
    %v9345 = vpop.permute.xlu0 %9344
    %9346 = vrot.lane.b32.xlu0 %v8813, 48
    %v9347 = vpop.permute.xlu0 %9346
    %9348 = vrot.lane.b32.xlu0 %v8814, 48
    %v9349 = vpop.permute.xlu0 %9348
    %9350 = vrot.lane.b32.xlu0 %v8815, 48
    %v9351 = vpop.permute.xlu0 %9350
    %9352 = vrot.lane.b32.xlu0 %v8816, 48
    %v9353 = vpop.permute.xlu0 %9352
    %9354 = vrot.lane.b32.xlu0 %v8817, 48
    %v9355 = vpop.permute.xlu0 %9354
    %9356 = vrot.lane.b32.xlu0 %v8818, 48
    %v9357 = vpop.permute.xlu0 %9356
    %9358 = vrot.lane.b32.xlu0 %v8819, 48
    %v9359 = vpop.permute.xlu0 %9358
    %9360 = vrot.lane.b32.xlu0 %v8820, 48
    %v9361 = vpop.permute.xlu0 %9360
    %9362 = vrot.lane.b32.xlu0 %v8821, 48
    %v9363 = vpop.permute.xlu0 %9362
    %9364 = vrot.lane.b32.xlu0 %v8822, 48
    %v9365 = vpop.permute.xlu0 %9364
    %9366 = vrot.lane.b32.xlu0 %v8823, 48
    %v9367 = vpop.permute.xlu0 %9366
    %9384 = vrot.lane.b32.xlu0 %v8712, 48
    %v9385 = vpop.permute.xlu0 %9384
    %9386 = vrot.lane.b32.xlu0 %v8713, 48
    %v9387 = vpop.permute.xlu0 %9386
    %9388 = vrot.lane.b32.xlu0 %v8714, 48
    %v9389 = vpop.permute.xlu0 %9388
    %9390 = vrot.lane.b32.xlu0 %v8715, 48
    %v9391 = vpop.permute.xlu0 %9390
    %9392 = vrot.lane.b32.xlu0 %v8716, 48
    %v9393 = vpop.permute.xlu0 %9392
    %9394 = vrot.lane.b32.xlu0 %v8717, 48
    %v9395 = vpop.permute.xlu0 %9394
    %9396 = vrot.lane.b32.xlu0 %v8718, 48
    %v9397 = vpop.permute.xlu0 %9396
    %9398 = vrot.lane.b32.xlu0 %v8719, 48
    %v9399 = vpop.permute.xlu0 %9398
    %9400 = vrot.lane.b32.xlu0 %v8720, 48
    %v9401 = vpop.permute.xlu0 %9400
    %9402 = vrot.lane.b32.xlu0 %v8721, 48
    %v9403 = vpop.permute.xlu0 %9402
    %9404 = vrot.lane.b32.xlu0 %v8722, 48
    %v9405 = vpop.permute.xlu0 %9404
    %9406 = vrot.lane.b32.xlu0 %v8723, 48
    %v9407 = vpop.permute.xlu0 %9406
    %9408 = vrot.lane.b32.xlu0 %v8724, 48
    %v9409 = vpop.permute.xlu0 %9408
    %9410 = vrot.lane.b32.xlu0 %v8725, 48
    %v9411 = vpop.permute.xlu0 %9410
    %9412 = vrot.lane.b32.xlu0 %v8726, 48
    %v9413 = vpop.permute.xlu0 %9412
    %9414 = vrot.lane.b32.xlu0 %v8727, 48
    %v9415 = vpop.permute.xlu0 %9414
    %9432 = vrot.lane.b32.xlu0 %v8808, 56
    %v9433 = vpop.permute.xlu0 %9432
    %9434 = vrot.lane.b32.xlu0 %v8809, 56
    %v9435 = vpop.permute.xlu0 %9434
    %9436 = vrot.lane.b32.xlu0 %v8810, 56
    %v9437 = vpop.permute.xlu0 %9436
    %9438 = vrot.lane.b32.xlu0 %v8811, 56
    %v9439 = vpop.permute.xlu0 %9438
    %9440 = vrot.lane.b32.xlu0 %v8812, 56
    %v9441 = vpop.permute.xlu0 %9440
    %9442 = vrot.lane.b32.xlu0 %v8813, 56
    %v9443 = vpop.permute.xlu0 %9442
    %9444 = vrot.lane.b32.xlu0 %v8814, 56
    %v9445 = vpop.permute.xlu0 %9444
    %9446 = vrot.lane.b32.xlu0 %v8815, 56
    %v9447 = vpop.permute.xlu0 %9446
    %9448 = vrot.lane.b32.xlu0 %v8816, 56
    %v9449 = vpop.permute.xlu0 %9448
    %9450 = vrot.lane.b32.xlu0 %v8817, 56
    %v9451 = vpop.permute.xlu0 %9450
    %9452 = vrot.lane.b32.xlu0 %v8818, 56
    %v9453 = vpop.permute.xlu0 %9452
    %9454 = vrot.lane.b32.xlu0 %v8819, 56
    %v9455 = vpop.permute.xlu0 %9454
    %9456 = vrot.lane.b32.xlu0 %v8820, 56
    %v9457 = vpop.permute.xlu0 %9456
    %9458 = vrot.lane.b32.xlu0 %v8821, 56
    %v9459 = vpop.permute.xlu0 %9458
    %9460 = vrot.lane.b32.xlu0 %v8822, 56
    %v9461 = vpop.permute.xlu0 %9460
    %9462 = vrot.lane.b32.xlu0 %v8823, 56
    %v9463 = vpop.permute.xlu0 %9462
    %9480 = vrot.lane.b32.xlu0 %v8712, 56
    %v9481 = vpop.permute.xlu0 %9480
    %9482 = vrot.lane.b32.xlu0 %v8713, 56
    %v9483 = vpop.permute.xlu0 %9482
    %9484 = vrot.lane.b32.xlu0 %v8714, 56
    %v9485 = vpop.permute.xlu0 %9484
    %9486 = vrot.lane.b32.xlu0 %v8715, 56
    %v9487 = vpop.permute.xlu0 %9486
    %9488 = vrot.lane.b32.xlu0 %v8716, 56
    %v9489 = vpop.permute.xlu0 %9488
    %9490 = vrot.lane.b32.xlu0 %v8717, 56
    %v9491 = vpop.permute.xlu0 %9490
    %9492 = vrot.lane.b32.xlu0 %v8718, 56
    %v9493 = vpop.permute.xlu0 %9492
    %9494 = vrot.lane.b32.xlu0 %v8719, 56
    %v9495 = vpop.permute.xlu0 %9494
    %9496 = vrot.lane.b32.xlu0 %v8720, 56
    %v9497 = vpop.permute.xlu0 %9496
    %9498 = vrot.lane.b32.xlu0 %v8721, 56
    %v9499 = vpop.permute.xlu0 %9498
    %9500 = vrot.lane.b32.xlu0 %v8722, 56
    %v9501 = vpop.permute.xlu0 %9500
    %9502 = vrot.lane.b32.xlu0 %v8723, 56
    %v9503 = vpop.permute.xlu0 %9502
    %9504 = vrot.lane.b32.xlu0 %v8724, 56
    %v9505 = vpop.permute.xlu0 %9504
    %9506 = vrot.lane.b32.xlu0 %v8725, 56
    %v9507 = vpop.permute.xlu0 %9506
    %9508 = vrot.lane.b32.xlu0 %v8726, 56
    %v9509 = vpop.permute.xlu0 %9508
    %9510 = vrot.lane.b32.xlu0 %v8727, 56
    %v9511 = vpop.permute.xlu0 %9510
    %9528 = vrot.lane.b32.xlu0 %v8808, 64
    %v9529 = vpop.permute.xlu0 %9528
    %9530 = vrot.lane.b32.xlu0 %v8809, 64
    %v9531 = vpop.permute.xlu0 %9530
    %9532 = vrot.lane.b32.xlu0 %v8810, 64
    %v9533 = vpop.permute.xlu0 %9532
    %9534 = vrot.lane.b32.xlu0 %v8811, 64
    %v9535 = vpop.permute.xlu0 %9534
    %9536 = vrot.lane.b32.xlu0 %v8812, 64
    %v9537 = vpop.permute.xlu0 %9536
    %9538 = vrot.lane.b32.xlu0 %v8813, 64
    %v9539 = vpop.permute.xlu0 %9538
    %9540 = vrot.lane.b32.xlu0 %v8814, 64
    %v9541 = vpop.permute.xlu0 %9540
    %9542 = vrot.lane.b32.xlu0 %v8815, 64
    %v9543 = vpop.permute.xlu0 %9542
    %9544 = vrot.lane.b32.xlu0 %v8816, 64
    %v9545 = vpop.permute.xlu0 %9544
    %9546 = vrot.lane.b32.xlu0 %v8817, 64
    %v9547 = vpop.permute.xlu0 %9546
    %9548 = vrot.lane.b32.xlu0 %v8818, 64
    %v9549 = vpop.permute.xlu0 %9548
    %9550 = vrot.lane.b32.xlu0 %v8819, 64
    %v9551 = vpop.permute.xlu0 %9550
    %9552 = vrot.lane.b32.xlu0 %v8820, 64
    %v9553 = vpop.permute.xlu0 %9552
    %9554 = vrot.lane.b32.xlu0 %v8821, 64
    %v9555 = vpop.permute.xlu0 %9554
    %9556 = vrot.lane.b32.xlu0 %v8822, 64
    %v9557 = vpop.permute.xlu0 %9556
    %9558 = vrot.lane.b32.xlu0 %v8823, 64
    %v9559 = vpop.permute.xlu0 %9558
    %v9576 = vsel %vm2054, %v8712, %v8841
    %v9577 = vsel %vm2054, %v8713, %v8843
    %v9578 = vsel %vm2054, %v8714, %v8845
    %v9579 = vsel %vm2054, %v8715, %v8847
    %v9580 = vsel %vm2054, %v8716, %v8849
    %v9581 = vsel %vm2054, %v8717, %v8851
    %v9582 = vsel %vm2054, %v8718, %v8853
    %v9583 = vsel %vm2054, %v8719, %v8855
    %v9584 = vsel %vm2054, %v8720, %v8857
    %v9585 = vsel %vm2054, %v8721, %v8859
    %v9586 = vsel %vm2054, %v8722, %v8861
    %v9587 = vsel %vm2054, %v8723, %v8863
    %v9588 = vsel %vm2054, %v8724, %v8865
    %v9589 = vsel %vm2054, %v8725, %v8867
    %v9590 = vsel %vm2054, %v8726, %v8869
    %v9591 = vsel %vm2054, %v8727, %v8871
    %v9592 = vsel %vm2056, %v9576, %v8905
    %v9593 = vsel %vm2056, %v9577, %v8907
    %v9594 = vsel %vm2056, %v9578, %v8909
    %v9595 = vsel %vm2056, %v9579, %v8911
    %v9596 = vsel %vm2056, %v9580, %v8913
    %v9597 = vsel %vm2056, %v9581, %v8915
    %v9598 = vsel %vm2056, %v9582, %v8917
    %v9599 = vsel %vm2056, %v9583, %v8919
    %v9600 = vsel %vm2056, %v9584, %v8921
    %v9601 = vsel %vm2056, %v9585, %v8923
    %v9602 = vsel %vm2056, %v9586, %v8925
    %v9603 = vsel %vm2056, %v9587, %v8927
    %v9604 = vsel %vm2056, %v9588, %v8929
    %v9605 = vsel %vm2056, %v9589, %v8931
    %v9606 = vsel %vm2056, %v9590, %v8933
    %v9607 = vsel %vm2056, %v9591, %v8935
    %v9608 = vsel %vm2058, %v9592, %v8953
    %v9609 = vsel %vm2058, %v9593, %v8955
    %v9610 = vsel %vm2058, %v9594, %v8957
    %v9611 = vsel %vm2058, %v9595, %v8959
    %v9612 = vsel %vm2058, %v9596, %v8961
    %v9613 = vsel %vm2058, %v9597, %v8963
    %v9614 = vsel %vm2058, %v9598, %v8965
    %v9615 = vsel %vm2058, %v9599, %v8967
    %v9616 = vsel %vm2058, %v9600, %v8969
    %v9617 = vsel %vm2058, %v9601, %v8971
    %v9618 = vsel %vm2058, %v9602, %v8973
    %v9619 = vsel %vm2058, %v9603, %v8975
    %v9620 = vsel %vm2058, %v9604, %v8977
    %v9621 = vsel %vm2058, %v9605, %v8979
    %v9622 = vsel %vm2058, %v9606, %v8981
    %v9623 = vsel %vm2058, %v9607, %v8983
    %v9624 = vsel %vm2060, %v9608, %v9001
    %v9625 = vsel %vm2060, %v9609, %v9003
    %v9626 = vsel %vm2060, %v9610, %v9005
    %v9627 = vsel %vm2060, %v9611, %v9007
    %v9628 = vsel %vm2060, %v9612, %v9009
    %v9629 = vsel %vm2060, %v9613, %v9011
    %v9630 = vsel %vm2060, %v9614, %v9013
    %v9631 = vsel %vm2060, %v9615, %v9015
    %v9632 = vsel %vm2060, %v9616, %v9017
    %v9633 = vsel %vm2060, %v9617, %v9019
    %v9634 = vsel %vm2060, %v9618, %v9021
    %v9635 = vsel %vm2060, %v9619, %v9023
    %v9636 = vsel %vm2060, %v9620, %v9025
    %v9637 = vsel %vm2060, %v9621, %v9027
    %v9638 = vsel %vm2060, %v9622, %v9029
    %v9639 = vsel %vm2060, %v9623, %v9031
    %v9640 = vsel %vm2062, %v9624, %v9049
    %v9641 = vsel %vm2062, %v9625, %v9051
    %v9642 = vsel %vm2062, %v9626, %v9053
    %v9643 = vsel %vm2062, %v9627, %v9055
    %v9644 = vsel %vm2062, %v9628, %v9057
    %v9645 = vsel %vm2062, %v9629, %v9059
    %v9646 = vsel %vm2062, %v9630, %v9061
    %v9647 = vsel %vm2062, %v9631, %v9063
    %v9648 = vsel %vm2062, %v9632, %v9065
    %v9649 = vsel %vm2062, %v9633, %v9067
    %v9650 = vsel %vm2062, %v9634, %v9069
    %v9651 = vsel %vm2062, %v9635, %v9071
    %v9652 = vsel %vm2062, %v9636, %v9073
    %v9653 = vsel %vm2062, %v9637, %v9075
    %v9654 = vsel %vm2062, %v9638, %v9077
    %v9655 = vsel %vm2062, %v9639, %v9079
    %v9656 = vsel %vm2064, %v9640, %v9097
    %v9657 = vsel %vm2064, %v9641, %v9099
    %v9658 = vsel %vm2064, %v9642, %v9101
    %v9659 = vsel %vm2064, %v9643, %v9103
    %v9660 = vsel %vm2064, %v9644, %v9105
    %v9661 = vsel %vm2064, %v9645, %v9107
    %v9662 = vsel %vm2064, %v9646, %v9109
    %v9663 = vsel %vm2064, %v9647, %v9111
    %v9664 = vsel %vm2064, %v9648, %v9113
    %v9665 = vsel %vm2064, %v9649, %v9115
    %v9666 = vsel %vm2064, %v9650, %v9117
    %v9667 = vsel %vm2064, %v9651, %v9119
    %v9668 = vsel %vm2064, %v9652, %v9121
    %v9669 = vsel %vm2064, %v9653, %v9123
    %v9670 = vsel %vm2064, %v9654, %v9125
    %v9671 = vsel %vm2064, %v9655, %v9127
    %v9672 = vsel %vm2066, %v9656, %v9145
    %v9673 = vsel %vm2066, %v9657, %v9147
    %v9674 = vsel %vm2066, %v9658, %v9149
    %v9675 = vsel %vm2066, %v9659, %v9151
    %v9676 = vsel %vm2066, %v9660, %v9153
    %v9677 = vsel %vm2066, %v9661, %v9155
    %v9678 = vsel %vm2066, %v9662, %v9157
    %v9679 = vsel %vm2066, %v9663, %v9159
    %v9680 = vsel %vm2066, %v9664, %v9161
    %v9681 = vsel %vm2066, %v9665, %v9163
    %v9682 = vsel %vm2066, %v9666, %v9165
    %v9683 = vsel %vm2066, %v9667, %v9167
    %v9684 = vsel %vm2066, %v9668, %v9169
    %v9685 = vsel %vm2066, %v9669, %v9171
    %v9686 = vsel %vm2066, %v9670, %v9173
    %v9687 = vsel %vm2066, %v9671, %v9175
    %v9688 = vsel %vm1865, %v9672, %v9193
    %v9689 = vsel %vm1865, %v9673, %v9195
    %v9690 = vsel %vm1865, %v9674, %v9197
    %v9691 = vsel %vm1865, %v9675, %v9199
    %v9692 = vsel %vm1865, %v9676, %v9201
    %v9693 = vsel %vm1865, %v9677, %v9203
    %v9694 = vsel %vm1865, %v9678, %v9205
    %v9695 = vsel %vm1865, %v9679, %v9207
    %v9696 = vsel %vm1865, %v9680, %v9209
    %v9697 = vsel %vm1865, %v9681, %v9211
    %v9698 = vsel %vm1865, %v9682, %v9213
    %v9699 = vsel %vm1865, %v9683, %v9215
    %v9700 = vsel %vm1865, %v9684, %v9217
    %v9701 = vsel %vm1865, %v9685, %v9219
    %v9702 = vsel %vm1865, %v9686, %v9221
    %v9703 = vsel %vm1865, %v9687, %v9223
    %v9704 = vsel %vm2237, %v9688, %v9241
    %v9705 = vsel %vm2237, %v9689, %v9243
    %v9706 = vsel %vm2237, %v9690, %v9245
    %v9707 = vsel %vm2237, %v9691, %v9247
    %v9708 = vsel %vm2237, %v9692, %v9249
    %v9709 = vsel %vm2237, %v9693, %v9251
    %v9710 = vsel %vm2237, %v9694, %v9253
    %v9711 = vsel %vm2237, %v9695, %v9255
    %v9712 = vsel %vm2237, %v9696, %v9257
    %v9713 = vsel %vm2237, %v9697, %v9259
    %v9714 = vsel %vm2237, %v9698, %v9261
    %v9715 = vsel %vm2237, %v9699, %v9263
    %v9716 = vsel %vm2237, %v9700, %v9265
    %v9717 = vsel %vm2237, %v9701, %v9267
    %v9718 = vsel %vm2237, %v9702, %v9269
    %v9719 = vsel %vm2237, %v9703, %v9271
    %v9720 = vsel %vm169, %v9704, %v9289
    %v9721 = vsel %vm169, %v9705, %v9291
    %v9722 = vsel %vm169, %v9706, %v9293
    %v9723 = vsel %vm169, %v9707, %v9295
    %v9724 = vsel %vm169, %v9708, %v9297
    %v9725 = vsel %vm169, %v9709, %v9299
    %v9726 = vsel %vm169, %v9710, %v9301
    %v9727 = vsel %vm169, %v9711, %v9303
    %v9728 = vsel %vm169, %v9712, %v9305
    %v9729 = vsel %vm169, %v9713, %v9307
    %v9730 = vsel %vm169, %v9714, %v9309
    %v9731 = vsel %vm169, %v9715, %v9311
    %v9732 = vsel %vm169, %v9716, %v9313
    %v9733 = vsel %vm169, %v9717, %v9315
    %v9734 = vsel %vm169, %v9718, %v9317
    %v9735 = vsel %vm169, %v9719, %v9319
    %v9736 = vsel %vm5743, %v9720, %v9337
    %v9737 = vsel %vm5743, %v9721, %v9339
    %v9738 = vsel %vm5743, %v9722, %v9341
    %v9739 = vsel %vm5743, %v9723, %v9343
    %v9740 = vsel %vm5743, %v9724, %v9345
    %v9741 = vsel %vm5743, %v9725, %v9347
    %v9742 = vsel %vm5743, %v9726, %v9349
    %v9743 = vsel %vm5743, %v9727, %v9351
    %v9744 = vsel %vm5743, %v9728, %v9353
    %v9745 = vsel %vm5743, %v9729, %v9355
    %v9746 = vsel %vm5743, %v9730, %v9357
    %v9747 = vsel %vm5743, %v9731, %v9359
    %v9748 = vsel %vm5743, %v9732, %v9361
    %v9749 = vsel %vm5743, %v9733, %v9363
    %v9750 = vsel %vm5743, %v9734, %v9365
    %v9751 = vsel %vm5743, %v9735, %v9367
    %v9752 = vsel %vm5760, %v9736, %v9385
    %v9753 = vsel %vm5760, %v9737, %v9387
    %v9754 = vsel %vm5760, %v9738, %v9389
    %v9755 = vsel %vm5760, %v9739, %v9391
    %v9756 = vsel %vm5760, %v9740, %v9393
    %v9757 = vsel %vm5760, %v9741, %v9395
    %v9758 = vsel %vm5760, %v9742, %v9397
    %v9759 = vsel %vm5760, %v9743, %v9399
    %v9760 = vsel %vm5760, %v9744, %v9401
    %v9761 = vsel %vm5760, %v9745, %v9403
    %v9762 = vsel %vm5760, %v9746, %v9405
    %v9763 = vsel %vm5760, %v9747, %v9407
    %v9764 = vsel %vm5760, %v9748, %v9409
    %v9765 = vsel %vm5760, %v9749, %v9411
    %v9766 = vsel %vm5760, %v9750, %v9413
    %v9767 = vsel %vm5760, %v9751, %v9415
    %v9768 = vsel %vm5777, %v9752, %v9433
    %v9769 = vsel %vm5777, %v9753, %v9435
    %v9770 = vsel %vm5777, %v9754, %v9437
    %v9771 = vsel %vm5777, %v9755, %v9439
    %v9772 = vsel %vm5777, %v9756, %v9441
    %v9773 = vsel %vm5777, %v9757, %v9443
    %v9774 = vsel %vm5777, %v9758, %v9445
    %v9775 = vsel %vm5777, %v9759, %v9447
    %v9776 = vsel %vm5777, %v9760, %v9449
    %v9777 = vsel %vm5777, %v9761, %v9451
    %v9778 = vsel %vm5777, %v9762, %v9453
    %v9779 = vsel %vm5777, %v9763, %v9455
    %v9780 = vsel %vm5777, %v9764, %v9457
    %v9781 = vsel %vm5777, %v9765, %v9459
    %v9782 = vsel %vm5777, %v9766, %v9461
    %v9783 = vsel %vm5777, %v9767, %v9463
    %v9784 = vsel %vm5794, %v9768, %v9481
    %v9785 = vsel %vm5794, %v9769, %v9483
    %v9786 = vsel %vm5794, %v9770, %v9485
    %v9787 = vsel %vm5794, %v9771, %v9487
    %v9788 = vsel %vm5794, %v9772, %v9489
    %v9789 = vsel %vm5794, %v9773, %v9491
    %v9790 = vsel %vm5794, %v9774, %v9493
    %v9791 = vsel %vm5794, %v9775, %v9495
    %v9792 = vsel %vm5794, %v9776, %v9497
    %v9793 = vsel %vm5794, %v9777, %v9499
    %v9794 = vsel %vm5794, %v9778, %v9501
    %v9795 = vsel %vm5794, %v9779, %v9503
    %v9796 = vsel %vm5794, %v9780, %v9505
    %v9797 = vsel %vm5794, %v9781, %v9507
    %v9798 = vsel %vm5794, %v9782, %v9509
    %v9799 = vsel %vm5794, %v9783, %v9511
    %v9800 = vsel %vm5811, %v9784, %v9529
    %v9801 = vsel %vm5811, %v9785, %v9531
    %v9802 = vsel %vm5811, %v9786, %v9533
    %v9803 = vsel %vm5811, %v9787, %v9535
    %v9804 = vsel %vm5811, %v9788, %v9537
    %v9805 = vsel %vm5811, %v9789, %v9539
    %v9806 = vsel %vm5811, %v9790, %v9541
    %v9807 = vsel %vm5811, %v9791, %v9543
    %v9808 = vsel %vm5811, %v9792, %v9545
    %v9809 = vsel %vm5811, %v9793, %v9547
    %v9810 = vsel %vm5811, %v9794, %v9549
    %v9811 = vsel %vm5811, %v9795, %v9551
    %v9812 = vsel %vm5811, %v9796, %v9553
    %v9813 = vsel %vm5811, %v9797, %v9555
    %v9814 = vsel %vm5811, %v9798, %v9557
    %v9815 = vsel %vm5811, %v9799, %v9559
    %s9816 = scalar_lea.vmem [#allocation2], 384
    %9817 = vst [vmem:[%s9816] sm:$0xff] %v9800
    %9818 = vst [vmem:[%s9816 + $0x8] sm:$0xff] %v9801
    %9819 = vst [vmem:[%s9816 + $0x10] sm:$0xff] %v9802
    %9820 = vst [vmem:[%s9816 + $0x18] sm:$0xff] %v9803
    %9821 = vst [vmem:[%s9816 + $0x20] sm:$0xff] %v9804
    %9822 = vst [vmem:[%s9816 + $0x28] sm:$0xff] %v9805
    %9823 = vst [vmem:[%s9816 + $0x30] sm:$0xff] %v9806
    %9824 = vst [vmem:[%s9816 + $0x38] sm:$0xff] %v9807
    %9825 = vst [vmem:[%s9816 + $0x40] sm:$0xff] %v9808
    %9826 = vst [vmem:[%s9816 + $0x48] sm:$0xff] %v9809
    %9827 = vst [vmem:[%s9816 + $0x50] sm:$0xff] %v9810
    %9828 = vst [vmem:[%s9816 + $0x58] sm:$0xff] %v9811
    %9829 = vst [vmem:[%s9816 + $0x60] sm:$0xff] %v9812
    %9830 = vst [vmem:[%s9816 + $0x68] sm:$0xff] %v9813
    %9831 = vst [vmem:[%s9816 + $0x70] sm:$0xff] %v9814
    %9832 = vst [vmem:[%s9816 + $0x78] sm:$0xff] %v9815
    // Predicated region
    $region30: #{tpu_custom_call.1} parent=1 // pred_check
      _
    $region31: #{tpu_custom_call.1} parent=1 // pred_check_branch
      %9834 = sbr.rel (0) target = $region33
    $region32: #{tpu_custom_call.1} parent=1 // pred_region
      %s9836 = ssub.s32 8192, 8192
      %9837 = vsyncadd [#allocation3], %s9836
      %s9838 = sshll.u32 [#allocation2], 4
      %s9839 = int_to_ptr.vmem [resolvable:$true] %s9838
      %9844 = dma.vmem_to_hbm [thread:$0]  %s9839, 8192, %s7, [#allocation3], 128, 128, 8
    $region33: #{tpu_custom_call.1} parent=1 // pred_fallthru
      _
    // Predicated region
    $region34: #{tpu_custom_call.1} parent=1 // pred_check
      _
    $region35: #{tpu_custom_call.1} parent=1 // pred_check_branch
      %9846 = sbr.rel (0) target = $region37
    $region36: #{tpu_custom_call.1} parent=1 // pred_region
      %9847 = dma.done [#allocation3], 8192
    $region37: #{tpu_custom_call.1} parent=1 // pred_fallthru
      _
    %9848 = vsyncpa [#allocation3], 1

</llo_original>
